<compile_context>
chip_gen: v7x
topology: tpu7x:2x2x1
jax: 0.10.0
libtpu: 0.0.40
codegen_flags: <defaults>
</compile_context>

<pallas_src>
import functools
import math

import jax
import jax.numpy as jnp
from jax.experimental import pallas as pl
from jax.experimental.pallas import tpu as pltpu

NEG_SLOPE = 0.01  # nn.LeakyReLU default negative_slope

# (kernel, stride, pad, cin, cout, leaky_relu) for the 15 convs, in forward order.
LAYER_SPECS = (
    [(7, 3, 3, 1, 128, True)]            # self.input + relu
    + [(7, 3, 3, 128, 128, True)] * 6    # 6x Conv_ReLU_Block7
    + [(5, 2, 2, 128, 128, True)] * 6    # 6x Conv_ReLU_Block5
    + [(3, 1, 1, 128, 128, True)]        # 1x Conv_ReLU_Block (make_layers early-returns)
    + [(3, 1, 1, 128, 1, False)]         # self.output (no relu)
)


def _round_up(x, m):
    return ((x + m - 1) // m) * m


# ---------------------------------------------------------------------------
# Static planning: per-layer geometry, kept taps, packed-weight offsets, and the
# per-tap row-gather maps.  Pure Python; runs once at init.
# ---------------------------------------------------------------------------
def build_plans(n_batch, height, width):
    plans = []
    h, w = height, width
    off = 0
    for idx, (k, s, p, cin, cout, relu) in enumerate(LAYER_SPECS):
        oh = (h + 2 * p - k) // s + 1
        ow = (w + 2 * p - k) // s + 1
        if idx == 0:
            taps = [(i, j) for i in range(k) for j in range(k)]
        else:
            # A tap whose row (or column) offset only ever lands on SAME-padding
            # zeros contributes an all-zero im2col column -> drop it (exact).
            act_i = [i for i in range(k)
                     if any(0 <= s * o + i - p < h for o in range(oh))]
            act_j = [j for j in range(k)
                     if any(0 <= s * o + j - p < w for o in range(ow))]
            taps = [(i, j) for i in act_i for j in act_j]
        k_eff = len(taps) * cin
        k_dma = _round_up(k_eff, 128)     # lane/tile-dense packed rows

        # Per-tap gather map: input activation row read at each output position
        # (None = SAME-padding zero).
        tap_rows = []
        for (i, j) in taps:
            rows = []
            for n in range(n_batch):
                for orow in range(oh):
                    for ocol in range(ow):
                        r = s * orow + i - p
                        c = s * ocol + j - p
                        rows.append(n * h * w + r * w + c
                                    if (0 <= r < h and 0 <= c < w) else None)
            tap_rows.append(rows)

        plans.append(dict(
            idx=idx, ksize=k, stride=s, pad=p, cin=cin, cout=cout, relu=relu,
            taps=taps, k_eff=k_eff, k_dma=k_dma, off=off,
            m_in=n_batch * h * w, m_out=n_batch * oh * ow,
            h_in=h, w_in=w, oh=oh, ow=ow, tap_rows=tap_rows))
        off += k_dma
        h, w = oh, ow

    # Structural assumptions baked into the fused kernel (true for 16x16 inputs);
    # other H/W must fail loudly here rather than silently produce wrong results.
    assert plans[-1]["oh"] == 1 and plans[-1]["ow"] == 1, (
        "residual broadcast needs the conv trunk to collapse to 1x1 spatial")
    for pln in plans[3:]:
        assert pln["tap_rows"] == [list(range(pln["m_in"]))], (
            "layers >= 3 must reduce to a single identity tap")
    for rows in plans[2]["tap_rows"]:
        assert all(r is not None for r in rows), (
            "layer-2 kept taps must all read valid (non-padding) positions")
    return plans


def pack_weights(weights_hwio, plans):
    """Pack all conv weights once into one flat [K_total, 128] bf16 matmul-layout slab."""
    slabs = []
    for w, plan in zip(weights_hwio, plans):
        blocks = [w[i, j] for (i, j) in plan["taps"]]     # each [cin, cout]
        wp = jnp.concatenate(blocks, axis=0)              # [k_eff, cout]
        pad_rows = plan["k_dma"] - wp.shape[0]            # layer 0: 49 -> 128
        pad_cols = 128 - wp.shape[1]                      # last layer: cout 1 -> 128
        if pad_rows or pad_cols:
            wp = jnp.pad(wp, ((0, pad_rows), (0, pad_cols)))
        slabs.append(wp)
    return jnp.concatenate(slabs, axis=0).astype(jnp.bfloat16)


# ---------------------------------------------------------------------------
# The fused kernel: all 15 convs, LeakyReLUs and the residual add in one launch.
#   cols0g_ref : [n_taps1*m1 (padded), 128] bf16  layer-0 im2col rows, pre-gathered
#                into layer-1 tap-grouped order by the wrapper.
#   xres_ref   : [N, H*W] f32 residual.
#   w_ref      : [K_total, 128] bf16 packed weight slab, fully VMEM-resident.
# ---------------------------------------------------------------------------
def _fused_net_kernel(cols0g_ref, xres_ref, w_ref, o_ref, *, plans):
    f32 = jnp.float32
    bf16 = jnp.bfloat16

    def wslab(plan):
        return w_ref[plan["off"]:plan["off"] + plan["k_dma"], :]   # bf16 [k,128]

    def leaky(x):
        return jnp.where(x >= 0, x, x * NEG_SLOPE)

    p0, p1, p2 = plans[0], plans[1], plans[2]
    m1 = p1["m_out"]

    # ---- layer 0 (1->128, k7 s3), with layer-1's row gather pre-folded in --------
    # One native bf16 MXU matmul directly yields the gathered layer-0 activations,
    # grouped per layer-1 tap (rows t*m1 .. t*m1+m1).
    g = jnp.dot(cols0g_ref[...], wslab(p0), preferred_element_type=f32)
    g = leaky(g)                                          # [~400, 128] f32

    # ---- layer 1 (128->128, k7 s3, 6x6 -> 2x2): per-tap accumulating matmuls -----
    acc = None
    for t in range(len(p1["taps"])):
        gt = g[t * m1:(t + 1) * m1, :].astype(bf16)       # 8-sublane-aligned slice
        wt = w_ref[p1["off"] + t * 128:p1["off"] + (t + 1) * 128, :]
        d = jnp.dot(gt, wt, preferred_element_type=f32)
        acc = d if acc is None else acc + d
    act = leaky(acc)                                      # [8, 128] f32

    # ---- layer 2 (128->128, k7 s3, 2x2 -> 1x1): 4 kept taps ----------------------
    acc = None
    for t, rows in enumerate(p2["tap_rows"]):
        blk = jnp.concatenate([act[r:r + 1, :] for r in rows], axis=0)   # [N,128]
        wt = w_ref[p2["off"] + t * 128:p2["off"] + (t + 1) * 128, :]
        d = jnp.dot(blk.astype(bf16), wt, preferred_element_type=f32)
        acc = d if acc is None else acc + d
    act = leaky(acc)                                      # [N, 128] f32

    # ---- layers 3..14: single identity tap -> plain [N,128]@[128,128] matmuls ----
    for plan in plans[3:]:
        acc = jnp.dot(act.astype(bf16), wslab(plan), preferred_element_type=f32)
        act = leaky(acc) if plan["relu"] else acc

    # Last conv has Cout=1; its padded weight columns 1..127 are exact zeros, so the
    # per-image scalar is simply lane 0 (no cross-lane reduce needed).
    scal = act[:, 0:1]                                    # [N, 1]
    # torch.add broadcast: conv stack collapsed to 1x1 -> add the scalar to residual.
    o_ref[...] = xres_ref[...] + scal


# ---------------------------------------------------------------------------
# Wrapper-side glue: im2col for layer 0 only (Cin=1 -> scalar taps, tiny), plus the
# static gather that regroups its rows into layer-1 tap order.
# ---------------------------------------------------------------------------
def _im2col(x, kh, kw, stride, pad):
    # x: [N, H, W, C]  (NHWC)
    n, h, w, c = x.shape
    xp = jnp.pad(x, ((0, 0), (pad, pad), (pad, pad), (0, 0)))
    oh = (h + 2 * pad - kh) // stride + 1
    ow = (w + 2 * pad - kw) // stride + 1
    patches = []
    for i in range(kh):
        for j in range(kw):
            patches.append(
                jax.lax.slice(
                    xp,
                    (0, i, j, 0),
                    (n, i + (oh - 1) * stride + 1, j + (ow - 1) * stride + 1, c),
                    (1, stride, stride, 1)))
    cols = jnp.stack(patches, axis=3)                 # [N, OH, OW, KH*KW, C]
    return cols.reshape(n * oh * ow, kh * kw * c)


def make_forward(plans, n_batch, height, width):
    hw = height * width
    p0, p1 = plans[0], plans[1]
    k0, s0, pd0 = p0["ksize"], p0["stride"], p0["pad"]
    kdma0 = p0["k_dma"]                       # 49 -> 128 (lane-dense)
    m1 = p1["m_out"]
    m0g_raw = len(p1["taps"]) * m1            # 49 taps * 8 output rows = 392
    m0g = _round_up(m0g_raw, 16)              # bf16 (16,128)-tile friendly
    k_total = plans[-1]["off"] + plans[-1]["k_dma"]

    # Static gather map: cols0_g row t*m1+m holds layer-0's im2col row for the pixel
    # layer-1 tap t reads at output position m; index "m_out0" selects the zero row.
    zero_row = p0["m_out"]
    idx = []
    for rows in p1["tap_rows"]:
        idx.extend(zero_row if r is None else r for r in rows)
    idx.extend([zero_row] * (m0g - m0g_raw))
    gather_idx = jnp.array(idx, dtype=jnp.int32)

    fused = pl.pallas_call(
        functools.partial(_fused_net_kernel, plans=plans),
        out_shape=jax.ShapeDtypeStruct((n_batch, hw), jnp.float32),
        grid=(1,),
        in_specs=[
            pl.BlockSpec((m0g, kdma0), lambda i: (0, 0)),     # gathered layer-0 im2col
            pl.BlockSpec((n_batch, hw), lambda i: (0, 0)),    # residual, lane-dense
            pl.BlockSpec((k_total, 128), lambda i: (0, 0)),   # full weight slab -> VMEM
        ],
        out_specs=pl.BlockSpec((n_batch, hw), lambda i: (0, 0)),
        compiler_params=pltpu.CompilerParams(
            dimension_semantics=("arbitrary",),   # weight-DMA bound: no megacore split
        ),
    )

    @jax.jit
    def forward(x_nchw, w_flat):
        x_nhwc = jnp.transpose(x_nchw, (0, 2, 3, 1))              # [N,H,W,1]
        cols0 = _im2col(x_nhwc, k0, k0, s0, pd0)                  # [72, 49]
        cols0 = jnp.pad(cols0, ((0, 0), (0, kdma0 - cols0.shape[1])))   # K 49 -> 128
        cols0_ext = jnp.concatenate(
            [cols0, jnp.zeros((1, kdma0), cols0.dtype)], axis=0)  # + zero (pad) row
        cols0_g = jnp.take(cols0_ext, gather_idx, axis=0).astype(jnp.bfloat16)
        xres = x_nchw.reshape(n_batch, hw)                        # C=1: pure reshape
        out = fused(cols0_g, xres, w_flat)                        # [N, H*W]
        return out.reshape(n_batch, 1, height, width)

    return forward


# ---------------------------------------------------------------------------
# Parameters (matches PyTorch init: N(0, sqrt(2/(k*k*Cout)))) and pure-JAX reference
# ---------------------------------------------------------------------------
def init_params(key):
    keys = jax.random.split(key, len(LAYER_SPECS))
    ws = []
    for kk, (ks, s, p, cin, cout, relu) in zip(keys, LAYER_SPECS):
        std = math.sqrt(2.0 / (ks * ks * cout))
        ws.append(jax.random.normal(kk, (ks, ks, cin, cout), jnp.float32) * std)  # HWIO
    return ws


def net_forward_ref(x_nchw, weights):
    out = x_nchw
    for w, (k, s, p, cin, cout, relu) in zip(weights, LAYER_SPECS):
        w_oihw = jnp.transpose(w, (3, 2, 0, 1))
        out = jax.lax.conv_general_dilated(
            out, w_oihw, (s, s), [(p, p), (p, p)],
            dimension_numbers=("NCHW", "OIHW", "NCHW"))
        if relu:
            out = jnp.where(out >= 0, out, out * NEG_SLOPE)
    return out + x_nchw   # torch.add broadcast of the 1x1 conv-stack output


if __name__ == "__main__":
    key = jax.random.PRNGKey(0)
    kx, kp = jax.random.split(key)
    n_batch, height, width = 2, 16, 16
    x = jax.random.normal(kx, (n_batch, 1, height, width), jnp.float32)

    weights = init_params(kp)
    # Weights are consumed as bf16 by the MXU; use the same bf16-rounded values
    # (in f32) for the reference so the comparison isolates kernel error.
    weights = [w.astype(jnp.bfloat16).astype(jnp.float32) for w in weights]

    plans = build_plans(n_batch, height, width)
    w_flat = pack_weights(weights, plans)        # packed ONCE at init: [K_total, 128] bf16
    forward = make_forward(plans, n_batch, height, width)

    y = jax.block_until_ready(forward(x, w_flat))
    assert y.shape == (n_batch, 1, height, width), y.shape

    y_ref = jax.block_until_ready(net_forward_ref(x, weights))
    assert jnp.allclose(y, y_ref, rtol=2e-2, atol=2e-2), float(jnp.max(jnp.abs(y - y_ref)))

    print("KERNEL_OK")
</pallas_src>

<mosaic_0001>
module attributes {stable_mosaic.version = 11 : i64} {
  func.func @_fused_net_kernel(%arg0: i32, %arg1: memref<400x128xbf16, #tpu.memory_space<vmem>>, %arg2: memref<2x256xf32, #tpu.memory_space<vmem>>, %arg3: memref<8448x128xbf16, #tpu.memory_space<vmem>>, %arg4: memref<2x256xf32, #tpu.memory_space<vmem>>) attributes {dimension_semantics = [#tpu.dimension_semantics<arbitrary>], iteration_bounds = array<i64: 1>, scalar_prefetch = 0 : i64, scratch_operands = 0 : i64, tpu.core_type = #tpu.core_type<tc>, window_params = [{pipeline_mode = #tpu.pipeline_mode<synchronous>, transform_indices = @transform_0, window_bounds = array<i64: 400, 128>}, {pipeline_mode = #tpu.pipeline_mode<synchronous>, transform_indices = @transform_1, window_bounds = array<i64: 2, 256>}, {pipeline_mode = #tpu.pipeline_mode<synchronous>, transform_indices = @transform_2, window_bounds = array<i64: 8448, 128>}, {pipeline_mode = #tpu.pipeline_mode<synchronous>, transform_indices = @transform_3, window_bounds = array<i64: 2, 256>}]} {
    %c0 = arith.constant 0 : index
    %c0_0 = arith.constant 0 : index
    %0 = vector.load %arg1[%c0, %c0_0] : memref<400x128xbf16, #tpu.memory_space<vmem>>, vector<400x128xbf16>
    %c0_1 = arith.constant 0 : index
    %c0_2 = arith.constant 0 : index
    %1 = vector.load %arg3[%c0_1, %c0_2] : memref<8448x128xbf16, #tpu.memory_space<vmem>>, vector<128x128xbf16>
    %cst = arith.constant dense<0.000000e+00> : vector<400x128xf32>
    %2 = tpu.matmul %0, %1, %cst {dimension_numbers = #tpu.dot_dimension_numbers<[1], [0], [0], [1], [0, 0, 1, 1], [], []>} : vector<400x128xbf16>, vector<128x128xbf16>, vector<400x128xf32> -> vector<400x128xf32>
    %cst_3 = arith.constant 0.000000e+00 : f32
    %3 = vector.broadcast %cst_3 : f32 to vector<400x128xf32>
    %4 = arith.cmpf oge, %2, %3 : vector<400x128xf32>
    %cst_4 = arith.constant 0.00999999977 : f32
    %5 = vector.broadcast %cst_4 : f32 to vector<400x128xf32>
    %6 = arith.mulf %2, %5 : vector<400x128xf32>
    %7 = arith.select %4, %2, %6 : vector<400x128xi1>, vector<400x128xf32>
    %8 = vector.extract_strided_slice %7 {offsets = [0, 0], sizes = [8, 128], strides = [1, 1]} : vector<400x128xf32> to vector<8x128xf32>
    %9 = arith.truncf %8 : vector<8x128xf32> to vector<8x128xbf16>
    %c128 = arith.constant 128 : index
    %c0_5 = arith.constant 0 : index
    %10 = vector.load %arg3[%c128, %c0_5] : memref<8448x128xbf16, #tpu.memory_space<vmem>>, vector<128x128xbf16>
    %cst_6 = arith.constant dense<0.000000e+00> : vector<8x128xf32>
    %11 = tpu.matmul %9, %10, %cst_6 {dimension_numbers = #tpu.dot_dimension_numbers<[1], [0], [0], [1], [0, 0, 1, 1], [], []>} : vector<8x128xbf16>, vector<128x128xbf16>, vector<8x128xf32> -> vector<8x128xf32>
    %12 = vector.extract_strided_slice %7 {offsets = [8, 0], sizes = [8, 128], strides = [1, 1]} : vector<400x128xf32> to vector<8x128xf32>
    %13 = arith.truncf %12 : vector<8x128xf32> to vector<8x128xbf16>
    %c256 = arith.constant 256 : index
    %c0_7 = arith.constant 0 : index
    %14 = vector.load %arg3[%c256, %c0_7] : memref<8448x128xbf16, #tpu.memory_space<vmem>>, vector<128x128xbf16>
    %cst_8 = arith.constant dense<0.000000e+00> : vector<8x128xf32>
    %15 = tpu.matmul %13, %14, %cst_8 {dimension_numbers = #tpu.dot_dimension_numbers<[1], [0], [0], [1], [0, 0, 1, 1], [], []>} : vector<8x128xbf16>, vector<128x128xbf16>, vector<8x128xf32> -> vector<8x128xf32>
    %16 = arith.addf %11, %15 : vector<8x128xf32>
    %17 = vector.extract_strided_slice %7 {offsets = [16, 0], sizes = [8, 128], strides = [1, 1]} : vector<400x128xf32> to vector<8x128xf32>
    %18 = arith.truncf %17 : vector<8x128xf32> to vector<8x128xbf16>
    %c384 = arith.constant 384 : index
    %c0_9 = arith.constant 0 : index
    %19 = vector.load %arg3[%c384, %c0_9] : memref<8448x128xbf16, #tpu.memory_space<vmem>>, vector<128x128xbf16>
    %cst_10 = arith.constant dense<0.000000e+00> : vector<8x128xf32>
    %20 = tpu.matmul %18, %19, %cst_10 {dimension_numbers = #tpu.dot_dimension_numbers<[1], [0], [0], [1], [0, 0, 1, 1], [], []>} : vector<8x128xbf16>, vector<128x128xbf16>, vector<8x128xf32> -> vector<8x128xf32>
    %21 = arith.addf %16, %20 : vector<8x128xf32>
    %22 = vector.extract_strided_slice %7 {offsets = [24, 0], sizes = [8, 128], strides = [1, 1]} : vector<400x128xf32> to vector<8x128xf32>
    %23 = arith.truncf %22 : vector<8x128xf32> to vector<8x128xbf16>
    %c512 = arith.constant 512 : index
    %c0_11 = arith.constant 0 : index
    %24 = vector.load %arg3[%c512, %c0_11] : memref<8448x128xbf16, #tpu.memory_space<vmem>>, vector<128x128xbf16>
    %cst_12 = arith.constant dense<0.000000e+00> : vector<8x128xf32>
    %25 = tpu.matmul %23, %24, %cst_12 {dimension_numbers = #tpu.dot_dimension_numbers<[1], [0], [0], [1], [0, 0, 1, 1], [], []>} : vector<8x128xbf16>, vector<128x128xbf16>, vector<8x128xf32> -> vector<8x128xf32>
    %26 = arith.addf %21, %25 : vector<8x128xf32>
    %27 = vector.extract_strided_slice %7 {offsets = [32, 0], sizes = [8, 128], strides = [1, 1]} : vector<400x128xf32> to vector<8x128xf32>
    %28 = arith.truncf %27 : vector<8x128xf32> to vector<8x128xbf16>
    %c640 = arith.constant 640 : index
    %c0_13 = arith.constant 0 : index
    %29 = vector.load %arg3[%c640, %c0_13] : memref<8448x128xbf16, #tpu.memory_space<vmem>>, vector<128x128xbf16>
    %cst_14 = arith.constant dense<0.000000e+00> : vector<8x128xf32>
    %30 = tpu.matmul %28, %29, %cst_14 {dimension_numbers = #tpu.dot_dimension_numbers<[1], [0], [0], [1], [0, 0, 1, 1], [], []>} : vector<8x128xbf16>, vector<128x128xbf16>, vector<8x128xf32> -> vector<8x128xf32>
    %31 = arith.addf %26, %30 : vector<8x128xf32>
    %32 = vector.extract_strided_slice %7 {offsets = [40, 0], sizes = [8, 128], strides = [1, 1]} : vector<400x128xf32> to vector<8x128xf32>
    %33 = arith.truncf %32 : vector<8x128xf32> to vector<8x128xbf16>
    %c768 = arith.constant 768 : index
    %c0_15 = arith.constant 0 : index
    %34 = vector.load %arg3[%c768, %c0_15] : memref<8448x128xbf16, #tpu.memory_space<vmem>>, vector<128x128xbf16>
    %cst_16 = arith.constant dense<0.000000e+00> : vector<8x128xf32>
    %35 = tpu.matmul %33, %34, %cst_16 {dimension_numbers = #tpu.dot_dimension_numbers<[1], [0], [0], [1], [0, 0, 1, 1], [], []>} : vector<8x128xbf16>, vector<128x128xbf16>, vector<8x128xf32> -> vector<8x128xf32>
    %36 = arith.addf %31, %35 : vector<8x128xf32>
    %37 = vector.extract_strided_slice %7 {offsets = [48, 0], sizes = [8, 128], strides = [1, 1]} : vector<400x128xf32> to vector<8x128xf32>
    %38 = arith.truncf %37 : vector<8x128xf32> to vector<8x128xbf16>
    %c896 = arith.constant 896 : index
    %c0_17 = arith.constant 0 : index
    %39 = vector.load %arg3[%c896, %c0_17] : memref<8448x128xbf16, #tpu.memory_space<vmem>>, vector<128x128xbf16>
    %cst_18 = arith.constant dense<0.000000e+00> : vector<8x128xf32>
    %40 = tpu.matmul %38, %39, %cst_18 {dimension_numbers = #tpu.dot_dimension_numbers<[1], [0], [0], [1], [0, 0, 1, 1], [], []>} : vector<8x128xbf16>, vector<128x128xbf16>, vector<8x128xf32> -> vector<8x128xf32>
    %41 = arith.addf %36, %40 : vector<8x128xf32>
    %42 = vector.extract_strided_slice %7 {offsets = [56, 0], sizes = [8, 128], strides = [1, 1]} : vector<400x128xf32> to vector<8x128xf32>
    %43 = arith.truncf %42 : vector<8x128xf32> to vector<8x128xbf16>
    %c1024 = arith.constant 1024 : index
    %c0_19 = arith.constant 0 : index
    %44 = vector.load %arg3[%c1024, %c0_19] : memref<8448x128xbf16, #tpu.memory_space<vmem>>, vector<128x128xbf16>
    %cst_20 = arith.constant dense<0.000000e+00> : vector<8x128xf32>
    %45 = tpu.matmul %43, %44, %cst_20 {dimension_numbers = #tpu.dot_dimension_numbers<[1], [0], [0], [1], [0, 0, 1, 1], [], []>} : vector<8x128xbf16>, vector<128x128xbf16>, vector<8x128xf32> -> vector<8x128xf32>
    %46 = arith.addf %41, %45 : vector<8x128xf32>
    %47 = vector.extract_strided_slice %7 {offsets = [64, 0], sizes = [8, 128], strides = [1, 1]} : vector<400x128xf32> to vector<8x128xf32>
    %48 = arith.truncf %47 : vector<8x128xf32> to vector<8x128xbf16>
    %c1152 = arith.constant 1152 : index
    %c0_21 = arith.constant 0 : index
    %49 = vector.load %arg3[%c1152, %c0_21] : memref<8448x128xbf16, #tpu.memory_space<vmem>>, vector<128x128xbf16>
    %cst_22 = arith.constant dense<0.000000e+00> : vector<8x128xf32>
    %50 = tpu.matmul %48, %49, %cst_22 {dimension_numbers = #tpu.dot_dimension_numbers<[1], [0], [0], [1], [0, 0, 1, 1], [], []>} : vector<8x128xbf16>, vector<128x128xbf16>, vector<8x128xf32> -> vector<8x128xf32>
    %51 = arith.addf %46, %50 : vector<8x128xf32>
    %52 = vector.extract_strided_slice %7 {offsets = [72, 0], sizes = [8, 128], strides = [1, 1]} : vector<400x128xf32> to vector<8x128xf32>
    %53 = arith.truncf %52 : vector<8x128xf32> to vector<8x128xbf16>
    %c1280 = arith.constant 1280 : index
    %c0_23 = arith.constant 0 : index
    %54 = vector.load %arg3[%c1280, %c0_23] : memref<8448x128xbf16, #tpu.memory_space<vmem>>, vector<128x128xbf16>
    %cst_24 = arith.constant dense<0.000000e+00> : vector<8x128xf32>
    %55 = tpu.matmul %53, %54, %cst_24 {dimension_numbers = #tpu.dot_dimension_numbers<[1], [0], [0], [1], [0, 0, 1, 1], [], []>} : vector<8x128xbf16>, vector<128x128xbf16>, vector<8x128xf32> -> vector<8x128xf32>
    %56 = arith.addf %51, %55 : vector<8x128xf32>
    %57 = vector.extract_strided_slice %7 {offsets = [80, 0], sizes = [8, 128], strides = [1, 1]} : vector<400x128xf32> to vector<8x128xf32>
    %58 = arith.truncf %57 : vector<8x128xf32> to vector<8x128xbf16>
    %c1408 = arith.constant 1408 : index
    %c0_25 = arith.constant 0 : index
    %59 = vector.load %arg3[%c1408, %c0_25] : memref<8448x128xbf16, #tpu.memory_space<vmem>>, vector<128x128xbf16>
    %cst_26 = arith.constant dense<0.000000e+00> : vector<8x128xf32>
    %60 = tpu.matmul %58, %59, %cst_26 {dimension_numbers = #tpu.dot_dimension_numbers<[1], [0], [0], [1], [0, 0, 1, 1], [], []>} : vector<8x128xbf16>, vector<128x128xbf16>, vector<8x128xf32> -> vector<8x128xf32>
    %61 = arith.addf %56, %60 : vector<8x128xf32>
    %62 = vector.extract_strided_slice %7 {offsets = [88, 0], sizes = [8, 128], strides = [1, 1]} : vector<400x128xf32> to vector<8x128xf32>
    %63 = arith.truncf %62 : vector<8x128xf32> to vector<8x128xbf16>
    %c1536 = arith.constant 1536 : index
    %c0_27 = arith.constant 0 : index
    %64 = vector.load %arg3[%c1536, %c0_27] : memref<8448x128xbf16, #tpu.memory_space<vmem>>, vector<128x128xbf16>
    %cst_28 = arith.constant dense<0.000000e+00> : vector<8x128xf32>
    %65 = tpu.matmul %63, %64, %cst_28 {dimension_numbers = #tpu.dot_dimension_numbers<[1], [0], [0], [1], [0, 0, 1, 1], [], []>} : vector<8x128xbf16>, vector<128x128xbf16>, vector<8x128xf32> -> vector<8x128xf32>
    %66 = arith.addf %61, %65 : vector<8x128xf32>
    %67 = vector.extract_strided_slice %7 {offsets = [96, 0], sizes = [8, 128], strides = [1, 1]} : vector<400x128xf32> to vector<8x128xf32>
    %68 = arith.truncf %67 : vector<8x128xf32> to vector<8x128xbf16>
    %c1664 = arith.constant 1664 : index
    %c0_29 = arith.constant 0 : index
    %69 = vector.load %arg3[%c1664, %c0_29] : memref<8448x128xbf16, #tpu.memory_space<vmem>>, vector<128x128xbf16>
    %cst_30 = arith.constant dense<0.000000e+00> : vector<8x128xf32>
    %70 = tpu.matmul %68, %69, %cst_30 {dimension_numbers = #tpu.dot_dimension_numbers<[1], [0], [0], [1], [0, 0, 1, 1], [], []>} : vector<8x128xbf16>, vector<128x128xbf16>, vector<8x128xf32> -> vector<8x128xf32>
    %71 = arith.addf %66, %70 : vector<8x128xf32>
    %72 = vector.extract_strided_slice %7 {offsets = [104, 0], sizes = [8, 128], strides = [1, 1]} : vector<400x128xf32> to vector<8x128xf32>
    %73 = arith.truncf %72 : vector<8x128xf32> to vector<8x128xbf16>
    %c1792 = arith.constant 1792 : index
    %c0_31 = arith.constant 0 : index
    %74 = vector.load %arg3[%c1792, %c0_31] : memref<8448x128xbf16, #tpu.memory_space<vmem>>, vector<128x128xbf16>
    %cst_32 = arith.constant dense<0.000000e+00> : vector<8x128xf32>
    %75 = tpu.matmul %73, %74, %cst_32 {dimension_numbers = #tpu.dot_dimension_numbers<[1], [0], [0], [1], [0, 0, 1, 1], [], []>} : vector<8x128xbf16>, vector<128x128xbf16>, vector<8x128xf32> -> vector<8x128xf32>
    %76 = arith.addf %71, %75 : vector<8x128xf32>
    %77 = vector.extract_strided_slice %7 {offsets = [112, 0], sizes = [8, 128], strides = [1, 1]} : vector<400x128xf32> to vector<8x128xf32>
    %78 = arith.truncf %77 : vector<8x128xf32> to vector<8x128xbf16>
    %c1920 = arith.constant 1920 : index
    %c0_33 = arith.constant 0 : index
    %79 = vector.load %arg3[%c1920, %c0_33] : memref<8448x128xbf16, #tpu.memory_space<vmem>>, vector<128x128xbf16>
    %cst_34 = arith.constant dense<0.000000e+00> : vector<8x128xf32>
    %80 = tpu.matmul %78, %79, %cst_34 {dimension_numbers = #tpu.dot_dimension_numbers<[1], [0], [0], [1], [0, 0, 1, 1], [], []>} : vector<8x128xbf16>, vector<128x128xbf16>, vector<8x128xf32> -> vector<8x128xf32>
    %81 = arith.addf %76, %80 : vector<8x128xf32>
    %82 = vector.extract_strided_slice %7 {offsets = [120, 0], sizes = [8, 128], strides = [1, 1]} : vector<400x128xf32> to vector<8x128xf32>
    %83 = arith.truncf %82 : vector<8x128xf32> to vector<8x128xbf16>
    %c2048 = arith.constant 2048 : index
    %c0_35 = arith.constant 0 : index
    %84 = vector.load %arg3[%c2048, %c0_35] : memref<8448x128xbf16, #tpu.memory_space<vmem>>, vector<128x128xbf16>
    %cst_36 = arith.constant dense<0.000000e+00> : vector<8x128xf32>
    %85 = tpu.matmul %83, %84, %cst_36 {dimension_numbers = #tpu.dot_dimension_numbers<[1], [0], [0], [1], [0, 0, 1, 1], [], []>} : vector<8x128xbf16>, vector<128x128xbf16>, vector<8x128xf32> -> vector<8x128xf32>
    %86 = arith.addf %81, %85 : vector<8x128xf32>
    %87 = vector.extract_strided_slice %7 {offsets = [128, 0], sizes = [8, 128], strides = [1, 1]} : vector<400x128xf32> to vector<8x128xf32>
    %88 = arith.truncf %87 : vector<8x128xf32> to vector<8x128xbf16>
    %c2176 = arith.constant 2176 : index
    %c0_37 = arith.constant 0 : index
    %89 = vector.load %arg3[%c2176, %c0_37] : memref<8448x128xbf16, #tpu.memory_space<vmem>>, vector<128x128xbf16>
    %cst_38 = arith.constant dense<0.000000e+00> : vector<8x128xf32>
    %90 = tpu.matmul %88, %89, %cst_38 {dimension_numbers = #tpu.dot_dimension_numbers<[1], [0], [0], [1], [0, 0, 1, 1], [], []>} : vector<8x128xbf16>, vector<128x128xbf16>, vector<8x128xf32> -> vector<8x128xf32>
    %91 = arith.addf %86, %90 : vector<8x128xf32>
    %92 = vector.extract_strided_slice %7 {offsets = [136, 0], sizes = [8, 128], strides = [1, 1]} : vector<400x128xf32> to vector<8x128xf32>
    %93 = arith.truncf %92 : vector<8x128xf32> to vector<8x128xbf16>
    %c2304 = arith.constant 2304 : index
    %c0_39 = arith.constant 0 : index
    %94 = vector.load %arg3[%c2304, %c0_39] : memref<8448x128xbf16, #tpu.memory_space<vmem>>, vector<128x128xbf16>
    %cst_40 = arith.constant dense<0.000000e+00> : vector<8x128xf32>
    %95 = tpu.matmul %93, %94, %cst_40 {dimension_numbers = #tpu.dot_dimension_numbers<[1], [0], [0], [1], [0, 0, 1, 1], [], []>} : vector<8x128xbf16>, vector<128x128xbf16>, vector<8x128xf32> -> vector<8x128xf32>
    %96 = arith.addf %91, %95 : vector<8x128xf32>
    %97 = vector.extract_strided_slice %7 {offsets = [144, 0], sizes = [8, 128], strides = [1, 1]} : vector<400x128xf32> to vector<8x128xf32>
    %98 = arith.truncf %97 : vector<8x128xf32> to vector<8x128xbf16>
    %c2432 = arith.constant 2432 : index
    %c0_41 = arith.constant 0 : index
    %99 = vector.load %arg3[%c2432, %c0_41] : memref<8448x128xbf16, #tpu.memory_space<vmem>>, vector<128x128xbf16>
    %cst_42 = arith.constant dense<0.000000e+00> : vector<8x128xf32>
    %100 = tpu.matmul %98, %99, %cst_42 {dimension_numbers = #tpu.dot_dimension_numbers<[1], [0], [0], [1], [0, 0, 1, 1], [], []>} : vector<8x128xbf16>, vector<128x128xbf16>, vector<8x128xf32> -> vector<8x128xf32>
    %101 = arith.addf %96, %100 : vector<8x128xf32>
    %102 = vector.extract_strided_slice %7 {offsets = [152, 0], sizes = [8, 128], strides = [1, 1]} : vector<400x128xf32> to vector<8x128xf32>
    %103 = arith.truncf %102 : vector<8x128xf32> to vector<8x128xbf16>
    %c2560 = arith.constant 2560 : index
    %c0_43 = arith.constant 0 : index
    %104 = vector.load %arg3[%c2560, %c0_43] : memref<8448x128xbf16, #tpu.memory_space<vmem>>, vector<128x128xbf16>
    %cst_44 = arith.constant dense<0.000000e+00> : vector<8x128xf32>
    %105 = tpu.matmul %103, %104, %cst_44 {dimension_numbers = #tpu.dot_dimension_numbers<[1], [0], [0], [1], [0, 0, 1, 1], [], []>} : vector<8x128xbf16>, vector<128x128xbf16>, vector<8x128xf32> -> vector<8x128xf32>
    %106 = arith.addf %101, %105 : vector<8x128xf32>
    %107 = vector.extract_strided_slice %7 {offsets = [160, 0], sizes = [8, 128], strides = [1, 1]} : vector<400x128xf32> to vector<8x128xf32>
    %108 = arith.truncf %107 : vector<8x128xf32> to vector<8x128xbf16>
    %c2688 = arith.constant 2688 : index
    %c0_45 = arith.constant 0 : index
    %109 = vector.load %arg3[%c2688, %c0_45] : memref<8448x128xbf16, #tpu.memory_space<vmem>>, vector<128x128xbf16>
    %cst_46 = arith.constant dense<0.000000e+00> : vector<8x128xf32>
    %110 = tpu.matmul %108, %109, %cst_46 {dimension_numbers = #tpu.dot_dimension_numbers<[1], [0], [0], [1], [0, 0, 1, 1], [], []>} : vector<8x128xbf16>, vector<128x128xbf16>, vector<8x128xf32> -> vector<8x128xf32>
    %111 = arith.addf %106, %110 : vector<8x128xf32>
    %112 = vector.extract_strided_slice %7 {offsets = [168, 0], sizes = [8, 128], strides = [1, 1]} : vector<400x128xf32> to vector<8x128xf32>
    %113 = arith.truncf %112 : vector<8x128xf32> to vector<8x128xbf16>
    %c2816 = arith.constant 2816 : index
    %c0_47 = arith.constant 0 : index
    %114 = vector.load %arg3[%c2816, %c0_47] : memref<8448x128xbf16, #tpu.memory_space<vmem>>, vector<128x128xbf16>
    %cst_48 = arith.constant dense<0.000000e+00> : vector<8x128xf32>
    %115 = tpu.matmul %113, %114, %cst_48 {dimension_numbers = #tpu.dot_dimension_numbers<[1], [0], [0], [1], [0, 0, 1, 1], [], []>} : vector<8x128xbf16>, vector<128x128xbf16>, vector<8x128xf32> -> vector<8x128xf32>
    %116 = arith.addf %111, %115 : vector<8x128xf32>
    %117 = vector.extract_strided_slice %7 {offsets = [176, 0], sizes = [8, 128], strides = [1, 1]} : vector<400x128xf32> to vector<8x128xf32>
    %118 = arith.truncf %117 : vector<8x128xf32> to vector<8x128xbf16>
    %c2944 = arith.constant 2944 : index
    %c0_49 = arith.constant 0 : index
    %119 = vector.load %arg3[%c2944, %c0_49] : memref<8448x128xbf16, #tpu.memory_space<vmem>>, vector<128x128xbf16>
    %cst_50 = arith.constant dense<0.000000e+00> : vector<8x128xf32>
    %120 = tpu.matmul %118, %119, %cst_50 {dimension_numbers = #tpu.dot_dimension_numbers<[1], [0], [0], [1], [0, 0, 1, 1], [], []>} : vector<8x128xbf16>, vector<128x128xbf16>, vector<8x128xf32> -> vector<8x128xf32>
    %121 = arith.addf %116, %120 : vector<8x128xf32>
    %122 = vector.extract_strided_slice %7 {offsets = [184, 0], sizes = [8, 128], strides = [1, 1]} : vector<400x128xf32> to vector<8x128xf32>
    %123 = arith.truncf %122 : vector<8x128xf32> to vector<8x128xbf16>
    %c3072 = arith.constant 3072 : index
    %c0_51 = arith.constant 0 : index
    %124 = vector.load %arg3[%c3072, %c0_51] : memref<8448x128xbf16, #tpu.memory_space<vmem>>, vector<128x128xbf16>
    %cst_52 = arith.constant dense<0.000000e+00> : vector<8x128xf32>
    %125 = tpu.matmul %123, %124, %cst_52 {dimension_numbers = #tpu.dot_dimension_numbers<[1], [0], [0], [1], [0, 0, 1, 1], [], []>} : vector<8x128xbf16>, vector<128x128xbf16>, vector<8x128xf32> -> vector<8x128xf32>
    %126 = arith.addf %121, %125 : vector<8x128xf32>
    %127 = vector.extract_strided_slice %7 {offsets = [192, 0], sizes = [8, 128], strides = [1, 1]} : vector<400x128xf32> to vector<8x128xf32>
    %128 = arith.truncf %127 : vector<8x128xf32> to vector<8x128xbf16>
    %c3200 = arith.constant 3200 : index
    %c0_53 = arith.constant 0 : index
    %129 = vector.load %arg3[%c3200, %c0_53] : memref<8448x128xbf16, #tpu.memory_space<vmem>>, vector<128x128xbf16>
    %cst_54 = arith.constant dense<0.000000e+00> : vector<8x128xf32>
    %130 = tpu.matmul %128, %129, %cst_54 {dimension_numbers = #tpu.dot_dimension_numbers<[1], [0], [0], [1], [0, 0, 1, 1], [], []>} : vector<8x128xbf16>, vector<128x128xbf16>, vector<8x128xf32> -> vector<8x128xf32>
    %131 = arith.addf %126, %130 : vector<8x128xf32>
    %132 = vector.extract_strided_slice %7 {offsets = [200, 0], sizes = [8, 128], strides = [1, 1]} : vector<400x128xf32> to vector<8x128xf32>
    %133 = arith.truncf %132 : vector<8x128xf32> to vector<8x128xbf16>
    %c3328 = arith.constant 3328 : index
    %c0_55 = arith.constant 0 : index
    %134 = vector.load %arg3[%c3328, %c0_55] : memref<8448x128xbf16, #tpu.memory_space<vmem>>, vector<128x128xbf16>
    %cst_56 = arith.constant dense<0.000000e+00> : vector<8x128xf32>
    %135 = tpu.matmul %133, %134, %cst_56 {dimension_numbers = #tpu.dot_dimension_numbers<[1], [0], [0], [1], [0, 0, 1, 1], [], []>} : vector<8x128xbf16>, vector<128x128xbf16>, vector<8x128xf32> -> vector<8x128xf32>
    %136 = arith.addf %131, %135 : vector<8x128xf32>
    %137 = vector.extract_strided_slice %7 {offsets = [208, 0], sizes = [8, 128], strides = [1, 1]} : vector<400x128xf32> to vector<8x128xf32>
    %138 = arith.truncf %137 : vector<8x128xf32> to vector<8x128xbf16>
    %c3456 = arith.constant 3456 : index
    %c0_57 = arith.constant 0 : index
    %139 = vector.load %arg3[%c3456, %c0_57] : memref<8448x128xbf16, #tpu.memory_space<vmem>>, vector<128x128xbf16>
    %cst_58 = arith.constant dense<0.000000e+00> : vector<8x128xf32>
    %140 = tpu.matmul %138, %139, %cst_58 {dimension_numbers = #tpu.dot_dimension_numbers<[1], [0], [0], [1], [0, 0, 1, 1], [], []>} : vector<8x128xbf16>, vector<128x128xbf16>, vector<8x128xf32> -> vector<8x128xf32>
    %141 = arith.addf %136, %140 : vector<8x128xf32>
    %142 = vector.extract_strided_slice %7 {offsets = [216, 0], sizes = [8, 128], strides = [1, 1]} : vector<400x128xf32> to vector<8x128xf32>
    %143 = arith.truncf %142 : vector<8x128xf32> to vector<8x128xbf16>
    %c3584 = arith.constant 3584 : index
    %c0_59 = arith.constant 0 : index
    %144 = vector.load %arg3[%c3584, %c0_59] : memref<8448x128xbf16, #tpu.memory_space<vmem>>, vector<128x128xbf16>
    %cst_60 = arith.constant dense<0.000000e+00> : vector<8x128xf32>
    %145 = tpu.matmul %143, %144, %cst_60 {dimension_numbers = #tpu.dot_dimension_numbers<[1], [0], [0], [1], [0, 0, 1, 1], [], []>} : vector<8x128xbf16>, vector<128x128xbf16>, vector<8x128xf32> -> vector<8x128xf32>
    %146 = arith.addf %141, %145 : vector<8x128xf32>
    %147 = vector.extract_strided_slice %7 {offsets = [224, 0], sizes = [8, 128], strides = [1, 1]} : vector<400x128xf32> to vector<8x128xf32>
    %148 = arith.truncf %147 : vector<8x128xf32> to vector<8x128xbf16>
    %c3712 = arith.constant 3712 : index
    %c0_61 = arith.constant 0 : index
    %149 = vector.load %arg3[%c3712, %c0_61] : memref<8448x128xbf16, #tpu.memory_space<vmem>>, vector<128x128xbf16>
    %cst_62 = arith.constant dense<0.000000e+00> : vector<8x128xf32>
    %150 = tpu.matmul %148, %149, %cst_62 {dimension_numbers = #tpu.dot_dimension_numbers<[1], [0], [0], [1], [0, 0, 1, 1], [], []>} : vector<8x128xbf16>, vector<128x128xbf16>, vector<8x128xf32> -> vector<8x128xf32>
    %151 = arith.addf %146, %150 : vector<8x128xf32>
    %152 = vector.extract_strided_slice %7 {offsets = [232, 0], sizes = [8, 128], strides = [1, 1]} : vector<400x128xf32> to vector<8x128xf32>
    %153 = arith.truncf %152 : vector<8x128xf32> to vector<8x128xbf16>
    %c3840 = arith.constant 3840 : index
    %c0_63 = arith.constant 0 : index
    %154 = vector.load %arg3[%c3840, %c0_63] : memref<8448x128xbf16, #tpu.memory_space<vmem>>, vector<128x128xbf16>
    %cst_64 = arith.constant dense<0.000000e+00> : vector<8x128xf32>
    %155 = tpu.matmul %153, %154, %cst_64 {dimension_numbers = #tpu.dot_dimension_numbers<[1], [0], [0], [1], [0, 0, 1, 1], [], []>} : vector<8x128xbf16>, vector<128x128xbf16>, vector<8x128xf32> -> vector<8x128xf32>
    %156 = arith.addf %151, %155 : vector<8x128xf32>
    %157 = vector.extract_strided_slice %7 {offsets = [240, 0], sizes = [8, 128], strides = [1, 1]} : vector<400x128xf32> to vector<8x128xf32>
    %158 = arith.truncf %157 : vector<8x128xf32> to vector<8x128xbf16>
    %c3968 = arith.constant 3968 : index
    %c0_65 = arith.constant 0 : index
    %159 = vector.load %arg3[%c3968, %c0_65] : memref<8448x128xbf16, #tpu.memory_space<vmem>>, vector<128x128xbf16>
    %cst_66 = arith.constant dense<0.000000e+00> : vector<8x128xf32>
    %160 = tpu.matmul %158, %159, %cst_66 {dimension_numbers = #tpu.dot_dimension_numbers<[1], [0], [0], [1], [0, 0, 1, 1], [], []>} : vector<8x128xbf16>, vector<128x128xbf16>, vector<8x128xf32> -> vector<8x128xf32>
    %161 = arith.addf %156, %160 : vector<8x128xf32>
    %162 = vector.extract_strided_slice %7 {offsets = [248, 0], sizes = [8, 128], strides = [1, 1]} : vector<400x128xf32> to vector<8x128xf32>
    %163 = arith.truncf %162 : vector<8x128xf32> to vector<8x128xbf16>
    %c4096 = arith.constant 4096 : index
    %c0_67 = arith.constant 0 : index
    %164 = vector.load %arg3[%c4096, %c0_67] : memref<8448x128xbf16, #tpu.memory_space<vmem>>, vector<128x128xbf16>
    %cst_68 = arith.constant dense<0.000000e+00> : vector<8x128xf32>
    %165 = tpu.matmul %163, %164, %cst_68 {dimension_numbers = #tpu.dot_dimension_numbers<[1], [0], [0], [1], [0, 0, 1, 1], [], []>} : vector<8x128xbf16>, vector<128x128xbf16>, vector<8x128xf32> -> vector<8x128xf32>
    %166 = arith.addf %161, %165 : vector<8x128xf32>
    %167 = vector.extract_strided_slice %7 {offsets = [256, 0], sizes = [8, 128], strides = [1, 1]} : vector<400x128xf32> to vector<8x128xf32>
    %168 = arith.truncf %167 : vector<8x128xf32> to vector<8x128xbf16>
    %c4224 = arith.constant 4224 : index
    %c0_69 = arith.constant 0 : index
    %169 = vector.load %arg3[%c4224, %c0_69] : memref<8448x128xbf16, #tpu.memory_space<vmem>>, vector<128x128xbf16>
    %cst_70 = arith.constant dense<0.000000e+00> : vector<8x128xf32>
    %170 = tpu.matmul %168, %169, %cst_70 {dimension_numbers = #tpu.dot_dimension_numbers<[1], [0], [0], [1], [0, 0, 1, 1], [], []>} : vector<8x128xbf16>, vector<128x128xbf16>, vector<8x128xf32> -> vector<8x128xf32>
    %171 = arith.addf %166, %170 : vector<8x128xf32>
    %172 = vector.extract_strided_slice %7 {offsets = [264, 0], sizes = [8, 128], strides = [1, 1]} : vector<400x128xf32> to vector<8x128xf32>
    %173 = arith.truncf %172 : vector<8x128xf32> to vector<8x128xbf16>
    %c4352 = arith.constant 4352 : index
    %c0_71 = arith.constant 0 : index
    %174 = vector.load %arg3[%c4352, %c0_71] : memref<8448x128xbf16, #tpu.memory_space<vmem>>, vector<128x128xbf16>
    %cst_72 = arith.constant dense<0.000000e+00> : vector<8x128xf32>
    %175 = tpu.matmul %173, %174, %cst_72 {dimension_numbers = #tpu.dot_dimension_numbers<[1], [0], [0], [1], [0, 0, 1, 1], [], []>} : vector<8x128xbf16>, vector<128x128xbf16>, vector<8x128xf32> -> vector<8x128xf32>
    %176 = arith.addf %171, %175 : vector<8x128xf32>
    %177 = vector.extract_strided_slice %7 {offsets = [272, 0], sizes = [8, 128], strides = [1, 1]} : vector<400x128xf32> to vector<8x128xf32>
    %178 = arith.truncf %177 : vector<8x128xf32> to vector<8x128xbf16>
    %c4480 = arith.constant 4480 : index
    %c0_73 = arith.constant 0 : index
    %179 = vector.load %arg3[%c4480, %c0_73] : memref<8448x128xbf16, #tpu.memory_space<vmem>>, vector<128x128xbf16>
    %cst_74 = arith.constant dense<0.000000e+00> : vector<8x128xf32>
    %180 = tpu.matmul %178, %179, %cst_74 {dimension_numbers = #tpu.dot_dimension_numbers<[1], [0], [0], [1], [0, 0, 1, 1], [], []>} : vector<8x128xbf16>, vector<128x128xbf16>, vector<8x128xf32> -> vector<8x128xf32>
    %181 = arith.addf %176, %180 : vector<8x128xf32>
    %182 = vector.extract_strided_slice %7 {offsets = [280, 0], sizes = [8, 128], strides = [1, 1]} : vector<400x128xf32> to vector<8x128xf32>
    %183 = arith.truncf %182 : vector<8x128xf32> to vector<8x128xbf16>
    %c4608 = arith.constant 4608 : index
    %c0_75 = arith.constant 0 : index
    %184 = vector.load %arg3[%c4608, %c0_75] : memref<8448x128xbf16, #tpu.memory_space<vmem>>, vector<128x128xbf16>
    %cst_76 = arith.constant dense<0.000000e+00> : vector<8x128xf32>
    %185 = tpu.matmul %183, %184, %cst_76 {dimension_numbers = #tpu.dot_dimension_numbers<[1], [0], [0], [1], [0, 0, 1, 1], [], []>} : vector<8x128xbf16>, vector<128x128xbf16>, vector<8x128xf32> -> vector<8x128xf32>
    %186 = arith.addf %181, %185 : vector<8x128xf32>
    %187 = vector.extract_strided_slice %7 {offsets = [288, 0], sizes = [8, 128], strides = [1, 1]} : vector<400x128xf32> to vector<8x128xf32>
    %188 = arith.truncf %187 : vector<8x128xf32> to vector<8x128xbf16>
    %c4736 = arith.constant 4736 : index
    %c0_77 = arith.constant 0 : index
    %189 = vector.load %arg3[%c4736, %c0_77] : memref<8448x128xbf16, #tpu.memory_space<vmem>>, vector<128x128xbf16>
    %cst_78 = arith.constant dense<0.000000e+00> : vector<8x128xf32>
    %190 = tpu.matmul %188, %189, %cst_78 {dimension_numbers = #tpu.dot_dimension_numbers<[1], [0], [0], [1], [0, 0, 1, 1], [], []>} : vector<8x128xbf16>, vector<128x128xbf16>, vector<8x128xf32> -> vector<8x128xf32>
    %191 = arith.addf %186, %190 : vector<8x128xf32>
    %192 = vector.extract_strided_slice %7 {offsets = [296, 0], sizes = [8, 128], strides = [1, 1]} : vector<400x128xf32> to vector<8x128xf32>
    %193 = arith.truncf %192 : vector<8x128xf32> to vector<8x128xbf16>
    %c4864 = arith.constant 4864 : index
    %c0_79 = arith.constant 0 : index
    %194 = vector.load %arg3[%c4864, %c0_79] : memref<8448x128xbf16, #tpu.memory_space<vmem>>, vector<128x128xbf16>
    %cst_80 = arith.constant dense<0.000000e+00> : vector<8x128xf32>
    %195 = tpu.matmul %193, %194, %cst_80 {dimension_numbers = #tpu.dot_dimension_numbers<[1], [0], [0], [1], [0, 0, 1, 1], [], []>} : vector<8x128xbf16>, vector<128x128xbf16>, vector<8x128xf32> -> vector<8x128xf32>
    %196 = arith.addf %191, %195 : vector<8x128xf32>
    %197 = vector.extract_strided_slice %7 {offsets = [304, 0], sizes = [8, 128], strides = [1, 1]} : vector<400x128xf32> to vector<8x128xf32>
    %198 = arith.truncf %197 : vector<8x128xf32> to vector<8x128xbf16>
    %c4992 = arith.constant 4992 : index
    %c0_81 = arith.constant 0 : index
    %199 = vector.load %arg3[%c4992, %c0_81] : memref<8448x128xbf16, #tpu.memory_space<vmem>>, vector<128x128xbf16>
    %cst_82 = arith.constant dense<0.000000e+00> : vector<8x128xf32>
    %200 = tpu.matmul %198, %199, %cst_82 {dimension_numbers = #tpu.dot_dimension_numbers<[1], [0], [0], [1], [0, 0, 1, 1], [], []>} : vector<8x128xbf16>, vector<128x128xbf16>, vector<8x128xf32> -> vector<8x128xf32>
    %201 = arith.addf %196, %200 : vector<8x128xf32>
    %202 = vector.extract_strided_slice %7 {offsets = [312, 0], sizes = [8, 128], strides = [1, 1]} : vector<400x128xf32> to vector<8x128xf32>
    %203 = arith.truncf %202 : vector<8x128xf32> to vector<8x128xbf16>
    %c5120 = arith.constant 5120 : index
    %c0_83 = arith.constant 0 : index
    %204 = vector.load %arg3[%c5120, %c0_83] : memref<8448x128xbf16, #tpu.memory_space<vmem>>, vector<128x128xbf16>
    %cst_84 = arith.constant dense<0.000000e+00> : vector<8x128xf32>
    %205 = tpu.matmul %203, %204, %cst_84 {dimension_numbers = #tpu.dot_dimension_numbers<[1], [0], [0], [1], [0, 0, 1, 1], [], []>} : vector<8x128xbf16>, vector<128x128xbf16>, vector<8x128xf32> -> vector<8x128xf32>
    %206 = arith.addf %201, %205 : vector<8x128xf32>
    %207 = vector.extract_strided_slice %7 {offsets = [320, 0], sizes = [8, 128], strides = [1, 1]} : vector<400x128xf32> to vector<8x128xf32>
    %208 = arith.truncf %207 : vector<8x128xf32> to vector<8x128xbf16>
    %c5248 = arith.constant 5248 : index
    %c0_85 = arith.constant 0 : index
    %209 = vector.load %arg3[%c5248, %c0_85] : memref<8448x128xbf16, #tpu.memory_space<vmem>>, vector<128x128xbf16>
    %cst_86 = arith.constant dense<0.000000e+00> : vector<8x128xf32>
    %210 = tpu.matmul %208, %209, %cst_86 {dimension_numbers = #tpu.dot_dimension_numbers<[1], [0], [0], [1], [0, 0, 1, 1], [], []>} : vector<8x128xbf16>, vector<128x128xbf16>, vector<8x128xf32> -> vector<8x128xf32>
    %211 = arith.addf %206, %210 : vector<8x128xf32>
    %212 = vector.extract_strided_slice %7 {offsets = [328, 0], sizes = [8, 128], strides = [1, 1]} : vector<400x128xf32> to vector<8x128xf32>
    %213 = arith.truncf %212 : vector<8x128xf32> to vector<8x128xbf16>
    %c5376 = arith.constant 5376 : index
    %c0_87 = arith.constant 0 : index
    %214 = vector.load %arg3[%c5376, %c0_87] : memref<8448x128xbf16, #tpu.memory_space<vmem>>, vector<128x128xbf16>
    %cst_88 = arith.constant dense<0.000000e+00> : vector<8x128xf32>
    %215 = tpu.matmul %213, %214, %cst_88 {dimension_numbers = #tpu.dot_dimension_numbers<[1], [0], [0], [1], [0, 0, 1, 1], [], []>} : vector<8x128xbf16>, vector<128x128xbf16>, vector<8x128xf32> -> vector<8x128xf32>
    %216 = arith.addf %211, %215 : vector<8x128xf32>
    %217 = vector.extract_strided_slice %7 {offsets = [336, 0], sizes = [8, 128], strides = [1, 1]} : vector<400x128xf32> to vector<8x128xf32>
    %218 = arith.truncf %217 : vector<8x128xf32> to vector<8x128xbf16>
    %c5504 = arith.constant 5504 : index
    %c0_89 = arith.constant 0 : index
    %219 = vector.load %arg3[%c5504, %c0_89] : memref<8448x128xbf16, #tpu.memory_space<vmem>>, vector<128x128xbf16>
    %cst_90 = arith.constant dense<0.000000e+00> : vector<8x128xf32>
    %220 = tpu.matmul %218, %219, %cst_90 {dimension_numbers = #tpu.dot_dimension_numbers<[1], [0], [0], [1], [0, 0, 1, 1], [], []>} : vector<8x128xbf16>, vector<128x128xbf16>, vector<8x128xf32> -> vector<8x128xf32>
    %221 = arith.addf %216, %220 : vector<8x128xf32>
    %222 = vector.extract_strided_slice %7 {offsets = [344, 0], sizes = [8, 128], strides = [1, 1]} : vector<400x128xf32> to vector<8x128xf32>
    %223 = arith.truncf %222 : vector<8x128xf32> to vector<8x128xbf16>
    %c5632 = arith.constant 5632 : index
    %c0_91 = arith.constant 0 : index
    %224 = vector.load %arg3[%c5632, %c0_91] : memref<8448x128xbf16, #tpu.memory_space<vmem>>, vector<128x128xbf16>
    %cst_92 = arith.constant dense<0.000000e+00> : vector<8x128xf32>
    %225 = tpu.matmul %223, %224, %cst_92 {dimension_numbers = #tpu.dot_dimension_numbers<[1], [0], [0], [1], [0, 0, 1, 1], [], []>} : vector<8x128xbf16>, vector<128x128xbf16>, vector<8x128xf32> -> vector<8x128xf32>
    %226 = arith.addf %221, %225 : vector<8x128xf32>
    %227 = vector.extract_strided_slice %7 {offsets = [352, 0], sizes = [8, 128], strides = [1, 1]} : vector<400x128xf32> to vector<8x128xf32>
    %228 = arith.truncf %227 : vector<8x128xf32> to vector<8x128xbf16>
    %c5760 = arith.constant 5760 : index
    %c0_93 = arith.constant 0 : index
    %229 = vector.load %arg3[%c5760, %c0_93] : memref<8448x128xbf16, #tpu.memory_space<vmem>>, vector<128x128xbf16>
    %cst_94 = arith.constant dense<0.000000e+00> : vector<8x128xf32>
    %230 = tpu.matmul %228, %229, %cst_94 {dimension_numbers = #tpu.dot_dimension_numbers<[1], [0], [0], [1], [0, 0, 1, 1], [], []>} : vector<8x128xbf16>, vector<128x128xbf16>, vector<8x128xf32> -> vector<8x128xf32>
    %231 = arith.addf %226, %230 : vector<8x128xf32>
    %232 = vector.extract_strided_slice %7 {offsets = [360, 0], sizes = [8, 128], strides = [1, 1]} : vector<400x128xf32> to vector<8x128xf32>
    %233 = arith.truncf %232 : vector<8x128xf32> to vector<8x128xbf16>
    %c5888 = arith.constant 5888 : index
    %c0_95 = arith.constant 0 : index
    %234 = vector.load %arg3[%c5888, %c0_95] : memref<8448x128xbf16, #tpu.memory_space<vmem>>, vector<128x128xbf16>
    %cst_96 = arith.constant dense<0.000000e+00> : vector<8x128xf32>
    %235 = tpu.matmul %233, %234, %cst_96 {dimension_numbers = #tpu.dot_dimension_numbers<[1], [0], [0], [1], [0, 0, 1, 1], [], []>} : vector<8x128xbf16>, vector<128x128xbf16>, vector<8x128xf32> -> vector<8x128xf32>
    %236 = arith.addf %231, %235 : vector<8x128xf32>
    %237 = vector.extract_strided_slice %7 {offsets = [368, 0], sizes = [8, 128], strides = [1, 1]} : vector<400x128xf32> to vector<8x128xf32>
    %238 = arith.truncf %237 : vector<8x128xf32> to vector<8x128xbf16>
    %c6016 = arith.constant 6016 : index
    %c0_97 = arith.constant 0 : index
    %239 = vector.load %arg3[%c6016, %c0_97] : memref<8448x128xbf16, #tpu.memory_space<vmem>>, vector<128x128xbf16>
    %cst_98 = arith.constant dense<0.000000e+00> : vector<8x128xf32>
    %240 = tpu.matmul %238, %239, %cst_98 {dimension_numbers = #tpu.dot_dimension_numbers<[1], [0], [0], [1], [0, 0, 1, 1], [], []>} : vector<8x128xbf16>, vector<128x128xbf16>, vector<8x128xf32> -> vector<8x128xf32>
    %241 = arith.addf %236, %240 : vector<8x128xf32>
    %242 = vector.extract_strided_slice %7 {offsets = [376, 0], sizes = [8, 128], strides = [1, 1]} : vector<400x128xf32> to vector<8x128xf32>
    %243 = arith.truncf %242 : vector<8x128xf32> to vector<8x128xbf16>
    %c6144 = arith.constant 6144 : index
    %c0_99 = arith.constant 0 : index
    %244 = vector.load %arg3[%c6144, %c0_99] : memref<8448x128xbf16, #tpu.memory_space<vmem>>, vector<128x128xbf16>
    %cst_100 = arith.constant dense<0.000000e+00> : vector<8x128xf32>
    %245 = tpu.matmul %243, %244, %cst_100 {dimension_numbers = #tpu.dot_dimension_numbers<[1], [0], [0], [1], [0, 0, 1, 1], [], []>} : vector<8x128xbf16>, vector<128x128xbf16>, vector<8x128xf32> -> vector<8x128xf32>
    %246 = arith.addf %241, %245 : vector<8x128xf32>
    %247 = vector.extract_strided_slice %7 {offsets = [384, 0], sizes = [8, 128], strides = [1, 1]} : vector<400x128xf32> to vector<8x128xf32>
    %248 = arith.truncf %247 : vector<8x128xf32> to vector<8x128xbf16>
    %c6272 = arith.constant 6272 : index
    %c0_101 = arith.constant 0 : index
    %249 = vector.load %arg3[%c6272, %c0_101] : memref<8448x128xbf16, #tpu.memory_space<vmem>>, vector<128x128xbf16>
    %cst_102 = arith.constant dense<0.000000e+00> : vector<8x128xf32>
    %250 = tpu.matmul %248, %249, %cst_102 {dimension_numbers = #tpu.dot_dimension_numbers<[1], [0], [0], [1], [0, 0, 1, 1], [], []>} : vector<8x128xbf16>, vector<128x128xbf16>, vector<8x128xf32> -> vector<8x128xf32>
    %251 = arith.addf %246, %250 : vector<8x128xf32>
    %cst_103 = arith.constant 0.000000e+00 : f32
    %252 = vector.broadcast %cst_103 : f32 to vector<8x128xf32>
    %253 = arith.cmpf oge, %251, %252 : vector<8x128xf32>
    %cst_104 = arith.constant 0.00999999977 : f32
    %254 = vector.broadcast %cst_104 : f32 to vector<8x128xf32>
    %255 = arith.mulf %251, %254 : vector<8x128xf32>
    %256 = arith.select %253, %251, %255 : vector<8x128xi1>, vector<8x128xf32>
    %257 = vector.extract_strided_slice %256 {offsets = [0, 0], sizes = [1, 128], strides = [1, 1]} : vector<8x128xf32> to vector<1x128xf32>
    %258 = vector.extract_strided_slice %256 {offsets = [4, 0], sizes = [1, 128], strides = [1, 1]} : vector<8x128xf32> to vector<1x128xf32>
    %259 = tpu.concatenate %257, %258 in 0 : vector<1x128xf32>, vector<1x128xf32> -> vector<2x128xf32>
    %c6400 = arith.constant 6400 : index
    %c0_105 = arith.constant 0 : index
    %260 = vector.load %arg3[%c6400, %c0_105] : memref<8448x128xbf16, #tpu.memory_space<vmem>>, vector<128x128xbf16>
    %261 = arith.truncf %259 : vector<2x128xf32> to vector<2x128xbf16>
    %cst_106 = arith.constant dense<0.000000e+00> : vector<2x128xf32>
    %262 = tpu.matmul %261, %260, %cst_106 {dimension_numbers = #tpu.dot_dimension_numbers<[1], [0], [0], [1], [0, 0, 1, 1], [], []>} : vector<2x128xbf16>, vector<128x128xbf16>, vector<2x128xf32> -> vector<2x128xf32>
    %263 = vector.extract_strided_slice %256 {offsets = [1, 0], sizes = [1, 128], strides = [1, 1]} : vector<8x128xf32> to vector<1x128xf32>
    %264 = vector.extract_strided_slice %256 {offsets = [5, 0], sizes = [1, 128], strides = [1, 1]} : vector<8x128xf32> to vector<1x128xf32>
    %265 = tpu.concatenate %263, %264 in 0 : vector<1x128xf32>, vector<1x128xf32> -> vector<2x128xf32>
    %c6528 = arith.constant 6528 : index
    %c0_107 = arith.constant 0 : index
    %266 = vector.load %arg3[%c6528, %c0_107] : memref<8448x128xbf16, #tpu.memory_space<vmem>>, vector<128x128xbf16>
    %267 = arith.truncf %265 : vector<2x128xf32> to vector<2x128xbf16>
    %cst_108 = arith.constant dense<0.000000e+00> : vector<2x128xf32>
    %268 = tpu.matmul %267, %266, %cst_108 {dimension_numbers = #tpu.dot_dimension_numbers<[1], [0], [0], [1], [0, 0, 1, 1], [], []>} : vector<2x128xbf16>, vector<128x128xbf16>, vector<2x128xf32> -> vector<2x128xf32>
    %269 = arith.addf %262, %268 : vector<2x128xf32>
    %270 = vector.extract_strided_slice %256 {offsets = [2, 0], sizes = [1, 128], strides = [1, 1]} : vector<8x128xf32> to vector<1x128xf32>
    %271 = vector.extract_strided_slice %256 {offsets = [6, 0], sizes = [1, 128], strides = [1, 1]} : vector<8x128xf32> to vector<1x128xf32>
    %272 = tpu.concatenate %270, %271 in 0 : vector<1x128xf32>, vector<1x128xf32> -> vector<2x128xf32>
    %c6656 = arith.constant 6656 : index
    %c0_109 = arith.constant 0 : index
    %273 = vector.load %arg3[%c6656, %c0_109] : memref<8448x128xbf16, #tpu.memory_space<vmem>>, vector<128x128xbf16>
    %274 = arith.truncf %272 : vector<2x128xf32> to vector<2x128xbf16>
    %cst_110 = arith.constant dense<0.000000e+00> : vector<2x128xf32>
    %275 = tpu.matmul %274, %273, %cst_110 {dimension_numbers = #tpu.dot_dimension_numbers<[1], [0], [0], [1], [0, 0, 1, 1], [], []>} : vector<2x128xbf16>, vector<128x128xbf16>, vector<2x128xf32> -> vector<2x128xf32>
    %276 = arith.addf %269, %275 : vector<2x128xf32>
    %277 = vector.extract_strided_slice %256 {offsets = [3, 0], sizes = [1, 128], strides = [1, 1]} : vector<8x128xf32> to vector<1x128xf32>
    %278 = vector.extract_strided_slice %256 {offsets = [7, 0], sizes = [1, 128], strides = [1, 1]} : vector<8x128xf32> to vector<1x128xf32>
    %279 = tpu.concatenate %277, %278 in 0 : vector<1x128xf32>, vector<1x128xf32> -> vector<2x128xf32>
    %c6784 = arith.constant 6784 : index
    %c0_111 = arith.constant 0 : index
    %280 = vector.load %arg3[%c6784, %c0_111] : memref<8448x128xbf16, #tpu.memory_space<vmem>>, vector<128x128xbf16>
    %281 = arith.truncf %279 : vector<2x128xf32> to vector<2x128xbf16>
    %cst_112 = arith.constant dense<0.000000e+00> : vector<2x128xf32>
    %282 = tpu.matmul %281, %280, %cst_112 {dimension_numbers = #tpu.dot_dimension_numbers<[1], [0], [0], [1], [0, 0, 1, 1], [], []>} : vector<2x128xbf16>, vector<128x128xbf16>, vector<2x128xf32> -> vector<2x128xf32>
    %283 = arith.addf %276, %282 : vector<2x128xf32>
    %cst_113 = arith.constant 0.000000e+00 : f32
    %284 = vector.broadcast %cst_113 : f32 to vector<2x128xf32>
    %285 = arith.cmpf oge, %283, %284 : vector<2x128xf32>
    %cst_114 = arith.constant 0.00999999977 : f32
    %286 = vector.broadcast %cst_114 : f32 to vector<2x128xf32>
    %287 = arith.mulf %283, %286 : vector<2x128xf32>
    %288 = arith.select %285, %283, %287 : vector<2x128xi1>, vector<2x128xf32>
    %289 = arith.truncf %288 : vector<2x128xf32> to vector<2x128xbf16>
    %c6912 = arith.constant 6912 : index
    %c0_115 = arith.constant 0 : index
    %290 = vector.load %arg3[%c6912, %c0_115] : memref<8448x128xbf16, #tpu.memory_space<vmem>>, vector<128x128xbf16>
    %cst_116 = arith.constant dense<0.000000e+00> : vector<2x128xf32>
    %291 = tpu.matmul %289, %290, %cst_116 {dimension_numbers = #tpu.dot_dimension_numbers<[1], [0], [0], [1], [0, 0, 1, 1], [], []>} : vector<2x128xbf16>, vector<128x128xbf16>, vector<2x128xf32> -> vector<2x128xf32>
    %cst_117 = arith.constant 0.000000e+00 : f32
    %292 = vector.broadcast %cst_117 : f32 to vector<2x128xf32>
    %293 = arith.cmpf oge, %291, %292 : vector<2x128xf32>
    %cst_118 = arith.constant 0.00999999977 : f32
    %294 = vector.broadcast %cst_118 : f32 to vector<2x128xf32>
    %295 = arith.mulf %291, %294 : vector<2x128xf32>
    %296 = arith.select %293, %291, %295 : vector<2x128xi1>, vector<2x128xf32>
    %297 = arith.truncf %296 : vector<2x128xf32> to vector<2x128xbf16>
    %c7040 = arith.constant 7040 : index
    %c0_119 = arith.constant 0 : index
    %298 = vector.load %arg3[%c7040, %c0_119] : memref<8448x128xbf16, #tpu.memory_space<vmem>>, vector<128x128xbf16>
    %cst_120 = arith.constant dense<0.000000e+00> : vector<2x128xf32>
    %299 = tpu.matmul %297, %298, %cst_120 {dimension_numbers = #tpu.dot_dimension_numbers<[1], [0], [0], [1], [0, 0, 1, 1], [], []>} : vector<2x128xbf16>, vector<128x128xbf16>, vector<2x128xf32> -> vector<2x128xf32>
    %cst_121 = arith.constant 0.000000e+00 : f32
    %300 = vector.broadcast %cst_121 : f32 to vector<2x128xf32>
    %301 = arith.cmpf oge, %299, %300 : vector<2x128xf32>
    %cst_122 = arith.constant 0.00999999977 : f32
    %302 = vector.broadcast %cst_122 : f32 to vector<2x128xf32>
    %303 = arith.mulf %299, %302 : vector<2x128xf32>
    %304 = arith.select %301, %299, %303 : vector<2x128xi1>, vector<2x128xf32>
    %305 = arith.truncf %304 : vector<2x128xf32> to vector<2x128xbf16>
    %c7168 = arith.constant 7168 : index
    %c0_123 = arith.constant 0 : index
    %306 = vector.load %arg3[%c7168, %c0_123] : memref<8448x128xbf16, #tpu.memory_space<vmem>>, vector<128x128xbf16>
    %cst_124 = arith.constant dense<0.000000e+00> : vector<2x128xf32>
    %307 = tpu.matmul %305, %306, %cst_124 {dimension_numbers = #tpu.dot_dimension_numbers<[1], [0], [0], [1], [0, 0, 1, 1], [], []>} : vector<2x128xbf16>, vector<128x128xbf16>, vector<2x128xf32> -> vector<2x128xf32>
    %cst_125 = arith.constant 0.000000e+00 : f32
    %308 = vector.broadcast %cst_125 : f32 to vector<2x128xf32>
    %309 = arith.cmpf oge, %307, %308 : vector<2x128xf32>
    %cst_126 = arith.constant 0.00999999977 : f32
    %310 = vector.broadcast %cst_126 : f32 to vector<2x128xf32>
    %311 = arith.mulf %307, %310 : vector<2x128xf32>
    %312 = arith.select %309, %307, %311 : vector<2x128xi1>, vector<2x128xf32>
    %313 = arith.truncf %312 : vector<2x128xf32> to vector<2x128xbf16>
    %c7296 = arith.constant 7296 : index
    %c0_127 = arith.constant 0 : index
    %314 = vector.load %arg3[%c7296, %c0_127] : memref<8448x128xbf16, #tpu.memory_space<vmem>>, vector<128x128xbf16>
    %cst_128 = arith.constant dense<0.000000e+00> : vector<2x128xf32>
    %315 = tpu.matmul %313, %314, %cst_128 {dimension_numbers = #tpu.dot_dimension_numbers<[1], [0], [0], [1], [0, 0, 1, 1], [], []>} : vector<2x128xbf16>, vector<128x128xbf16>, vector<2x128xf32> -> vector<2x128xf32>
    %cst_129 = arith.constant 0.000000e+00 : f32
    %316 = vector.broadcast %cst_129 : f32 to vector<2x128xf32>
    %317 = arith.cmpf oge, %315, %316 : vector<2x128xf32>
    %cst_130 = arith.constant 0.00999999977 : f32
    %318 = vector.broadcast %cst_130 : f32 to vector<2x128xf32>
    %319 = arith.mulf %315, %318 : vector<2x128xf32>
    %320 = arith.select %317, %315, %319 : vector<2x128xi1>, vector<2x128xf32>
    %321 = arith.truncf %320 : vector<2x128xf32> to vector<2x128xbf16>
    %c7424 = arith.constant 7424 : index
    %c0_131 = arith.constant 0 : index
    %322 = vector.load %arg3[%c7424, %c0_131] : memref<8448x128xbf16, #tpu.memory_space<vmem>>, vector<128x128xbf16>
    %cst_132 = arith.constant dense<0.000000e+00> : vector<2x128xf32>
    %323 = tpu.matmul %321, %322, %cst_132 {dimension_numbers = #tpu.dot_dimension_numbers<[1], [0], [0], [1], [0, 0, 1, 1], [], []>} : vector<2x128xbf16>, vector<128x128xbf16>, vector<2x128xf32> -> vector<2x128xf32>
    %cst_133 = arith.constant 0.000000e+00 : f32
    %324 = vector.broadcast %cst_133 : f32 to vector<2x128xf32>
    %325 = arith.cmpf oge, %323, %324 : vector<2x128xf32>
    %cst_134 = arith.constant 0.00999999977 : f32
    %326 = vector.broadcast %cst_134 : f32 to vector<2x128xf32>
    %327 = arith.mulf %323, %326 : vector<2x128xf32>
    %328 = arith.select %325, %323, %327 : vector<2x128xi1>, vector<2x128xf32>
    %329 = arith.truncf %328 : vector<2x128xf32> to vector<2x128xbf16>
    %c7552 = arith.constant 7552 : index
    %c0_135 = arith.constant 0 : index
    %330 = vector.load %arg3[%c7552, %c0_135] : memref<8448x128xbf16, #tpu.memory_space<vmem>>, vector<128x128xbf16>
    %cst_136 = arith.constant dense<0.000000e+00> : vector<2x128xf32>
    %331 = tpu.matmul %329, %330, %cst_136 {dimension_numbers = #tpu.dot_dimension_numbers<[1], [0], [0], [1], [0, 0, 1, 1], [], []>} : vector<2x128xbf16>, vector<128x128xbf16>, vector<2x128xf32> -> vector<2x128xf32>
    %cst_137 = arith.constant 0.000000e+00 : f32
    %332 = vector.broadcast %cst_137 : f32 to vector<2x128xf32>
    %333 = arith.cmpf oge, %331, %332 : vector<2x128xf32>
    %cst_138 = arith.constant 0.00999999977 : f32
    %334 = vector.broadcast %cst_138 : f32 to vector<2x128xf32>
    %335 = arith.mulf %331, %334 : vector<2x128xf32>
    %336 = arith.select %333, %331, %335 : vector<2x128xi1>, vector<2x128xf32>
    %337 = arith.truncf %336 : vector<2x128xf32> to vector<2x128xbf16>
    %c7680 = arith.constant 7680 : index
    %c0_139 = arith.constant 0 : index
    %338 = vector.load %arg3[%c7680, %c0_139] : memref<8448x128xbf16, #tpu.memory_space<vmem>>, vector<128x128xbf16>
    %cst_140 = arith.constant dense<0.000000e+00> : vector<2x128xf32>
    %339 = tpu.matmul %337, %338, %cst_140 {dimension_numbers = #tpu.dot_dimension_numbers<[1], [0], [0], [1], [0, 0, 1, 1], [], []>} : vector<2x128xbf16>, vector<128x128xbf16>, vector<2x128xf32> -> vector<2x128xf32>
    %cst_141 = arith.constant 0.000000e+00 : f32
    %340 = vector.broadcast %cst_141 : f32 to vector<2x128xf32>
    %341 = arith.cmpf oge, %339, %340 : vector<2x128xf32>
    %cst_142 = arith.constant 0.00999999977 : f32
    %342 = vector.broadcast %cst_142 : f32 to vector<2x128xf32>
    %343 = arith.mulf %339, %342 : vector<2x128xf32>
    %344 = arith.select %341, %339, %343 : vector<2x128xi1>, vector<2x128xf32>
    %345 = arith.truncf %344 : vector<2x128xf32> to vector<2x128xbf16>
    %c7808 = arith.constant 7808 : index
    %c0_143 = arith.constant 0 : index
    %346 = vector.load %arg3[%c7808, %c0_143] : memref<8448x128xbf16, #tpu.memory_space<vmem>>, vector<128x128xbf16>
    %cst_144 = arith.constant dense<0.000000e+00> : vector<2x128xf32>
    %347 = tpu.matmul %345, %346, %cst_144 {dimension_numbers = #tpu.dot_dimension_numbers<[1], [0], [0], [1], [0, 0, 1, 1], [], []>} : vector<2x128xbf16>, vector<128x128xbf16>, vector<2x128xf32> -> vector<2x128xf32>
    %cst_145 = arith.constant 0.000000e+00 : f32
    %348 = vector.broadcast %cst_145 : f32 to vector<2x128xf32>
    %349 = arith.cmpf oge, %347, %348 : vector<2x128xf32>
    %cst_146 = arith.constant 0.00999999977 : f32
    %350 = vector.broadcast %cst_146 : f32 to vector<2x128xf32>
    %351 = arith.mulf %347, %350 : vector<2x128xf32>
    %352 = arith.select %349, %347, %351 : vector<2x128xi1>, vector<2x128xf32>
    %353 = arith.truncf %352 : vector<2x128xf32> to vector<2x128xbf16>
    %c7936 = arith.constant 7936 : index
    %c0_147 = arith.constant 0 : index
    %354 = vector.load %arg3[%c7936, %c0_147] : memref<8448x128xbf16, #tpu.memory_space<vmem>>, vector<128x128xbf16>
    %cst_148 = arith.constant dense<0.000000e+00> : vector<2x128xf32>
    %355 = tpu.matmul %353, %354, %cst_148 {dimension_numbers = #tpu.dot_dimension_numbers<[1], [0], [0], [1], [0, 0, 1, 1], [], []>} : vector<2x128xbf16>, vector<128x128xbf16>, vector<2x128xf32> -> vector<2x128xf32>
    %cst_149 = arith.constant 0.000000e+00 : f32
    %356 = vector.broadcast %cst_149 : f32 to vector<2x128xf32>
    %357 = arith.cmpf oge, %355, %356 : vector<2x128xf32>
    %cst_150 = arith.constant 0.00999999977 : f32
    %358 = vector.broadcast %cst_150 : f32 to vector<2x128xf32>
    %359 = arith.mulf %355, %358 : vector<2x128xf32>
    %360 = arith.select %357, %355, %359 : vector<2x128xi1>, vector<2x128xf32>
    %361 = arith.truncf %360 : vector<2x128xf32> to vector<2x128xbf16>
    %c8064 = arith.constant 8064 : index
    %c0_151 = arith.constant 0 : index
    %362 = vector.load %arg3[%c8064, %c0_151] : memref<8448x128xbf16, #tpu.memory_space<vmem>>, vector<128x128xbf16>
    %cst_152 = arith.constant dense<0.000000e+00> : vector<2x128xf32>
    %363 = tpu.matmul %361, %362, %cst_152 {dimension_numbers = #tpu.dot_dimension_numbers<[1], [0], [0], [1], [0, 0, 1, 1], [], []>} : vector<2x128xbf16>, vector<128x128xbf16>, vector<2x128xf32> -> vector<2x128xf32>
    %cst_153 = arith.constant 0.000000e+00 : f32
    %364 = vector.broadcast %cst_153 : f32 to vector<2x128xf32>
    %365 = arith.cmpf oge, %363, %364 : vector<2x128xf32>
    %cst_154 = arith.constant 0.00999999977 : f32
    %366 = vector.broadcast %cst_154 : f32 to vector<2x128xf32>
    %367 = arith.mulf %363, %366 : vector<2x128xf32>
    %368 = arith.select %365, %363, %367 : vector<2x128xi1>, vector<2x128xf32>
    %369 = arith.truncf %368 : vector<2x128xf32> to vector<2x128xbf16>
    %c8192 = arith.constant 8192 : index
    %c0_155 = arith.constant 0 : index
    %370 = vector.load %arg3[%c8192, %c0_155] : memref<8448x128xbf16, #tpu.memory_space<vmem>>, vector<128x128xbf16>
    %cst_156 = arith.constant dense<0.000000e+00> : vector<2x128xf32>
    %371 = tpu.matmul %369, %370, %cst_156 {dimension_numbers = #tpu.dot_dimension_numbers<[1], [0], [0], [1], [0, 0, 1, 1], [], []>} : vector<2x128xbf16>, vector<128x128xbf16>, vector<2x128xf32> -> vector<2x128xf32>
    %cst_157 = arith.constant 0.000000e+00 : f32
    %372 = vector.broadcast %cst_157 : f32 to vector<2x128xf32>
    %373 = arith.cmpf oge, %371, %372 : vector<2x128xf32>
    %cst_158 = arith.constant 0.00999999977 : f32
    %374 = vector.broadcast %cst_158 : f32 to vector<2x128xf32>
    %375 = arith.mulf %371, %374 : vector<2x128xf32>
    %376 = arith.select %373, %371, %375 : vector<2x128xi1>, vector<2x128xf32>
    %377 = arith.truncf %376 : vector<2x128xf32> to vector<2x128xbf16>
    %c8320 = arith.constant 8320 : index
    %c0_159 = arith.constant 0 : index
    %378 = vector.load %arg3[%c8320, %c0_159] : memref<8448x128xbf16, #tpu.memory_space<vmem>>, vector<128x128xbf16>
    %cst_160 = arith.constant dense<0.000000e+00> : vector<2x128xf32>
    %379 = tpu.matmul %377, %378, %cst_160 {dimension_numbers = #tpu.dot_dimension_numbers<[1], [0], [0], [1], [0, 0, 1, 1], [], []>} : vector<2x128xbf16>, vector<128x128xbf16>, vector<2x128xf32> -> vector<2x128xf32>
    %380 = vector.extract_strided_slice %379 {offsets = [0, 0], sizes = [2, 1], strides = [1, 1]} : vector<2x128xf32> to vector<2x1xf32>
    %c0_161 = arith.constant 0 : index
    %c0_162 = arith.constant 0 : index
    %381 = vector.load %arg2[%c0_161, %c0_162] : memref<2x256xf32, #tpu.memory_space<vmem>>, vector<2x256xf32>
    %382 = vector.broadcast %380 : vector<2x1xf32> to vector<2x256xf32>
    %383 = arith.addf %381, %382 : vector<2x256xf32>
    %c0_163 = arith.constant 0 : index
    %c0_164 = arith.constant 0 : index
    %384 = vector.load %arg4[%c0_163, %c0_164] : memref<2x256xf32, #tpu.memory_space<vmem>>, vector<2x256xf32>
    tpu.vector_store %arg4[%c0_163, %c0_164], %383 {strides = array<i32>} : memref<2x256xf32, #tpu.memory_space<vmem>>, vector<2x256xf32>,
    return
  }
  func.func @transform_0(%arg0: i32) -> (i32, i32) {
    %c0_i32 = arith.constant 0 : i32
    %c0_i32_0 = arith.constant 0 : i32
    %c0_i32_1 = arith.constant 0 : i32
    return %c0_i32, %c0_i32_0 : i32, i32
  }
  func.func @transform_1(%arg0: i32) -> (i32, i32) {
    %c0_i32 = arith.constant 0 : i32
    %c0_i32_0 = arith.constant 0 : i32
    %c0_i32_1 = arith.constant 0 : i32
    return %c0_i32, %c0_i32_0 : i32, i32
  }
  func.func @transform_2(%arg0: i32) -> (i32, i32) {
    %c0_i32 = arith.constant 0 : i32
    %c0_i32_0 = arith.constant 0 : i32
    %c0_i32_1 = arith.constant 0 : i32
    return %c0_i32, %c0_i32_0 : i32, i32
  }
  func.func @transform_3(%arg0: i32) -> (i32, i32) {
    %c0_i32 = arith.constant 0 : i32
    %c0_i32_0 = arith.constant 0 : i32
    %c0_i32_1 = arith.constant 0 : i32
    return %c0_i32, %c0_i32_0 : i32, i32
  }
}

</mosaic_0001>

<llo_original>
// kernel: forward.1
$region0: #{forward.1}
  #allocation0 [shape = 'u32[]', space=smem, size = 0x4, offset = 0x4, fixed_abs, tag = 'smem constant byte address 0x4 - core index']
  #allocation1 [shape = 'u32[144,128]{1,0:T(1,128)}', space=vmem, size = 0x12000, scoped, tag = 'internal scratch']
  %s0 = inlined_call_operand.vmem [shape: bf16[400,128], index: 0, kind: input, shape index: {}]
  %s1 = inlined_call_operand.vmem [shape: f32[2,256], index: 1, kind: input, shape index: {}]
  %s2 = inlined_call_operand.vmem [shape: bf16[8448,128], index: 2, kind: input, shape index: {}]
  %s3 = inlined_call_operand.vmem [shape: f32[2,256], index: 3, kind: output, shape index: {}]
  %s4 = sld [smem:[#allocation0]]
  $region22: #{forward.1} parent=0
    _
  %s6 = ssub.s32 1, %s4
  %s7 = scalar_select 0, %s6, %s4
  // Predicated region
  $region2: #{forward.1} parent=0 // pred_check
    _
  $region3: #{forward.1} parent=0 // pred_check_branch
    %9 = sbr.rel (0) target = $region5
  $region4: #{forward.1} parent=0 // pred_region
    _
  $region5: #{forward.1} parent=0 // pred_fallthru
    _
  // Predicated region
  $region6: #{forward.1} parent=0 // pred_check
    _
  $region7: #{forward.1} parent=0 // pred_check_branch
    %11 = sbr.rel (0) target = $region9
  $region8: #{forward.1} parent=0 // pred_region
    _
  $region9: #{forward.1} parent=0 // pred_fallthru
    _
  // Predicated region
  $region10: #{forward.1} parent=0 // pred_check
    _
  $region11: #{forward.1} parent=0 // pred_check_branch
    %13 = sbr.rel (0) target = $region13
  $region12: #{forward.1} parent=0 // pred_region
    _
  $region13: #{forward.1} parent=0 // pred_fallthru
    _
  %v15 = vld [vmem:[%s0] sm:$0xf]
  %v16 = vld [vmem:[%s0 + $0x4] sm:$0xf]
  %v17 = vld [vmem:[%s0 + $0x8] sm:$0xf]
  %v18 = vld [vmem:[%s0 + $0xc] sm:$0xf]
  %v19 = vld [vmem:[%s0 + $0x10] sm:$0xf]
  %v20 = vld [vmem:[%s0 + $0x14] sm:$0xf]
  %v21 = vld [vmem:[%s0 + $0x18] sm:$0xf]
  %v22 = vld [vmem:[%s0 + $0x1c] sm:$0xf]
  %v23 = vld [vmem:[%s0 + $0x20] sm:$0xf]
  %v24 = vld [vmem:[%s0 + $0x24] sm:$0xf]
  %v25 = vld [vmem:[%s0 + $0x28] sm:$0xf]
  %v26 = vld [vmem:[%s0 + $0x2c] sm:$0xf]
  %v27 = vld [vmem:[%s0 + $0x30] sm:$0xf]
  %v28 = vld [vmem:[%s0 + $0x34] sm:$0xf]
  %v29 = vld [vmem:[%s0 + $0x38] sm:$0xf]
  %v30 = vld [vmem:[%s0 + $0x3c] sm:$0xf]
  %v31 = vld [vmem:[%s0 + $0x40] sm:$0xf]
  %v32 = vld [vmem:[%s0 + $0x44] sm:$0xf]
  %v33 = vld [vmem:[%s0 + $0x48] sm:$0xf]
  %v34 = vld [vmem:[%s0 + $0x4c] sm:$0xf]
  %v35 = vld [vmem:[%s0 + $0x50] sm:$0xf]
  %v36 = vld [vmem:[%s0 + $0x54] sm:$0xf]
  %v37 = vld [vmem:[%s0 + $0x58] sm:$0xf]
  %v38 = vld [vmem:[%s0 + $0x5c] sm:$0xf]
  %v39 = vld [vmem:[%s0 + $0x60] sm:$0xf]
  %v40 = vld [vmem:[%s0 + $0x64] sm:$0xf]
  %v41 = vld [vmem:[%s0 + $0x68] sm:$0xf]
  %v42 = vld [vmem:[%s0 + $0x6c] sm:$0xf]
  %v43 = vld [vmem:[%s0 + $0x70] sm:$0xf]
  %v44 = vld [vmem:[%s0 + $0x74] sm:$0xf]
  %v45 = vld [vmem:[%s0 + $0x78] sm:$0xf]
  %v46 = vld [vmem:[%s0 + $0x7c] sm:$0xf]
  %v47 = vld [vmem:[%s0 + $0x80] sm:$0xf]
  %v48 = vld [vmem:[%s0 + $0x84] sm:$0xf]
  %v49 = vld [vmem:[%s0 + $0x88] sm:$0xf]
  %v50 = vld [vmem:[%s0 + $0x8c] sm:$0xf]
  %v51 = vld [vmem:[%s0 + $0x90] sm:$0xf]
  %v52 = vld [vmem:[%s0 + $0x94] sm:$0xf]
  %v53 = vld [vmem:[%s0 + $0x98] sm:$0xf]
  %v54 = vld [vmem:[%s0 + $0x9c] sm:$0xf]
  %v55 = vld [vmem:[%s0 + $0xa0] sm:$0xf]
  %v56 = vld [vmem:[%s0 + $0xa4] sm:$0xf]
  %v57 = vld [vmem:[%s0 + $0xa8] sm:$0xf]
  %v58 = vld [vmem:[%s0 + $0xac] sm:$0xf]
  %v59 = vld [vmem:[%s0 + $0xb0] sm:$0xf]
  %v60 = vld [vmem:[%s0 + $0xb4] sm:$0xf]
  %v61 = vld [vmem:[%s0 + $0xb8] sm:$0xf]
  %v62 = vld [vmem:[%s0 + $0xbc] sm:$0xf]
  %v63 = vld [vmem:[%s0 + $0xc0] sm:$0xf]
  %v64 = vld [vmem:[%s0 + $0xc4] sm:$0xf]
  %v65 = vld [vmem:[%s2] sm:$0xf]
  %v66 = vld [vmem:[%s2 + $0x4] sm:$0xf]
  %v67 = vld [vmem:[%s2 + $0x8] sm:$0xf]
  %v68 = vld [vmem:[%s2 + $0xc] sm:$0xf]
  %v69 = vld [vmem:[%s2 + $0x10] sm:$0xf]
  %v70 = vld [vmem:[%s2 + $0x14] sm:$0xf]
  %v71 = vld [vmem:[%s2 + $0x18] sm:$0xf]
  %v72 = vld [vmem:[%s2 + $0x1c] sm:$0xf]
  %v73 = vld [vmem:[%s2 + $0x20] sm:$0xf]
  %v74 = vld [vmem:[%s2 + $0x24] sm:$0xf]
  %v75 = vld [vmem:[%s2 + $0x28] sm:$0xf]
  %v76 = vld [vmem:[%s2 + $0x2c] sm:$0xf]
  %v77 = vld [vmem:[%s2 + $0x30] sm:$0xf]
  %v78 = vld [vmem:[%s2 + $0x34] sm:$0xf]
  %v79 = vld [vmem:[%s2 + $0x38] sm:$0xf]
  %v80 = vld [vmem:[%s2 + $0x3c] sm:$0xf]
  %v131 = vunpack.c.l.b16 %v15
  %v132 = vunpack.c.l.b16 %v16
  %v133 = vunpack.c.l.b16 %v17
  %v134 = vunpack.c.l.b16 %v18
  %v135 = vunpack.c.l.b16 %v19
  %v136 = vunpack.c.l.b16 %v20
  %v137 = vunpack.c.l.b16 %v21
  %v138 = vunpack.c.l.b16 %v22
  %v139 = vunpack.c.l.b16 %v23
  %v140 = vunpack.c.l.b16 %v24
  %v141 = vunpack.c.l.b16 %v25
  %v142 = vunpack.c.l.b16 %v26
  %v143 = vunpack.c.l.b16 %v27
  %v144 = vunpack.c.l.b16 %v28
  %v145 = vunpack.c.l.b16 %v29
  %v146 = vunpack.c.l.b16 %v30
  %v147 = vunpack.c.l.b16 %v31
  %v148 = vunpack.c.l.b16 %v32
  %v149 = vunpack.c.l.b16 %v33
  %v150 = vunpack.c.l.b16 %v34
  %v151 = vunpack.c.l.b16 %v35
  %v152 = vunpack.c.l.b16 %v36
  %v153 = vunpack.c.l.b16 %v37
  %v154 = vunpack.c.l.b16 %v38
  %v155 = vunpack.c.l.b16 %v39
  %v156 = vunpack.c.l.b16 %v40
  %v157 = vunpack.c.l.b16 %v41
  %v158 = vunpack.c.l.b16 %v42
  %v159 = vunpack.c.l.b16 %v43
  %v160 = vunpack.c.l.b16 %v44
  %v161 = vunpack.c.l.b16 %v45
  %v162 = vunpack.c.l.b16 %v46
  %v163 = vunpack.c.l.b16 %v47
  %v164 = vunpack.c.l.b16 %v48
  %v165 = vunpack.c.l.b16 %v49
  %v166 = vunpack.c.l.b16 %v50
  %v167 = vunpack.c.l.b16 %v51
  %v168 = vunpack.c.l.b16 %v52
  %v169 = vunpack.c.l.b16 %v53
  %v170 = vunpack.c.l.b16 %v54
  %v171 = vunpack.c.l.b16 %v55
  %v172 = vunpack.c.l.b16 %v56
  %v173 = vunpack.c.l.b16 %v57
  %v174 = vunpack.c.l.b16 %v58
  %v175 = vunpack.c.l.b16 %v59
  %v176 = vunpack.c.l.b16 %v60
  %v177 = vunpack.c.l.b16 %v61
  %v178 = vunpack.c.l.b16 %v62
  %v179 = vunpack.c.l.b16 %v63
  %v180 = vunpack.c.l.b16 %v64
  %v181 = vpack.c.b16 %v132, %v131
  %v182 = vpack.c.b16 %v134, %v133
  %v183 = vpack.c.b16 %v136, %v135
  %v184 = vpack.c.b16 %v138, %v137
  %v185 = vpack.c.b16 %v140, %v139
  %v186 = vpack.c.b16 %v142, %v141
  %v187 = vpack.c.b16 %v144, %v143
  %v188 = vpack.c.b16 %v146, %v145
  %v189 = vpack.c.b16 %v148, %v147
  %v190 = vpack.c.b16 %v150, %v149
  %v191 = vpack.c.b16 %v152, %v151
  %v192 = vpack.c.b16 %v154, %v153
  %v193 = vpack.c.b16 %v156, %v155
  %v194 = vpack.c.b16 %v158, %v157
  %v195 = vpack.c.b16 %v160, %v159
  %v196 = vpack.c.b16 %v162, %v161
  %v197 = vpack.c.b16 %v164, %v163
  %v198 = vpack.c.b16 %v166, %v165
  %v199 = vpack.c.b16 %v168, %v167
  %v200 = vpack.c.b16 %v170, %v169
  %v201 = vpack.c.b16 %v172, %v171
  %v202 = vpack.c.b16 %v174, %v173
  %v203 = vpack.c.b16 %v176, %v175
  %v204 = vpack.c.b16 %v178, %v177
  %v205 = vpack.c.b16 %v180, %v179
  %v247 = vunpack.c.l.b16 %v65
  %v248 = vunpack.c.l.b16 %v66
  %v249 = vunpack.c.l.b16 %v67
  %v250 = vunpack.c.l.b16 %v68
  %v251 = vunpack.c.l.b16 %v69
  %v252 = vunpack.c.l.b16 %v70
  %v253 = vunpack.c.l.b16 %v71
  %v254 = vunpack.c.l.b16 %v72
  %v255 = vunpack.c.l.b16 %v73
  %v256 = vunpack.c.l.b16 %v74
  %v257 = vunpack.c.l.b16 %v75
  %v258 = vunpack.c.l.b16 %v76
  %v259 = vunpack.c.l.b16 %v77
  %v260 = vunpack.c.l.b16 %v78
  %v261 = vunpack.c.l.b16 %v79
  %v262 = vunpack.c.l.b16 %v80
  %v263 = vpack.c.b16 %v248, %v247
  %v264 = vpack.c.b16 %v250, %v249
  %v265 = vpack.c.b16 %v252, %v251
  %v266 = vpack.c.b16 %v254, %v253
  %v267 = vpack.c.b16 %v256, %v255
  %v268 = vpack.c.b16 %v258, %v257
  %v269 = vpack.c.b16 %v260, %v259
  %v270 = vpack.c.b16 %v262, %v261
  %279 = vmatprep.subr.bf16.mxu0 0
  %280 = vmatpush1.bf16.msra.mxu0 %v263
  %281 = vmatprep.subr.bf16.mxu0 0
  %282 = vmatpush1.bf16.msra.mxu0 %v264
  %283 = vmatprep.subr.bf16.mxu0 0
  %284 = vmatpush1.bf16.msra.mxu0 %v265
  %285 = vmatprep.subr.bf16.mxu0 0
  %286 = vmatpush1.bf16.msra.mxu0 %v266
  %287 = vmatprep.subr.bf16.mxu0 0
  %288 = vmatpush1.bf16.msra.mxu0 %v267
  %289 = vmatprep.subr.bf16.mxu0 0
  %290 = vmatpush1.bf16.msra.mxu0 %v268
  %291 = vmatprep.subr.bf16.mxu0 0
  %292 = vmatpush1.bf16.msra.mxu0 %v269
  %293 = vmatprep.subr.bf16.mxu0 0
  %294 = vmatpush1.bf16.msra.mxu0 %v270
  %295 = vmatprep.subr.bf16.mxu0 0
  %296 = vmatpush1.bf16.msra.mxu0 0
  %297 = vmatprep.subr.bf16.mxu0 0
  %298 = vmatpush1.bf16.msra.mxu0 0
  %299 = vmatprep.subr.bf16.mxu0 0
  %300 = vmatpush1.bf16.msra.mxu0 0
  %301 = vmatprep.subr.bf16.mxu0 0
  %302 = vmatpush1.bf16.msra.mxu0 0
  %303 = vmatprep.subr.bf16.mxu0 0
  %304 = vmatpush1.bf16.msra.mxu0 0
  %305 = vmatprep.subr.bf16.mxu0 0
  %306 = vmatpush1.bf16.msra.mxu0 0
  %307 = vmatprep.subr.bf16.mxu0 0
  %308 = vmatpush1.bf16.msra.mxu0 0
  %309 = vmatprep.subr.bf16.mxu0 0
  %310 = vmatpush1.bf16.msra.mxu0 0
  %311 = vmatprep.mubr.bf16.mxu0 0
  %312 = vmatmul.mubr.bf16.gmra.mrb[0].mxu0 %v181
  %v313 = vpop.f32.mrb[0].mxu0
  %v314 = vadd.f32 0.0, %v313
  %v315 = vpop.f32.mrb[0].mxu0
  %v316 = vpop.f32.mrb[0].mxu0
  %v317 = vadd.f32 0.0, %v316
  %v318 = vpop.f32.mrb[0].mxu0
  %319 = vmatprep.mubr.bf16.mxu0 0
  %320 = vmatmul.mubr.bf16.gmra.mrb[0].mxu0 %v182
  %v321 = vpop.f32.mrb[0].mxu0
  %v322 = vadd.f32 0.0, %v321
  %v323 = vpop.f32.mrb[0].mxu0
  %v324 = vpop.f32.mrb[0].mxu0
  %v325 = vadd.f32 0.0, %v324
  %v326 = vpop.f32.mrb[0].mxu0
  %327 = vmatprep.mubr.bf16.mxu0 0
  %328 = vmatmul.mubr.bf16.gmra.mrb[0].mxu0 %v183
  %v329 = vpop.f32.mrb[0].mxu0
  %v330 = vadd.f32 0.0, %v329
  %v331 = vpop.f32.mrb[0].mxu0
  %v332 = vpop.f32.mrb[0].mxu0
  %v333 = vadd.f32 0.0, %v332
  %v334 = vpop.f32.mrb[0].mxu0
  %335 = vmatprep.mubr.bf16.mxu0 0
  %336 = vmatmul.mubr.bf16.gmra.mrb[0].mxu0 %v184
  %v337 = vpop.f32.mrb[0].mxu0
  %v338 = vadd.f32 0.0, %v337
  %v339 = vpop.f32.mrb[0].mxu0
  %v340 = vpop.f32.mrb[0].mxu0
  %v341 = vadd.f32 0.0, %v340
  %v342 = vpop.f32.mrb[0].mxu0
  %343 = vmatprep.mubr.bf16.mxu0 0
  %344 = vmatmul.mubr.bf16.gmra.mrb[0].mxu0 %v185
  %v345 = vpop.f32.mrb[0].mxu0
  %v346 = vadd.f32 0.0, %v345
  %v347 = vpop.f32.mrb[0].mxu0
  %v348 = vpop.f32.mrb[0].mxu0
  %v349 = vadd.f32 0.0, %v348
  %v350 = vpop.f32.mrb[0].mxu0
  %351 = vmatprep.mubr.bf16.mxu0 0
  %352 = vmatmul.mubr.bf16.gmra.mrb[0].mxu0 %v186
  %v353 = vpop.f32.mrb[0].mxu0
  %v354 = vadd.f32 0.0, %v353
  %v355 = vpop.f32.mrb[0].mxu0
  %v356 = vpop.f32.mrb[0].mxu0
  %v357 = vadd.f32 0.0, %v356
  %v358 = vpop.f32.mrb[0].mxu0
  %359 = vmatprep.mubr.bf16.mxu0 0
  %360 = vmatmul.mubr.bf16.gmra.mrb[0].mxu0 %v187
  %v361 = vpop.f32.mrb[0].mxu0
  %v362 = vadd.f32 0.0, %v361
  %v363 = vpop.f32.mrb[0].mxu0
  %v364 = vpop.f32.mrb[0].mxu0
  %v365 = vadd.f32 0.0, %v364
  %v366 = vpop.f32.mrb[0].mxu0
  %367 = vmatprep.mubr.bf16.mxu0 0
  %368 = vmatmul.mubr.bf16.gmra.mrb[0].mxu0 %v188
  %v369 = vpop.f32.mrb[0].mxu0
  %v370 = vadd.f32 0.0, %v369
  %v371 = vpop.f32.mrb[0].mxu0
  %v372 = vpop.f32.mrb[0].mxu0
  %v373 = vadd.f32 0.0, %v372
  %v374 = vpop.f32.mrb[0].mxu0
  %375 = vmatprep.mubr.bf16.mxu0 0
  %376 = vmatmul.mubr.bf16.gmra.mrb[0].mxu0 %v189
  %v377 = vpop.f32.mrb[0].mxu0
  %v378 = vadd.f32 0.0, %v377
  %v379 = vpop.f32.mrb[0].mxu0
  %v380 = vpop.f32.mrb[0].mxu0
  %v381 = vadd.f32 0.0, %v380
  %v382 = vpop.f32.mrb[0].mxu0
  %383 = vmatprep.mubr.bf16.mxu0 0
  %384 = vmatmul.mubr.bf16.gmra.mrb[0].mxu0 %v190
  %v385 = vpop.f32.mrb[0].mxu0
  %v386 = vadd.f32 0.0, %v385
  %v387 = vpop.f32.mrb[0].mxu0
  %v388 = vpop.f32.mrb[0].mxu0
  %v389 = vadd.f32 0.0, %v388
  %v390 = vpop.f32.mrb[0].mxu0
  %391 = vmatprep.mubr.bf16.mxu0 0
  %392 = vmatmul.mubr.bf16.gmra.mrb[0].mxu0 %v191
  %v393 = vpop.f32.mrb[0].mxu0
  %v394 = vadd.f32 0.0, %v393
  %v395 = vpop.f32.mrb[0].mxu0
  %v396 = vpop.f32.mrb[0].mxu0
  %v397 = vadd.f32 0.0, %v396
  %v398 = vpop.f32.mrb[0].mxu0
  %399 = vmatprep.mubr.bf16.mxu0 0
  %400 = vmatmul.mubr.bf16.gmra.mrb[0].mxu0 %v192
  %v401 = vpop.f32.mrb[0].mxu0
  %v402 = vadd.f32 0.0, %v401
  %v403 = vpop.f32.mrb[0].mxu0
  %v404 = vpop.f32.mrb[0].mxu0
  %v405 = vadd.f32 0.0, %v404
  %v406 = vpop.f32.mrb[0].mxu0
  %407 = vmatprep.mubr.bf16.mxu0 0
  %408 = vmatmul.mubr.bf16.gmra.mrb[0].mxu0 %v193
  %v409 = vpop.f32.mrb[0].mxu0
  %v410 = vadd.f32 0.0, %v409
  %v411 = vpop.f32.mrb[0].mxu0
  %v412 = vpop.f32.mrb[0].mxu0
  %v413 = vadd.f32 0.0, %v412
  %v414 = vpop.f32.mrb[0].mxu0
  %415 = vmatprep.mubr.bf16.mxu0 0
  %416 = vmatmul.mubr.bf16.gmra.mrb[0].mxu0 %v194
  %v417 = vpop.f32.mrb[0].mxu0
  %v418 = vadd.f32 0.0, %v417
  %v419 = vpop.f32.mrb[0].mxu0
  %v420 = vpop.f32.mrb[0].mxu0
  %v421 = vadd.f32 0.0, %v420
  %v422 = vpop.f32.mrb[0].mxu0
  %423 = vmatprep.mubr.bf16.mxu0 0
  %424 = vmatmul.mubr.bf16.gmra.mrb[0].mxu0 %v195
  %v425 = vpop.f32.mrb[0].mxu0
  %v426 = vadd.f32 0.0, %v425
  %v427 = vpop.f32.mrb[0].mxu0
  %v428 = vpop.f32.mrb[0].mxu0
  %v429 = vadd.f32 0.0, %v428
  %v430 = vpop.f32.mrb[0].mxu0
  %431 = vmatprep.mubr.bf16.mxu0 0
  %432 = vmatmul.mubr.bf16.gmra.mrb[0].mxu0 %v196
  %v433 = vpop.f32.mrb[0].mxu0
  %v434 = vadd.f32 0.0, %v433
  %v435 = vpop.f32.mrb[0].mxu0
  %v436 = vpop.f32.mrb[0].mxu0
  %v437 = vadd.f32 0.0, %v436
  %v438 = vpop.f32.mrb[0].mxu0
  %439 = vmatprep.mubr.bf16.mxu0 0
  %440 = vmatmul.mubr.bf16.gmra.mrb[0].mxu0 %v197
  %v441 = vpop.f32.mrb[0].mxu0
  %v442 = vadd.f32 0.0, %v441
  %v443 = vpop.f32.mrb[0].mxu0
  %v444 = vpop.f32.mrb[0].mxu0
  %v445 = vadd.f32 0.0, %v444
  %v446 = vpop.f32.mrb[0].mxu0
  %447 = vmatprep.mubr.bf16.mxu0 0
  %448 = vmatmul.mubr.bf16.gmra.mrb[0].mxu0 %v198
  %v449 = vpop.f32.mrb[0].mxu0
  %v450 = vadd.f32 0.0, %v449
  %v451 = vpop.f32.mrb[0].mxu0
  %v452 = vpop.f32.mrb[0].mxu0
  %v453 = vadd.f32 0.0, %v452
  %v454 = vpop.f32.mrb[0].mxu0
  %455 = vmatprep.mubr.bf16.mxu0 0
  %456 = vmatmul.mubr.bf16.gmra.mrb[0].mxu0 %v199
  %v457 = vpop.f32.mrb[0].mxu0
  %v458 = vadd.f32 0.0, %v457
  %v459 = vpop.f32.mrb[0].mxu0
  %v460 = vpop.f32.mrb[0].mxu0
  %v461 = vadd.f32 0.0, %v460
  %v462 = vpop.f32.mrb[0].mxu0
  %463 = vmatprep.mubr.bf16.mxu0 0
  %464 = vmatmul.mubr.bf16.gmra.mrb[0].mxu0 %v200
  %v465 = vpop.f32.mrb[0].mxu0
  %v466 = vadd.f32 0.0, %v465
  %v467 = vpop.f32.mrb[0].mxu0
  %v468 = vpop.f32.mrb[0].mxu0
  %v469 = vadd.f32 0.0, %v468
  %v470 = vpop.f32.mrb[0].mxu0
  %471 = vmatprep.mubr.bf16.mxu0 0
  %472 = vmatmul.mubr.bf16.gmra.mrb[0].mxu0 %v201
  %v473 = vpop.f32.mrb[0].mxu0
  %v474 = vadd.f32 0.0, %v473
  %v475 = vpop.f32.mrb[0].mxu0
  %v476 = vpop.f32.mrb[0].mxu0
  %v477 = vadd.f32 0.0, %v476
  %v478 = vpop.f32.mrb[0].mxu0
  %479 = vmatprep.mubr.bf16.mxu0 0
  %480 = vmatmul.mubr.bf16.gmra.mrb[0].mxu0 %v202
  %v481 = vpop.f32.mrb[0].mxu0
  %v482 = vadd.f32 0.0, %v481
  %v483 = vpop.f32.mrb[0].mxu0
  %v484 = vpop.f32.mrb[0].mxu0
  %v485 = vadd.f32 0.0, %v484
  %v486 = vpop.f32.mrb[0].mxu0
  %487 = vmatprep.mubr.bf16.mxu0 0
  %488 = vmatmul.mubr.bf16.gmra.mrb[0].mxu0 %v203
  %v489 = vpop.f32.mrb[0].mxu0
  %v490 = vadd.f32 0.0, %v489
  %v491 = vpop.f32.mrb[0].mxu0
  %v492 = vpop.f32.mrb[0].mxu0
  %v493 = vadd.f32 0.0, %v492
  %v494 = vpop.f32.mrb[0].mxu0
  %495 = vmatprep.mubr.bf16.mxu0 0
  %496 = vmatmul.mubr.bf16.gmra.mrb[0].mxu0 %v204
  %v497 = vpop.f32.mrb[0].mxu0
  %v498 = vadd.f32 0.0, %v497
  %v499 = vpop.f32.mrb[0].mxu0
  %v500 = vpop.f32.mrb[0].mxu0
  %v501 = vadd.f32 0.0, %v500
  %v502 = vpop.f32.mrb[0].mxu0
  %503 = vmatprep.mubr.bf16.mxu0 0
  %504 = vmatmul.mubr.bf16.gmra.mrb[0].mxu0 %v205
  %v505 = vpop.f32.mrb[0].mxu0
  %v506 = vadd.f32 0.0, %v505
  %v507 = vpop.f32.mrb[0].mxu0
  %v508 = vpop.f32.mrb[0].mxu0
  %v509 = vpop.f32.mrb[0].mxu0
  %510 = vdwg.mxu0
  %vm511 = vcmp.ge.f32.partialorder %v314, 0.0
  %vm512 = vcmp.ge.f32.partialorder %v317, 0.0
  %vm513 = vcmp.ge.f32.partialorder %v322, 0.0
  %vm514 = vcmp.ge.f32.partialorder %v325, 0.0
  %vm515 = vcmp.ge.f32.partialorder %v330, 0.0
  %vm516 = vcmp.ge.f32.partialorder %v333, 0.0
  %vm517 = vcmp.ge.f32.partialorder %v338, 0.0
  %vm518 = vcmp.ge.f32.partialorder %v341, 0.0
  %vm519 = vcmp.ge.f32.partialorder %v346, 0.0
  %vm520 = vcmp.ge.f32.partialorder %v349, 0.0
  %vm521 = vcmp.ge.f32.partialorder %v354, 0.0
  %vm522 = vcmp.ge.f32.partialorder %v357, 0.0
  %vm523 = vcmp.ge.f32.partialorder %v362, 0.0
  %vm524 = vcmp.ge.f32.partialorder %v365, 0.0
  %vm525 = vcmp.ge.f32.partialorder %v370, 0.0
  %vm526 = vcmp.ge.f32.partialorder %v373, 0.0
  %vm527 = vcmp.ge.f32.partialorder %v378, 0.0
  %vm528 = vcmp.ge.f32.partialorder %v381, 0.0
  %vm529 = vcmp.ge.f32.partialorder %v386, 0.0
  %vm530 = vcmp.ge.f32.partialorder %v389, 0.0
  %vm531 = vcmp.ge.f32.partialorder %v394, 0.0
  %vm532 = vcmp.ge.f32.partialorder %v397, 0.0
  %vm533 = vcmp.ge.f32.partialorder %v402, 0.0
  %vm534 = vcmp.ge.f32.partialorder %v405, 0.0
  %vm535 = vcmp.ge.f32.partialorder %v410, 0.0
  %vm536 = vcmp.ge.f32.partialorder %v413, 0.0
  %vm537 = vcmp.ge.f32.partialorder %v418, 0.0
  %vm538 = vcmp.ge.f32.partialorder %v421, 0.0
  %vm539 = vcmp.ge.f32.partialorder %v426, 0.0
  %vm540 = vcmp.ge.f32.partialorder %v429, 0.0
  %vm541 = vcmp.ge.f32.partialorder %v434, 0.0
  %vm542 = vcmp.ge.f32.partialorder %v437, 0.0
  %vm543 = vcmp.ge.f32.partialorder %v442, 0.0
  %vm544 = vcmp.ge.f32.partialorder %v445, 0.0
  %vm545 = vcmp.ge.f32.partialorder %v450, 0.0
  %vm546 = vcmp.ge.f32.partialorder %v453, 0.0
  %vm547 = vcmp.ge.f32.partialorder %v458, 0.0
  %vm548 = vcmp.ge.f32.partialorder %v461, 0.0
  %vm549 = vcmp.ge.f32.partialorder %v466, 0.0
  %vm550 = vcmp.ge.f32.partialorder %v469, 0.0
  %vm551 = vcmp.ge.f32.partialorder %v474, 0.0
  %vm552 = vcmp.ge.f32.partialorder %v477, 0.0
  %vm553 = vcmp.ge.f32.partialorder %v482, 0.0
  %vm554 = vcmp.ge.f32.partialorder %v485, 0.0
  %vm555 = vcmp.ge.f32.partialorder %v490, 0.0
  %vm556 = vcmp.ge.f32.partialorder %v493, 0.0
  %vm557 = vcmp.ge.f32.partialorder %v498, 0.0
  %vm558 = vcmp.ge.f32.partialorder %v501, 0.0
  %vm559 = vcmp.ge.f32.partialorder %v506, 0.0
  %v560 = vmul.f32 %v314, 0.01
  %v561 = vmul.f32 %v317, 0.01
  %v562 = vmul.f32 %v322, 0.01
  %v563 = vmul.f32 %v325, 0.01
  %v564 = vmul.f32 %v330, 0.01
  %v565 = vmul.f32 %v333, 0.01
  %v566 = vmul.f32 %v338, 0.01
  %v567 = vmul.f32 %v341, 0.01
  %v568 = vmul.f32 %v346, 0.01
  %v569 = vmul.f32 %v349, 0.01
  %v570 = vmul.f32 %v354, 0.01
  %v571 = vmul.f32 %v357, 0.01
  %v572 = vmul.f32 %v362, 0.01
  %v573 = vmul.f32 %v365, 0.01
  %v574 = vmul.f32 %v370, 0.01
  %v575 = vmul.f32 %v373, 0.01
  %v576 = vmul.f32 %v378, 0.01
  %v577 = vmul.f32 %v381, 0.01
  %v578 = vmul.f32 %v386, 0.01
  %v579 = vmul.f32 %v389, 0.01
  %v580 = vmul.f32 %v394, 0.01
  %v581 = vmul.f32 %v397, 0.01
  %v582 = vmul.f32 %v402, 0.01
  %v583 = vmul.f32 %v405, 0.01
  %v584 = vmul.f32 %v410, 0.01
  %v585 = vmul.f32 %v413, 0.01
  %v586 = vmul.f32 %v418, 0.01
  %v587 = vmul.f32 %v421, 0.01
  %v588 = vmul.f32 %v426, 0.01
  %v589 = vmul.f32 %v429, 0.01
  %v590 = vmul.f32 %v434, 0.01
  %v591 = vmul.f32 %v437, 0.01
  %v592 = vmul.f32 %v442, 0.01
  %v593 = vmul.f32 %v445, 0.01
  %v594 = vmul.f32 %v450, 0.01
  %v595 = vmul.f32 %v453, 0.01
  %v596 = vmul.f32 %v458, 0.01
  %v597 = vmul.f32 %v461, 0.01
  %v598 = vmul.f32 %v466, 0.01
  %v599 = vmul.f32 %v469, 0.01
  %v600 = vmul.f32 %v474, 0.01
  %v601 = vmul.f32 %v477, 0.01
  %v602 = vmul.f32 %v482, 0.01
  %v603 = vmul.f32 %v485, 0.01
  %v604 = vmul.f32 %v490, 0.01
  %v605 = vmul.f32 %v493, 0.01
  %v606 = vmul.f32 %v498, 0.01
  %v607 = vmul.f32 %v501, 0.01
  %v608 = vmul.f32 %v506, 0.01
  %v609 = vsel %vm511, %v314, %v560
  %v610 = vsel %vm512, %v317, %v561
  %v611 = vsel %vm513, %v322, %v562
  %v612 = vsel %vm514, %v325, %v563
  %v613 = vsel %vm515, %v330, %v564
  %v614 = vsel %vm516, %v333, %v565
  %v615 = vsel %vm517, %v338, %v566
  %v616 = vsel %vm518, %v341, %v567
  %v617 = vsel %vm519, %v346, %v568
  %v618 = vsel %vm520, %v349, %v569
  %v619 = vsel %vm521, %v354, %v570
  %v620 = vsel %vm522, %v357, %v571
  %v621 = vsel %vm523, %v362, %v572
  %v622 = vsel %vm524, %v365, %v573
  %v623 = vsel %vm525, %v370, %v574
  %v624 = vsel %vm526, %v373, %v575
  %v625 = vsel %vm527, %v378, %v576
  %v626 = vsel %vm528, %v381, %v577
  %v627 = vsel %vm529, %v386, %v578
  %v628 = vsel %vm530, %v389, %v579
  %v629 = vsel %vm531, %v394, %v580
  %v630 = vsel %vm532, %v397, %v581
  %v631 = vsel %vm533, %v402, %v582
  %v632 = vsel %vm534, %v405, %v583
  %v633 = vsel %vm535, %v410, %v584
  %v634 = vsel %vm536, %v413, %v585
  %v635 = vsel %vm537, %v418, %v586
  %v636 = vsel %vm538, %v421, %v587
  %v637 = vsel %vm539, %v426, %v588
  %v638 = vsel %vm540, %v429, %v589
  %v639 = vsel %vm541, %v434, %v590
  %v640 = vsel %vm542, %v437, %v591
  %v641 = vsel %vm543, %v442, %v592
  %v642 = vsel %vm544, %v445, %v593
  %v643 = vsel %vm545, %v450, %v594
  %v644 = vsel %vm546, %v453, %v595
  %v645 = vsel %vm547, %v458, %v596
  %v646 = vsel %vm548, %v461, %v597
  %v647 = vsel %vm549, %v466, %v598
  %v648 = vsel %vm550, %v469, %v599
  %v649 = vsel %vm551, %v474, %v600
  %v650 = vsel %vm552, %v477, %v601
  %v651 = vsel %vm553, %v482, %v602
  %v652 = vsel %vm554, %v485, %v603
  %v653 = vsel %vm555, %v490, %v604
  %v654 = vsel %vm556, %v493, %v605
  %v655 = vsel %vm557, %v498, %v606
  %v656 = vsel %vm558, %v501, %v607
  %v657 = vsel %vm559, %v506, %v608
  %v658 = vpack.c.bf16 %v609, %v609
  %v659 = vld [vmem:[%s2 + $0x40] sm:$0xf]
  %v660 = vld [vmem:[%s2 + $0x44] sm:$0xf]
  %v661 = vld [vmem:[%s2 + $0x48] sm:$0xf]
  %v662 = vld [vmem:[%s2 + $0x4c] sm:$0xf]
  %v663 = vld [vmem:[%s2 + $0x50] sm:$0xf]
  %v664 = vld [vmem:[%s2 + $0x54] sm:$0xf]
  %v665 = vld [vmem:[%s2 + $0x58] sm:$0xf]
  %v666 = vld [vmem:[%s2 + $0x5c] sm:$0xf]
  %v667 = vld [vmem:[%s2 + $0x60] sm:$0xf]
  %v668 = vld [vmem:[%s2 + $0x64] sm:$0xf]
  %v669 = vld [vmem:[%s2 + $0x68] sm:$0xf]
  %v670 = vld [vmem:[%s2 + $0x6c] sm:$0xf]
  %v671 = vld [vmem:[%s2 + $0x70] sm:$0xf]
  %v672 = vld [vmem:[%s2 + $0x74] sm:$0xf]
  %v673 = vld [vmem:[%s2 + $0x78] sm:$0xf]
  %v674 = vld [vmem:[%s2 + $0x7c] sm:$0xf]
  %v675 = vpack.c.bf16 %v610, %v610
  %v676 = vld [vmem:[%s2 + $0x80] sm:$0xf]
  %v677 = vld [vmem:[%s2 + $0x84] sm:$0xf]
  %v678 = vld [vmem:[%s2 + $0x88] sm:$0xf]
  %v679 = vld [vmem:[%s2 + $0x8c] sm:$0xf]
  %v680 = vld [vmem:[%s2 + $0x90] sm:$0xf]
  %v681 = vld [vmem:[%s2 + $0x94] sm:$0xf]
  %v682 = vld [vmem:[%s2 + $0x98] sm:$0xf]
  %v683 = vld [vmem:[%s2 + $0x9c] sm:$0xf]
  %v684 = vld [vmem:[%s2 + $0xa0] sm:$0xf]
  %v685 = vld [vmem:[%s2 + $0xa4] sm:$0xf]
  %v686 = vld [vmem:[%s2 + $0xa8] sm:$0xf]
  %v687 = vld [vmem:[%s2 + $0xac] sm:$0xf]
  %v688 = vld [vmem:[%s2 + $0xb0] sm:$0xf]
  %v689 = vld [vmem:[%s2 + $0xb4] sm:$0xf]
  %v690 = vld [vmem:[%s2 + $0xb8] sm:$0xf]
  %v691 = vld [vmem:[%s2 + $0xbc] sm:$0xf]
  %v708 = vunpack.c.l.b16 %v676
  %v709 = vunpack.c.l.b16 %v677
  %v710 = vunpack.c.l.b16 %v678
  %v711 = vunpack.c.l.b16 %v679
  %v712 = vunpack.c.l.b16 %v680
  %v713 = vunpack.c.l.b16 %v681
  %v714 = vunpack.c.l.b16 %v682
  %v715 = vunpack.c.l.b16 %v683
  %v716 = vunpack.c.l.b16 %v684
  %v717 = vunpack.c.l.b16 %v685
  %v718 = vunpack.c.l.b16 %v686
  %v719 = vunpack.c.l.b16 %v687
  %v720 = vunpack.c.l.b16 %v688
  %v721 = vunpack.c.l.b16 %v689
  %v722 = vunpack.c.l.b16 %v690
  %v723 = vunpack.c.l.b16 %v691
  %v724 = vpack.c.b16 %v709, %v708
  %v725 = vpack.c.b16 %v711, %v710
  %v726 = vpack.c.b16 %v713, %v712
  %v727 = vpack.c.b16 %v715, %v714
  %v728 = vpack.c.b16 %v717, %v716
  %v729 = vpack.c.b16 %v719, %v718
  %v730 = vpack.c.b16 %v721, %v720
  %v731 = vpack.c.b16 %v723, %v722
  %740 = vmatprep.subr.bf16.mxu0 0
  %741 = vmatpush1.bf16.msra.mxu0 %v724
  %742 = vmatprep.subr.bf16.mxu0 0
  %743 = vmatpush1.bf16.msra.mxu0 %v725
  %744 = vmatprep.subr.bf16.mxu0 0
  %745 = vmatpush1.bf16.msra.mxu0 %v726
  %746 = vmatprep.subr.bf16.mxu0 0
  %747 = vmatpush1.bf16.msra.mxu0 %v727
  %748 = vmatprep.subr.bf16.mxu0 0
  %749 = vmatpush1.bf16.msra.mxu0 %v728
  %750 = vmatprep.subr.bf16.mxu0 0
  %751 = vmatpush1.bf16.msra.mxu0 %v729
  %752 = vmatprep.subr.bf16.mxu0 0
  %753 = vmatpush1.bf16.msra.mxu0 %v730
  %754 = vmatprep.subr.bf16.mxu0 0
  %755 = vmatpush1.bf16.msra.mxu0 %v731
  %756 = vmatprep.subr.bf16.mxu0 0
  %757 = vmatpush1.bf16.msra.mxu0 0
  %758 = vmatprep.subr.bf16.mxu0 0
  %759 = vmatpush1.bf16.msra.mxu0 0
  %760 = vmatprep.subr.bf16.mxu0 0
  %761 = vmatpush1.bf16.msra.mxu0 0
  %762 = vmatprep.subr.bf16.mxu0 0
  %763 = vmatpush1.bf16.msra.mxu0 0
  %764 = vmatprep.subr.bf16.mxu0 0
  %765 = vmatpush1.bf16.msra.mxu0 0
  %766 = vmatprep.subr.bf16.mxu0 0
  %767 = vmatpush1.bf16.msra.mxu0 0
  %768 = vmatprep.subr.bf16.mxu0 0
  %769 = vmatpush1.bf16.msra.mxu0 0
  %770 = vmatprep.subr.bf16.mxu0 0
  %771 = vmatpush1.bf16.msra.mxu0 0
  %772 = vmatprep.mubr.bf16.mxu0 0
  %773 = vmatmul.mubr.bf16.gmra.mrb[0].mxu0 %v675
  %v774 = vpop.f32.mrb[0].mxu0
  %v775 = vadd.f32 0.0, %v774
  %v776 = vpop.f32.mrb[0].mxu0
  %v777 = vpop.f32.mrb[0].mxu0
  %v778 = vpop.f32.mrb[0].mxu0
  %779 = vdwg.mxu0
  %v796 = vunpack.c.l.b16 %v659
  %v797 = vunpack.c.l.b16 %v660
  %v798 = vunpack.c.l.b16 %v661
  %v799 = vunpack.c.l.b16 %v662
  %v800 = vunpack.c.l.b16 %v663
  %v801 = vunpack.c.l.b16 %v664
  %v802 = vunpack.c.l.b16 %v665
  %v803 = vunpack.c.l.b16 %v666
  %v804 = vunpack.c.l.b16 %v667
  %v805 = vunpack.c.l.b16 %v668
  %v806 = vunpack.c.l.b16 %v669
  %v807 = vunpack.c.l.b16 %v670
  %v808 = vunpack.c.l.b16 %v671
  %v809 = vunpack.c.l.b16 %v672
  %v810 = vunpack.c.l.b16 %v673
  %v811 = vunpack.c.l.b16 %v674
  %v812 = vpack.c.b16 %v797, %v796
  %v813 = vpack.c.b16 %v799, %v798
  %v814 = vpack.c.b16 %v801, %v800
  %v815 = vpack.c.b16 %v803, %v802
  %v816 = vpack.c.b16 %v805, %v804
  %v817 = vpack.c.b16 %v807, %v806
  %v818 = vpack.c.b16 %v809, %v808
  %v819 = vpack.c.b16 %v811, %v810
  %828 = vmatprep.subr.bf16.mxu0 0
  %829 = vmatpush1.bf16.msra.mxu0 %v812
  %830 = vmatprep.subr.bf16.mxu0 0
  %831 = vmatpush1.bf16.msra.mxu0 %v813
  %832 = vmatprep.subr.bf16.mxu0 0
  %833 = vmatpush1.bf16.msra.mxu0 %v814
  %834 = vmatprep.subr.bf16.mxu0 0
  %835 = vmatpush1.bf16.msra.mxu0 %v815
  %836 = vmatprep.subr.bf16.mxu0 0
  %837 = vmatpush1.bf16.msra.mxu0 %v816
  %838 = vmatprep.subr.bf16.mxu0 0
  %839 = vmatpush1.bf16.msra.mxu0 %v817
  %840 = vmatprep.subr.bf16.mxu0 0
  %841 = vmatpush1.bf16.msra.mxu0 %v818
  %842 = vmatprep.subr.bf16.mxu0 0
  %843 = vmatpush1.bf16.msra.mxu0 %v819
  %844 = vmatprep.subr.bf16.mxu0 0
  %845 = vmatpush1.bf16.msra.mxu0 0
  %846 = vmatprep.subr.bf16.mxu0 0
  %847 = vmatpush1.bf16.msra.mxu0 0
  %848 = vmatprep.subr.bf16.mxu0 0
  %849 = vmatpush1.bf16.msra.mxu0 0
  %850 = vmatprep.subr.bf16.mxu0 0
  %851 = vmatpush1.bf16.msra.mxu0 0
  %852 = vmatprep.subr.bf16.mxu0 0
  %853 = vmatpush1.bf16.msra.mxu0 0
  %854 = vmatprep.subr.bf16.mxu0 0
  %855 = vmatpush1.bf16.msra.mxu0 0
  %856 = vmatprep.subr.bf16.mxu0 0
  %857 = vmatpush1.bf16.msra.mxu0 0
  %858 = vmatprep.subr.bf16.mxu0 0
  %859 = vmatpush1.bf16.msra.mxu0 0
  %860 = vmatprep.mubr.bf16.mxu0 0
  %861 = vmatmul.mubr.bf16.gmra.mrb[0].mxu0 %v658
  %v862 = vpop.f32.mrb[0].mxu0
  %v863 = vadd.f32 %v775, %v862
  %v864 = vpop.f32.mrb[0].mxu0
  %v865 = vpop.f32.mrb[0].mxu0
  %v866 = vpop.f32.mrb[0].mxu0
  %867 = vdwg.mxu0
  %v868 = vpack.c.bf16 %v611, %v611
  %v869 = vld [vmem:[%s2 + $0xc0] sm:$0xf]
  %v870 = vld [vmem:[%s2 + $0xc4] sm:$0xf]
  %v871 = vld [vmem:[%s2 + $0xc8] sm:$0xf]
  %v872 = vld [vmem:[%s2 + $0xcc] sm:$0xf]
  %v873 = vld [vmem:[%s2 + $0xd0] sm:$0xf]
  %v874 = vld [vmem:[%s2 + $0xd4] sm:$0xf]
  %v875 = vld [vmem:[%s2 + $0xd8] sm:$0xf]
  %v876 = vld [vmem:[%s2 + $0xdc] sm:$0xf]
  %v877 = vld [vmem:[%s2 + $0xe0] sm:$0xf]
  %v878 = vld [vmem:[%s2 + $0xe4] sm:$0xf]
  %v879 = vld [vmem:[%s2 + $0xe8] sm:$0xf]
  %v880 = vld [vmem:[%s2 + $0xec] sm:$0xf]
  %v881 = vld [vmem:[%s2 + $0xf0] sm:$0xf]
  %v882 = vld [vmem:[%s2 + $0xf4] sm:$0xf]
  %v883 = vld [vmem:[%s2 + $0xf8] sm:$0xf]
  %v884 = vld [vmem:[%s2 + $0xfc] sm:$0xf]
  %v901 = vunpack.c.l.b16 %v869
  %v902 = vunpack.c.l.b16 %v870
  %v903 = vunpack.c.l.b16 %v871
  %v904 = vunpack.c.l.b16 %v872
  %v905 = vunpack.c.l.b16 %v873
  %v906 = vunpack.c.l.b16 %v874
  %v907 = vunpack.c.l.b16 %v875
  %v908 = vunpack.c.l.b16 %v876
  %v909 = vunpack.c.l.b16 %v877
  %v910 = vunpack.c.l.b16 %v878
  %v911 = vunpack.c.l.b16 %v879
  %v912 = vunpack.c.l.b16 %v880
  %v913 = vunpack.c.l.b16 %v881
  %v914 = vunpack.c.l.b16 %v882
  %v915 = vunpack.c.l.b16 %v883
  %v916 = vunpack.c.l.b16 %v884
  %v917 = vpack.c.b16 %v902, %v901
  %v918 = vpack.c.b16 %v904, %v903
  %v919 = vpack.c.b16 %v906, %v905
  %v920 = vpack.c.b16 %v908, %v907
  %v921 = vpack.c.b16 %v910, %v909
  %v922 = vpack.c.b16 %v912, %v911
  %v923 = vpack.c.b16 %v914, %v913
  %v924 = vpack.c.b16 %v916, %v915
  %933 = vmatprep.subr.bf16.mxu0 0
  %934 = vmatpush1.bf16.msra.mxu0 %v917
  %935 = vmatprep.subr.bf16.mxu0 0
  %936 = vmatpush1.bf16.msra.mxu0 %v918
  %937 = vmatprep.subr.bf16.mxu0 0
  %938 = vmatpush1.bf16.msra.mxu0 %v919
  %939 = vmatprep.subr.bf16.mxu0 0
  %940 = vmatpush1.bf16.msra.mxu0 %v920
  %941 = vmatprep.subr.bf16.mxu0 0
  %942 = vmatpush1.bf16.msra.mxu0 %v921
  %943 = vmatprep.subr.bf16.mxu0 0
  %944 = vmatpush1.bf16.msra.mxu0 %v922
  %945 = vmatprep.subr.bf16.mxu0 0
  %946 = vmatpush1.bf16.msra.mxu0 %v923
  %947 = vmatprep.subr.bf16.mxu0 0
  %948 = vmatpush1.bf16.msra.mxu0 %v924
  %949 = vmatprep.subr.bf16.mxu0 0
  %950 = vmatpush1.bf16.msra.mxu0 0
  %951 = vmatprep.subr.bf16.mxu0 0
  %952 = vmatpush1.bf16.msra.mxu0 0
  %953 = vmatprep.subr.bf16.mxu0 0
  %954 = vmatpush1.bf16.msra.mxu0 0
  %955 = vmatprep.subr.bf16.mxu0 0
  %956 = vmatpush1.bf16.msra.mxu0 0
  %957 = vmatprep.subr.bf16.mxu0 0
  %958 = vmatpush1.bf16.msra.mxu0 0
  %959 = vmatprep.subr.bf16.mxu0 0
  %960 = vmatpush1.bf16.msra.mxu0 0
  %961 = vmatprep.subr.bf16.mxu0 0
  %962 = vmatpush1.bf16.msra.mxu0 0
  %963 = vmatprep.subr.bf16.mxu0 0
  %964 = vmatpush1.bf16.msra.mxu0 0
  %965 = vmatprep.mubr.bf16.mxu0 0
  %966 = vmatmul.mubr.bf16.gmra.mrb[0].mxu0 %v868
  %v967 = vpop.f32.mrb[0].mxu0
  %v968 = vadd.f32 0.0, %v967
  %v969 = vpop.f32.mrb[0].mxu0
  %v970 = vpop.f32.mrb[0].mxu0
  %v971 = vpop.f32.mrb[0].mxu0
  %972 = vdwg.mxu0
  %v973 = vadd.f32 %v863, %v968
  %v974 = vpack.c.bf16 %v612, %v612
  %v975 = vld [vmem:[%s2 + $0x100] sm:$0xf]
  %v976 = vld [vmem:[%s2 + $0x104] sm:$0xf]
  %v977 = vld [vmem:[%s2 + $0x108] sm:$0xf]
  %v978 = vld [vmem:[%s2 + $0x10c] sm:$0xf]
  %v979 = vld [vmem:[%s2 + $0x110] sm:$0xf]
  %v980 = vld [vmem:[%s2 + $0x114] sm:$0xf]
  %v981 = vld [vmem:[%s2 + $0x118] sm:$0xf]
  %v982 = vld [vmem:[%s2 + $0x11c] sm:$0xf]
  %v983 = vld [vmem:[%s2 + $0x120] sm:$0xf]
  %v984 = vld [vmem:[%s2 + $0x124] sm:$0xf]
  %v985 = vld [vmem:[%s2 + $0x128] sm:$0xf]
  %v986 = vld [vmem:[%s2 + $0x12c] sm:$0xf]
  %v987 = vld [vmem:[%s2 + $0x130] sm:$0xf]
  %v988 = vld [vmem:[%s2 + $0x134] sm:$0xf]
  %v989 = vld [vmem:[%s2 + $0x138] sm:$0xf]
  %v990 = vld [vmem:[%s2 + $0x13c] sm:$0xf]
  %v1007 = vunpack.c.l.b16 %v975
  %v1008 = vunpack.c.l.b16 %v976
  %v1009 = vunpack.c.l.b16 %v977
  %v1010 = vunpack.c.l.b16 %v978
  %v1011 = vunpack.c.l.b16 %v979
  %v1012 = vunpack.c.l.b16 %v980
  %v1013 = vunpack.c.l.b16 %v981
  %v1014 = vunpack.c.l.b16 %v982
  %v1015 = vunpack.c.l.b16 %v983
  %v1016 = vunpack.c.l.b16 %v984
  %v1017 = vunpack.c.l.b16 %v985
  %v1018 = vunpack.c.l.b16 %v986
  %v1019 = vunpack.c.l.b16 %v987
  %v1020 = vunpack.c.l.b16 %v988
  %v1021 = vunpack.c.l.b16 %v989
  %v1022 = vunpack.c.l.b16 %v990
  %v1023 = vpack.c.b16 %v1008, %v1007
  %v1024 = vpack.c.b16 %v1010, %v1009
  %v1025 = vpack.c.b16 %v1012, %v1011
  %v1026 = vpack.c.b16 %v1014, %v1013
  %v1027 = vpack.c.b16 %v1016, %v1015
  %v1028 = vpack.c.b16 %v1018, %v1017
  %v1029 = vpack.c.b16 %v1020, %v1019
  %v1030 = vpack.c.b16 %v1022, %v1021
  %1039 = vmatprep.subr.bf16.mxu0 0
  %1040 = vmatpush1.bf16.msra.mxu0 %v1023
  %1041 = vmatprep.subr.bf16.mxu0 0
  %1042 = vmatpush1.bf16.msra.mxu0 %v1024
  %1043 = vmatprep.subr.bf16.mxu0 0
  %1044 = vmatpush1.bf16.msra.mxu0 %v1025
  %1045 = vmatprep.subr.bf16.mxu0 0
  %1046 = vmatpush1.bf16.msra.mxu0 %v1026
  %1047 = vmatprep.subr.bf16.mxu0 0
  %1048 = vmatpush1.bf16.msra.mxu0 %v1027
  %1049 = vmatprep.subr.bf16.mxu0 0
  %1050 = vmatpush1.bf16.msra.mxu0 %v1028
  %1051 = vmatprep.subr.bf16.mxu0 0
  %1052 = vmatpush1.bf16.msra.mxu0 %v1029
  %1053 = vmatprep.subr.bf16.mxu0 0
  %1054 = vmatpush1.bf16.msra.mxu0 %v1030
  %1055 = vmatprep.subr.bf16.mxu0 0
  %1056 = vmatpush1.bf16.msra.mxu0 0
  %1057 = vmatprep.subr.bf16.mxu0 0
  %1058 = vmatpush1.bf16.msra.mxu0 0
  %1059 = vmatprep.subr.bf16.mxu0 0
  %1060 = vmatpush1.bf16.msra.mxu0 0
  %1061 = vmatprep.subr.bf16.mxu0 0
  %1062 = vmatpush1.bf16.msra.mxu0 0
  %1063 = vmatprep.subr.bf16.mxu0 0
  %1064 = vmatpush1.bf16.msra.mxu0 0
  %1065 = vmatprep.subr.bf16.mxu0 0
  %1066 = vmatpush1.bf16.msra.mxu0 0
  %1067 = vmatprep.subr.bf16.mxu0 0
  %1068 = vmatpush1.bf16.msra.mxu0 0
  %1069 = vmatprep.subr.bf16.mxu0 0
  %1070 = vmatpush1.bf16.msra.mxu0 0
  %1071 = vmatprep.mubr.bf16.mxu0 0
  %1072 = vmatmul.mubr.bf16.gmra.mrb[0].mxu0 %v974
  %v1073 = vpop.f32.mrb[0].mxu0
  %v1074 = vadd.f32 0.0, %v1073
  %v1075 = vpop.f32.mrb[0].mxu0
  %v1076 = vpop.f32.mrb[0].mxu0
  %v1077 = vpop.f32.mrb[0].mxu0
  %1078 = vdwg.mxu0
  %v1079 = vadd.f32 %v973, %v1074
  %v1080 = vpack.c.bf16 %v613, %v613
  %v1081 = vld [vmem:[%s2 + $0x140] sm:$0xf]
  %v1082 = vld [vmem:[%s2 + $0x144] sm:$0xf]
  %v1083 = vld [vmem:[%s2 + $0x148] sm:$0xf]
  %v1084 = vld [vmem:[%s2 + $0x14c] sm:$0xf]
  %v1085 = vld [vmem:[%s2 + $0x150] sm:$0xf]
  %v1086 = vld [vmem:[%s2 + $0x154] sm:$0xf]
  %v1087 = vld [vmem:[%s2 + $0x158] sm:$0xf]
  %v1088 = vld [vmem:[%s2 + $0x15c] sm:$0xf]
  %v1089 = vld [vmem:[%s2 + $0x160] sm:$0xf]
  %v1090 = vld [vmem:[%s2 + $0x164] sm:$0xf]
  %v1091 = vld [vmem:[%s2 + $0x168] sm:$0xf]
  %v1092 = vld [vmem:[%s2 + $0x16c] sm:$0xf]
  %v1093 = vld [vmem:[%s2 + $0x170] sm:$0xf]
  %v1094 = vld [vmem:[%s2 + $0x174] sm:$0xf]
  %v1095 = vld [vmem:[%s2 + $0x178] sm:$0xf]
  %v1096 = vld [vmem:[%s2 + $0x17c] sm:$0xf]
  %v1113 = vunpack.c.l.b16 %v1081
  %v1114 = vunpack.c.l.b16 %v1082
  %v1115 = vunpack.c.l.b16 %v1083
  %v1116 = vunpack.c.l.b16 %v1084
  %v1117 = vunpack.c.l.b16 %v1085
  %v1118 = vunpack.c.l.b16 %v1086
  %v1119 = vunpack.c.l.b16 %v1087
  %v1120 = vunpack.c.l.b16 %v1088
  %v1121 = vunpack.c.l.b16 %v1089
  %v1122 = vunpack.c.l.b16 %v1090
  %v1123 = vunpack.c.l.b16 %v1091
  %v1124 = vunpack.c.l.b16 %v1092
  %v1125 = vunpack.c.l.b16 %v1093
  %v1126 = vunpack.c.l.b16 %v1094
  %v1127 = vunpack.c.l.b16 %v1095
  %v1128 = vunpack.c.l.b16 %v1096
  %v1129 = vpack.c.b16 %v1114, %v1113
  %v1130 = vpack.c.b16 %v1116, %v1115
  %v1131 = vpack.c.b16 %v1118, %v1117
  %v1132 = vpack.c.b16 %v1120, %v1119
  %v1133 = vpack.c.b16 %v1122, %v1121
  %v1134 = vpack.c.b16 %v1124, %v1123
  %v1135 = vpack.c.b16 %v1126, %v1125
  %v1136 = vpack.c.b16 %v1128, %v1127
  %1145 = vmatprep.subr.bf16.mxu0 0
  %1146 = vmatpush1.bf16.msra.mxu0 %v1129
  %1147 = vmatprep.subr.bf16.mxu0 0
  %1148 = vmatpush1.bf16.msra.mxu0 %v1130
  %1149 = vmatprep.subr.bf16.mxu0 0
  %1150 = vmatpush1.bf16.msra.mxu0 %v1131
  %1151 = vmatprep.subr.bf16.mxu0 0
  %1152 = vmatpush1.bf16.msra.mxu0 %v1132
  %1153 = vmatprep.subr.bf16.mxu0 0
  %1154 = vmatpush1.bf16.msra.mxu0 %v1133
  %1155 = vmatprep.subr.bf16.mxu0 0
  %1156 = vmatpush1.bf16.msra.mxu0 %v1134
  %1157 = vmatprep.subr.bf16.mxu0 0
  %1158 = vmatpush1.bf16.msra.mxu0 %v1135
  %1159 = vmatprep.subr.bf16.mxu0 0
  %1160 = vmatpush1.bf16.msra.mxu0 %v1136
  %1161 = vmatprep.subr.bf16.mxu0 0
  %1162 = vmatpush1.bf16.msra.mxu0 0
  %1163 = vmatprep.subr.bf16.mxu0 0
  %1164 = vmatpush1.bf16.msra.mxu0 0
  %1165 = vmatprep.subr.bf16.mxu0 0
  %1166 = vmatpush1.bf16.msra.mxu0 0
  %1167 = vmatprep.subr.bf16.mxu0 0
  %1168 = vmatpush1.bf16.msra.mxu0 0
  %1169 = vmatprep.subr.bf16.mxu0 0
  %1170 = vmatpush1.bf16.msra.mxu0 0
  %1171 = vmatprep.subr.bf16.mxu0 0
  %1172 = vmatpush1.bf16.msra.mxu0 0
  %1173 = vmatprep.subr.bf16.mxu0 0
  %1174 = vmatpush1.bf16.msra.mxu0 0
  %1175 = vmatprep.subr.bf16.mxu0 0
  %1176 = vmatpush1.bf16.msra.mxu0 0
  %1177 = vmatprep.mubr.bf16.mxu0 0
  %1178 = vmatmul.mubr.bf16.gmra.mrb[0].mxu0 %v1080
  %v1179 = vpop.f32.mrb[0].mxu0
  %v1180 = vadd.f32 0.0, %v1179
  %v1181 = vpop.f32.mrb[0].mxu0
  %v1182 = vpop.f32.mrb[0].mxu0
  %v1183 = vpop.f32.mrb[0].mxu0
  %1184 = vdwg.mxu0
  %v1185 = vadd.f32 %v1079, %v1180
  %v1186 = vpack.c.bf16 %v614, %v614
  %v1187 = vld [vmem:[%s2 + $0x180] sm:$0xf]
  %v1188 = vld [vmem:[%s2 + $0x184] sm:$0xf]
  %v1189 = vld [vmem:[%s2 + $0x188] sm:$0xf]
  %v1190 = vld [vmem:[%s2 + $0x18c] sm:$0xf]
  %v1191 = vld [vmem:[%s2 + $0x190] sm:$0xf]
  %v1192 = vld [vmem:[%s2 + $0x194] sm:$0xf]
  %v1193 = vld [vmem:[%s2 + $0x198] sm:$0xf]
  %v1194 = vld [vmem:[%s2 + $0x19c] sm:$0xf]
  %v1195 = vld [vmem:[%s2 + $0x1a0] sm:$0xf]
  %v1196 = vld [vmem:[%s2 + $0x1a4] sm:$0xf]
  %v1197 = vld [vmem:[%s2 + $0x1a8] sm:$0xf]
  %v1198 = vld [vmem:[%s2 + $0x1ac] sm:$0xf]
  %v1199 = vld [vmem:[%s2 + $0x1b0] sm:$0xf]
  %v1200 = vld [vmem:[%s2 + $0x1b4] sm:$0xf]
  %v1201 = vld [vmem:[%s2 + $0x1b8] sm:$0xf]
  %v1202 = vld [vmem:[%s2 + $0x1bc] sm:$0xf]
  %v1219 = vunpack.c.l.b16 %v1187
  %v1220 = vunpack.c.l.b16 %v1188
  %v1221 = vunpack.c.l.b16 %v1189
  %v1222 = vunpack.c.l.b16 %v1190
  %v1223 = vunpack.c.l.b16 %v1191
  %v1224 = vunpack.c.l.b16 %v1192
  %v1225 = vunpack.c.l.b16 %v1193
  %v1226 = vunpack.c.l.b16 %v1194
  %v1227 = vunpack.c.l.b16 %v1195
  %v1228 = vunpack.c.l.b16 %v1196
  %v1229 = vunpack.c.l.b16 %v1197
  %v1230 = vunpack.c.l.b16 %v1198
  %v1231 = vunpack.c.l.b16 %v1199
  %v1232 = vunpack.c.l.b16 %v1200
  %v1233 = vunpack.c.l.b16 %v1201
  %v1234 = vunpack.c.l.b16 %v1202
  %v1235 = vpack.c.b16 %v1220, %v1219
  %v1236 = vpack.c.b16 %v1222, %v1221
  %v1237 = vpack.c.b16 %v1224, %v1223
  %v1238 = vpack.c.b16 %v1226, %v1225
  %v1239 = vpack.c.b16 %v1228, %v1227
  %v1240 = vpack.c.b16 %v1230, %v1229
  %v1241 = vpack.c.b16 %v1232, %v1231
  %v1242 = vpack.c.b16 %v1234, %v1233
  %1251 = vmatprep.subr.bf16.mxu0 0
  %1252 = vmatpush1.bf16.msra.mxu0 %v1235
  %1253 = vmatprep.subr.bf16.mxu0 0
  %1254 = vmatpush1.bf16.msra.mxu0 %v1236
  %1255 = vmatprep.subr.bf16.mxu0 0
  %1256 = vmatpush1.bf16.msra.mxu0 %v1237
  %1257 = vmatprep.subr.bf16.mxu0 0
  %1258 = vmatpush1.bf16.msra.mxu0 %v1238
  %1259 = vmatprep.subr.bf16.mxu0 0
  %1260 = vmatpush1.bf16.msra.mxu0 %v1239
  %1261 = vmatprep.subr.bf16.mxu0 0
  %1262 = vmatpush1.bf16.msra.mxu0 %v1240
  %1263 = vmatprep.subr.bf16.mxu0 0
  %1264 = vmatpush1.bf16.msra.mxu0 %v1241
  %1265 = vmatprep.subr.bf16.mxu0 0
  %1266 = vmatpush1.bf16.msra.mxu0 %v1242
  %1267 = vmatprep.subr.bf16.mxu0 0
  %1268 = vmatpush1.bf16.msra.mxu0 0
  %1269 = vmatprep.subr.bf16.mxu0 0
  %1270 = vmatpush1.bf16.msra.mxu0 0
  %1271 = vmatprep.subr.bf16.mxu0 0
  %1272 = vmatpush1.bf16.msra.mxu0 0
  %1273 = vmatprep.subr.bf16.mxu0 0
  %1274 = vmatpush1.bf16.msra.mxu0 0
  %1275 = vmatprep.subr.bf16.mxu0 0
  %1276 = vmatpush1.bf16.msra.mxu0 0
  %1277 = vmatprep.subr.bf16.mxu0 0
  %1278 = vmatpush1.bf16.msra.mxu0 0
  %1279 = vmatprep.subr.bf16.mxu0 0
  %1280 = vmatpush1.bf16.msra.mxu0 0
  %1281 = vmatprep.subr.bf16.mxu0 0
  %1282 = vmatpush1.bf16.msra.mxu0 0
  %1283 = vmatprep.mubr.bf16.mxu0 0
  %1284 = vmatmul.mubr.bf16.gmra.mrb[0].mxu0 %v1186
  %v1285 = vpop.f32.mrb[0].mxu0
  %v1286 = vadd.f32 0.0, %v1285
  %v1287 = vpop.f32.mrb[0].mxu0
  %v1288 = vpop.f32.mrb[0].mxu0
  %v1289 = vpop.f32.mrb[0].mxu0
  %1290 = vdwg.mxu0
  %v1291 = vadd.f32 %v1185, %v1286
  %v1292 = vpack.c.bf16 %v615, %v615
  %v1293 = vld [vmem:[%s2 + $0x1c0] sm:$0xf]
  %v1294 = vld [vmem:[%s2 + $0x1c4] sm:$0xf]
  %v1295 = vld [vmem:[%s2 + $0x1c8] sm:$0xf]
  %v1296 = vld [vmem:[%s2 + $0x1cc] sm:$0xf]
  %v1297 = vld [vmem:[%s2 + $0x1d0] sm:$0xf]
  %v1298 = vld [vmem:[%s2 + $0x1d4] sm:$0xf]
  %v1299 = vld [vmem:[%s2 + $0x1d8] sm:$0xf]
  %v1300 = vld [vmem:[%s2 + $0x1dc] sm:$0xf]
  %v1301 = vld [vmem:[%s2 + $0x1e0] sm:$0xf]
  %v1302 = vld [vmem:[%s2 + $0x1e4] sm:$0xf]
  %v1303 = vld [vmem:[%s2 + $0x1e8] sm:$0xf]
  %v1304 = vld [vmem:[%s2 + $0x1ec] sm:$0xf]
  %v1305 = vld [vmem:[%s2 + $0x1f0] sm:$0xf]
  %v1306 = vld [vmem:[%s2 + $0x1f4] sm:$0xf]
  %v1307 = vld [vmem:[%s2 + $0x1f8] sm:$0xf]
  %v1308 = vld [vmem:[%s2 + $0x1fc] sm:$0xf]
  %v1325 = vunpack.c.l.b16 %v1293
  %v1326 = vunpack.c.l.b16 %v1294
  %v1327 = vunpack.c.l.b16 %v1295
  %v1328 = vunpack.c.l.b16 %v1296
  %v1329 = vunpack.c.l.b16 %v1297
  %v1330 = vunpack.c.l.b16 %v1298
  %v1331 = vunpack.c.l.b16 %v1299
  %v1332 = vunpack.c.l.b16 %v1300
  %v1333 = vunpack.c.l.b16 %v1301
  %v1334 = vunpack.c.l.b16 %v1302
  %v1335 = vunpack.c.l.b16 %v1303
  %v1336 = vunpack.c.l.b16 %v1304
  %v1337 = vunpack.c.l.b16 %v1305
  %v1338 = vunpack.c.l.b16 %v1306
  %v1339 = vunpack.c.l.b16 %v1307
  %v1340 = vunpack.c.l.b16 %v1308
  %v1341 = vpack.c.b16 %v1326, %v1325
  %v1342 = vpack.c.b16 %v1328, %v1327
  %v1343 = vpack.c.b16 %v1330, %v1329
  %v1344 = vpack.c.b16 %v1332, %v1331
  %v1345 = vpack.c.b16 %v1334, %v1333
  %v1346 = vpack.c.b16 %v1336, %v1335
  %v1347 = vpack.c.b16 %v1338, %v1337
  %v1348 = vpack.c.b16 %v1340, %v1339
  %1357 = vmatprep.subr.bf16.mxu0 0
  %1358 = vmatpush1.bf16.msra.mxu0 %v1341
  %1359 = vmatprep.subr.bf16.mxu0 0
  %1360 = vmatpush1.bf16.msra.mxu0 %v1342
  %1361 = vmatprep.subr.bf16.mxu0 0
  %1362 = vmatpush1.bf16.msra.mxu0 %v1343
  %1363 = vmatprep.subr.bf16.mxu0 0
  %1364 = vmatpush1.bf16.msra.mxu0 %v1344
  %1365 = vmatprep.subr.bf16.mxu0 0
  %1366 = vmatpush1.bf16.msra.mxu0 %v1345
  %1367 = vmatprep.subr.bf16.mxu0 0
  %1368 = vmatpush1.bf16.msra.mxu0 %v1346
  %1369 = vmatprep.subr.bf16.mxu0 0
  %1370 = vmatpush1.bf16.msra.mxu0 %v1347
  %1371 = vmatprep.subr.bf16.mxu0 0
  %1372 = vmatpush1.bf16.msra.mxu0 %v1348
  %1373 = vmatprep.subr.bf16.mxu0 0
  %1374 = vmatpush1.bf16.msra.mxu0 0
  %1375 = vmatprep.subr.bf16.mxu0 0
  %1376 = vmatpush1.bf16.msra.mxu0 0
  %1377 = vmatprep.subr.bf16.mxu0 0
  %1378 = vmatpush1.bf16.msra.mxu0 0
  %1379 = vmatprep.subr.bf16.mxu0 0
  %1380 = vmatpush1.bf16.msra.mxu0 0
  %1381 = vmatprep.subr.bf16.mxu0 0
  %1382 = vmatpush1.bf16.msra.mxu0 0
  %1383 = vmatprep.subr.bf16.mxu0 0
  %1384 = vmatpush1.bf16.msra.mxu0 0
  %1385 = vmatprep.subr.bf16.mxu0 0
  %1386 = vmatpush1.bf16.msra.mxu0 0
  %1387 = vmatprep.subr.bf16.mxu0 0
  %1388 = vmatpush1.bf16.msra.mxu0 0
  %1389 = vmatprep.mubr.bf16.mxu0 0
  %1390 = vmatmul.mubr.bf16.gmra.mrb[0].mxu0 %v1292
  %v1391 = vpop.f32.mrb[0].mxu0
  %v1392 = vadd.f32 0.0, %v1391
  %v1393 = vpop.f32.mrb[0].mxu0
  %v1394 = vpop.f32.mrb[0].mxu0
  %v1395 = vpop.f32.mrb[0].mxu0
  %1396 = vdwg.mxu0
  %v1397 = vadd.f32 %v1291, %v1392
  %v1398 = vpack.c.bf16 %v616, %v616
  %v1399 = vld [vmem:[%s2 + $0x200] sm:$0xf]
  %v1400 = vld [vmem:[%s2 + $0x204] sm:$0xf]
  %v1401 = vld [vmem:[%s2 + $0x208] sm:$0xf]
  %v1402 = vld [vmem:[%s2 + $0x20c] sm:$0xf]
  %v1403 = vld [vmem:[%s2 + $0x210] sm:$0xf]
  %v1404 = vld [vmem:[%s2 + $0x214] sm:$0xf]
  %v1405 = vld [vmem:[%s2 + $0x218] sm:$0xf]
  %v1406 = vld [vmem:[%s2 + $0x21c] sm:$0xf]
  %v1407 = vld [vmem:[%s2 + $0x220] sm:$0xf]
  %v1408 = vld [vmem:[%s2 + $0x224] sm:$0xf]
  %v1409 = vld [vmem:[%s2 + $0x228] sm:$0xf]
  %v1410 = vld [vmem:[%s2 + $0x22c] sm:$0xf]
  %v1411 = vld [vmem:[%s2 + $0x230] sm:$0xf]
  %v1412 = vld [vmem:[%s2 + $0x234] sm:$0xf]
  %v1413 = vld [vmem:[%s2 + $0x238] sm:$0xf]
  %v1414 = vld [vmem:[%s2 + $0x23c] sm:$0xf]
  %v1431 = vunpack.c.l.b16 %v1399
  %v1432 = vunpack.c.l.b16 %v1400
  %v1433 = vunpack.c.l.b16 %v1401
  %v1434 = vunpack.c.l.b16 %v1402
  %v1435 = vunpack.c.l.b16 %v1403
  %v1436 = vunpack.c.l.b16 %v1404
  %v1437 = vunpack.c.l.b16 %v1405
  %v1438 = vunpack.c.l.b16 %v1406
  %v1439 = vunpack.c.l.b16 %v1407
  %v1440 = vunpack.c.l.b16 %v1408
  %v1441 = vunpack.c.l.b16 %v1409
  %v1442 = vunpack.c.l.b16 %v1410
  %v1443 = vunpack.c.l.b16 %v1411
  %v1444 = vunpack.c.l.b16 %v1412
  %v1445 = vunpack.c.l.b16 %v1413
  %v1446 = vunpack.c.l.b16 %v1414
  %v1447 = vpack.c.b16 %v1432, %v1431
  %v1448 = vpack.c.b16 %v1434, %v1433
  %v1449 = vpack.c.b16 %v1436, %v1435
  %v1450 = vpack.c.b16 %v1438, %v1437
  %v1451 = vpack.c.b16 %v1440, %v1439
  %v1452 = vpack.c.b16 %v1442, %v1441
  %v1453 = vpack.c.b16 %v1444, %v1443
  %v1454 = vpack.c.b16 %v1446, %v1445
  %1463 = vmatprep.subr.bf16.mxu0 0
  %1464 = vmatpush1.bf16.msra.mxu0 %v1447
  %1465 = vmatprep.subr.bf16.mxu0 0
  %1466 = vmatpush1.bf16.msra.mxu0 %v1448
  %1467 = vmatprep.subr.bf16.mxu0 0
  %1468 = vmatpush1.bf16.msra.mxu0 %v1449
  %1469 = vmatprep.subr.bf16.mxu0 0
  %1470 = vmatpush1.bf16.msra.mxu0 %v1450
  %1471 = vmatprep.subr.bf16.mxu0 0
  %1472 = vmatpush1.bf16.msra.mxu0 %v1451
  %1473 = vmatprep.subr.bf16.mxu0 0
  %1474 = vmatpush1.bf16.msra.mxu0 %v1452
  %1475 = vmatprep.subr.bf16.mxu0 0
  %1476 = vmatpush1.bf16.msra.mxu0 %v1453
  %1477 = vmatprep.subr.bf16.mxu0 0
  %1478 = vmatpush1.bf16.msra.mxu0 %v1454
  %1479 = vmatprep.subr.bf16.mxu0 0
  %1480 = vmatpush1.bf16.msra.mxu0 0
  %1481 = vmatprep.subr.bf16.mxu0 0
  %1482 = vmatpush1.bf16.msra.mxu0 0
  %1483 = vmatprep.subr.bf16.mxu0 0
  %1484 = vmatpush1.bf16.msra.mxu0 0
  %1485 = vmatprep.subr.bf16.mxu0 0
  %1486 = vmatpush1.bf16.msra.mxu0 0
  %1487 = vmatprep.subr.bf16.mxu0 0
  %1488 = vmatpush1.bf16.msra.mxu0 0
  %1489 = vmatprep.subr.bf16.mxu0 0
  %1490 = vmatpush1.bf16.msra.mxu0 0
  %1491 = vmatprep.subr.bf16.mxu0 0
  %1492 = vmatpush1.bf16.msra.mxu0 0
  %1493 = vmatprep.subr.bf16.mxu0 0
  %1494 = vmatpush1.bf16.msra.mxu0 0
  %1495 = vmatprep.mubr.bf16.mxu0 0
  %1496 = vmatmul.mubr.bf16.gmra.mrb[0].mxu0 %v1398
  %v1497 = vpop.f32.mrb[0].mxu0
  %v1498 = vadd.f32 0.0, %v1497
  %v1499 = vpop.f32.mrb[0].mxu0
  %v1500 = vpop.f32.mrb[0].mxu0
  %v1501 = vpop.f32.mrb[0].mxu0
  %1502 = vdwg.mxu0
  %v1503 = vadd.f32 %v1397, %v1498
  %v1504 = vpack.c.bf16 %v617, %v617
  %v1505 = vld [vmem:[%s2 + $0x240] sm:$0xf]
  %v1506 = vld [vmem:[%s2 + $0x244] sm:$0xf]
  %v1507 = vld [vmem:[%s2 + $0x248] sm:$0xf]
  %v1508 = vld [vmem:[%s2 + $0x24c] sm:$0xf]
  %v1509 = vld [vmem:[%s2 + $0x250] sm:$0xf]
  %v1510 = vld [vmem:[%s2 + $0x254] sm:$0xf]
  %v1511 = vld [vmem:[%s2 + $0x258] sm:$0xf]
  %v1512 = vld [vmem:[%s2 + $0x25c] sm:$0xf]
  %v1513 = vld [vmem:[%s2 + $0x260] sm:$0xf]
  %v1514 = vld [vmem:[%s2 + $0x264] sm:$0xf]
  %v1515 = vld [vmem:[%s2 + $0x268] sm:$0xf]
  %v1516 = vld [vmem:[%s2 + $0x26c] sm:$0xf]
  %v1517 = vld [vmem:[%s2 + $0x270] sm:$0xf]
  %v1518 = vld [vmem:[%s2 + $0x274] sm:$0xf]
  %v1519 = vld [vmem:[%s2 + $0x278] sm:$0xf]
  %v1520 = vld [vmem:[%s2 + $0x27c] sm:$0xf]
  %v1537 = vunpack.c.l.b16 %v1505
  %v1538 = vunpack.c.l.b16 %v1506
  %v1539 = vunpack.c.l.b16 %v1507
  %v1540 = vunpack.c.l.b16 %v1508
  %v1541 = vunpack.c.l.b16 %v1509
  %v1542 = vunpack.c.l.b16 %v1510
  %v1543 = vunpack.c.l.b16 %v1511
  %v1544 = vunpack.c.l.b16 %v1512
  %v1545 = vunpack.c.l.b16 %v1513
  %v1546 = vunpack.c.l.b16 %v1514
  %v1547 = vunpack.c.l.b16 %v1515
  %v1548 = vunpack.c.l.b16 %v1516
  %v1549 = vunpack.c.l.b16 %v1517
  %v1550 = vunpack.c.l.b16 %v1518
  %v1551 = vunpack.c.l.b16 %v1519
  %v1552 = vunpack.c.l.b16 %v1520
  %v1553 = vpack.c.b16 %v1538, %v1537
  %v1554 = vpack.c.b16 %v1540, %v1539
  %v1555 = vpack.c.b16 %v1542, %v1541
  %v1556 = vpack.c.b16 %v1544, %v1543
  %v1557 = vpack.c.b16 %v1546, %v1545
  %v1558 = vpack.c.b16 %v1548, %v1547
  %v1559 = vpack.c.b16 %v1550, %v1549
  %v1560 = vpack.c.b16 %v1552, %v1551
  %1569 = vmatprep.subr.bf16.mxu0 0
  %1570 = vmatpush1.bf16.msra.mxu0 %v1553
  %1571 = vmatprep.subr.bf16.mxu0 0
  %1572 = vmatpush1.bf16.msra.mxu0 %v1554
  %1573 = vmatprep.subr.bf16.mxu0 0
  %1574 = vmatpush1.bf16.msra.mxu0 %v1555
  %1575 = vmatprep.subr.bf16.mxu0 0
  %1576 = vmatpush1.bf16.msra.mxu0 %v1556
  %1577 = vmatprep.subr.bf16.mxu0 0
  %1578 = vmatpush1.bf16.msra.mxu0 %v1557
  %1579 = vmatprep.subr.bf16.mxu0 0
  %1580 = vmatpush1.bf16.msra.mxu0 %v1558
  %1581 = vmatprep.subr.bf16.mxu0 0
  %1582 = vmatpush1.bf16.msra.mxu0 %v1559
  %1583 = vmatprep.subr.bf16.mxu0 0
  %1584 = vmatpush1.bf16.msra.mxu0 %v1560
  %1585 = vmatprep.subr.bf16.mxu0 0
  %1586 = vmatpush1.bf16.msra.mxu0 0
  %1587 = vmatprep.subr.bf16.mxu0 0
  %1588 = vmatpush1.bf16.msra.mxu0 0
  %1589 = vmatprep.subr.bf16.mxu0 0
  %1590 = vmatpush1.bf16.msra.mxu0 0
  %1591 = vmatprep.subr.bf16.mxu0 0
  %1592 = vmatpush1.bf16.msra.mxu0 0
  %1593 = vmatprep.subr.bf16.mxu0 0
  %1594 = vmatpush1.bf16.msra.mxu0 0
  %1595 = vmatprep.subr.bf16.mxu0 0
  %1596 = vmatpush1.bf16.msra.mxu0 0
  %1597 = vmatprep.subr.bf16.mxu0 0
  %1598 = vmatpush1.bf16.msra.mxu0 0
  %1599 = vmatprep.subr.bf16.mxu0 0
  %1600 = vmatpush1.bf16.msra.mxu0 0
  %1601 = vmatprep.mubr.bf16.mxu0 0
  %1602 = vmatmul.mubr.bf16.gmra.mrb[0].mxu0 %v1504
  %v1603 = vpop.f32.mrb[0].mxu0
  %v1604 = vadd.f32 0.0, %v1603
  %v1605 = vpop.f32.mrb[0].mxu0
  %v1606 = vpop.f32.mrb[0].mxu0
  %v1607 = vpop.f32.mrb[0].mxu0
  %1608 = vdwg.mxu0
  %v1609 = vadd.f32 %v1503, %v1604
  %v1610 = vpack.c.bf16 %v618, %v618
  %v1611 = vld [vmem:[%s2 + $0x280] sm:$0xf]
  %v1612 = vld [vmem:[%s2 + $0x284] sm:$0xf]
  %v1613 = vld [vmem:[%s2 + $0x288] sm:$0xf]
  %v1614 = vld [vmem:[%s2 + $0x28c] sm:$0xf]
  %v1615 = vld [vmem:[%s2 + $0x290] sm:$0xf]
  %v1616 = vld [vmem:[%s2 + $0x294] sm:$0xf]
  %v1617 = vld [vmem:[%s2 + $0x298] sm:$0xf]
  %v1618 = vld [vmem:[%s2 + $0x29c] sm:$0xf]
  %v1619 = vld [vmem:[%s2 + $0x2a0] sm:$0xf]
  %v1620 = vld [vmem:[%s2 + $0x2a4] sm:$0xf]
  %v1621 = vld [vmem:[%s2 + $0x2a8] sm:$0xf]
  %v1622 = vld [vmem:[%s2 + $0x2ac] sm:$0xf]
  %v1623 = vld [vmem:[%s2 + $0x2b0] sm:$0xf]
  %v1624 = vld [vmem:[%s2 + $0x2b4] sm:$0xf]
  %v1625 = vld [vmem:[%s2 + $0x2b8] sm:$0xf]
  %v1626 = vld [vmem:[%s2 + $0x2bc] sm:$0xf]
  %v1643 = vunpack.c.l.b16 %v1611
  %v1644 = vunpack.c.l.b16 %v1612
  %v1645 = vunpack.c.l.b16 %v1613
  %v1646 = vunpack.c.l.b16 %v1614
  %v1647 = vunpack.c.l.b16 %v1615
  %v1648 = vunpack.c.l.b16 %v1616
  %v1649 = vunpack.c.l.b16 %v1617
  %v1650 = vunpack.c.l.b16 %v1618
  %v1651 = vunpack.c.l.b16 %v1619
  %v1652 = vunpack.c.l.b16 %v1620
  %v1653 = vunpack.c.l.b16 %v1621
  %v1654 = vunpack.c.l.b16 %v1622
  %v1655 = vunpack.c.l.b16 %v1623
  %v1656 = vunpack.c.l.b16 %v1624
  %v1657 = vunpack.c.l.b16 %v1625
  %v1658 = vunpack.c.l.b16 %v1626
  %v1659 = vpack.c.b16 %v1644, %v1643
  %v1660 = vpack.c.b16 %v1646, %v1645
  %v1661 = vpack.c.b16 %v1648, %v1647
  %v1662 = vpack.c.b16 %v1650, %v1649
  %v1663 = vpack.c.b16 %v1652, %v1651
  %v1664 = vpack.c.b16 %v1654, %v1653
  %v1665 = vpack.c.b16 %v1656, %v1655
  %v1666 = vpack.c.b16 %v1658, %v1657
  %1675 = vmatprep.subr.bf16.mxu0 0
  %1676 = vmatpush1.bf16.msra.mxu0 %v1659
  %1677 = vmatprep.subr.bf16.mxu0 0
  %1678 = vmatpush1.bf16.msra.mxu0 %v1660
  %1679 = vmatprep.subr.bf16.mxu0 0
  %1680 = vmatpush1.bf16.msra.mxu0 %v1661
  %1681 = vmatprep.subr.bf16.mxu0 0
  %1682 = vmatpush1.bf16.msra.mxu0 %v1662
  %1683 = vmatprep.subr.bf16.mxu0 0
  %1684 = vmatpush1.bf16.msra.mxu0 %v1663
  %1685 = vmatprep.subr.bf16.mxu0 0
  %1686 = vmatpush1.bf16.msra.mxu0 %v1664
  %1687 = vmatprep.subr.bf16.mxu0 0
  %1688 = vmatpush1.bf16.msra.mxu0 %v1665
  %1689 = vmatprep.subr.bf16.mxu0 0
  %1690 = vmatpush1.bf16.msra.mxu0 %v1666
  %1691 = vmatprep.subr.bf16.mxu0 0
  %1692 = vmatpush1.bf16.msra.mxu0 0
  %1693 = vmatprep.subr.bf16.mxu0 0
  %1694 = vmatpush1.bf16.msra.mxu0 0
  %1695 = vmatprep.subr.bf16.mxu0 0
  %1696 = vmatpush1.bf16.msra.mxu0 0
  %1697 = vmatprep.subr.bf16.mxu0 0
  %1698 = vmatpush1.bf16.msra.mxu0 0
  %1699 = vmatprep.subr.bf16.mxu0 0
  %1700 = vmatpush1.bf16.msra.mxu0 0
  %1701 = vmatprep.subr.bf16.mxu0 0
  %1702 = vmatpush1.bf16.msra.mxu0 0
  %1703 = vmatprep.subr.bf16.mxu0 0
  %1704 = vmatpush1.bf16.msra.mxu0 0
  %1705 = vmatprep.subr.bf16.mxu0 0
  %1706 = vmatpush1.bf16.msra.mxu0 0
  %1707 = vmatprep.mubr.bf16.mxu0 0
  %1708 = vmatmul.mubr.bf16.gmra.mrb[0].mxu0 %v1610
  %v1709 = vpop.f32.mrb[0].mxu0
  %v1710 = vadd.f32 0.0, %v1709
  %v1711 = vpop.f32.mrb[0].mxu0
  %v1712 = vpop.f32.mrb[0].mxu0
  %v1713 = vpop.f32.mrb[0].mxu0
  %1714 = vdwg.mxu0
  %v1715 = vadd.f32 %v1609, %v1710
  %v1716 = vpack.c.bf16 %v619, %v619
  %v1717 = vld [vmem:[%s2 + $0x2c0] sm:$0xf]
  %v1718 = vld [vmem:[%s2 + $0x2c4] sm:$0xf]
  %v1719 = vld [vmem:[%s2 + $0x2c8] sm:$0xf]
  %v1720 = vld [vmem:[%s2 + $0x2cc] sm:$0xf]
  %v1721 = vld [vmem:[%s2 + $0x2d0] sm:$0xf]
  %v1722 = vld [vmem:[%s2 + $0x2d4] sm:$0xf]
  %v1723 = vld [vmem:[%s2 + $0x2d8] sm:$0xf]
  %v1724 = vld [vmem:[%s2 + $0x2dc] sm:$0xf]
  %v1725 = vld [vmem:[%s2 + $0x2e0] sm:$0xf]
  %v1726 = vld [vmem:[%s2 + $0x2e4] sm:$0xf]
  %v1727 = vld [vmem:[%s2 + $0x2e8] sm:$0xf]
  %v1728 = vld [vmem:[%s2 + $0x2ec] sm:$0xf]
  %v1729 = vld [vmem:[%s2 + $0x2f0] sm:$0xf]
  %v1730 = vld [vmem:[%s2 + $0x2f4] sm:$0xf]
  %v1731 = vld [vmem:[%s2 + $0x2f8] sm:$0xf]
  %v1732 = vld [vmem:[%s2 + $0x2fc] sm:$0xf]
  %v1749 = vunpack.c.l.b16 %v1717
  %v1750 = vunpack.c.l.b16 %v1718
  %v1751 = vunpack.c.l.b16 %v1719
  %v1752 = vunpack.c.l.b16 %v1720
  %v1753 = vunpack.c.l.b16 %v1721
  %v1754 = vunpack.c.l.b16 %v1722
  %v1755 = vunpack.c.l.b16 %v1723
  %v1756 = vunpack.c.l.b16 %v1724
  %v1757 = vunpack.c.l.b16 %v1725
  %v1758 = vunpack.c.l.b16 %v1726
  %v1759 = vunpack.c.l.b16 %v1727
  %v1760 = vunpack.c.l.b16 %v1728
  %v1761 = vunpack.c.l.b16 %v1729
  %v1762 = vunpack.c.l.b16 %v1730
  %v1763 = vunpack.c.l.b16 %v1731
  %v1764 = vunpack.c.l.b16 %v1732
  %v1765 = vpack.c.b16 %v1750, %v1749
  %v1766 = vpack.c.b16 %v1752, %v1751
  %v1767 = vpack.c.b16 %v1754, %v1753
  %v1768 = vpack.c.b16 %v1756, %v1755
  %v1769 = vpack.c.b16 %v1758, %v1757
  %v1770 = vpack.c.b16 %v1760, %v1759
  %v1771 = vpack.c.b16 %v1762, %v1761
  %v1772 = vpack.c.b16 %v1764, %v1763
  %1781 = vmatprep.subr.bf16.mxu0 0
  %1782 = vmatpush1.bf16.msra.mxu0 %v1765
  %1783 = vmatprep.subr.bf16.mxu0 0
  %1784 = vmatpush1.bf16.msra.mxu0 %v1766
  %1785 = vmatprep.subr.bf16.mxu0 0
  %1786 = vmatpush1.bf16.msra.mxu0 %v1767
  %1787 = vmatprep.subr.bf16.mxu0 0
  %1788 = vmatpush1.bf16.msra.mxu0 %v1768
  %1789 = vmatprep.subr.bf16.mxu0 0
  %1790 = vmatpush1.bf16.msra.mxu0 %v1769
  %1791 = vmatprep.subr.bf16.mxu0 0
  %1792 = vmatpush1.bf16.msra.mxu0 %v1770
  %1793 = vmatprep.subr.bf16.mxu0 0
  %1794 = vmatpush1.bf16.msra.mxu0 %v1771
  %1795 = vmatprep.subr.bf16.mxu0 0
  %1796 = vmatpush1.bf16.msra.mxu0 %v1772
  %1797 = vmatprep.subr.bf16.mxu0 0
  %1798 = vmatpush1.bf16.msra.mxu0 0
  %1799 = vmatprep.subr.bf16.mxu0 0
  %1800 = vmatpush1.bf16.msra.mxu0 0
  %1801 = vmatprep.subr.bf16.mxu0 0
  %1802 = vmatpush1.bf16.msra.mxu0 0
  %1803 = vmatprep.subr.bf16.mxu0 0
  %1804 = vmatpush1.bf16.msra.mxu0 0
  %1805 = vmatprep.subr.bf16.mxu0 0
  %1806 = vmatpush1.bf16.msra.mxu0 0
  %1807 = vmatprep.subr.bf16.mxu0 0
  %1808 = vmatpush1.bf16.msra.mxu0 0
  %1809 = vmatprep.subr.bf16.mxu0 0
  %1810 = vmatpush1.bf16.msra.mxu0 0
  %1811 = vmatprep.subr.bf16.mxu0 0
  %1812 = vmatpush1.bf16.msra.mxu0 0
  %1813 = vmatprep.mubr.bf16.mxu0 0
  %1814 = vmatmul.mubr.bf16.gmra.mrb[0].mxu0 %v1716
  %v1815 = vpop.f32.mrb[0].mxu0
  %v1816 = vadd.f32 0.0, %v1815
  %v1817 = vpop.f32.mrb[0].mxu0
  %v1818 = vpop.f32.mrb[0].mxu0
  %v1819 = vpop.f32.mrb[0].mxu0
  %1820 = vdwg.mxu0
  %v1821 = vadd.f32 %v1715, %v1816
  %v1822 = vpack.c.bf16 %v620, %v620
  %v1823 = vld [vmem:[%s2 + $0x300] sm:$0xf]
  %v1824 = vld [vmem:[%s2 + $0x304] sm:$0xf]
  %v1825 = vld [vmem:[%s2 + $0x308] sm:$0xf]
  %v1826 = vld [vmem:[%s2 + $0x30c] sm:$0xf]
  %v1827 = vld [vmem:[%s2 + $0x310] sm:$0xf]
  %v1828 = vld [vmem:[%s2 + $0x314] sm:$0xf]
  %v1829 = vld [vmem:[%s2 + $0x318] sm:$0xf]
  %v1830 = vld [vmem:[%s2 + $0x31c] sm:$0xf]
  %v1831 = vld [vmem:[%s2 + $0x320] sm:$0xf]
  %v1832 = vld [vmem:[%s2 + $0x324] sm:$0xf]
  %v1833 = vld [vmem:[%s2 + $0x328] sm:$0xf]
  %v1834 = vld [vmem:[%s2 + $0x32c] sm:$0xf]
  %v1835 = vld [vmem:[%s2 + $0x330] sm:$0xf]
  %v1836 = vld [vmem:[%s2 + $0x334] sm:$0xf]
  %v1837 = vld [vmem:[%s2 + $0x338] sm:$0xf]
  %v1838 = vld [vmem:[%s2 + $0x33c] sm:$0xf]
  %v1855 = vunpack.c.l.b16 %v1823
  %v1856 = vunpack.c.l.b16 %v1824
  %v1857 = vunpack.c.l.b16 %v1825
  %v1858 = vunpack.c.l.b16 %v1826
  %v1859 = vunpack.c.l.b16 %v1827
  %v1860 = vunpack.c.l.b16 %v1828
  %v1861 = vunpack.c.l.b16 %v1829
  %v1862 = vunpack.c.l.b16 %v1830
  %v1863 = vunpack.c.l.b16 %v1831
  %v1864 = vunpack.c.l.b16 %v1832
  %v1865 = vunpack.c.l.b16 %v1833
  %v1866 = vunpack.c.l.b16 %v1834
  %v1867 = vunpack.c.l.b16 %v1835
  %v1868 = vunpack.c.l.b16 %v1836
  %v1869 = vunpack.c.l.b16 %v1837
  %v1870 = vunpack.c.l.b16 %v1838
  %v1871 = vpack.c.b16 %v1856, %v1855
  %v1872 = vpack.c.b16 %v1858, %v1857
  %v1873 = vpack.c.b16 %v1860, %v1859
  %v1874 = vpack.c.b16 %v1862, %v1861
  %v1875 = vpack.c.b16 %v1864, %v1863
  %v1876 = vpack.c.b16 %v1866, %v1865
  %v1877 = vpack.c.b16 %v1868, %v1867
  %v1878 = vpack.c.b16 %v1870, %v1869
  %1887 = vmatprep.subr.bf16.mxu0 0
  %1888 = vmatpush1.bf16.msra.mxu0 %v1871
  %1889 = vmatprep.subr.bf16.mxu0 0
  %1890 = vmatpush1.bf16.msra.mxu0 %v1872
  %1891 = vmatprep.subr.bf16.mxu0 0
  %1892 = vmatpush1.bf16.msra.mxu0 %v1873
  %1893 = vmatprep.subr.bf16.mxu0 0
  %1894 = vmatpush1.bf16.msra.mxu0 %v1874
  %1895 = vmatprep.subr.bf16.mxu0 0
  %1896 = vmatpush1.bf16.msra.mxu0 %v1875
  %1897 = vmatprep.subr.bf16.mxu0 0
  %1898 = vmatpush1.bf16.msra.mxu0 %v1876
  %1899 = vmatprep.subr.bf16.mxu0 0
  %1900 = vmatpush1.bf16.msra.mxu0 %v1877
  %1901 = vmatprep.subr.bf16.mxu0 0
  %1902 = vmatpush1.bf16.msra.mxu0 %v1878
  %1903 = vmatprep.subr.bf16.mxu0 0
  %1904 = vmatpush1.bf16.msra.mxu0 0
  %1905 = vmatprep.subr.bf16.mxu0 0
  %1906 = vmatpush1.bf16.msra.mxu0 0
  %1907 = vmatprep.subr.bf16.mxu0 0
  %1908 = vmatpush1.bf16.msra.mxu0 0
  %1909 = vmatprep.subr.bf16.mxu0 0
  %1910 = vmatpush1.bf16.msra.mxu0 0
  %1911 = vmatprep.subr.bf16.mxu0 0
  %1912 = vmatpush1.bf16.msra.mxu0 0
  %1913 = vmatprep.subr.bf16.mxu0 0
  %1914 = vmatpush1.bf16.msra.mxu0 0
  %1915 = vmatprep.subr.bf16.mxu0 0
  %1916 = vmatpush1.bf16.msra.mxu0 0
  %1917 = vmatprep.subr.bf16.mxu0 0
  %1918 = vmatpush1.bf16.msra.mxu0 0
  %1919 = vmatprep.mubr.bf16.mxu0 0
  %1920 = vmatmul.mubr.bf16.gmra.mrb[0].mxu0 %v1822
  %v1921 = vpop.f32.mrb[0].mxu0
  %v1922 = vadd.f32 0.0, %v1921
  %v1923 = vpop.f32.mrb[0].mxu0
  %v1924 = vpop.f32.mrb[0].mxu0
  %v1925 = vpop.f32.mrb[0].mxu0
  %1926 = vdwg.mxu0
  %v1927 = vadd.f32 %v1821, %v1922
  %v1928 = vpack.c.bf16 %v621, %v621
  %v1929 = vld [vmem:[%s2 + $0x340] sm:$0xf]
  %v1930 = vld [vmem:[%s2 + $0x344] sm:$0xf]
  %v1931 = vld [vmem:[%s2 + $0x348] sm:$0xf]
  %v1932 = vld [vmem:[%s2 + $0x34c] sm:$0xf]
  %v1933 = vld [vmem:[%s2 + $0x350] sm:$0xf]
  %v1934 = vld [vmem:[%s2 + $0x354] sm:$0xf]
  %v1935 = vld [vmem:[%s2 + $0x358] sm:$0xf]
  %v1936 = vld [vmem:[%s2 + $0x35c] sm:$0xf]
  %v1937 = vld [vmem:[%s2 + $0x360] sm:$0xf]
  %v1938 = vld [vmem:[%s2 + $0x364] sm:$0xf]
  %v1939 = vld [vmem:[%s2 + $0x368] sm:$0xf]
  %v1940 = vld [vmem:[%s2 + $0x36c] sm:$0xf]
  %v1941 = vld [vmem:[%s2 + $0x370] sm:$0xf]
  %v1942 = vld [vmem:[%s2 + $0x374] sm:$0xf]
  %v1943 = vld [vmem:[%s2 + $0x378] sm:$0xf]
  %v1944 = vld [vmem:[%s2 + $0x37c] sm:$0xf]
  %v1961 = vunpack.c.l.b16 %v1929
  %v1962 = vunpack.c.l.b16 %v1930
  %v1963 = vunpack.c.l.b16 %v1931
  %v1964 = vunpack.c.l.b16 %v1932
  %v1965 = vunpack.c.l.b16 %v1933
  %v1966 = vunpack.c.l.b16 %v1934
  %v1967 = vunpack.c.l.b16 %v1935
  %v1968 = vunpack.c.l.b16 %v1936
  %v1969 = vunpack.c.l.b16 %v1937
  %v1970 = vunpack.c.l.b16 %v1938
  %v1971 = vunpack.c.l.b16 %v1939
  %v1972 = vunpack.c.l.b16 %v1940
  %v1973 = vunpack.c.l.b16 %v1941
  %v1974 = vunpack.c.l.b16 %v1942
  %v1975 = vunpack.c.l.b16 %v1943
  %v1976 = vunpack.c.l.b16 %v1944
  %v1977 = vpack.c.b16 %v1962, %v1961
  %v1978 = vpack.c.b16 %v1964, %v1963
  %v1979 = vpack.c.b16 %v1966, %v1965
  %v1980 = vpack.c.b16 %v1968, %v1967
  %v1981 = vpack.c.b16 %v1970, %v1969
  %v1982 = vpack.c.b16 %v1972, %v1971
  %v1983 = vpack.c.b16 %v1974, %v1973
  %v1984 = vpack.c.b16 %v1976, %v1975
  %1993 = vmatprep.subr.bf16.mxu0 0
  %1994 = vmatpush1.bf16.msra.mxu0 %v1977
  %1995 = vmatprep.subr.bf16.mxu0 0
  %1996 = vmatpush1.bf16.msra.mxu0 %v1978
  %1997 = vmatprep.subr.bf16.mxu0 0
  %1998 = vmatpush1.bf16.msra.mxu0 %v1979
  %1999 = vmatprep.subr.bf16.mxu0 0
  %2000 = vmatpush1.bf16.msra.mxu0 %v1980
  %2001 = vmatprep.subr.bf16.mxu0 0
  %2002 = vmatpush1.bf16.msra.mxu0 %v1981
  %2003 = vmatprep.subr.bf16.mxu0 0
  %2004 = vmatpush1.bf16.msra.mxu0 %v1982
  %2005 = vmatprep.subr.bf16.mxu0 0
  %2006 = vmatpush1.bf16.msra.mxu0 %v1983
  %2007 = vmatprep.subr.bf16.mxu0 0
  %2008 = vmatpush1.bf16.msra.mxu0 %v1984
  %2009 = vmatprep.subr.bf16.mxu0 0
  %2010 = vmatpush1.bf16.msra.mxu0 0
  %2011 = vmatprep.subr.bf16.mxu0 0
  %2012 = vmatpush1.bf16.msra.mxu0 0
  %2013 = vmatprep.subr.bf16.mxu0 0
  %2014 = vmatpush1.bf16.msra.mxu0 0
  %2015 = vmatprep.subr.bf16.mxu0 0
  %2016 = vmatpush1.bf16.msra.mxu0 0
  %2017 = vmatprep.subr.bf16.mxu0 0
  %2018 = vmatpush1.bf16.msra.mxu0 0
  %2019 = vmatprep.subr.bf16.mxu0 0
  %2020 = vmatpush1.bf16.msra.mxu0 0
  %2021 = vmatprep.subr.bf16.mxu0 0
  %2022 = vmatpush1.bf16.msra.mxu0 0
  %2023 = vmatprep.subr.bf16.mxu0 0
  %2024 = vmatpush1.bf16.msra.mxu0 0
  %2025 = vmatprep.mubr.bf16.mxu0 0
  %2026 = vmatmul.mubr.bf16.gmra.mrb[0].mxu0 %v1928
  %v2027 = vpop.f32.mrb[0].mxu0
  %v2028 = vadd.f32 0.0, %v2027
  %v2029 = vpop.f32.mrb[0].mxu0
  %v2030 = vpop.f32.mrb[0].mxu0
  %v2031 = vpop.f32.mrb[0].mxu0
  %2032 = vdwg.mxu0
  %v2033 = vadd.f32 %v1927, %v2028
  %v2034 = vpack.c.bf16 %v622, %v622
  %v2035 = vld [vmem:[%s2 + $0x380] sm:$0xf]
  %v2036 = vld [vmem:[%s2 + $0x384] sm:$0xf]
  %v2037 = vld [vmem:[%s2 + $0x388] sm:$0xf]
  %v2038 = vld [vmem:[%s2 + $0x38c] sm:$0xf]
  %v2039 = vld [vmem:[%s2 + $0x390] sm:$0xf]
  %v2040 = vld [vmem:[%s2 + $0x394] sm:$0xf]
  %v2041 = vld [vmem:[%s2 + $0x398] sm:$0xf]
  %v2042 = vld [vmem:[%s2 + $0x39c] sm:$0xf]
  %v2043 = vld [vmem:[%s2 + $0x3a0] sm:$0xf]
  %v2044 = vld [vmem:[%s2 + $0x3a4] sm:$0xf]
  %v2045 = vld [vmem:[%s2 + $0x3a8] sm:$0xf]
  %v2046 = vld [vmem:[%s2 + $0x3ac] sm:$0xf]
  %v2047 = vld [vmem:[%s2 + $0x3b0] sm:$0xf]
  %v2048 = vld [vmem:[%s2 + $0x3b4] sm:$0xf]
  %v2049 = vld [vmem:[%s2 + $0x3b8] sm:$0xf]
  %v2050 = vld [vmem:[%s2 + $0x3bc] sm:$0xf]
  %v2067 = vunpack.c.l.b16 %v2035
  %v2068 = vunpack.c.l.b16 %v2036
  %v2069 = vunpack.c.l.b16 %v2037
  %v2070 = vunpack.c.l.b16 %v2038
  %v2071 = vunpack.c.l.b16 %v2039
  %v2072 = vunpack.c.l.b16 %v2040
  %v2073 = vunpack.c.l.b16 %v2041
  %v2074 = vunpack.c.l.b16 %v2042
  %v2075 = vunpack.c.l.b16 %v2043
  %v2076 = vunpack.c.l.b16 %v2044
  %v2077 = vunpack.c.l.b16 %v2045
  %v2078 = vunpack.c.l.b16 %v2046
  %v2079 = vunpack.c.l.b16 %v2047
  %v2080 = vunpack.c.l.b16 %v2048
  %v2081 = vunpack.c.l.b16 %v2049
  %v2082 = vunpack.c.l.b16 %v2050
  %v2083 = vpack.c.b16 %v2068, %v2067
  %v2084 = vpack.c.b16 %v2070, %v2069
  %v2085 = vpack.c.b16 %v2072, %v2071
  %v2086 = vpack.c.b16 %v2074, %v2073
  %v2087 = vpack.c.b16 %v2076, %v2075
  %v2088 = vpack.c.b16 %v2078, %v2077
  %v2089 = vpack.c.b16 %v2080, %v2079
  %v2090 = vpack.c.b16 %v2082, %v2081
  %2099 = vmatprep.subr.bf16.mxu0 0
  %2100 = vmatpush1.bf16.msra.mxu0 %v2083
  %2101 = vmatprep.subr.bf16.mxu0 0
  %2102 = vmatpush1.bf16.msra.mxu0 %v2084
  %2103 = vmatprep.subr.bf16.mxu0 0
  %2104 = vmatpush1.bf16.msra.mxu0 %v2085
  %2105 = vmatprep.subr.bf16.mxu0 0
  %2106 = vmatpush1.bf16.msra.mxu0 %v2086
  %2107 = vmatprep.subr.bf16.mxu0 0
  %2108 = vmatpush1.bf16.msra.mxu0 %v2087
  %2109 = vmatprep.subr.bf16.mxu0 0
  %2110 = vmatpush1.bf16.msra.mxu0 %v2088
  %2111 = vmatprep.subr.bf16.mxu0 0
  %2112 = vmatpush1.bf16.msra.mxu0 %v2089
  %2113 = vmatprep.subr.bf16.mxu0 0
  %2114 = vmatpush1.bf16.msra.mxu0 %v2090
  %2115 = vmatprep.subr.bf16.mxu0 0
  %2116 = vmatpush1.bf16.msra.mxu0 0
  %2117 = vmatprep.subr.bf16.mxu0 0
  %2118 = vmatpush1.bf16.msra.mxu0 0
  %2119 = vmatprep.subr.bf16.mxu0 0
  %2120 = vmatpush1.bf16.msra.mxu0 0
  %2121 = vmatprep.subr.bf16.mxu0 0
  %2122 = vmatpush1.bf16.msra.mxu0 0
  %2123 = vmatprep.subr.bf16.mxu0 0
  %2124 = vmatpush1.bf16.msra.mxu0 0
  %2125 = vmatprep.subr.bf16.mxu0 0
  %2126 = vmatpush1.bf16.msra.mxu0 0
  %2127 = vmatprep.subr.bf16.mxu0 0
  %2128 = vmatpush1.bf16.msra.mxu0 0
  %2129 = vmatprep.subr.bf16.mxu0 0
  %2130 = vmatpush1.bf16.msra.mxu0 0
  %2131 = vmatprep.mubr.bf16.mxu0 0
  %2132 = vmatmul.mubr.bf16.gmra.mrb[0].mxu0 %v2034
  %v2133 = vpop.f32.mrb[0].mxu0
  %v2134 = vadd.f32 0.0, %v2133
  %v2135 = vpop.f32.mrb[0].mxu0
  %v2136 = vpop.f32.mrb[0].mxu0
  %v2137 = vpop.f32.mrb[0].mxu0
  %2138 = vdwg.mxu0
  %v2139 = vadd.f32 %v2033, %v2134
  %v2140 = vpack.c.bf16 %v623, %v623
  %v2141 = vld [vmem:[%s2 + $0x3c0] sm:$0xf]
  %v2142 = vld [vmem:[%s2 + $0x3c4] sm:$0xf]
  %v2143 = vld [vmem:[%s2 + $0x3c8] sm:$0xf]
  %v2144 = vld [vmem:[%s2 + $0x3cc] sm:$0xf]
  %v2145 = vld [vmem:[%s2 + $0x3d0] sm:$0xf]
  %v2146 = vld [vmem:[%s2 + $0x3d4] sm:$0xf]
  %v2147 = vld [vmem:[%s2 + $0x3d8] sm:$0xf]
  %v2148 = vld [vmem:[%s2 + $0x3dc] sm:$0xf]
  %v2149 = vld [vmem:[%s2 + $0x3e0] sm:$0xf]
  %v2150 = vld [vmem:[%s2 + $0x3e4] sm:$0xf]
  %v2151 = vld [vmem:[%s2 + $0x3e8] sm:$0xf]
  %v2152 = vld [vmem:[%s2 + $0x3ec] sm:$0xf]
  %v2153 = vld [vmem:[%s2 + $0x3f0] sm:$0xf]
  %v2154 = vld [vmem:[%s2 + $0x3f4] sm:$0xf]
  %v2155 = vld [vmem:[%s2 + $0x3f8] sm:$0xf]
  %v2156 = vld [vmem:[%s2 + $0x3fc] sm:$0xf]
  %v2173 = vunpack.c.l.b16 %v2141
  %v2174 = vunpack.c.l.b16 %v2142
  %v2175 = vunpack.c.l.b16 %v2143
  %v2176 = vunpack.c.l.b16 %v2144
  %v2177 = vunpack.c.l.b16 %v2145
  %v2178 = vunpack.c.l.b16 %v2146
  %v2179 = vunpack.c.l.b16 %v2147
  %v2180 = vunpack.c.l.b16 %v2148
  %v2181 = vunpack.c.l.b16 %v2149
  %v2182 = vunpack.c.l.b16 %v2150
  %v2183 = vunpack.c.l.b16 %v2151
  %v2184 = vunpack.c.l.b16 %v2152
  %v2185 = vunpack.c.l.b16 %v2153
  %v2186 = vunpack.c.l.b16 %v2154
  %v2187 = vunpack.c.l.b16 %v2155
  %v2188 = vunpack.c.l.b16 %v2156
  %v2189 = vpack.c.b16 %v2174, %v2173
  %v2190 = vpack.c.b16 %v2176, %v2175
  %v2191 = vpack.c.b16 %v2178, %v2177
  %v2192 = vpack.c.b16 %v2180, %v2179
  %v2193 = vpack.c.b16 %v2182, %v2181
  %v2194 = vpack.c.b16 %v2184, %v2183
  %v2195 = vpack.c.b16 %v2186, %v2185
  %v2196 = vpack.c.b16 %v2188, %v2187
  %2205 = vmatprep.subr.bf16.mxu0 0
  %2206 = vmatpush1.bf16.msra.mxu0 %v2189
  %2207 = vmatprep.subr.bf16.mxu0 0
  %2208 = vmatpush1.bf16.msra.mxu0 %v2190
  %2209 = vmatprep.subr.bf16.mxu0 0
  %2210 = vmatpush1.bf16.msra.mxu0 %v2191
  %2211 = vmatprep.subr.bf16.mxu0 0
  %2212 = vmatpush1.bf16.msra.mxu0 %v2192
  %2213 = vmatprep.subr.bf16.mxu0 0
  %2214 = vmatpush1.bf16.msra.mxu0 %v2193
  %2215 = vmatprep.subr.bf16.mxu0 0
  %2216 = vmatpush1.bf16.msra.mxu0 %v2194
  %2217 = vmatprep.subr.bf16.mxu0 0
  %2218 = vmatpush1.bf16.msra.mxu0 %v2195
  %2219 = vmatprep.subr.bf16.mxu0 0
  %2220 = vmatpush1.bf16.msra.mxu0 %v2196
  %2221 = vmatprep.subr.bf16.mxu0 0
  %2222 = vmatpush1.bf16.msra.mxu0 0
  %2223 = vmatprep.subr.bf16.mxu0 0
  %2224 = vmatpush1.bf16.msra.mxu0 0
  %2225 = vmatprep.subr.bf16.mxu0 0
  %2226 = vmatpush1.bf16.msra.mxu0 0
  %2227 = vmatprep.subr.bf16.mxu0 0
  %2228 = vmatpush1.bf16.msra.mxu0 0
  %2229 = vmatprep.subr.bf16.mxu0 0
  %2230 = vmatpush1.bf16.msra.mxu0 0
  %2231 = vmatprep.subr.bf16.mxu0 0
  %2232 = vmatpush1.bf16.msra.mxu0 0
  %2233 = vmatprep.subr.bf16.mxu0 0
  %2234 = vmatpush1.bf16.msra.mxu0 0
  %2235 = vmatprep.subr.bf16.mxu0 0
  %2236 = vmatpush1.bf16.msra.mxu0 0
  %2237 = vmatprep.mubr.bf16.mxu0 0
  %2238 = vmatmul.mubr.bf16.gmra.mrb[0].mxu0 %v2140
  %v2239 = vpop.f32.mrb[0].mxu0
  %v2240 = vadd.f32 0.0, %v2239
  %v2241 = vpop.f32.mrb[0].mxu0
  %v2242 = vpop.f32.mrb[0].mxu0
  %v2243 = vpop.f32.mrb[0].mxu0
  %2244 = vdwg.mxu0
  %v2245 = vadd.f32 %v2139, %v2240
  %v2246 = vpack.c.bf16 %v624, %v624
  %v2247 = vld [vmem:[%s2 + $0x400] sm:$0xf]
  %v2248 = vld [vmem:[%s2 + $0x404] sm:$0xf]
  %v2249 = vld [vmem:[%s2 + $0x408] sm:$0xf]
  %v2250 = vld [vmem:[%s2 + $0x40c] sm:$0xf]
  %v2251 = vld [vmem:[%s2 + $0x410] sm:$0xf]
  %v2252 = vld [vmem:[%s2 + $0x414] sm:$0xf]
  %v2253 = vld [vmem:[%s2 + $0x418] sm:$0xf]
  %v2254 = vld [vmem:[%s2 + $0x41c] sm:$0xf]
  %v2255 = vld [vmem:[%s2 + $0x420] sm:$0xf]
  %v2256 = vld [vmem:[%s2 + $0x424] sm:$0xf]
  %v2257 = vld [vmem:[%s2 + $0x428] sm:$0xf]
  %v2258 = vld [vmem:[%s2 + $0x42c] sm:$0xf]
  %v2259 = vld [vmem:[%s2 + $0x430] sm:$0xf]
  %v2260 = vld [vmem:[%s2 + $0x434] sm:$0xf]
  %v2261 = vld [vmem:[%s2 + $0x438] sm:$0xf]
  %v2262 = vld [vmem:[%s2 + $0x43c] sm:$0xf]
  %v2279 = vunpack.c.l.b16 %v2247
  %v2280 = vunpack.c.l.b16 %v2248
  %v2281 = vunpack.c.l.b16 %v2249
  %v2282 = vunpack.c.l.b16 %v2250
  %v2283 = vunpack.c.l.b16 %v2251
  %v2284 = vunpack.c.l.b16 %v2252
  %v2285 = vunpack.c.l.b16 %v2253
  %v2286 = vunpack.c.l.b16 %v2254
  %v2287 = vunpack.c.l.b16 %v2255
  %v2288 = vunpack.c.l.b16 %v2256
  %v2289 = vunpack.c.l.b16 %v2257
  %v2290 = vunpack.c.l.b16 %v2258
  %v2291 = vunpack.c.l.b16 %v2259
  %v2292 = vunpack.c.l.b16 %v2260
  %v2293 = vunpack.c.l.b16 %v2261
  %v2294 = vunpack.c.l.b16 %v2262
  %v2295 = vpack.c.b16 %v2280, %v2279
  %v2296 = vpack.c.b16 %v2282, %v2281
  %v2297 = vpack.c.b16 %v2284, %v2283
  %v2298 = vpack.c.b16 %v2286, %v2285
  %v2299 = vpack.c.b16 %v2288, %v2287
  %v2300 = vpack.c.b16 %v2290, %v2289
  %v2301 = vpack.c.b16 %v2292, %v2291
  %v2302 = vpack.c.b16 %v2294, %v2293
  %2311 = vmatprep.subr.bf16.mxu0 0
  %2312 = vmatpush1.bf16.msra.mxu0 %v2295
  %2313 = vmatprep.subr.bf16.mxu0 0
  %2314 = vmatpush1.bf16.msra.mxu0 %v2296
  %2315 = vmatprep.subr.bf16.mxu0 0
  %2316 = vmatpush1.bf16.msra.mxu0 %v2297
  %2317 = vmatprep.subr.bf16.mxu0 0
  %2318 = vmatpush1.bf16.msra.mxu0 %v2298
  %2319 = vmatprep.subr.bf16.mxu0 0
  %2320 = vmatpush1.bf16.msra.mxu0 %v2299
  %2321 = vmatprep.subr.bf16.mxu0 0
  %2322 = vmatpush1.bf16.msra.mxu0 %v2300
  %2323 = vmatprep.subr.bf16.mxu0 0
  %2324 = vmatpush1.bf16.msra.mxu0 %v2301
  %2325 = vmatprep.subr.bf16.mxu0 0
  %2326 = vmatpush1.bf16.msra.mxu0 %v2302
  %2327 = vmatprep.subr.bf16.mxu0 0
  %2328 = vmatpush1.bf16.msra.mxu0 0
  %2329 = vmatprep.subr.bf16.mxu0 0
  %2330 = vmatpush1.bf16.msra.mxu0 0
  %2331 = vmatprep.subr.bf16.mxu0 0
  %2332 = vmatpush1.bf16.msra.mxu0 0
  %2333 = vmatprep.subr.bf16.mxu0 0
  %2334 = vmatpush1.bf16.msra.mxu0 0
  %2335 = vmatprep.subr.bf16.mxu0 0
  %2336 = vmatpush1.bf16.msra.mxu0 0
  %2337 = vmatprep.subr.bf16.mxu0 0
  %2338 = vmatpush1.bf16.msra.mxu0 0
  %2339 = vmatprep.subr.bf16.mxu0 0
  %2340 = vmatpush1.bf16.msra.mxu0 0
  %2341 = vmatprep.subr.bf16.mxu0 0
  %2342 = vmatpush1.bf16.msra.mxu0 0
  %2343 = vmatprep.mubr.bf16.mxu0 0
  %2344 = vmatmul.mubr.bf16.gmra.mrb[0].mxu0 %v2246
  %v2345 = vpop.f32.mrb[0].mxu0
  %v2346 = vadd.f32 0.0, %v2345
  %v2347 = vpop.f32.mrb[0].mxu0
  %v2348 = vpop.f32.mrb[0].mxu0
  %v2349 = vpop.f32.mrb[0].mxu0
  %2350 = vdwg.mxu0
  %v2351 = vadd.f32 %v2245, %v2346
  %v2352 = vpack.c.bf16 %v625, %v625
  %v2353 = vld [vmem:[%s2 + $0x440] sm:$0xf]
  %v2354 = vld [vmem:[%s2 + $0x444] sm:$0xf]
  %v2355 = vld [vmem:[%s2 + $0x448] sm:$0xf]
  %v2356 = vld [vmem:[%s2 + $0x44c] sm:$0xf]
  %v2357 = vld [vmem:[%s2 + $0x450] sm:$0xf]
  %v2358 = vld [vmem:[%s2 + $0x454] sm:$0xf]
  %v2359 = vld [vmem:[%s2 + $0x458] sm:$0xf]
  %v2360 = vld [vmem:[%s2 + $0x45c] sm:$0xf]
  %v2361 = vld [vmem:[%s2 + $0x460] sm:$0xf]
  %v2362 = vld [vmem:[%s2 + $0x464] sm:$0xf]
  %v2363 = vld [vmem:[%s2 + $0x468] sm:$0xf]
  %v2364 = vld [vmem:[%s2 + $0x46c] sm:$0xf]
  %v2365 = vld [vmem:[%s2 + $0x470] sm:$0xf]
  %v2366 = vld [vmem:[%s2 + $0x474] sm:$0xf]
  %v2367 = vld [vmem:[%s2 + $0x478] sm:$0xf]
  %v2368 = vld [vmem:[%s2 + $0x47c] sm:$0xf]
  %v2385 = vunpack.c.l.b16 %v2353
  %v2386 = vunpack.c.l.b16 %v2354
  %v2387 = vunpack.c.l.b16 %v2355
  %v2388 = vunpack.c.l.b16 %v2356
  %v2389 = vunpack.c.l.b16 %v2357
  %v2390 = vunpack.c.l.b16 %v2358
  %v2391 = vunpack.c.l.b16 %v2359
  %v2392 = vunpack.c.l.b16 %v2360
  %v2393 = vunpack.c.l.b16 %v2361
  %v2394 = vunpack.c.l.b16 %v2362
  %v2395 = vunpack.c.l.b16 %v2363
  %v2396 = vunpack.c.l.b16 %v2364
  %v2397 = vunpack.c.l.b16 %v2365
  %v2398 = vunpack.c.l.b16 %v2366
  %v2399 = vunpack.c.l.b16 %v2367
  %v2400 = vunpack.c.l.b16 %v2368
  %v2401 = vpack.c.b16 %v2386, %v2385
  %v2402 = vpack.c.b16 %v2388, %v2387
  %v2403 = vpack.c.b16 %v2390, %v2389
  %v2404 = vpack.c.b16 %v2392, %v2391
  %v2405 = vpack.c.b16 %v2394, %v2393
  %v2406 = vpack.c.b16 %v2396, %v2395
  %v2407 = vpack.c.b16 %v2398, %v2397
  %v2408 = vpack.c.b16 %v2400, %v2399
  %2417 = vmatprep.subr.bf16.mxu0 0
  %2418 = vmatpush1.bf16.msra.mxu0 %v2401
  %2419 = vmatprep.subr.bf16.mxu0 0
  %2420 = vmatpush1.bf16.msra.mxu0 %v2402
  %2421 = vmatprep.subr.bf16.mxu0 0
  %2422 = vmatpush1.bf16.msra.mxu0 %v2403
  %2423 = vmatprep.subr.bf16.mxu0 0
  %2424 = vmatpush1.bf16.msra.mxu0 %v2404
  %2425 = vmatprep.subr.bf16.mxu0 0
  %2426 = vmatpush1.bf16.msra.mxu0 %v2405
  %2427 = vmatprep.subr.bf16.mxu0 0
  %2428 = vmatpush1.bf16.msra.mxu0 %v2406
  %2429 = vmatprep.subr.bf16.mxu0 0
  %2430 = vmatpush1.bf16.msra.mxu0 %v2407
  %2431 = vmatprep.subr.bf16.mxu0 0
  %2432 = vmatpush1.bf16.msra.mxu0 %v2408
  %2433 = vmatprep.subr.bf16.mxu0 0
  %2434 = vmatpush1.bf16.msra.mxu0 0
  %2435 = vmatprep.subr.bf16.mxu0 0
  %2436 = vmatpush1.bf16.msra.mxu0 0
  %2437 = vmatprep.subr.bf16.mxu0 0
  %2438 = vmatpush1.bf16.msra.mxu0 0
  %2439 = vmatprep.subr.bf16.mxu0 0
  %2440 = vmatpush1.bf16.msra.mxu0 0
  %2441 = vmatprep.subr.bf16.mxu0 0
  %2442 = vmatpush1.bf16.msra.mxu0 0
  %2443 = vmatprep.subr.bf16.mxu0 0
  %2444 = vmatpush1.bf16.msra.mxu0 0
  %2445 = vmatprep.subr.bf16.mxu0 0
  %2446 = vmatpush1.bf16.msra.mxu0 0
  %2447 = vmatprep.subr.bf16.mxu0 0
  %2448 = vmatpush1.bf16.msra.mxu0 0
  %2449 = vmatprep.mubr.bf16.mxu0 0
  %2450 = vmatmul.mubr.bf16.gmra.mrb[0].mxu0 %v2352
  %v2451 = vpop.f32.mrb[0].mxu0
  %v2452 = vadd.f32 0.0, %v2451
  %v2453 = vpop.f32.mrb[0].mxu0
  %v2454 = vpop.f32.mrb[0].mxu0
  %v2455 = vpop.f32.mrb[0].mxu0
  %2456 = vdwg.mxu0
  %v2457 = vadd.f32 %v2351, %v2452
  %v2458 = vpack.c.bf16 %v626, %v626
  %v2459 = vld [vmem:[%s2 + $0x480] sm:$0xf]
  %v2460 = vld [vmem:[%s2 + $0x484] sm:$0xf]
  %v2461 = vld [vmem:[%s2 + $0x488] sm:$0xf]
  %v2462 = vld [vmem:[%s2 + $0x48c] sm:$0xf]
  %v2463 = vld [vmem:[%s2 + $0x490] sm:$0xf]
  %v2464 = vld [vmem:[%s2 + $0x494] sm:$0xf]
  %v2465 = vld [vmem:[%s2 + $0x498] sm:$0xf]
  %v2466 = vld [vmem:[%s2 + $0x49c] sm:$0xf]
  %v2467 = vld [vmem:[%s2 + $0x4a0] sm:$0xf]
  %v2468 = vld [vmem:[%s2 + $0x4a4] sm:$0xf]
  %v2469 = vld [vmem:[%s2 + $0x4a8] sm:$0xf]
  %v2470 = vld [vmem:[%s2 + $0x4ac] sm:$0xf]
  %v2471 = vld [vmem:[%s2 + $0x4b0] sm:$0xf]
  %v2472 = vld [vmem:[%s2 + $0x4b4] sm:$0xf]
  %v2473 = vld [vmem:[%s2 + $0x4b8] sm:$0xf]
  %v2474 = vld [vmem:[%s2 + $0x4bc] sm:$0xf]
  %v2491 = vunpack.c.l.b16 %v2459
  %v2492 = vunpack.c.l.b16 %v2460
  %v2493 = vunpack.c.l.b16 %v2461
  %v2494 = vunpack.c.l.b16 %v2462
  %v2495 = vunpack.c.l.b16 %v2463
  %v2496 = vunpack.c.l.b16 %v2464
  %v2497 = vunpack.c.l.b16 %v2465
  %v2498 = vunpack.c.l.b16 %v2466
  %v2499 = vunpack.c.l.b16 %v2467
  %v2500 = vunpack.c.l.b16 %v2468
  %v2501 = vunpack.c.l.b16 %v2469
  %v2502 = vunpack.c.l.b16 %v2470
  %v2503 = vunpack.c.l.b16 %v2471
  %v2504 = vunpack.c.l.b16 %v2472
  %v2505 = vunpack.c.l.b16 %v2473
  %v2506 = vunpack.c.l.b16 %v2474
  %v2507 = vpack.c.b16 %v2492, %v2491
  %v2508 = vpack.c.b16 %v2494, %v2493
  %v2509 = vpack.c.b16 %v2496, %v2495
  %v2510 = vpack.c.b16 %v2498, %v2497
  %v2511 = vpack.c.b16 %v2500, %v2499
  %v2512 = vpack.c.b16 %v2502, %v2501
  %v2513 = vpack.c.b16 %v2504, %v2503
  %v2514 = vpack.c.b16 %v2506, %v2505
  %2523 = vmatprep.subr.bf16.mxu0 0
  %2524 = vmatpush1.bf16.msra.mxu0 %v2507
  %2525 = vmatprep.subr.bf16.mxu0 0
  %2526 = vmatpush1.bf16.msra.mxu0 %v2508
  %2527 = vmatprep.subr.bf16.mxu0 0
  %2528 = vmatpush1.bf16.msra.mxu0 %v2509
  %2529 = vmatprep.subr.bf16.mxu0 0
  %2530 = vmatpush1.bf16.msra.mxu0 %v2510
  %2531 = vmatprep.subr.bf16.mxu0 0
  %2532 = vmatpush1.bf16.msra.mxu0 %v2511
  %2533 = vmatprep.subr.bf16.mxu0 0
  %2534 = vmatpush1.bf16.msra.mxu0 %v2512
  %2535 = vmatprep.subr.bf16.mxu0 0
  %2536 = vmatpush1.bf16.msra.mxu0 %v2513
  %2537 = vmatprep.subr.bf16.mxu0 0
  %2538 = vmatpush1.bf16.msra.mxu0 %v2514
  %2539 = vmatprep.subr.bf16.mxu0 0
  %2540 = vmatpush1.bf16.msra.mxu0 0
  %2541 = vmatprep.subr.bf16.mxu0 0
  %2542 = vmatpush1.bf16.msra.mxu0 0
  %2543 = vmatprep.subr.bf16.mxu0 0
  %2544 = vmatpush1.bf16.msra.mxu0 0
  %2545 = vmatprep.subr.bf16.mxu0 0
  %2546 = vmatpush1.bf16.msra.mxu0 0
  %2547 = vmatprep.subr.bf16.mxu0 0
  %2548 = vmatpush1.bf16.msra.mxu0 0
  %2549 = vmatprep.subr.bf16.mxu0 0
  %2550 = vmatpush1.bf16.msra.mxu0 0
  %2551 = vmatprep.subr.bf16.mxu0 0
  %2552 = vmatpush1.bf16.msra.mxu0 0
  %2553 = vmatprep.subr.bf16.mxu0 0
  %2554 = vmatpush1.bf16.msra.mxu0 0
  %2555 = vmatprep.mubr.bf16.mxu0 0
  %2556 = vmatmul.mubr.bf16.gmra.mrb[0].mxu0 %v2458
  %v2557 = vpop.f32.mrb[0].mxu0
  %v2558 = vadd.f32 0.0, %v2557
  %v2559 = vpop.f32.mrb[0].mxu0
  %v2560 = vpop.f32.mrb[0].mxu0
  %v2561 = vpop.f32.mrb[0].mxu0
  %2562 = vdwg.mxu0
  %v2563 = vadd.f32 %v2457, %v2558
  %v2564 = vpack.c.bf16 %v627, %v627
  %v2565 = vld [vmem:[%s2 + $0x4c0] sm:$0xf]
  %v2566 = vld [vmem:[%s2 + $0x4c4] sm:$0xf]
  %v2567 = vld [vmem:[%s2 + $0x4c8] sm:$0xf]
  %v2568 = vld [vmem:[%s2 + $0x4cc] sm:$0xf]
  %v2569 = vld [vmem:[%s2 + $0x4d0] sm:$0xf]
  %v2570 = vld [vmem:[%s2 + $0x4d4] sm:$0xf]
  %v2571 = vld [vmem:[%s2 + $0x4d8] sm:$0xf]
  %v2572 = vld [vmem:[%s2 + $0x4dc] sm:$0xf]
  %v2573 = vld [vmem:[%s2 + $0x4e0] sm:$0xf]
  %v2574 = vld [vmem:[%s2 + $0x4e4] sm:$0xf]
  %v2575 = vld [vmem:[%s2 + $0x4e8] sm:$0xf]
  %v2576 = vld [vmem:[%s2 + $0x4ec] sm:$0xf]
  %v2577 = vld [vmem:[%s2 + $0x4f0] sm:$0xf]
  %v2578 = vld [vmem:[%s2 + $0x4f4] sm:$0xf]
  %v2579 = vld [vmem:[%s2 + $0x4f8] sm:$0xf]
  %v2580 = vld [vmem:[%s2 + $0x4fc] sm:$0xf]
  %v2597 = vunpack.c.l.b16 %v2565
  %v2598 = vunpack.c.l.b16 %v2566
  %v2599 = vunpack.c.l.b16 %v2567
  %v2600 = vunpack.c.l.b16 %v2568
  %v2601 = vunpack.c.l.b16 %v2569
  %v2602 = vunpack.c.l.b16 %v2570
  %v2603 = vunpack.c.l.b16 %v2571
  %v2604 = vunpack.c.l.b16 %v2572
  %v2605 = vunpack.c.l.b16 %v2573
  %v2606 = vunpack.c.l.b16 %v2574
  %v2607 = vunpack.c.l.b16 %v2575
  %v2608 = vunpack.c.l.b16 %v2576
  %v2609 = vunpack.c.l.b16 %v2577
  %v2610 = vunpack.c.l.b16 %v2578
  %v2611 = vunpack.c.l.b16 %v2579
  %v2612 = vunpack.c.l.b16 %v2580
  %v2613 = vpack.c.b16 %v2598, %v2597
  %v2614 = vpack.c.b16 %v2600, %v2599
  %v2615 = vpack.c.b16 %v2602, %v2601
  %v2616 = vpack.c.b16 %v2604, %v2603
  %v2617 = vpack.c.b16 %v2606, %v2605
  %v2618 = vpack.c.b16 %v2608, %v2607
  %v2619 = vpack.c.b16 %v2610, %v2609
  %v2620 = vpack.c.b16 %v2612, %v2611
  %2629 = vmatprep.subr.bf16.mxu0 0
  %2630 = vmatpush1.bf16.msra.mxu0 %v2613
  %2631 = vmatprep.subr.bf16.mxu0 0
  %2632 = vmatpush1.bf16.msra.mxu0 %v2614
  %2633 = vmatprep.subr.bf16.mxu0 0
  %2634 = vmatpush1.bf16.msra.mxu0 %v2615
  %2635 = vmatprep.subr.bf16.mxu0 0
  %2636 = vmatpush1.bf16.msra.mxu0 %v2616
  %2637 = vmatprep.subr.bf16.mxu0 0
  %2638 = vmatpush1.bf16.msra.mxu0 %v2617
  %2639 = vmatprep.subr.bf16.mxu0 0
  %2640 = vmatpush1.bf16.msra.mxu0 %v2618
  %2641 = vmatprep.subr.bf16.mxu0 0
  %2642 = vmatpush1.bf16.msra.mxu0 %v2619
  %2643 = vmatprep.subr.bf16.mxu0 0
  %2644 = vmatpush1.bf16.msra.mxu0 %v2620
  %2645 = vmatprep.subr.bf16.mxu0 0
  %2646 = vmatpush1.bf16.msra.mxu0 0
  %2647 = vmatprep.subr.bf16.mxu0 0
  %2648 = vmatpush1.bf16.msra.mxu0 0
  %2649 = vmatprep.subr.bf16.mxu0 0
  %2650 = vmatpush1.bf16.msra.mxu0 0
  %2651 = vmatprep.subr.bf16.mxu0 0
  %2652 = vmatpush1.bf16.msra.mxu0 0
  %2653 = vmatprep.subr.bf16.mxu0 0
  %2654 = vmatpush1.bf16.msra.mxu0 0
  %2655 = vmatprep.subr.bf16.mxu0 0
  %2656 = vmatpush1.bf16.msra.mxu0 0
  %2657 = vmatprep.subr.bf16.mxu0 0
  %2658 = vmatpush1.bf16.msra.mxu0 0
  %2659 = vmatprep.subr.bf16.mxu0 0
  %2660 = vmatpush1.bf16.msra.mxu0 0
  %2661 = vmatprep.mubr.bf16.mxu0 0
  %2662 = vmatmul.mubr.bf16.gmra.mrb[0].mxu0 %v2564
  %v2663 = vpop.f32.mrb[0].mxu0
  %v2664 = vadd.f32 0.0, %v2663
  %v2665 = vpop.f32.mrb[0].mxu0
  %v2666 = vpop.f32.mrb[0].mxu0
  %v2667 = vpop.f32.mrb[0].mxu0
  %2668 = vdwg.mxu0
  %v2669 = vadd.f32 %v2563, %v2664
  %v2670 = vpack.c.bf16 %v628, %v628
  %v2671 = vld [vmem:[%s2 + $0x500] sm:$0xf]
  %v2672 = vld [vmem:[%s2 + $0x504] sm:$0xf]
  %v2673 = vld [vmem:[%s2 + $0x508] sm:$0xf]
  %v2674 = vld [vmem:[%s2 + $0x50c] sm:$0xf]
  %v2675 = vld [vmem:[%s2 + $0x510] sm:$0xf]
  %v2676 = vld [vmem:[%s2 + $0x514] sm:$0xf]
  %v2677 = vld [vmem:[%s2 + $0x518] sm:$0xf]
  %v2678 = vld [vmem:[%s2 + $0x51c] sm:$0xf]
  %v2679 = vld [vmem:[%s2 + $0x520] sm:$0xf]
  %v2680 = vld [vmem:[%s2 + $0x524] sm:$0xf]
  %v2681 = vld [vmem:[%s2 + $0x528] sm:$0xf]
  %v2682 = vld [vmem:[%s2 + $0x52c] sm:$0xf]
  %v2683 = vld [vmem:[%s2 + $0x530] sm:$0xf]
  %v2684 = vld [vmem:[%s2 + $0x534] sm:$0xf]
  %v2685 = vld [vmem:[%s2 + $0x538] sm:$0xf]
  %v2686 = vld [vmem:[%s2 + $0x53c] sm:$0xf]
  %v2703 = vunpack.c.l.b16 %v2671
  %v2704 = vunpack.c.l.b16 %v2672
  %v2705 = vunpack.c.l.b16 %v2673
  %v2706 = vunpack.c.l.b16 %v2674
  %v2707 = vunpack.c.l.b16 %v2675
  %v2708 = vunpack.c.l.b16 %v2676
  %v2709 = vunpack.c.l.b16 %v2677
  %v2710 = vunpack.c.l.b16 %v2678
  %v2711 = vunpack.c.l.b16 %v2679
  %v2712 = vunpack.c.l.b16 %v2680
  %v2713 = vunpack.c.l.b16 %v2681
  %v2714 = vunpack.c.l.b16 %v2682
  %v2715 = vunpack.c.l.b16 %v2683
  %v2716 = vunpack.c.l.b16 %v2684
  %v2717 = vunpack.c.l.b16 %v2685
  %v2718 = vunpack.c.l.b16 %v2686
  %v2719 = vpack.c.b16 %v2704, %v2703
  %v2720 = vpack.c.b16 %v2706, %v2705
  %v2721 = vpack.c.b16 %v2708, %v2707
  %v2722 = vpack.c.b16 %v2710, %v2709
  %v2723 = vpack.c.b16 %v2712, %v2711
  %v2724 = vpack.c.b16 %v2714, %v2713
  %v2725 = vpack.c.b16 %v2716, %v2715
  %v2726 = vpack.c.b16 %v2718, %v2717
  %2735 = vmatprep.subr.bf16.mxu0 0
  %2736 = vmatpush1.bf16.msra.mxu0 %v2719
  %2737 = vmatprep.subr.bf16.mxu0 0
  %2738 = vmatpush1.bf16.msra.mxu0 %v2720
  %2739 = vmatprep.subr.bf16.mxu0 0
  %2740 = vmatpush1.bf16.msra.mxu0 %v2721
  %2741 = vmatprep.subr.bf16.mxu0 0
  %2742 = vmatpush1.bf16.msra.mxu0 %v2722
  %2743 = vmatprep.subr.bf16.mxu0 0
  %2744 = vmatpush1.bf16.msra.mxu0 %v2723
  %2745 = vmatprep.subr.bf16.mxu0 0
  %2746 = vmatpush1.bf16.msra.mxu0 %v2724
  %2747 = vmatprep.subr.bf16.mxu0 0
  %2748 = vmatpush1.bf16.msra.mxu0 %v2725
  %2749 = vmatprep.subr.bf16.mxu0 0
  %2750 = vmatpush1.bf16.msra.mxu0 %v2726
  %2751 = vmatprep.subr.bf16.mxu0 0
  %2752 = vmatpush1.bf16.msra.mxu0 0
  %2753 = vmatprep.subr.bf16.mxu0 0
  %2754 = vmatpush1.bf16.msra.mxu0 0
  %2755 = vmatprep.subr.bf16.mxu0 0
  %2756 = vmatpush1.bf16.msra.mxu0 0
  %2757 = vmatprep.subr.bf16.mxu0 0
  %2758 = vmatpush1.bf16.msra.mxu0 0
  %2759 = vmatprep.subr.bf16.mxu0 0
  %2760 = vmatpush1.bf16.msra.mxu0 0
  %2761 = vmatprep.subr.bf16.mxu0 0
  %2762 = vmatpush1.bf16.msra.mxu0 0
  %2763 = vmatprep.subr.bf16.mxu0 0
  %2764 = vmatpush1.bf16.msra.mxu0 0
  %2765 = vmatprep.subr.bf16.mxu0 0
  %2766 = vmatpush1.bf16.msra.mxu0 0
  %2767 = vmatprep.mubr.bf16.mxu0 0
  %2768 = vmatmul.mubr.bf16.gmra.mrb[0].mxu0 %v2670
  %v2769 = vpop.f32.mrb[0].mxu0
  %v2770 = vadd.f32 0.0, %v2769
  %v2771 = vpop.f32.mrb[0].mxu0
  %v2772 = vpop.f32.mrb[0].mxu0
  %v2773 = vpop.f32.mrb[0].mxu0
  %2774 = vdwg.mxu0
  %v2775 = vadd.f32 %v2669, %v2770
  %v2776 = vpack.c.bf16 %v629, %v629
  %v2777 = vld [vmem:[%s2 + $0x540] sm:$0xf]
  %v2778 = vld [vmem:[%s2 + $0x544] sm:$0xf]
  %v2779 = vld [vmem:[%s2 + $0x548] sm:$0xf]
  %v2780 = vld [vmem:[%s2 + $0x54c] sm:$0xf]
  %v2781 = vld [vmem:[%s2 + $0x550] sm:$0xf]
  %v2782 = vld [vmem:[%s2 + $0x554] sm:$0xf]
  %v2783 = vld [vmem:[%s2 + $0x558] sm:$0xf]
  %v2784 = vld [vmem:[%s2 + $0x55c] sm:$0xf]
  %v2785 = vld [vmem:[%s2 + $0x560] sm:$0xf]
  %v2786 = vld [vmem:[%s2 + $0x564] sm:$0xf]
  %v2787 = vld [vmem:[%s2 + $0x568] sm:$0xf]
  %v2788 = vld [vmem:[%s2 + $0x56c] sm:$0xf]
  %v2789 = vld [vmem:[%s2 + $0x570] sm:$0xf]
  %v2790 = vld [vmem:[%s2 + $0x574] sm:$0xf]
  %v2791 = vld [vmem:[%s2 + $0x578] sm:$0xf]
  %v2792 = vld [vmem:[%s2 + $0x57c] sm:$0xf]
  %v2809 = vunpack.c.l.b16 %v2777
  %v2810 = vunpack.c.l.b16 %v2778
  %v2811 = vunpack.c.l.b16 %v2779
  %v2812 = vunpack.c.l.b16 %v2780
  %v2813 = vunpack.c.l.b16 %v2781
  %v2814 = vunpack.c.l.b16 %v2782
  %v2815 = vunpack.c.l.b16 %v2783
  %v2816 = vunpack.c.l.b16 %v2784
  %v2817 = vunpack.c.l.b16 %v2785
  %v2818 = vunpack.c.l.b16 %v2786
  %v2819 = vunpack.c.l.b16 %v2787
  %v2820 = vunpack.c.l.b16 %v2788
  %v2821 = vunpack.c.l.b16 %v2789
  %v2822 = vunpack.c.l.b16 %v2790
  %v2823 = vunpack.c.l.b16 %v2791
  %v2824 = vunpack.c.l.b16 %v2792
  %v2825 = vpack.c.b16 %v2810, %v2809
  %v2826 = vpack.c.b16 %v2812, %v2811
  %v2827 = vpack.c.b16 %v2814, %v2813
  %v2828 = vpack.c.b16 %v2816, %v2815
  %v2829 = vpack.c.b16 %v2818, %v2817
  %v2830 = vpack.c.b16 %v2820, %v2819
  %v2831 = vpack.c.b16 %v2822, %v2821
  %v2832 = vpack.c.b16 %v2824, %v2823
  %2841 = vmatprep.subr.bf16.mxu0 0
  %2842 = vmatpush1.bf16.msra.mxu0 %v2825
  %2843 = vmatprep.subr.bf16.mxu0 0
  %2844 = vmatpush1.bf16.msra.mxu0 %v2826
  %2845 = vmatprep.subr.bf16.mxu0 0
  %2846 = vmatpush1.bf16.msra.mxu0 %v2827
  %2847 = vmatprep.subr.bf16.mxu0 0
  %2848 = vmatpush1.bf16.msra.mxu0 %v2828
  %2849 = vmatprep.subr.bf16.mxu0 0
  %2850 = vmatpush1.bf16.msra.mxu0 %v2829
  %2851 = vmatprep.subr.bf16.mxu0 0
  %2852 = vmatpush1.bf16.msra.mxu0 %v2830
  %2853 = vmatprep.subr.bf16.mxu0 0
  %2854 = vmatpush1.bf16.msra.mxu0 %v2831
  %2855 = vmatprep.subr.bf16.mxu0 0
  %2856 = vmatpush1.bf16.msra.mxu0 %v2832
  %2857 = vmatprep.subr.bf16.mxu0 0
  %2858 = vmatpush1.bf16.msra.mxu0 0
  %2859 = vmatprep.subr.bf16.mxu0 0
  %2860 = vmatpush1.bf16.msra.mxu0 0
  %2861 = vmatprep.subr.bf16.mxu0 0
  %2862 = vmatpush1.bf16.msra.mxu0 0
  %2863 = vmatprep.subr.bf16.mxu0 0
  %2864 = vmatpush1.bf16.msra.mxu0 0
  %2865 = vmatprep.subr.bf16.mxu0 0
  %2866 = vmatpush1.bf16.msra.mxu0 0
  %2867 = vmatprep.subr.bf16.mxu0 0
  %2868 = vmatpush1.bf16.msra.mxu0 0
  %2869 = vmatprep.subr.bf16.mxu0 0
  %2870 = vmatpush1.bf16.msra.mxu0 0
  %2871 = vmatprep.subr.bf16.mxu0 0
  %2872 = vmatpush1.bf16.msra.mxu0 0
  %2873 = vmatprep.mubr.bf16.mxu0 0
  %2874 = vmatmul.mubr.bf16.gmra.mrb[0].mxu0 %v2776
  %v2875 = vpop.f32.mrb[0].mxu0
  %v2876 = vadd.f32 0.0, %v2875
  %v2877 = vpop.f32.mrb[0].mxu0
  %v2878 = vpop.f32.mrb[0].mxu0
  %v2879 = vpop.f32.mrb[0].mxu0
  %2880 = vdwg.mxu0
  %v2881 = vadd.f32 %v2775, %v2876
  %v2882 = vpack.c.bf16 %v630, %v630
  %v2883 = vld [vmem:[%s2 + $0x580] sm:$0xf]
  %v2884 = vld [vmem:[%s2 + $0x584] sm:$0xf]
  %v2885 = vld [vmem:[%s2 + $0x588] sm:$0xf]
  %v2886 = vld [vmem:[%s2 + $0x58c] sm:$0xf]
  %v2887 = vld [vmem:[%s2 + $0x590] sm:$0xf]
  %v2888 = vld [vmem:[%s2 + $0x594] sm:$0xf]
  %v2889 = vld [vmem:[%s2 + $0x598] sm:$0xf]
  %v2890 = vld [vmem:[%s2 + $0x59c] sm:$0xf]
  %v2891 = vld [vmem:[%s2 + $0x5a0] sm:$0xf]
  %v2892 = vld [vmem:[%s2 + $0x5a4] sm:$0xf]
  %v2893 = vld [vmem:[%s2 + $0x5a8] sm:$0xf]
  %v2894 = vld [vmem:[%s2 + $0x5ac] sm:$0xf]
  %v2895 = vld [vmem:[%s2 + $0x5b0] sm:$0xf]
  %v2896 = vld [vmem:[%s2 + $0x5b4] sm:$0xf]
  %v2897 = vld [vmem:[%s2 + $0x5b8] sm:$0xf]
  %v2898 = vld [vmem:[%s2 + $0x5bc] sm:$0xf]
  %v2915 = vunpack.c.l.b16 %v2883
  %v2916 = vunpack.c.l.b16 %v2884
  %v2917 = vunpack.c.l.b16 %v2885
  %v2918 = vunpack.c.l.b16 %v2886
  %v2919 = vunpack.c.l.b16 %v2887
  %v2920 = vunpack.c.l.b16 %v2888
  %v2921 = vunpack.c.l.b16 %v2889
  %v2922 = vunpack.c.l.b16 %v2890
  %v2923 = vunpack.c.l.b16 %v2891
  %v2924 = vunpack.c.l.b16 %v2892
  %v2925 = vunpack.c.l.b16 %v2893
  %v2926 = vunpack.c.l.b16 %v2894
  %v2927 = vunpack.c.l.b16 %v2895
  %v2928 = vunpack.c.l.b16 %v2896
  %v2929 = vunpack.c.l.b16 %v2897
  %v2930 = vunpack.c.l.b16 %v2898
  %v2931 = vpack.c.b16 %v2916, %v2915
  %v2932 = vpack.c.b16 %v2918, %v2917
  %v2933 = vpack.c.b16 %v2920, %v2919
  %v2934 = vpack.c.b16 %v2922, %v2921
  %v2935 = vpack.c.b16 %v2924, %v2923
  %v2936 = vpack.c.b16 %v2926, %v2925
  %v2937 = vpack.c.b16 %v2928, %v2927
  %v2938 = vpack.c.b16 %v2930, %v2929
  %2947 = vmatprep.subr.bf16.mxu0 0
  %2948 = vmatpush1.bf16.msra.mxu0 %v2931
  %2949 = vmatprep.subr.bf16.mxu0 0
  %2950 = vmatpush1.bf16.msra.mxu0 %v2932
  %2951 = vmatprep.subr.bf16.mxu0 0
  %2952 = vmatpush1.bf16.msra.mxu0 %v2933
  %2953 = vmatprep.subr.bf16.mxu0 0
  %2954 = vmatpush1.bf16.msra.mxu0 %v2934
  %2955 = vmatprep.subr.bf16.mxu0 0
  %2956 = vmatpush1.bf16.msra.mxu0 %v2935
  %2957 = vmatprep.subr.bf16.mxu0 0
  %2958 = vmatpush1.bf16.msra.mxu0 %v2936
  %2959 = vmatprep.subr.bf16.mxu0 0
  %2960 = vmatpush1.bf16.msra.mxu0 %v2937
  %2961 = vmatprep.subr.bf16.mxu0 0
  %2962 = vmatpush1.bf16.msra.mxu0 %v2938
  %2963 = vmatprep.subr.bf16.mxu0 0
  %2964 = vmatpush1.bf16.msra.mxu0 0
  %2965 = vmatprep.subr.bf16.mxu0 0
  %2966 = vmatpush1.bf16.msra.mxu0 0
  %2967 = vmatprep.subr.bf16.mxu0 0
  %2968 = vmatpush1.bf16.msra.mxu0 0
  %2969 = vmatprep.subr.bf16.mxu0 0
  %2970 = vmatpush1.bf16.msra.mxu0 0
  %2971 = vmatprep.subr.bf16.mxu0 0
  %2972 = vmatpush1.bf16.msra.mxu0 0
  %2973 = vmatprep.subr.bf16.mxu0 0
  %2974 = vmatpush1.bf16.msra.mxu0 0
  %2975 = vmatprep.subr.bf16.mxu0 0
  %2976 = vmatpush1.bf16.msra.mxu0 0
  %2977 = vmatprep.subr.bf16.mxu0 0
  %2978 = vmatpush1.bf16.msra.mxu0 0
  %2979 = vmatprep.mubr.bf16.mxu0 0
  %2980 = vmatmul.mubr.bf16.gmra.mrb[0].mxu0 %v2882
  %v2981 = vpop.f32.mrb[0].mxu0
  %v2982 = vadd.f32 0.0, %v2981
  %v2983 = vpop.f32.mrb[0].mxu0
  %v2984 = vpop.f32.mrb[0].mxu0
  %v2985 = vpop.f32.mrb[0].mxu0
  %2986 = vdwg.mxu0
  %v2987 = vadd.f32 %v2881, %v2982
  %v2988 = vpack.c.bf16 %v631, %v631
  %v2989 = vld [vmem:[%s2 + $0x5c0] sm:$0xf]
  %v2990 = vld [vmem:[%s2 + $0x5c4] sm:$0xf]
  %v2991 = vld [vmem:[%s2 + $0x5c8] sm:$0xf]
  %v2992 = vld [vmem:[%s2 + $0x5cc] sm:$0xf]
  %v2993 = vld [vmem:[%s2 + $0x5d0] sm:$0xf]
  %v2994 = vld [vmem:[%s2 + $0x5d4] sm:$0xf]
  %v2995 = vld [vmem:[%s2 + $0x5d8] sm:$0xf]
  %v2996 = vld [vmem:[%s2 + $0x5dc] sm:$0xf]
  %v2997 = vld [vmem:[%s2 + $0x5e0] sm:$0xf]
  %v2998 = vld [vmem:[%s2 + $0x5e4] sm:$0xf]
  %v2999 = vld [vmem:[%s2 + $0x5e8] sm:$0xf]
  %v3000 = vld [vmem:[%s2 + $0x5ec] sm:$0xf]
  %v3001 = vld [vmem:[%s2 + $0x5f0] sm:$0xf]
  %v3002 = vld [vmem:[%s2 + $0x5f4] sm:$0xf]
  %v3003 = vld [vmem:[%s2 + $0x5f8] sm:$0xf]
  %v3004 = vld [vmem:[%s2 + $0x5fc] sm:$0xf]
  %v3021 = vunpack.c.l.b16 %v2989
  %v3022 = vunpack.c.l.b16 %v2990
  %v3023 = vunpack.c.l.b16 %v2991
  %v3024 = vunpack.c.l.b16 %v2992
  %v3025 = vunpack.c.l.b16 %v2993
  %v3026 = vunpack.c.l.b16 %v2994
  %v3027 = vunpack.c.l.b16 %v2995
  %v3028 = vunpack.c.l.b16 %v2996
  %v3029 = vunpack.c.l.b16 %v2997
  %v3030 = vunpack.c.l.b16 %v2998
  %v3031 = vunpack.c.l.b16 %v2999
  %v3032 = vunpack.c.l.b16 %v3000
  %v3033 = vunpack.c.l.b16 %v3001
  %v3034 = vunpack.c.l.b16 %v3002
  %v3035 = vunpack.c.l.b16 %v3003
  %v3036 = vunpack.c.l.b16 %v3004
  %v3037 = vpack.c.b16 %v3022, %v3021
  %v3038 = vpack.c.b16 %v3024, %v3023
  %v3039 = vpack.c.b16 %v3026, %v3025
  %v3040 = vpack.c.b16 %v3028, %v3027
  %v3041 = vpack.c.b16 %v3030, %v3029
  %v3042 = vpack.c.b16 %v3032, %v3031
  %v3043 = vpack.c.b16 %v3034, %v3033
  %v3044 = vpack.c.b16 %v3036, %v3035
  %3053 = vmatprep.subr.bf16.mxu0 0
  %3054 = vmatpush1.bf16.msra.mxu0 %v3037
  %3055 = vmatprep.subr.bf16.mxu0 0
  %3056 = vmatpush1.bf16.msra.mxu0 %v3038
  %3057 = vmatprep.subr.bf16.mxu0 0
  %3058 = vmatpush1.bf16.msra.mxu0 %v3039
  %3059 = vmatprep.subr.bf16.mxu0 0
  %3060 = vmatpush1.bf16.msra.mxu0 %v3040
  %3061 = vmatprep.subr.bf16.mxu0 0
  %3062 = vmatpush1.bf16.msra.mxu0 %v3041
  %3063 = vmatprep.subr.bf16.mxu0 0
  %3064 = vmatpush1.bf16.msra.mxu0 %v3042
  %3065 = vmatprep.subr.bf16.mxu0 0
  %3066 = vmatpush1.bf16.msra.mxu0 %v3043
  %3067 = vmatprep.subr.bf16.mxu0 0
  %3068 = vmatpush1.bf16.msra.mxu0 %v3044
  %3069 = vmatprep.subr.bf16.mxu0 0
  %3070 = vmatpush1.bf16.msra.mxu0 0
  %3071 = vmatprep.subr.bf16.mxu0 0
  %3072 = vmatpush1.bf16.msra.mxu0 0
  %3073 = vmatprep.subr.bf16.mxu0 0
  %3074 = vmatpush1.bf16.msra.mxu0 0
  %3075 = vmatprep.subr.bf16.mxu0 0
  %3076 = vmatpush1.bf16.msra.mxu0 0
  %3077 = vmatprep.subr.bf16.mxu0 0
  %3078 = vmatpush1.bf16.msra.mxu0 0
  %3079 = vmatprep.subr.bf16.mxu0 0
  %3080 = vmatpush1.bf16.msra.mxu0 0
  %3081 = vmatprep.subr.bf16.mxu0 0
  %3082 = vmatpush1.bf16.msra.mxu0 0
  %3083 = vmatprep.subr.bf16.mxu0 0
  %3084 = vmatpush1.bf16.msra.mxu0 0
  %3085 = vmatprep.mubr.bf16.mxu0 0
  %3086 = vmatmul.mubr.bf16.gmra.mrb[0].mxu0 %v2988
  %v3087 = vpop.f32.mrb[0].mxu0
  %v3088 = vadd.f32 0.0, %v3087
  %v3089 = vpop.f32.mrb[0].mxu0
  %v3090 = vpop.f32.mrb[0].mxu0
  %v3091 = vpop.f32.mrb[0].mxu0
  %3092 = vdwg.mxu0
  %v3093 = vadd.f32 %v2987, %v3088
  %v3094 = vpack.c.bf16 %v632, %v632
  %v3095 = vld [vmem:[%s2 + $0x600] sm:$0xf]
  %v3096 = vld [vmem:[%s2 + $0x604] sm:$0xf]
  %v3097 = vld [vmem:[%s2 + $0x608] sm:$0xf]
  %v3098 = vld [vmem:[%s2 + $0x60c] sm:$0xf]
  %v3099 = vld [vmem:[%s2 + $0x610] sm:$0xf]
  %v3100 = vld [vmem:[%s2 + $0x614] sm:$0xf]
  %v3101 = vld [vmem:[%s2 + $0x618] sm:$0xf]
  %v3102 = vld [vmem:[%s2 + $0x61c] sm:$0xf]
  %v3103 = vld [vmem:[%s2 + $0x620] sm:$0xf]
  %v3104 = vld [vmem:[%s2 + $0x624] sm:$0xf]
  %v3105 = vld [vmem:[%s2 + $0x628] sm:$0xf]
  %v3106 = vld [vmem:[%s2 + $0x62c] sm:$0xf]
  %v3107 = vld [vmem:[%s2 + $0x630] sm:$0xf]
  %v3108 = vld [vmem:[%s2 + $0x634] sm:$0xf]
  %v3109 = vld [vmem:[%s2 + $0x638] sm:$0xf]
  %v3110 = vld [vmem:[%s2 + $0x63c] sm:$0xf]
  %v3127 = vunpack.c.l.b16 %v3095
  %v3128 = vunpack.c.l.b16 %v3096
  %v3129 = vunpack.c.l.b16 %v3097
  %v3130 = vunpack.c.l.b16 %v3098
  %v3131 = vunpack.c.l.b16 %v3099
  %v3132 = vunpack.c.l.b16 %v3100
  %v3133 = vunpack.c.l.b16 %v3101
  %v3134 = vunpack.c.l.b16 %v3102
  %v3135 = vunpack.c.l.b16 %v3103
  %v3136 = vunpack.c.l.b16 %v3104
  %v3137 = vunpack.c.l.b16 %v3105
  %v3138 = vunpack.c.l.b16 %v3106
  %v3139 = vunpack.c.l.b16 %v3107
  %v3140 = vunpack.c.l.b16 %v3108
  %v3141 = vunpack.c.l.b16 %v3109
  %v3142 = vunpack.c.l.b16 %v3110
  %v3143 = vpack.c.b16 %v3128, %v3127
  %v3144 = vpack.c.b16 %v3130, %v3129
  %v3145 = vpack.c.b16 %v3132, %v3131
  %v3146 = vpack.c.b16 %v3134, %v3133
  %v3147 = vpack.c.b16 %v3136, %v3135
  %v3148 = vpack.c.b16 %v3138, %v3137
  %v3149 = vpack.c.b16 %v3140, %v3139
  %v3150 = vpack.c.b16 %v3142, %v3141
  %3159 = vmatprep.subr.bf16.mxu0 0
  %3160 = vmatpush1.bf16.msra.mxu0 %v3143
  %3161 = vmatprep.subr.bf16.mxu0 0
  %3162 = vmatpush1.bf16.msra.mxu0 %v3144
  %3163 = vmatprep.subr.bf16.mxu0 0
  %3164 = vmatpush1.bf16.msra.mxu0 %v3145
  %3165 = vmatprep.subr.bf16.mxu0 0
  %3166 = vmatpush1.bf16.msra.mxu0 %v3146
  %3167 = vmatprep.subr.bf16.mxu0 0
  %3168 = vmatpush1.bf16.msra.mxu0 %v3147
  %3169 = vmatprep.subr.bf16.mxu0 0
  %3170 = vmatpush1.bf16.msra.mxu0 %v3148
  %3171 = vmatprep.subr.bf16.mxu0 0
  %3172 = vmatpush1.bf16.msra.mxu0 %v3149
  %3173 = vmatprep.subr.bf16.mxu0 0
  %3174 = vmatpush1.bf16.msra.mxu0 %v3150
  %3175 = vmatprep.subr.bf16.mxu0 0
  %3176 = vmatpush1.bf16.msra.mxu0 0
  %3177 = vmatprep.subr.bf16.mxu0 0
  %3178 = vmatpush1.bf16.msra.mxu0 0
  %3179 = vmatprep.subr.bf16.mxu0 0
  %3180 = vmatpush1.bf16.msra.mxu0 0
  %3181 = vmatprep.subr.bf16.mxu0 0
  %3182 = vmatpush1.bf16.msra.mxu0 0
  %3183 = vmatprep.subr.bf16.mxu0 0
  %3184 = vmatpush1.bf16.msra.mxu0 0
  %3185 = vmatprep.subr.bf16.mxu0 0
  %3186 = vmatpush1.bf16.msra.mxu0 0
  %3187 = vmatprep.subr.bf16.mxu0 0
  %3188 = vmatpush1.bf16.msra.mxu0 0
  %3189 = vmatprep.subr.bf16.mxu0 0
  %3190 = vmatpush1.bf16.msra.mxu0 0
  %3191 = vmatprep.mubr.bf16.mxu0 0
  %3192 = vmatmul.mubr.bf16.gmra.mrb[0].mxu0 %v3094
  %v3193 = vpop.f32.mrb[0].mxu0
  %v3194 = vadd.f32 0.0, %v3193
  %v3195 = vpop.f32.mrb[0].mxu0
  %v3196 = vpop.f32.mrb[0].mxu0
  %v3197 = vpop.f32.mrb[0].mxu0
  %3198 = vdwg.mxu0
  %v3199 = vadd.f32 %v3093, %v3194
  %v3200 = vpack.c.bf16 %v633, %v633
  %v3201 = vld [vmem:[%s2 + $0x640] sm:$0xf]
  %v3202 = vld [vmem:[%s2 + $0x644] sm:$0xf]
  %v3203 = vld [vmem:[%s2 + $0x648] sm:$0xf]
  %v3204 = vld [vmem:[%s2 + $0x64c] sm:$0xf]
  %v3205 = vld [vmem:[%s2 + $0x650] sm:$0xf]
  %v3206 = vld [vmem:[%s2 + $0x654] sm:$0xf]
  %v3207 = vld [vmem:[%s2 + $0x658] sm:$0xf]
  %v3208 = vld [vmem:[%s2 + $0x65c] sm:$0xf]
  %v3209 = vld [vmem:[%s2 + $0x660] sm:$0xf]
  %v3210 = vld [vmem:[%s2 + $0x664] sm:$0xf]
  %v3211 = vld [vmem:[%s2 + $0x668] sm:$0xf]
  %v3212 = vld [vmem:[%s2 + $0x66c] sm:$0xf]
  %v3213 = vld [vmem:[%s2 + $0x670] sm:$0xf]
  %v3214 = vld [vmem:[%s2 + $0x674] sm:$0xf]
  %v3215 = vld [vmem:[%s2 + $0x678] sm:$0xf]
  %v3216 = vld [vmem:[%s2 + $0x67c] sm:$0xf]
  %v3233 = vunpack.c.l.b16 %v3201
  %v3234 = vunpack.c.l.b16 %v3202
  %v3235 = vunpack.c.l.b16 %v3203
  %v3236 = vunpack.c.l.b16 %v3204
  %v3237 = vunpack.c.l.b16 %v3205
  %v3238 = vunpack.c.l.b16 %v3206
  %v3239 = vunpack.c.l.b16 %v3207
  %v3240 = vunpack.c.l.b16 %v3208
  %v3241 = vunpack.c.l.b16 %v3209
  %v3242 = vunpack.c.l.b16 %v3210
  %v3243 = vunpack.c.l.b16 %v3211
  %v3244 = vunpack.c.l.b16 %v3212
  %v3245 = vunpack.c.l.b16 %v3213
  %v3246 = vunpack.c.l.b16 %v3214
  %v3247 = vunpack.c.l.b16 %v3215
  %v3248 = vunpack.c.l.b16 %v3216
  %v3249 = vpack.c.b16 %v3234, %v3233
  %v3250 = vpack.c.b16 %v3236, %v3235
  %v3251 = vpack.c.b16 %v3238, %v3237
  %v3252 = vpack.c.b16 %v3240, %v3239
  %v3253 = vpack.c.b16 %v3242, %v3241
  %v3254 = vpack.c.b16 %v3244, %v3243
  %v3255 = vpack.c.b16 %v3246, %v3245
  %v3256 = vpack.c.b16 %v3248, %v3247
  %3265 = vmatprep.subr.bf16.mxu0 0
  %3266 = vmatpush1.bf16.msra.mxu0 %v3249
  %3267 = vmatprep.subr.bf16.mxu0 0
  %3268 = vmatpush1.bf16.msra.mxu0 %v3250
  %3269 = vmatprep.subr.bf16.mxu0 0
  %3270 = vmatpush1.bf16.msra.mxu0 %v3251
  %3271 = vmatprep.subr.bf16.mxu0 0
  %3272 = vmatpush1.bf16.msra.mxu0 %v3252
  %3273 = vmatprep.subr.bf16.mxu0 0
  %3274 = vmatpush1.bf16.msra.mxu0 %v3253
  %3275 = vmatprep.subr.bf16.mxu0 0
  %3276 = vmatpush1.bf16.msra.mxu0 %v3254
  %3277 = vmatprep.subr.bf16.mxu0 0
  %3278 = vmatpush1.bf16.msra.mxu0 %v3255
  %3279 = vmatprep.subr.bf16.mxu0 0
  %3280 = vmatpush1.bf16.msra.mxu0 %v3256
  %3281 = vmatprep.subr.bf16.mxu0 0
  %3282 = vmatpush1.bf16.msra.mxu0 0
  %3283 = vmatprep.subr.bf16.mxu0 0
  %3284 = vmatpush1.bf16.msra.mxu0 0
  %3285 = vmatprep.subr.bf16.mxu0 0
  %3286 = vmatpush1.bf16.msra.mxu0 0
  %3287 = vmatprep.subr.bf16.mxu0 0
  %3288 = vmatpush1.bf16.msra.mxu0 0
  %3289 = vmatprep.subr.bf16.mxu0 0
  %3290 = vmatpush1.bf16.msra.mxu0 0
  %3291 = vmatprep.subr.bf16.mxu0 0
  %3292 = vmatpush1.bf16.msra.mxu0 0
  %3293 = vmatprep.subr.bf16.mxu0 0
  %3294 = vmatpush1.bf16.msra.mxu0 0
  %3295 = vmatprep.subr.bf16.mxu0 0
  %3296 = vmatpush1.bf16.msra.mxu0 0
  %3297 = vmatprep.mubr.bf16.mxu0 0
  %3298 = vmatmul.mubr.bf16.gmra.mrb[0].mxu0 %v3200
  %v3299 = vpop.f32.mrb[0].mxu0
  %v3300 = vadd.f32 0.0, %v3299
  %v3301 = vpop.f32.mrb[0].mxu0
  %v3302 = vpop.f32.mrb[0].mxu0
  %v3303 = vpop.f32.mrb[0].mxu0
  %3304 = vdwg.mxu0
  %v3305 = vadd.f32 %v3199, %v3300
  %v3306 = vpack.c.bf16 %v634, %v634
  %v3307 = vld [vmem:[%s2 + $0x680] sm:$0xf]
  %v3308 = vld [vmem:[%s2 + $0x684] sm:$0xf]
  %v3309 = vld [vmem:[%s2 + $0x688] sm:$0xf]
  %v3310 = vld [vmem:[%s2 + $0x68c] sm:$0xf]
  %v3311 = vld [vmem:[%s2 + $0x690] sm:$0xf]
  %v3312 = vld [vmem:[%s2 + $0x694] sm:$0xf]
  %v3313 = vld [vmem:[%s2 + $0x698] sm:$0xf]
  %v3314 = vld [vmem:[%s2 + $0x69c] sm:$0xf]
  %v3315 = vld [vmem:[%s2 + $0x6a0] sm:$0xf]
  %v3316 = vld [vmem:[%s2 + $0x6a4] sm:$0xf]
  %v3317 = vld [vmem:[%s2 + $0x6a8] sm:$0xf]
  %v3318 = vld [vmem:[%s2 + $0x6ac] sm:$0xf]
  %v3319 = vld [vmem:[%s2 + $0x6b0] sm:$0xf]
  %v3320 = vld [vmem:[%s2 + $0x6b4] sm:$0xf]
  %v3321 = vld [vmem:[%s2 + $0x6b8] sm:$0xf]
  %v3322 = vld [vmem:[%s2 + $0x6bc] sm:$0xf]
  %v3339 = vunpack.c.l.b16 %v3307
  %v3340 = vunpack.c.l.b16 %v3308
  %v3341 = vunpack.c.l.b16 %v3309
  %v3342 = vunpack.c.l.b16 %v3310
  %v3343 = vunpack.c.l.b16 %v3311
  %v3344 = vunpack.c.l.b16 %v3312
  %v3345 = vunpack.c.l.b16 %v3313
  %v3346 = vunpack.c.l.b16 %v3314
  %v3347 = vunpack.c.l.b16 %v3315
  %v3348 = vunpack.c.l.b16 %v3316
  %v3349 = vunpack.c.l.b16 %v3317
  %v3350 = vunpack.c.l.b16 %v3318
  %v3351 = vunpack.c.l.b16 %v3319
  %v3352 = vunpack.c.l.b16 %v3320
  %v3353 = vunpack.c.l.b16 %v3321
  %v3354 = vunpack.c.l.b16 %v3322
  %v3355 = vpack.c.b16 %v3340, %v3339
  %v3356 = vpack.c.b16 %v3342, %v3341
  %v3357 = vpack.c.b16 %v3344, %v3343
  %v3358 = vpack.c.b16 %v3346, %v3345
  %v3359 = vpack.c.b16 %v3348, %v3347
  %v3360 = vpack.c.b16 %v3350, %v3349
  %v3361 = vpack.c.b16 %v3352, %v3351
  %v3362 = vpack.c.b16 %v3354, %v3353
  %3371 = vmatprep.subr.bf16.mxu0 0
  %3372 = vmatpush1.bf16.msra.mxu0 %v3355
  %3373 = vmatprep.subr.bf16.mxu0 0
  %3374 = vmatpush1.bf16.msra.mxu0 %v3356
  %3375 = vmatprep.subr.bf16.mxu0 0
  %3376 = vmatpush1.bf16.msra.mxu0 %v3357
  %3377 = vmatprep.subr.bf16.mxu0 0
  %3378 = vmatpush1.bf16.msra.mxu0 %v3358
  %3379 = vmatprep.subr.bf16.mxu0 0
  %3380 = vmatpush1.bf16.msra.mxu0 %v3359
  %3381 = vmatprep.subr.bf16.mxu0 0
  %3382 = vmatpush1.bf16.msra.mxu0 %v3360
  %3383 = vmatprep.subr.bf16.mxu0 0
  %3384 = vmatpush1.bf16.msra.mxu0 %v3361
  %3385 = vmatprep.subr.bf16.mxu0 0
  %3386 = vmatpush1.bf16.msra.mxu0 %v3362
  %3387 = vmatprep.subr.bf16.mxu0 0
  %3388 = vmatpush1.bf16.msra.mxu0 0
  %3389 = vmatprep.subr.bf16.mxu0 0
  %3390 = vmatpush1.bf16.msra.mxu0 0
  %3391 = vmatprep.subr.bf16.mxu0 0
  %3392 = vmatpush1.bf16.msra.mxu0 0
  %3393 = vmatprep.subr.bf16.mxu0 0
  %3394 = vmatpush1.bf16.msra.mxu0 0
  %3395 = vmatprep.subr.bf16.mxu0 0
  %3396 = vmatpush1.bf16.msra.mxu0 0
  %3397 = vmatprep.subr.bf16.mxu0 0
  %3398 = vmatpush1.bf16.msra.mxu0 0
  %3399 = vmatprep.subr.bf16.mxu0 0
  %3400 = vmatpush1.bf16.msra.mxu0 0
  %3401 = vmatprep.subr.bf16.mxu0 0
  %3402 = vmatpush1.bf16.msra.mxu0 0
  %3403 = vmatprep.mubr.bf16.mxu0 0
  %3404 = vmatmul.mubr.bf16.gmra.mrb[0].mxu0 %v3306
  %v3405 = vpop.f32.mrb[0].mxu0
  %v3406 = vadd.f32 0.0, %v3405
  %v3407 = vpop.f32.mrb[0].mxu0
  %v3408 = vpop.f32.mrb[0].mxu0
  %v3409 = vpop.f32.mrb[0].mxu0
  %3410 = vdwg.mxu0
  %v3411 = vadd.f32 %v3305, %v3406
  %v3412 = vpack.c.bf16 %v635, %v635
  %v3413 = vld [vmem:[%s2 + $0x6c0] sm:$0xf]
  %v3414 = vld [vmem:[%s2 + $0x6c4] sm:$0xf]
  %v3415 = vld [vmem:[%s2 + $0x6c8] sm:$0xf]
  %v3416 = vld [vmem:[%s2 + $0x6cc] sm:$0xf]
  %v3417 = vld [vmem:[%s2 + $0x6d0] sm:$0xf]
  %v3418 = vld [vmem:[%s2 + $0x6d4] sm:$0xf]
  %v3419 = vld [vmem:[%s2 + $0x6d8] sm:$0xf]
  %v3420 = vld [vmem:[%s2 + $0x6dc] sm:$0xf]
  %v3421 = vld [vmem:[%s2 + $0x6e0] sm:$0xf]
  %v3422 = vld [vmem:[%s2 + $0x6e4] sm:$0xf]
  %v3423 = vld [vmem:[%s2 + $0x6e8] sm:$0xf]
  %v3424 = vld [vmem:[%s2 + $0x6ec] sm:$0xf]
  %v3425 = vld [vmem:[%s2 + $0x6f0] sm:$0xf]
  %v3426 = vld [vmem:[%s2 + $0x6f4] sm:$0xf]
  %v3427 = vld [vmem:[%s2 + $0x6f8] sm:$0xf]
  %v3428 = vld [vmem:[%s2 + $0x6fc] sm:$0xf]
  %v3445 = vunpack.c.l.b16 %v3413
  %v3446 = vunpack.c.l.b16 %v3414
  %v3447 = vunpack.c.l.b16 %v3415
  %v3448 = vunpack.c.l.b16 %v3416
  %v3449 = vunpack.c.l.b16 %v3417
  %v3450 = vunpack.c.l.b16 %v3418
  %v3451 = vunpack.c.l.b16 %v3419
  %v3452 = vunpack.c.l.b16 %v3420
  %v3453 = vunpack.c.l.b16 %v3421
  %v3454 = vunpack.c.l.b16 %v3422
  %v3455 = vunpack.c.l.b16 %v3423
  %v3456 = vunpack.c.l.b16 %v3424
  %v3457 = vunpack.c.l.b16 %v3425
  %v3458 = vunpack.c.l.b16 %v3426
  %v3459 = vunpack.c.l.b16 %v3427
  %v3460 = vunpack.c.l.b16 %v3428
  %v3461 = vpack.c.b16 %v3446, %v3445
  %v3462 = vpack.c.b16 %v3448, %v3447
  %v3463 = vpack.c.b16 %v3450, %v3449
  %v3464 = vpack.c.b16 %v3452, %v3451
  %v3465 = vpack.c.b16 %v3454, %v3453
  %v3466 = vpack.c.b16 %v3456, %v3455
  %v3467 = vpack.c.b16 %v3458, %v3457
  %v3468 = vpack.c.b16 %v3460, %v3459
  %3477 = vmatprep.subr.bf16.mxu0 0
  %3478 = vmatpush1.bf16.msra.mxu0 %v3461
  %3479 = vmatprep.subr.bf16.mxu0 0
  %3480 = vmatpush1.bf16.msra.mxu0 %v3462
  %3481 = vmatprep.subr.bf16.mxu0 0
  %3482 = vmatpush1.bf16.msra.mxu0 %v3463
  %3483 = vmatprep.subr.bf16.mxu0 0
  %3484 = vmatpush1.bf16.msra.mxu0 %v3464
  %3485 = vmatprep.subr.bf16.mxu0 0
  %3486 = vmatpush1.bf16.msra.mxu0 %v3465
  %3487 = vmatprep.subr.bf16.mxu0 0
  %3488 = vmatpush1.bf16.msra.mxu0 %v3466
  %3489 = vmatprep.subr.bf16.mxu0 0
  %3490 = vmatpush1.bf16.msra.mxu0 %v3467
  %3491 = vmatprep.subr.bf16.mxu0 0
  %3492 = vmatpush1.bf16.msra.mxu0 %v3468
  %3493 = vmatprep.subr.bf16.mxu0 0
  %3494 = vmatpush1.bf16.msra.mxu0 0
  %3495 = vmatprep.subr.bf16.mxu0 0
  %3496 = vmatpush1.bf16.msra.mxu0 0
  %3497 = vmatprep.subr.bf16.mxu0 0
  %3498 = vmatpush1.bf16.msra.mxu0 0
  %3499 = vmatprep.subr.bf16.mxu0 0
  %3500 = vmatpush1.bf16.msra.mxu0 0
  %3501 = vmatprep.subr.bf16.mxu0 0
  %3502 = vmatpush1.bf16.msra.mxu0 0
  %3503 = vmatprep.subr.bf16.mxu0 0
  %3504 = vmatpush1.bf16.msra.mxu0 0
  %3505 = vmatprep.subr.bf16.mxu0 0
  %3506 = vmatpush1.bf16.msra.mxu0 0
  %3507 = vmatprep.subr.bf16.mxu0 0
  %3508 = vmatpush1.bf16.msra.mxu0 0
  %3509 = vmatprep.mubr.bf16.mxu0 0
  %3510 = vmatmul.mubr.bf16.gmra.mrb[0].mxu0 %v3412
  %v3511 = vpop.f32.mrb[0].mxu0
  %v3512 = vadd.f32 0.0, %v3511
  %v3513 = vpop.f32.mrb[0].mxu0
  %v3514 = vpop.f32.mrb[0].mxu0
  %v3515 = vpop.f32.mrb[0].mxu0
  %3516 = vdwg.mxu0
  %v3517 = vadd.f32 %v3411, %v3512
  %v3518 = vpack.c.bf16 %v636, %v636
  %v3519 = vld [vmem:[%s2 + $0x700] sm:$0xf]
  %v3520 = vld [vmem:[%s2 + $0x704] sm:$0xf]
  %v3521 = vld [vmem:[%s2 + $0x708] sm:$0xf]
  %v3522 = vld [vmem:[%s2 + $0x70c] sm:$0xf]
  %v3523 = vld [vmem:[%s2 + $0x710] sm:$0xf]
  %v3524 = vld [vmem:[%s2 + $0x714] sm:$0xf]
  %v3525 = vld [vmem:[%s2 + $0x718] sm:$0xf]
  %v3526 = vld [vmem:[%s2 + $0x71c] sm:$0xf]
  %v3527 = vld [vmem:[%s2 + $0x720] sm:$0xf]
  %v3528 = vld [vmem:[%s2 + $0x724] sm:$0xf]
  %v3529 = vld [vmem:[%s2 + $0x728] sm:$0xf]
  %v3530 = vld [vmem:[%s2 + $0x72c] sm:$0xf]
  %v3531 = vld [vmem:[%s2 + $0x730] sm:$0xf]
  %v3532 = vld [vmem:[%s2 + $0x734] sm:$0xf]
  %v3533 = vld [vmem:[%s2 + $0x738] sm:$0xf]
  %v3534 = vld [vmem:[%s2 + $0x73c] sm:$0xf]
  %v3551 = vunpack.c.l.b16 %v3519
  %v3552 = vunpack.c.l.b16 %v3520
  %v3553 = vunpack.c.l.b16 %v3521
  %v3554 = vunpack.c.l.b16 %v3522
  %v3555 = vunpack.c.l.b16 %v3523
  %v3556 = vunpack.c.l.b16 %v3524
  %v3557 = vunpack.c.l.b16 %v3525
  %v3558 = vunpack.c.l.b16 %v3526
  %v3559 = vunpack.c.l.b16 %v3527
  %v3560 = vunpack.c.l.b16 %v3528
  %v3561 = vunpack.c.l.b16 %v3529
  %v3562 = vunpack.c.l.b16 %v3530
  %v3563 = vunpack.c.l.b16 %v3531
  %v3564 = vunpack.c.l.b16 %v3532
  %v3565 = vunpack.c.l.b16 %v3533
  %v3566 = vunpack.c.l.b16 %v3534
  %v3567 = vpack.c.b16 %v3552, %v3551
  %v3568 = vpack.c.b16 %v3554, %v3553
  %v3569 = vpack.c.b16 %v3556, %v3555
  %v3570 = vpack.c.b16 %v3558, %v3557
  %v3571 = vpack.c.b16 %v3560, %v3559
  %v3572 = vpack.c.b16 %v3562, %v3561
  %v3573 = vpack.c.b16 %v3564, %v3563
  %v3574 = vpack.c.b16 %v3566, %v3565
  %3583 = vmatprep.subr.bf16.mxu0 0
  %3584 = vmatpush1.bf16.msra.mxu0 %v3567
  %3585 = vmatprep.subr.bf16.mxu0 0
  %3586 = vmatpush1.bf16.msra.mxu0 %v3568
  %3587 = vmatprep.subr.bf16.mxu0 0
  %3588 = vmatpush1.bf16.msra.mxu0 %v3569
  %3589 = vmatprep.subr.bf16.mxu0 0
  %3590 = vmatpush1.bf16.msra.mxu0 %v3570
  %3591 = vmatprep.subr.bf16.mxu0 0
  %3592 = vmatpush1.bf16.msra.mxu0 %v3571
  %3593 = vmatprep.subr.bf16.mxu0 0
  %3594 = vmatpush1.bf16.msra.mxu0 %v3572
  %3595 = vmatprep.subr.bf16.mxu0 0
  %3596 = vmatpush1.bf16.msra.mxu0 %v3573
  %3597 = vmatprep.subr.bf16.mxu0 0
  %3598 = vmatpush1.bf16.msra.mxu0 %v3574
  %3599 = vmatprep.subr.bf16.mxu0 0
  %3600 = vmatpush1.bf16.msra.mxu0 0
  %3601 = vmatprep.subr.bf16.mxu0 0
  %3602 = vmatpush1.bf16.msra.mxu0 0
  %3603 = vmatprep.subr.bf16.mxu0 0
  %3604 = vmatpush1.bf16.msra.mxu0 0
  %3605 = vmatprep.subr.bf16.mxu0 0
  %3606 = vmatpush1.bf16.msra.mxu0 0
  %3607 = vmatprep.subr.bf16.mxu0 0
  %3608 = vmatpush1.bf16.msra.mxu0 0
  %3609 = vmatprep.subr.bf16.mxu0 0
  %3610 = vmatpush1.bf16.msra.mxu0 0
  %3611 = vmatprep.subr.bf16.mxu0 0
  %3612 = vmatpush1.bf16.msra.mxu0 0
  %3613 = vmatprep.subr.bf16.mxu0 0
  %3614 = vmatpush1.bf16.msra.mxu0 0
  %3615 = vmatprep.mubr.bf16.mxu0 0
  %3616 = vmatmul.mubr.bf16.gmra.mrb[0].mxu0 %v3518
  %v3617 = vpop.f32.mrb[0].mxu0
  %v3618 = vadd.f32 0.0, %v3617
  %v3619 = vpop.f32.mrb[0].mxu0
  %v3620 = vpop.f32.mrb[0].mxu0
  %v3621 = vpop.f32.mrb[0].mxu0
  %3622 = vdwg.mxu0
  %v3623 = vadd.f32 %v3517, %v3618
  %v3624 = vpack.c.bf16 %v637, %v637
  %v3625 = vld [vmem:[%s2 + $0x740] sm:$0xf]
  %v3626 = vld [vmem:[%s2 + $0x744] sm:$0xf]
  %v3627 = vld [vmem:[%s2 + $0x748] sm:$0xf]
  %v3628 = vld [vmem:[%s2 + $0x74c] sm:$0xf]
  %v3629 = vld [vmem:[%s2 + $0x750] sm:$0xf]
  %v3630 = vld [vmem:[%s2 + $0x754] sm:$0xf]
  %v3631 = vld [vmem:[%s2 + $0x758] sm:$0xf]
  %v3632 = vld [vmem:[%s2 + $0x75c] sm:$0xf]
  %v3633 = vld [vmem:[%s2 + $0x760] sm:$0xf]
  %v3634 = vld [vmem:[%s2 + $0x764] sm:$0xf]
  %v3635 = vld [vmem:[%s2 + $0x768] sm:$0xf]
  %v3636 = vld [vmem:[%s2 + $0x76c] sm:$0xf]
  %v3637 = vld [vmem:[%s2 + $0x770] sm:$0xf]
  %v3638 = vld [vmem:[%s2 + $0x774] sm:$0xf]
  %v3639 = vld [vmem:[%s2 + $0x778] sm:$0xf]
  %v3640 = vld [vmem:[%s2 + $0x77c] sm:$0xf]
  %v3657 = vunpack.c.l.b16 %v3625
  %v3658 = vunpack.c.l.b16 %v3626
  %v3659 = vunpack.c.l.b16 %v3627
  %v3660 = vunpack.c.l.b16 %v3628
  %v3661 = vunpack.c.l.b16 %v3629
  %v3662 = vunpack.c.l.b16 %v3630
  %v3663 = vunpack.c.l.b16 %v3631
  %v3664 = vunpack.c.l.b16 %v3632
  %v3665 = vunpack.c.l.b16 %v3633
  %v3666 = vunpack.c.l.b16 %v3634
  %v3667 = vunpack.c.l.b16 %v3635
  %v3668 = vunpack.c.l.b16 %v3636
  %v3669 = vunpack.c.l.b16 %v3637
  %v3670 = vunpack.c.l.b16 %v3638
  %v3671 = vunpack.c.l.b16 %v3639
  %v3672 = vunpack.c.l.b16 %v3640
  %v3673 = vpack.c.b16 %v3658, %v3657
  %v3674 = vpack.c.b16 %v3660, %v3659
  %v3675 = vpack.c.b16 %v3662, %v3661
  %v3676 = vpack.c.b16 %v3664, %v3663
  %v3677 = vpack.c.b16 %v3666, %v3665
  %v3678 = vpack.c.b16 %v3668, %v3667
  %v3679 = vpack.c.b16 %v3670, %v3669
  %v3680 = vpack.c.b16 %v3672, %v3671
  %3689 = vmatprep.subr.bf16.mxu0 0
  %3690 = vmatpush1.bf16.msra.mxu0 %v3673
  %3691 = vmatprep.subr.bf16.mxu0 0
  %3692 = vmatpush1.bf16.msra.mxu0 %v3674
  %3693 = vmatprep.subr.bf16.mxu0 0
  %3694 = vmatpush1.bf16.msra.mxu0 %v3675
  %3695 = vmatprep.subr.bf16.mxu0 0
  %3696 = vmatpush1.bf16.msra.mxu0 %v3676
  %3697 = vmatprep.subr.bf16.mxu0 0
  %3698 = vmatpush1.bf16.msra.mxu0 %v3677
  %3699 = vmatprep.subr.bf16.mxu0 0
  %3700 = vmatpush1.bf16.msra.mxu0 %v3678
  %3701 = vmatprep.subr.bf16.mxu0 0
  %3702 = vmatpush1.bf16.msra.mxu0 %v3679
  %3703 = vmatprep.subr.bf16.mxu0 0
  %3704 = vmatpush1.bf16.msra.mxu0 %v3680
  %3705 = vmatprep.subr.bf16.mxu0 0
  %3706 = vmatpush1.bf16.msra.mxu0 0
  %3707 = vmatprep.subr.bf16.mxu0 0
  %3708 = vmatpush1.bf16.msra.mxu0 0
  %3709 = vmatprep.subr.bf16.mxu0 0
  %3710 = vmatpush1.bf16.msra.mxu0 0
  %3711 = vmatprep.subr.bf16.mxu0 0
  %3712 = vmatpush1.bf16.msra.mxu0 0
  %3713 = vmatprep.subr.bf16.mxu0 0
  %3714 = vmatpush1.bf16.msra.mxu0 0
  %3715 = vmatprep.subr.bf16.mxu0 0
  %3716 = vmatpush1.bf16.msra.mxu0 0
  %3717 = vmatprep.subr.bf16.mxu0 0
  %3718 = vmatpush1.bf16.msra.mxu0 0
  %3719 = vmatprep.subr.bf16.mxu0 0
  %3720 = vmatpush1.bf16.msra.mxu0 0
  %3721 = vmatprep.mubr.bf16.mxu0 0
  %3722 = vmatmul.mubr.bf16.gmra.mrb[0].mxu0 %v3624
  %v3723 = vpop.f32.mrb[0].mxu0
  %v3724 = vadd.f32 0.0, %v3723
  %v3725 = vpop.f32.mrb[0].mxu0
  %v3726 = vpop.f32.mrb[0].mxu0
  %v3727 = vpop.f32.mrb[0].mxu0
  %3728 = vdwg.mxu0
  %v3729 = vadd.f32 %v3623, %v3724
  %v3730 = vpack.c.bf16 %v638, %v638
  %v3731 = vld [vmem:[%s2 + $0x780] sm:$0xf]
  %v3732 = vld [vmem:[%s2 + $0x784] sm:$0xf]
  %v3733 = vld [vmem:[%s2 + $0x788] sm:$0xf]
  %v3734 = vld [vmem:[%s2 + $0x78c] sm:$0xf]
  %v3735 = vld [vmem:[%s2 + $0x790] sm:$0xf]
  %v3736 = vld [vmem:[%s2 + $0x794] sm:$0xf]
  %v3737 = vld [vmem:[%s2 + $0x798] sm:$0xf]
  %v3738 = vld [vmem:[%s2 + $0x79c] sm:$0xf]
  %v3739 = vld [vmem:[%s2 + $0x7a0] sm:$0xf]
  %v3740 = vld [vmem:[%s2 + $0x7a4] sm:$0xf]
  %v3741 = vld [vmem:[%s2 + $0x7a8] sm:$0xf]
  %v3742 = vld [vmem:[%s2 + $0x7ac] sm:$0xf]
  %v3743 = vld [vmem:[%s2 + $0x7b0] sm:$0xf]
  %v3744 = vld [vmem:[%s2 + $0x7b4] sm:$0xf]
  %v3745 = vld [vmem:[%s2 + $0x7b8] sm:$0xf]
  %v3746 = vld [vmem:[%s2 + $0x7bc] sm:$0xf]
  %v3763 = vunpack.c.l.b16 %v3731
  %v3764 = vunpack.c.l.b16 %v3732
  %v3765 = vunpack.c.l.b16 %v3733
  %v3766 = vunpack.c.l.b16 %v3734
  %v3767 = vunpack.c.l.b16 %v3735
  %v3768 = vunpack.c.l.b16 %v3736
  %v3769 = vunpack.c.l.b16 %v3737
  %v3770 = vunpack.c.l.b16 %v3738
  %v3771 = vunpack.c.l.b16 %v3739
  %v3772 = vunpack.c.l.b16 %v3740
  %v3773 = vunpack.c.l.b16 %v3741
  %v3774 = vunpack.c.l.b16 %v3742
  %v3775 = vunpack.c.l.b16 %v3743
  %v3776 = vunpack.c.l.b16 %v3744
  %v3777 = vunpack.c.l.b16 %v3745
  %v3778 = vunpack.c.l.b16 %v3746
  %v3779 = vpack.c.b16 %v3764, %v3763
  %v3780 = vpack.c.b16 %v3766, %v3765
  %v3781 = vpack.c.b16 %v3768, %v3767
  %v3782 = vpack.c.b16 %v3770, %v3769
  %v3783 = vpack.c.b16 %v3772, %v3771
  %v3784 = vpack.c.b16 %v3774, %v3773
  %v3785 = vpack.c.b16 %v3776, %v3775
  %v3786 = vpack.c.b16 %v3778, %v3777
  %3795 = vmatprep.subr.bf16.mxu0 0
  %3796 = vmatpush1.bf16.msra.mxu0 %v3779
  %3797 = vmatprep.subr.bf16.mxu0 0
  %3798 = vmatpush1.bf16.msra.mxu0 %v3780
  %3799 = vmatprep.subr.bf16.mxu0 0
  %3800 = vmatpush1.bf16.msra.mxu0 %v3781
  %3801 = vmatprep.subr.bf16.mxu0 0
  %3802 = vmatpush1.bf16.msra.mxu0 %v3782
  %3803 = vmatprep.subr.bf16.mxu0 0
  %3804 = vmatpush1.bf16.msra.mxu0 %v3783
  %3805 = vmatprep.subr.bf16.mxu0 0
  %3806 = vmatpush1.bf16.msra.mxu0 %v3784
  %3807 = vmatprep.subr.bf16.mxu0 0
  %3808 = vmatpush1.bf16.msra.mxu0 %v3785
  %3809 = vmatprep.subr.bf16.mxu0 0
  %3810 = vmatpush1.bf16.msra.mxu0 %v3786
  %3811 = vmatprep.subr.bf16.mxu0 0
  %3812 = vmatpush1.bf16.msra.mxu0 0
  %3813 = vmatprep.subr.bf16.mxu0 0
  %3814 = vmatpush1.bf16.msra.mxu0 0
  %3815 = vmatprep.subr.bf16.mxu0 0
  %3816 = vmatpush1.bf16.msra.mxu0 0
  %3817 = vmatprep.subr.bf16.mxu0 0
  %3818 = vmatpush1.bf16.msra.mxu0 0
  %3819 = vmatprep.subr.bf16.mxu0 0
  %3820 = vmatpush1.bf16.msra.mxu0 0
  %3821 = vmatprep.subr.bf16.mxu0 0
  %3822 = vmatpush1.bf16.msra.mxu0 0
  %3823 = vmatprep.subr.bf16.mxu0 0
  %3824 = vmatpush1.bf16.msra.mxu0 0
  %3825 = vmatprep.subr.bf16.mxu0 0
  %3826 = vmatpush1.bf16.msra.mxu0 0
  %3827 = vmatprep.mubr.bf16.mxu0 0
  %3828 = vmatmul.mubr.bf16.gmra.mrb[0].mxu0 %v3730
  %v3829 = vpop.f32.mrb[0].mxu0
  %v3830 = vadd.f32 0.0, %v3829
  %v3831 = vpop.f32.mrb[0].mxu0
  %v3832 = vpop.f32.mrb[0].mxu0
  %v3833 = vpop.f32.mrb[0].mxu0
  %3834 = vdwg.mxu0
  %v3835 = vadd.f32 %v3729, %v3830
  %v3836 = vpack.c.bf16 %v639, %v639
  %v3837 = vld [vmem:[%s2 + $0x7c0] sm:$0xf]
  %v3838 = vld [vmem:[%s2 + $0x7c4] sm:$0xf]
  %v3839 = vld [vmem:[%s2 + $0x7c8] sm:$0xf]
  %v3840 = vld [vmem:[%s2 + $0x7cc] sm:$0xf]
  %v3841 = vld [vmem:[%s2 + $0x7d0] sm:$0xf]
  %v3842 = vld [vmem:[%s2 + $0x7d4] sm:$0xf]
  %v3843 = vld [vmem:[%s2 + $0x7d8] sm:$0xf]
  %v3844 = vld [vmem:[%s2 + $0x7dc] sm:$0xf]
  %v3845 = vld [vmem:[%s2 + $0x7e0] sm:$0xf]
  %v3846 = vld [vmem:[%s2 + $0x7e4] sm:$0xf]
  %v3847 = vld [vmem:[%s2 + $0x7e8] sm:$0xf]
  %v3848 = vld [vmem:[%s2 + $0x7ec] sm:$0xf]
  %v3849 = vld [vmem:[%s2 + $0x7f0] sm:$0xf]
  %v3850 = vld [vmem:[%s2 + $0x7f4] sm:$0xf]
  %v3851 = vld [vmem:[%s2 + $0x7f8] sm:$0xf]
  %v3852 = vld [vmem:[%s2 + $0x7fc] sm:$0xf]
  %v3869 = vunpack.c.l.b16 %v3837
  %v3870 = vunpack.c.l.b16 %v3838
  %v3871 = vunpack.c.l.b16 %v3839
  %v3872 = vunpack.c.l.b16 %v3840
  %v3873 = vunpack.c.l.b16 %v3841
  %v3874 = vunpack.c.l.b16 %v3842
  %v3875 = vunpack.c.l.b16 %v3843
  %v3876 = vunpack.c.l.b16 %v3844
  %v3877 = vunpack.c.l.b16 %v3845
  %v3878 = vunpack.c.l.b16 %v3846
  %v3879 = vunpack.c.l.b16 %v3847
  %v3880 = vunpack.c.l.b16 %v3848
  %v3881 = vunpack.c.l.b16 %v3849
  %v3882 = vunpack.c.l.b16 %v3850
  %v3883 = vunpack.c.l.b16 %v3851
  %v3884 = vunpack.c.l.b16 %v3852
  %v3885 = vpack.c.b16 %v3870, %v3869
  %v3886 = vpack.c.b16 %v3872, %v3871
  %v3887 = vpack.c.b16 %v3874, %v3873
  %v3888 = vpack.c.b16 %v3876, %v3875
  %v3889 = vpack.c.b16 %v3878, %v3877
  %v3890 = vpack.c.b16 %v3880, %v3879
  %v3891 = vpack.c.b16 %v3882, %v3881
  %v3892 = vpack.c.b16 %v3884, %v3883
  %3901 = vmatprep.subr.bf16.mxu0 0
  %3902 = vmatpush1.bf16.msra.mxu0 %v3885
  %3903 = vmatprep.subr.bf16.mxu0 0
  %3904 = vmatpush1.bf16.msra.mxu0 %v3886
  %3905 = vmatprep.subr.bf16.mxu0 0
  %3906 = vmatpush1.bf16.msra.mxu0 %v3887
  %3907 = vmatprep.subr.bf16.mxu0 0
  %3908 = vmatpush1.bf16.msra.mxu0 %v3888
  %3909 = vmatprep.subr.bf16.mxu0 0
  %3910 = vmatpush1.bf16.msra.mxu0 %v3889
  %3911 = vmatprep.subr.bf16.mxu0 0
  %3912 = vmatpush1.bf16.msra.mxu0 %v3890
  %3913 = vmatprep.subr.bf16.mxu0 0
  %3914 = vmatpush1.bf16.msra.mxu0 %v3891
  %3915 = vmatprep.subr.bf16.mxu0 0
  %3916 = vmatpush1.bf16.msra.mxu0 %v3892
  %3917 = vmatprep.subr.bf16.mxu0 0
  %3918 = vmatpush1.bf16.msra.mxu0 0
  %3919 = vmatprep.subr.bf16.mxu0 0
  %3920 = vmatpush1.bf16.msra.mxu0 0
  %3921 = vmatprep.subr.bf16.mxu0 0
  %3922 = vmatpush1.bf16.msra.mxu0 0
  %3923 = vmatprep.subr.bf16.mxu0 0
  %3924 = vmatpush1.bf16.msra.mxu0 0
  %3925 = vmatprep.subr.bf16.mxu0 0
  %3926 = vmatpush1.bf16.msra.mxu0 0
  %3927 = vmatprep.subr.bf16.mxu0 0
  %3928 = vmatpush1.bf16.msra.mxu0 0
  %3929 = vmatprep.subr.bf16.mxu0 0
  %3930 = vmatpush1.bf16.msra.mxu0 0
  %3931 = vmatprep.subr.bf16.mxu0 0
  %3932 = vmatpush1.bf16.msra.mxu0 0
  %3933 = vmatprep.mubr.bf16.mxu0 0
  %3934 = vmatmul.mubr.bf16.gmra.mrb[0].mxu0 %v3836
  %v3935 = vpop.f32.mrb[0].mxu0
  %v3936 = vadd.f32 0.0, %v3935
  %v3937 = vpop.f32.mrb[0].mxu0
  %v3938 = vpop.f32.mrb[0].mxu0
  %v3939 = vpop.f32.mrb[0].mxu0
  %3940 = vdwg.mxu0
  %v3941 = vadd.f32 %v3835, %v3936
  %v3942 = vpack.c.bf16 %v640, %v640
  %v3943 = vld [vmem:[%s2 + $0x800] sm:$0xf]
  %v3944 = vld [vmem:[%s2 + $0x804] sm:$0xf]
  %v3945 = vld [vmem:[%s2 + $0x808] sm:$0xf]
  %v3946 = vld [vmem:[%s2 + $0x80c] sm:$0xf]
  %v3947 = vld [vmem:[%s2 + $0x810] sm:$0xf]
  %v3948 = vld [vmem:[%s2 + $0x814] sm:$0xf]
  %v3949 = vld [vmem:[%s2 + $0x818] sm:$0xf]
  %v3950 = vld [vmem:[%s2 + $0x81c] sm:$0xf]
  %v3951 = vld [vmem:[%s2 + $0x820] sm:$0xf]
  %v3952 = vld [vmem:[%s2 + $0x824] sm:$0xf]
  %v3953 = vld [vmem:[%s2 + $0x828] sm:$0xf]
  %v3954 = vld [vmem:[%s2 + $0x82c] sm:$0xf]
  %v3955 = vld [vmem:[%s2 + $0x830] sm:$0xf]
  %v3956 = vld [vmem:[%s2 + $0x834] sm:$0xf]
  %v3957 = vld [vmem:[%s2 + $0x838] sm:$0xf]
  %v3958 = vld [vmem:[%s2 + $0x83c] sm:$0xf]
  %v3975 = vunpack.c.l.b16 %v3943
  %v3976 = vunpack.c.l.b16 %v3944
  %v3977 = vunpack.c.l.b16 %v3945
  %v3978 = vunpack.c.l.b16 %v3946
  %v3979 = vunpack.c.l.b16 %v3947
  %v3980 = vunpack.c.l.b16 %v3948
  %v3981 = vunpack.c.l.b16 %v3949
  %v3982 = vunpack.c.l.b16 %v3950
  %v3983 = vunpack.c.l.b16 %v3951
  %v3984 = vunpack.c.l.b16 %v3952
  %v3985 = vunpack.c.l.b16 %v3953
  %v3986 = vunpack.c.l.b16 %v3954
  %v3987 = vunpack.c.l.b16 %v3955
  %v3988 = vunpack.c.l.b16 %v3956
  %v3989 = vunpack.c.l.b16 %v3957
  %v3990 = vunpack.c.l.b16 %v3958
  %v3991 = vpack.c.b16 %v3976, %v3975
  %v3992 = vpack.c.b16 %v3978, %v3977
  %v3993 = vpack.c.b16 %v3980, %v3979
  %v3994 = vpack.c.b16 %v3982, %v3981
  %v3995 = vpack.c.b16 %v3984, %v3983
  %v3996 = vpack.c.b16 %v3986, %v3985
  %v3997 = vpack.c.b16 %v3988, %v3987
  %v3998 = vpack.c.b16 %v3990, %v3989
  %4007 = vmatprep.subr.bf16.mxu0 0
  %4008 = vmatpush1.bf16.msra.mxu0 %v3991
  %4009 = vmatprep.subr.bf16.mxu0 0
  %4010 = vmatpush1.bf16.msra.mxu0 %v3992
  %4011 = vmatprep.subr.bf16.mxu0 0
  %4012 = vmatpush1.bf16.msra.mxu0 %v3993
  %4013 = vmatprep.subr.bf16.mxu0 0
  %4014 = vmatpush1.bf16.msra.mxu0 %v3994
  %4015 = vmatprep.subr.bf16.mxu0 0
  %4016 = vmatpush1.bf16.msra.mxu0 %v3995
  %4017 = vmatprep.subr.bf16.mxu0 0
  %4018 = vmatpush1.bf16.msra.mxu0 %v3996
  %4019 = vmatprep.subr.bf16.mxu0 0
  %4020 = vmatpush1.bf16.msra.mxu0 %v3997
  %4021 = vmatprep.subr.bf16.mxu0 0
  %4022 = vmatpush1.bf16.msra.mxu0 %v3998
  %4023 = vmatprep.subr.bf16.mxu0 0
  %4024 = vmatpush1.bf16.msra.mxu0 0
  %4025 = vmatprep.subr.bf16.mxu0 0
  %4026 = vmatpush1.bf16.msra.mxu0 0
  %4027 = vmatprep.subr.bf16.mxu0 0
  %4028 = vmatpush1.bf16.msra.mxu0 0
  %4029 = vmatprep.subr.bf16.mxu0 0
  %4030 = vmatpush1.bf16.msra.mxu0 0
  %4031 = vmatprep.subr.bf16.mxu0 0
  %4032 = vmatpush1.bf16.msra.mxu0 0
  %4033 = vmatprep.subr.bf16.mxu0 0
  %4034 = vmatpush1.bf16.msra.mxu0 0
  %4035 = vmatprep.subr.bf16.mxu0 0
  %4036 = vmatpush1.bf16.msra.mxu0 0
  %4037 = vmatprep.subr.bf16.mxu0 0
  %4038 = vmatpush1.bf16.msra.mxu0 0
  %4039 = vmatprep.mubr.bf16.mxu0 0
  %4040 = vmatmul.mubr.bf16.gmra.mrb[0].mxu0 %v3942
  %v4041 = vpop.f32.mrb[0].mxu0
  %v4042 = vadd.f32 0.0, %v4041
  %v4043 = vpop.f32.mrb[0].mxu0
  %v4044 = vpop.f32.mrb[0].mxu0
  %v4045 = vpop.f32.mrb[0].mxu0
  %4046 = vdwg.mxu0
  %v4047 = vadd.f32 %v3941, %v4042
  %v4048 = vpack.c.bf16 %v641, %v641
  %v4049 = vld [vmem:[%s2 + $0x840] sm:$0xf]
  %v4050 = vld [vmem:[%s2 + $0x844] sm:$0xf]
  %v4051 = vld [vmem:[%s2 + $0x848] sm:$0xf]
  %v4052 = vld [vmem:[%s2 + $0x84c] sm:$0xf]
  %v4053 = vld [vmem:[%s2 + $0x850] sm:$0xf]
  %v4054 = vld [vmem:[%s2 + $0x854] sm:$0xf]
  %v4055 = vld [vmem:[%s2 + $0x858] sm:$0xf]
  %v4056 = vld [vmem:[%s2 + $0x85c] sm:$0xf]
  %v4057 = vld [vmem:[%s2 + $0x860] sm:$0xf]
  %v4058 = vld [vmem:[%s2 + $0x864] sm:$0xf]
  %v4059 = vld [vmem:[%s2 + $0x868] sm:$0xf]
  %v4060 = vld [vmem:[%s2 + $0x86c] sm:$0xf]
  %v4061 = vld [vmem:[%s2 + $0x870] sm:$0xf]
  %v4062 = vld [vmem:[%s2 + $0x874] sm:$0xf]
  %v4063 = vld [vmem:[%s2 + $0x878] sm:$0xf]
  %v4064 = vld [vmem:[%s2 + $0x87c] sm:$0xf]
  %v4081 = vunpack.c.l.b16 %v4049
  %v4082 = vunpack.c.l.b16 %v4050
  %v4083 = vunpack.c.l.b16 %v4051
  %v4084 = vunpack.c.l.b16 %v4052
  %v4085 = vunpack.c.l.b16 %v4053
  %v4086 = vunpack.c.l.b16 %v4054
  %v4087 = vunpack.c.l.b16 %v4055
  %v4088 = vunpack.c.l.b16 %v4056
  %v4089 = vunpack.c.l.b16 %v4057
  %v4090 = vunpack.c.l.b16 %v4058
  %v4091 = vunpack.c.l.b16 %v4059
  %v4092 = vunpack.c.l.b16 %v4060
  %v4093 = vunpack.c.l.b16 %v4061
  %v4094 = vunpack.c.l.b16 %v4062
  %v4095 = vunpack.c.l.b16 %v4063
  %v4096 = vunpack.c.l.b16 %v4064
  %v4097 = vpack.c.b16 %v4082, %v4081
  %v4098 = vpack.c.b16 %v4084, %v4083
  %v4099 = vpack.c.b16 %v4086, %v4085
  %v4100 = vpack.c.b16 %v4088, %v4087
  %v4101 = vpack.c.b16 %v4090, %v4089
  %v4102 = vpack.c.b16 %v4092, %v4091
  %v4103 = vpack.c.b16 %v4094, %v4093
  %v4104 = vpack.c.b16 %v4096, %v4095
  %4113 = vmatprep.subr.bf16.mxu0 0
  %4114 = vmatpush1.bf16.msra.mxu0 %v4097
  %4115 = vmatprep.subr.bf16.mxu0 0
  %4116 = vmatpush1.bf16.msra.mxu0 %v4098
  %4117 = vmatprep.subr.bf16.mxu0 0
  %4118 = vmatpush1.bf16.msra.mxu0 %v4099
  %4119 = vmatprep.subr.bf16.mxu0 0
  %4120 = vmatpush1.bf16.msra.mxu0 %v4100
  %4121 = vmatprep.subr.bf16.mxu0 0
  %4122 = vmatpush1.bf16.msra.mxu0 %v4101
  %4123 = vmatprep.subr.bf16.mxu0 0
  %4124 = vmatpush1.bf16.msra.mxu0 %v4102
  %4125 = vmatprep.subr.bf16.mxu0 0
  %4126 = vmatpush1.bf16.msra.mxu0 %v4103
  %4127 = vmatprep.subr.bf16.mxu0 0
  %4128 = vmatpush1.bf16.msra.mxu0 %v4104
  %4129 = vmatprep.subr.bf16.mxu0 0
  %4130 = vmatpush1.bf16.msra.mxu0 0
  %4131 = vmatprep.subr.bf16.mxu0 0
  %4132 = vmatpush1.bf16.msra.mxu0 0
  %4133 = vmatprep.subr.bf16.mxu0 0
  %4134 = vmatpush1.bf16.msra.mxu0 0
  %4135 = vmatprep.subr.bf16.mxu0 0
  %4136 = vmatpush1.bf16.msra.mxu0 0
  %4137 = vmatprep.subr.bf16.mxu0 0
  %4138 = vmatpush1.bf16.msra.mxu0 0
  %4139 = vmatprep.subr.bf16.mxu0 0
  %4140 = vmatpush1.bf16.msra.mxu0 0
  %4141 = vmatprep.subr.bf16.mxu0 0
  %4142 = vmatpush1.bf16.msra.mxu0 0
  %4143 = vmatprep.subr.bf16.mxu0 0
  %4144 = vmatpush1.bf16.msra.mxu0 0
  %4145 = vmatprep.mubr.bf16.mxu0 0
  %4146 = vmatmul.mubr.bf16.gmra.mrb[0].mxu0 %v4048
  %v4147 = vpop.f32.mrb[0].mxu0
  %v4148 = vadd.f32 0.0, %v4147
  %v4149 = vpop.f32.mrb[0].mxu0
  %v4150 = vpop.f32.mrb[0].mxu0
  %v4151 = vpop.f32.mrb[0].mxu0
  %4152 = vdwg.mxu0
  %v4153 = vadd.f32 %v4047, %v4148
  %v4154 = vpack.c.bf16 %v642, %v642
  %v4155 = vld [vmem:[%s2 + $0x880] sm:$0xf]
  %v4156 = vld [vmem:[%s2 + $0x884] sm:$0xf]
  %v4157 = vld [vmem:[%s2 + $0x888] sm:$0xf]
  %v4158 = vld [vmem:[%s2 + $0x88c] sm:$0xf]
  %v4159 = vld [vmem:[%s2 + $0x890] sm:$0xf]
  %v4160 = vld [vmem:[%s2 + $0x894] sm:$0xf]
  %v4161 = vld [vmem:[%s2 + $0x898] sm:$0xf]
  %v4162 = vld [vmem:[%s2 + $0x89c] sm:$0xf]
  %v4163 = vld [vmem:[%s2 + $0x8a0] sm:$0xf]
  %v4164 = vld [vmem:[%s2 + $0x8a4] sm:$0xf]
  %v4165 = vld [vmem:[%s2 + $0x8a8] sm:$0xf]
  %v4166 = vld [vmem:[%s2 + $0x8ac] sm:$0xf]
  %v4167 = vld [vmem:[%s2 + $0x8b0] sm:$0xf]
  %v4168 = vld [vmem:[%s2 + $0x8b4] sm:$0xf]
  %v4169 = vld [vmem:[%s2 + $0x8b8] sm:$0xf]
  %v4170 = vld [vmem:[%s2 + $0x8bc] sm:$0xf]
  %v4187 = vunpack.c.l.b16 %v4155
  %v4188 = vunpack.c.l.b16 %v4156
  %v4189 = vunpack.c.l.b16 %v4157
  %v4190 = vunpack.c.l.b16 %v4158
  %v4191 = vunpack.c.l.b16 %v4159
  %v4192 = vunpack.c.l.b16 %v4160
  %v4193 = vunpack.c.l.b16 %v4161
  %v4194 = vunpack.c.l.b16 %v4162
  %v4195 = vunpack.c.l.b16 %v4163
  %v4196 = vunpack.c.l.b16 %v4164
  %v4197 = vunpack.c.l.b16 %v4165
  %v4198 = vunpack.c.l.b16 %v4166
  %v4199 = vunpack.c.l.b16 %v4167
  %v4200 = vunpack.c.l.b16 %v4168
  %v4201 = vunpack.c.l.b16 %v4169
  %v4202 = vunpack.c.l.b16 %v4170
  %v4203 = vpack.c.b16 %v4188, %v4187
  %v4204 = vpack.c.b16 %v4190, %v4189
  %v4205 = vpack.c.b16 %v4192, %v4191
  %v4206 = vpack.c.b16 %v4194, %v4193
  %v4207 = vpack.c.b16 %v4196, %v4195
  %v4208 = vpack.c.b16 %v4198, %v4197
  %v4209 = vpack.c.b16 %v4200, %v4199
  %v4210 = vpack.c.b16 %v4202, %v4201
  %4219 = vmatprep.subr.bf16.mxu0 0
  %4220 = vmatpush1.bf16.msra.mxu0 %v4203
  %4221 = vmatprep.subr.bf16.mxu0 0
  %4222 = vmatpush1.bf16.msra.mxu0 %v4204
  %4223 = vmatprep.subr.bf16.mxu0 0
  %4224 = vmatpush1.bf16.msra.mxu0 %v4205
  %4225 = vmatprep.subr.bf16.mxu0 0
  %4226 = vmatpush1.bf16.msra.mxu0 %v4206
  %4227 = vmatprep.subr.bf16.mxu0 0
  %4228 = vmatpush1.bf16.msra.mxu0 %v4207
  %4229 = vmatprep.subr.bf16.mxu0 0
  %4230 = vmatpush1.bf16.msra.mxu0 %v4208
  %4231 = vmatprep.subr.bf16.mxu0 0
  %4232 = vmatpush1.bf16.msra.mxu0 %v4209
  %4233 = vmatprep.subr.bf16.mxu0 0
  %4234 = vmatpush1.bf16.msra.mxu0 %v4210
  %4235 = vmatprep.subr.bf16.mxu0 0
  %4236 = vmatpush1.bf16.msra.mxu0 0
  %4237 = vmatprep.subr.bf16.mxu0 0
  %4238 = vmatpush1.bf16.msra.mxu0 0
  %4239 = vmatprep.subr.bf16.mxu0 0
  %4240 = vmatpush1.bf16.msra.mxu0 0
  %4241 = vmatprep.subr.bf16.mxu0 0
  %4242 = vmatpush1.bf16.msra.mxu0 0
  %4243 = vmatprep.subr.bf16.mxu0 0
  %4244 = vmatpush1.bf16.msra.mxu0 0
  %4245 = vmatprep.subr.bf16.mxu0 0
  %4246 = vmatpush1.bf16.msra.mxu0 0
  %4247 = vmatprep.subr.bf16.mxu0 0
  %4248 = vmatpush1.bf16.msra.mxu0 0
  %4249 = vmatprep.subr.bf16.mxu0 0
  %4250 = vmatpush1.bf16.msra.mxu0 0
  %4251 = vmatprep.mubr.bf16.mxu0 0
  %4252 = vmatmul.mubr.bf16.gmra.mrb[0].mxu0 %v4154
  %v4253 = vpop.f32.mrb[0].mxu0
  %v4254 = vadd.f32 0.0, %v4253
  %v4255 = vpop.f32.mrb[0].mxu0
  %v4256 = vpop.f32.mrb[0].mxu0
  %v4257 = vpop.f32.mrb[0].mxu0
  %4258 = vdwg.mxu0
  %v4259 = vadd.f32 %v4153, %v4254
  %v4260 = vpack.c.bf16 %v643, %v643
  %v4261 = vld [vmem:[%s2 + $0x8c0] sm:$0xf]
  %v4262 = vld [vmem:[%s2 + $0x8c4] sm:$0xf]
  %v4263 = vld [vmem:[%s2 + $0x8c8] sm:$0xf]
  %v4264 = vld [vmem:[%s2 + $0x8cc] sm:$0xf]
  %v4265 = vld [vmem:[%s2 + $0x8d0] sm:$0xf]
  %v4266 = vld [vmem:[%s2 + $0x8d4] sm:$0xf]
  %v4267 = vld [vmem:[%s2 + $0x8d8] sm:$0xf]
  %v4268 = vld [vmem:[%s2 + $0x8dc] sm:$0xf]
  %v4269 = vld [vmem:[%s2 + $0x8e0] sm:$0xf]
  %v4270 = vld [vmem:[%s2 + $0x8e4] sm:$0xf]
  %v4271 = vld [vmem:[%s2 + $0x8e8] sm:$0xf]
  %v4272 = vld [vmem:[%s2 + $0x8ec] sm:$0xf]
  %v4273 = vld [vmem:[%s2 + $0x8f0] sm:$0xf]
  %v4274 = vld [vmem:[%s2 + $0x8f4] sm:$0xf]
  %v4275 = vld [vmem:[%s2 + $0x8f8] sm:$0xf]
  %v4276 = vld [vmem:[%s2 + $0x8fc] sm:$0xf]
  %v4293 = vunpack.c.l.b16 %v4261
  %v4294 = vunpack.c.l.b16 %v4262
  %v4295 = vunpack.c.l.b16 %v4263
  %v4296 = vunpack.c.l.b16 %v4264
  %v4297 = vunpack.c.l.b16 %v4265
  %v4298 = vunpack.c.l.b16 %v4266
  %v4299 = vunpack.c.l.b16 %v4267
  %v4300 = vunpack.c.l.b16 %v4268
  %v4301 = vunpack.c.l.b16 %v4269
  %v4302 = vunpack.c.l.b16 %v4270
  %v4303 = vunpack.c.l.b16 %v4271
  %v4304 = vunpack.c.l.b16 %v4272
  %v4305 = vunpack.c.l.b16 %v4273
  %v4306 = vunpack.c.l.b16 %v4274
  %v4307 = vunpack.c.l.b16 %v4275
  %v4308 = vunpack.c.l.b16 %v4276
  %v4309 = vpack.c.b16 %v4294, %v4293
  %v4310 = vpack.c.b16 %v4296, %v4295
  %v4311 = vpack.c.b16 %v4298, %v4297
  %v4312 = vpack.c.b16 %v4300, %v4299
  %v4313 = vpack.c.b16 %v4302, %v4301
  %v4314 = vpack.c.b16 %v4304, %v4303
  %v4315 = vpack.c.b16 %v4306, %v4305
  %v4316 = vpack.c.b16 %v4308, %v4307
  %4325 = vmatprep.subr.bf16.mxu0 0
  %4326 = vmatpush1.bf16.msra.mxu0 %v4309
  %4327 = vmatprep.subr.bf16.mxu0 0
  %4328 = vmatpush1.bf16.msra.mxu0 %v4310
  %4329 = vmatprep.subr.bf16.mxu0 0
  %4330 = vmatpush1.bf16.msra.mxu0 %v4311
  %4331 = vmatprep.subr.bf16.mxu0 0
  %4332 = vmatpush1.bf16.msra.mxu0 %v4312
  %4333 = vmatprep.subr.bf16.mxu0 0
  %4334 = vmatpush1.bf16.msra.mxu0 %v4313
  %4335 = vmatprep.subr.bf16.mxu0 0
  %4336 = vmatpush1.bf16.msra.mxu0 %v4314
  %4337 = vmatprep.subr.bf16.mxu0 0
  %4338 = vmatpush1.bf16.msra.mxu0 %v4315
  %4339 = vmatprep.subr.bf16.mxu0 0
  %4340 = vmatpush1.bf16.msra.mxu0 %v4316
  %4341 = vmatprep.subr.bf16.mxu0 0
  %4342 = vmatpush1.bf16.msra.mxu0 0
  %4343 = vmatprep.subr.bf16.mxu0 0
  %4344 = vmatpush1.bf16.msra.mxu0 0
  %4345 = vmatprep.subr.bf16.mxu0 0
  %4346 = vmatpush1.bf16.msra.mxu0 0
  %4347 = vmatprep.subr.bf16.mxu0 0
  %4348 = vmatpush1.bf16.msra.mxu0 0
  %4349 = vmatprep.subr.bf16.mxu0 0
  %4350 = vmatpush1.bf16.msra.mxu0 0
  %4351 = vmatprep.subr.bf16.mxu0 0
  %4352 = vmatpush1.bf16.msra.mxu0 0
  %4353 = vmatprep.subr.bf16.mxu0 0
  %4354 = vmatpush1.bf16.msra.mxu0 0
  %4355 = vmatprep.subr.bf16.mxu0 0
  %4356 = vmatpush1.bf16.msra.mxu0 0
  %4357 = vmatprep.mubr.bf16.mxu0 0
  %4358 = vmatmul.mubr.bf16.gmra.mrb[0].mxu0 %v4260
  %v4359 = vpop.f32.mrb[0].mxu0
  %v4360 = vadd.f32 0.0, %v4359
  %v4361 = vpop.f32.mrb[0].mxu0
  %v4362 = vpop.f32.mrb[0].mxu0
  %v4363 = vpop.f32.mrb[0].mxu0
  %4364 = vdwg.mxu0
  %v4365 = vadd.f32 %v4259, %v4360
  %v4366 = vpack.c.bf16 %v644, %v644
  %v4367 = vld [vmem:[%s2 + $0x900] sm:$0xf]
  %v4368 = vld [vmem:[%s2 + $0x904] sm:$0xf]
  %v4369 = vld [vmem:[%s2 + $0x908] sm:$0xf]
  %v4370 = vld [vmem:[%s2 + $0x90c] sm:$0xf]
  %v4371 = vld [vmem:[%s2 + $0x910] sm:$0xf]
  %v4372 = vld [vmem:[%s2 + $0x914] sm:$0xf]
  %v4373 = vld [vmem:[%s2 + $0x918] sm:$0xf]
  %v4374 = vld [vmem:[%s2 + $0x91c] sm:$0xf]
  %v4375 = vld [vmem:[%s2 + $0x920] sm:$0xf]
  %v4376 = vld [vmem:[%s2 + $0x924] sm:$0xf]
  %v4377 = vld [vmem:[%s2 + $0x928] sm:$0xf]
  %v4378 = vld [vmem:[%s2 + $0x92c] sm:$0xf]
  %v4379 = vld [vmem:[%s2 + $0x930] sm:$0xf]
  %v4380 = vld [vmem:[%s2 + $0x934] sm:$0xf]
  %v4381 = vld [vmem:[%s2 + $0x938] sm:$0xf]
  %v4382 = vld [vmem:[%s2 + $0x93c] sm:$0xf]
  %v4399 = vunpack.c.l.b16 %v4367
  %v4400 = vunpack.c.l.b16 %v4368
  %v4401 = vunpack.c.l.b16 %v4369
  %v4402 = vunpack.c.l.b16 %v4370
  %v4403 = vunpack.c.l.b16 %v4371
  %v4404 = vunpack.c.l.b16 %v4372
  %v4405 = vunpack.c.l.b16 %v4373
  %v4406 = vunpack.c.l.b16 %v4374
  %v4407 = vunpack.c.l.b16 %v4375
  %v4408 = vunpack.c.l.b16 %v4376
  %v4409 = vunpack.c.l.b16 %v4377
  %v4410 = vunpack.c.l.b16 %v4378
  %v4411 = vunpack.c.l.b16 %v4379
  %v4412 = vunpack.c.l.b16 %v4380
  %v4413 = vunpack.c.l.b16 %v4381
  %v4414 = vunpack.c.l.b16 %v4382
  %v4415 = vpack.c.b16 %v4400, %v4399
  %v4416 = vpack.c.b16 %v4402, %v4401
  %v4417 = vpack.c.b16 %v4404, %v4403
  %v4418 = vpack.c.b16 %v4406, %v4405
  %v4419 = vpack.c.b16 %v4408, %v4407
  %v4420 = vpack.c.b16 %v4410, %v4409
  %v4421 = vpack.c.b16 %v4412, %v4411
  %v4422 = vpack.c.b16 %v4414, %v4413
  %4431 = vmatprep.subr.bf16.mxu0 0
  %4432 = vmatpush1.bf16.msra.mxu0 %v4415
  %4433 = vmatprep.subr.bf16.mxu0 0
  %4434 = vmatpush1.bf16.msra.mxu0 %v4416
  %4435 = vmatprep.subr.bf16.mxu0 0
  %4436 = vmatpush1.bf16.msra.mxu0 %v4417
  %4437 = vmatprep.subr.bf16.mxu0 0
  %4438 = vmatpush1.bf16.msra.mxu0 %v4418
  %4439 = vmatprep.subr.bf16.mxu0 0
  %4440 = vmatpush1.bf16.msra.mxu0 %v4419
  %4441 = vmatprep.subr.bf16.mxu0 0
  %4442 = vmatpush1.bf16.msra.mxu0 %v4420
  %4443 = vmatprep.subr.bf16.mxu0 0
  %4444 = vmatpush1.bf16.msra.mxu0 %v4421
  %4445 = vmatprep.subr.bf16.mxu0 0
  %4446 = vmatpush1.bf16.msra.mxu0 %v4422
  %4447 = vmatprep.subr.bf16.mxu0 0
  %4448 = vmatpush1.bf16.msra.mxu0 0
  %4449 = vmatprep.subr.bf16.mxu0 0
  %4450 = vmatpush1.bf16.msra.mxu0 0
  %4451 = vmatprep.subr.bf16.mxu0 0
  %4452 = vmatpush1.bf16.msra.mxu0 0
  %4453 = vmatprep.subr.bf16.mxu0 0
  %4454 = vmatpush1.bf16.msra.mxu0 0
  %4455 = vmatprep.subr.bf16.mxu0 0
  %4456 = vmatpush1.bf16.msra.mxu0 0
  %4457 = vmatprep.subr.bf16.mxu0 0
  %4458 = vmatpush1.bf16.msra.mxu0 0
  %4459 = vmatprep.subr.bf16.mxu0 0
  %4460 = vmatpush1.bf16.msra.mxu0 0
  %4461 = vmatprep.subr.bf16.mxu0 0
  %4462 = vmatpush1.bf16.msra.mxu0 0
  %4463 = vmatprep.mubr.bf16.mxu0 0
  %4464 = vmatmul.mubr.bf16.gmra.mrb[0].mxu0 %v4366
  %v4465 = vpop.f32.mrb[0].mxu0
  %v4466 = vadd.f32 0.0, %v4465
  %v4467 = vpop.f32.mrb[0].mxu0
  %v4468 = vpop.f32.mrb[0].mxu0
  %v4469 = vpop.f32.mrb[0].mxu0
  %4470 = vdwg.mxu0
  %v4471 = vadd.f32 %v4365, %v4466
  %v4472 = vpack.c.bf16 %v645, %v645
  %v4473 = vld [vmem:[%s2 + $0x940] sm:$0xf]
  %v4474 = vld [vmem:[%s2 + $0x944] sm:$0xf]
  %v4475 = vld [vmem:[%s2 + $0x948] sm:$0xf]
  %v4476 = vld [vmem:[%s2 + $0x94c] sm:$0xf]
  %v4477 = vld [vmem:[%s2 + $0x950] sm:$0xf]
  %v4478 = vld [vmem:[%s2 + $0x954] sm:$0xf]
  %v4479 = vld [vmem:[%s2 + $0x958] sm:$0xf]
  %v4480 = vld [vmem:[%s2 + $0x95c] sm:$0xf]
  %v4481 = vld [vmem:[%s2 + $0x960] sm:$0xf]
  %v4482 = vld [vmem:[%s2 + $0x964] sm:$0xf]
  %v4483 = vld [vmem:[%s2 + $0x968] sm:$0xf]
  %v4484 = vld [vmem:[%s2 + $0x96c] sm:$0xf]
  %v4485 = vld [vmem:[%s2 + $0x970] sm:$0xf]
  %v4486 = vld [vmem:[%s2 + $0x974] sm:$0xf]
  %v4487 = vld [vmem:[%s2 + $0x978] sm:$0xf]
  %v4488 = vld [vmem:[%s2 + $0x97c] sm:$0xf]
  %v4505 = vunpack.c.l.b16 %v4473
  %v4506 = vunpack.c.l.b16 %v4474
  %v4507 = vunpack.c.l.b16 %v4475
  %v4508 = vunpack.c.l.b16 %v4476
  %v4509 = vunpack.c.l.b16 %v4477
  %v4510 = vunpack.c.l.b16 %v4478
  %v4511 = vunpack.c.l.b16 %v4479
  %v4512 = vunpack.c.l.b16 %v4480
  %v4513 = vunpack.c.l.b16 %v4481
  %v4514 = vunpack.c.l.b16 %v4482
  %v4515 = vunpack.c.l.b16 %v4483
  %v4516 = vunpack.c.l.b16 %v4484
  %v4517 = vunpack.c.l.b16 %v4485
  %v4518 = vunpack.c.l.b16 %v4486
  %v4519 = vunpack.c.l.b16 %v4487
  %v4520 = vunpack.c.l.b16 %v4488
  %v4521 = vpack.c.b16 %v4506, %v4505
  %v4522 = vpack.c.b16 %v4508, %v4507
  %v4523 = vpack.c.b16 %v4510, %v4509
  %v4524 = vpack.c.b16 %v4512, %v4511
  %v4525 = vpack.c.b16 %v4514, %v4513
  %v4526 = vpack.c.b16 %v4516, %v4515
  %v4527 = vpack.c.b16 %v4518, %v4517
  %v4528 = vpack.c.b16 %v4520, %v4519
  %4537 = vmatprep.subr.bf16.mxu0 0
  %4538 = vmatpush1.bf16.msra.mxu0 %v4521
  %4539 = vmatprep.subr.bf16.mxu0 0
  %4540 = vmatpush1.bf16.msra.mxu0 %v4522
  %4541 = vmatprep.subr.bf16.mxu0 0
  %4542 = vmatpush1.bf16.msra.mxu0 %v4523
  %4543 = vmatprep.subr.bf16.mxu0 0
  %4544 = vmatpush1.bf16.msra.mxu0 %v4524
  %4545 = vmatprep.subr.bf16.mxu0 0
  %4546 = vmatpush1.bf16.msra.mxu0 %v4525
  %4547 = vmatprep.subr.bf16.mxu0 0
  %4548 = vmatpush1.bf16.msra.mxu0 %v4526
  %4549 = vmatprep.subr.bf16.mxu0 0
  %4550 = vmatpush1.bf16.msra.mxu0 %v4527
  %4551 = vmatprep.subr.bf16.mxu0 0
  %4552 = vmatpush1.bf16.msra.mxu0 %v4528
  %4553 = vmatprep.subr.bf16.mxu0 0
  %4554 = vmatpush1.bf16.msra.mxu0 0
  %4555 = vmatprep.subr.bf16.mxu0 0
  %4556 = vmatpush1.bf16.msra.mxu0 0
  %4557 = vmatprep.subr.bf16.mxu0 0
  %4558 = vmatpush1.bf16.msra.mxu0 0
  %4559 = vmatprep.subr.bf16.mxu0 0
  %4560 = vmatpush1.bf16.msra.mxu0 0
  %4561 = vmatprep.subr.bf16.mxu0 0
  %4562 = vmatpush1.bf16.msra.mxu0 0
  %4563 = vmatprep.subr.bf16.mxu0 0
  %4564 = vmatpush1.bf16.msra.mxu0 0
  %4565 = vmatprep.subr.bf16.mxu0 0
  %4566 = vmatpush1.bf16.msra.mxu0 0
  %4567 = vmatprep.subr.bf16.mxu0 0
  %4568 = vmatpush1.bf16.msra.mxu0 0
  %4569 = vmatprep.mubr.bf16.mxu0 0
  %4570 = vmatmul.mubr.bf16.gmra.mrb[0].mxu0 %v4472
  %v4571 = vpop.f32.mrb[0].mxu0
  %v4572 = vadd.f32 0.0, %v4571
  %v4573 = vpop.f32.mrb[0].mxu0
  %v4574 = vpop.f32.mrb[0].mxu0
  %v4575 = vpop.f32.mrb[0].mxu0
  %4576 = vdwg.mxu0
  %v4577 = vadd.f32 %v4471, %v4572
  %v4578 = vpack.c.bf16 %v646, %v646
  %v4579 = vld [vmem:[%s2 + $0x980] sm:$0xf]
  %v4580 = vld [vmem:[%s2 + $0x984] sm:$0xf]
  %v4581 = vld [vmem:[%s2 + $0x988] sm:$0xf]
  %v4582 = vld [vmem:[%s2 + $0x98c] sm:$0xf]
  %v4583 = vld [vmem:[%s2 + $0x990] sm:$0xf]
  %v4584 = vld [vmem:[%s2 + $0x994] sm:$0xf]
  %v4585 = vld [vmem:[%s2 + $0x998] sm:$0xf]
  %v4586 = vld [vmem:[%s2 + $0x99c] sm:$0xf]
  %v4587 = vld [vmem:[%s2 + $0x9a0] sm:$0xf]
  %v4588 = vld [vmem:[%s2 + $0x9a4] sm:$0xf]
  %v4589 = vld [vmem:[%s2 + $0x9a8] sm:$0xf]
  %v4590 = vld [vmem:[%s2 + $0x9ac] sm:$0xf]
  %v4591 = vld [vmem:[%s2 + $0x9b0] sm:$0xf]
  %v4592 = vld [vmem:[%s2 + $0x9b4] sm:$0xf]
  %v4593 = vld [vmem:[%s2 + $0x9b8] sm:$0xf]
  %v4594 = vld [vmem:[%s2 + $0x9bc] sm:$0xf]
  %v4611 = vunpack.c.l.b16 %v4579
  %v4612 = vunpack.c.l.b16 %v4580
  %v4613 = vunpack.c.l.b16 %v4581
  %v4614 = vunpack.c.l.b16 %v4582
  %v4615 = vunpack.c.l.b16 %v4583
  %v4616 = vunpack.c.l.b16 %v4584
  %v4617 = vunpack.c.l.b16 %v4585
  %v4618 = vunpack.c.l.b16 %v4586
  %v4619 = vunpack.c.l.b16 %v4587
  %v4620 = vunpack.c.l.b16 %v4588
  %v4621 = vunpack.c.l.b16 %v4589
  %v4622 = vunpack.c.l.b16 %v4590
  %v4623 = vunpack.c.l.b16 %v4591
  %v4624 = vunpack.c.l.b16 %v4592
  %v4625 = vunpack.c.l.b16 %v4593
  %v4626 = vunpack.c.l.b16 %v4594
  %v4627 = vpack.c.b16 %v4612, %v4611
  %v4628 = vpack.c.b16 %v4614, %v4613
  %v4629 = vpack.c.b16 %v4616, %v4615
  %v4630 = vpack.c.b16 %v4618, %v4617
  %v4631 = vpack.c.b16 %v4620, %v4619
  %v4632 = vpack.c.b16 %v4622, %v4621
  %v4633 = vpack.c.b16 %v4624, %v4623
  %v4634 = vpack.c.b16 %v4626, %v4625
  %4643 = vmatprep.subr.bf16.mxu0 0
  %4644 = vmatpush1.bf16.msra.mxu0 %v4627
  %4645 = vmatprep.subr.bf16.mxu0 0
  %4646 = vmatpush1.bf16.msra.mxu0 %v4628
  %4647 = vmatprep.subr.bf16.mxu0 0
  %4648 = vmatpush1.bf16.msra.mxu0 %v4629
  %4649 = vmatprep.subr.bf16.mxu0 0
  %4650 = vmatpush1.bf16.msra.mxu0 %v4630
  %4651 = vmatprep.subr.bf16.mxu0 0
  %4652 = vmatpush1.bf16.msra.mxu0 %v4631
  %4653 = vmatprep.subr.bf16.mxu0 0
  %4654 = vmatpush1.bf16.msra.mxu0 %v4632
  %4655 = vmatprep.subr.bf16.mxu0 0
  %4656 = vmatpush1.bf16.msra.mxu0 %v4633
  %4657 = vmatprep.subr.bf16.mxu0 0
  %4658 = vmatpush1.bf16.msra.mxu0 %v4634
  %4659 = vmatprep.subr.bf16.mxu0 0
  %4660 = vmatpush1.bf16.msra.mxu0 0
  %4661 = vmatprep.subr.bf16.mxu0 0
  %4662 = vmatpush1.bf16.msra.mxu0 0
  %4663 = vmatprep.subr.bf16.mxu0 0
  %4664 = vmatpush1.bf16.msra.mxu0 0
  %4665 = vmatprep.subr.bf16.mxu0 0
  %4666 = vmatpush1.bf16.msra.mxu0 0
  %4667 = vmatprep.subr.bf16.mxu0 0
  %4668 = vmatpush1.bf16.msra.mxu0 0
  %4669 = vmatprep.subr.bf16.mxu0 0
  %4670 = vmatpush1.bf16.msra.mxu0 0
  %4671 = vmatprep.subr.bf16.mxu0 0
  %4672 = vmatpush1.bf16.msra.mxu0 0
  %4673 = vmatprep.subr.bf16.mxu0 0
  %4674 = vmatpush1.bf16.msra.mxu0 0
  %4675 = vmatprep.mubr.bf16.mxu0 0
  %4676 = vmatmul.mubr.bf16.gmra.mrb[0].mxu0 %v4578
  %v4677 = vpop.f32.mrb[0].mxu0
  %v4678 = vadd.f32 0.0, %v4677
  %v4679 = vpop.f32.mrb[0].mxu0
  %v4680 = vpop.f32.mrb[0].mxu0
  %v4681 = vpop.f32.mrb[0].mxu0
  %4682 = vdwg.mxu0
  %v4683 = vadd.f32 %v4577, %v4678
  %v4684 = vpack.c.bf16 %v647, %v647
  %v4685 = vld [vmem:[%s2 + $0x9c0] sm:$0xf]
  %v4686 = vld [vmem:[%s2 + $0x9c4] sm:$0xf]
  %v4687 = vld [vmem:[%s2 + $0x9c8] sm:$0xf]
  %v4688 = vld [vmem:[%s2 + $0x9cc] sm:$0xf]
  %v4689 = vld [vmem:[%s2 + $0x9d0] sm:$0xf]
  %v4690 = vld [vmem:[%s2 + $0x9d4] sm:$0xf]
  %v4691 = vld [vmem:[%s2 + $0x9d8] sm:$0xf]
  %v4692 = vld [vmem:[%s2 + $0x9dc] sm:$0xf]
  %v4693 = vld [vmem:[%s2 + $0x9e0] sm:$0xf]
  %v4694 = vld [vmem:[%s2 + $0x9e4] sm:$0xf]
  %v4695 = vld [vmem:[%s2 + $0x9e8] sm:$0xf]
  %v4696 = vld [vmem:[%s2 + $0x9ec] sm:$0xf]
  %v4697 = vld [vmem:[%s2 + $0x9f0] sm:$0xf]
  %v4698 = vld [vmem:[%s2 + $0x9f4] sm:$0xf]
  %v4699 = vld [vmem:[%s2 + $0x9f8] sm:$0xf]
  %v4700 = vld [vmem:[%s2 + $0x9fc] sm:$0xf]
  %v4717 = vunpack.c.l.b16 %v4685
  %v4718 = vunpack.c.l.b16 %v4686
  %v4719 = vunpack.c.l.b16 %v4687
  %v4720 = vunpack.c.l.b16 %v4688
  %v4721 = vunpack.c.l.b16 %v4689
  %v4722 = vunpack.c.l.b16 %v4690
  %v4723 = vunpack.c.l.b16 %v4691
  %v4724 = vunpack.c.l.b16 %v4692
  %v4725 = vunpack.c.l.b16 %v4693
  %v4726 = vunpack.c.l.b16 %v4694
  %v4727 = vunpack.c.l.b16 %v4695
  %v4728 = vunpack.c.l.b16 %v4696
  %v4729 = vunpack.c.l.b16 %v4697
  %v4730 = vunpack.c.l.b16 %v4698
  %v4731 = vunpack.c.l.b16 %v4699
  %v4732 = vunpack.c.l.b16 %v4700
  %v4733 = vpack.c.b16 %v4718, %v4717
  %v4734 = vpack.c.b16 %v4720, %v4719
  %v4735 = vpack.c.b16 %v4722, %v4721
  %v4736 = vpack.c.b16 %v4724, %v4723
  %v4737 = vpack.c.b16 %v4726, %v4725
  %v4738 = vpack.c.b16 %v4728, %v4727
  %v4739 = vpack.c.b16 %v4730, %v4729
  %v4740 = vpack.c.b16 %v4732, %v4731
  %4749 = vmatprep.subr.bf16.mxu0 0
  %4750 = vmatpush1.bf16.msra.mxu0 %v4733
  %4751 = vmatprep.subr.bf16.mxu0 0
  %4752 = vmatpush1.bf16.msra.mxu0 %v4734
  %4753 = vmatprep.subr.bf16.mxu0 0
  %4754 = vmatpush1.bf16.msra.mxu0 %v4735
  %4755 = vmatprep.subr.bf16.mxu0 0
  %4756 = vmatpush1.bf16.msra.mxu0 %v4736
  %4757 = vmatprep.subr.bf16.mxu0 0
  %4758 = vmatpush1.bf16.msra.mxu0 %v4737
  %4759 = vmatprep.subr.bf16.mxu0 0
  %4760 = vmatpush1.bf16.msra.mxu0 %v4738
  %4761 = vmatprep.subr.bf16.mxu0 0
  %4762 = vmatpush1.bf16.msra.mxu0 %v4739
  %4763 = vmatprep.subr.bf16.mxu0 0
  %4764 = vmatpush1.bf16.msra.mxu0 %v4740
  %4765 = vmatprep.subr.bf16.mxu0 0
  %4766 = vmatpush1.bf16.msra.mxu0 0
  %4767 = vmatprep.subr.bf16.mxu0 0
  %4768 = vmatpush1.bf16.msra.mxu0 0
  %4769 = vmatprep.subr.bf16.mxu0 0
  %4770 = vmatpush1.bf16.msra.mxu0 0
  %4771 = vmatprep.subr.bf16.mxu0 0
  %4772 = vmatpush1.bf16.msra.mxu0 0
  %4773 = vmatprep.subr.bf16.mxu0 0
  %4774 = vmatpush1.bf16.msra.mxu0 0
  %4775 = vmatprep.subr.bf16.mxu0 0
  %4776 = vmatpush1.bf16.msra.mxu0 0
  %4777 = vmatprep.subr.bf16.mxu0 0
  %4778 = vmatpush1.bf16.msra.mxu0 0
  %4779 = vmatprep.subr.bf16.mxu0 0
  %4780 = vmatpush1.bf16.msra.mxu0 0
  %4781 = vmatprep.mubr.bf16.mxu0 0
  %4782 = vmatmul.mubr.bf16.gmra.mrb[0].mxu0 %v4684
  %v4783 = vpop.f32.mrb[0].mxu0
  %v4784 = vadd.f32 0.0, %v4783
  %v4785 = vpop.f32.mrb[0].mxu0
  %v4786 = vpop.f32.mrb[0].mxu0
  %v4787 = vpop.f32.mrb[0].mxu0
  %4788 = vdwg.mxu0
  %v4789 = vadd.f32 %v4683, %v4784
  %v4790 = vpack.c.bf16 %v648, %v648
  %v4791 = vld [vmem:[%s2 + $0xa00] sm:$0xf]
  %v4792 = vld [vmem:[%s2 + $0xa04] sm:$0xf]
  %v4793 = vld [vmem:[%s2 + $0xa08] sm:$0xf]
  %v4794 = vld [vmem:[%s2 + $0xa0c] sm:$0xf]
  %v4795 = vld [vmem:[%s2 + $0xa10] sm:$0xf]
  %v4796 = vld [vmem:[%s2 + $0xa14] sm:$0xf]
  %v4797 = vld [vmem:[%s2 + $0xa18] sm:$0xf]
  %v4798 = vld [vmem:[%s2 + $0xa1c] sm:$0xf]
  %v4799 = vld [vmem:[%s2 + $0xa20] sm:$0xf]
  %v4800 = vld [vmem:[%s2 + $0xa24] sm:$0xf]
  %v4801 = vld [vmem:[%s2 + $0xa28] sm:$0xf]
  %v4802 = vld [vmem:[%s2 + $0xa2c] sm:$0xf]
  %v4803 = vld [vmem:[%s2 + $0xa30] sm:$0xf]
  %v4804 = vld [vmem:[%s2 + $0xa34] sm:$0xf]
  %v4805 = vld [vmem:[%s2 + $0xa38] sm:$0xf]
  %v4806 = vld [vmem:[%s2 + $0xa3c] sm:$0xf]
  %v4823 = vunpack.c.l.b16 %v4791
  %v4824 = vunpack.c.l.b16 %v4792
  %v4825 = vunpack.c.l.b16 %v4793
  %v4826 = vunpack.c.l.b16 %v4794
  %v4827 = vunpack.c.l.b16 %v4795
  %v4828 = vunpack.c.l.b16 %v4796
  %v4829 = vunpack.c.l.b16 %v4797
  %v4830 = vunpack.c.l.b16 %v4798
  %v4831 = vunpack.c.l.b16 %v4799
  %v4832 = vunpack.c.l.b16 %v4800
  %v4833 = vunpack.c.l.b16 %v4801
  %v4834 = vunpack.c.l.b16 %v4802
  %v4835 = vunpack.c.l.b16 %v4803
  %v4836 = vunpack.c.l.b16 %v4804
  %v4837 = vunpack.c.l.b16 %v4805
  %v4838 = vunpack.c.l.b16 %v4806
  %v4839 = vpack.c.b16 %v4824, %v4823
  %v4840 = vpack.c.b16 %v4826, %v4825
  %v4841 = vpack.c.b16 %v4828, %v4827
  %v4842 = vpack.c.b16 %v4830, %v4829
  %v4843 = vpack.c.b16 %v4832, %v4831
  %v4844 = vpack.c.b16 %v4834, %v4833
  %v4845 = vpack.c.b16 %v4836, %v4835
  %v4846 = vpack.c.b16 %v4838, %v4837
  %4855 = vmatprep.subr.bf16.mxu0 0
  %4856 = vmatpush1.bf16.msra.mxu0 %v4839
  %4857 = vmatprep.subr.bf16.mxu0 0
  %4858 = vmatpush1.bf16.msra.mxu0 %v4840
  %4859 = vmatprep.subr.bf16.mxu0 0
  %4860 = vmatpush1.bf16.msra.mxu0 %v4841
  %4861 = vmatprep.subr.bf16.mxu0 0
  %4862 = vmatpush1.bf16.msra.mxu0 %v4842
  %4863 = vmatprep.subr.bf16.mxu0 0
  %4864 = vmatpush1.bf16.msra.mxu0 %v4843
  %4865 = vmatprep.subr.bf16.mxu0 0
  %4866 = vmatpush1.bf16.msra.mxu0 %v4844
  %4867 = vmatprep.subr.bf16.mxu0 0
  %4868 = vmatpush1.bf16.msra.mxu0 %v4845
  %4869 = vmatprep.subr.bf16.mxu0 0
  %4870 = vmatpush1.bf16.msra.mxu0 %v4846
  %4871 = vmatprep.subr.bf16.mxu0 0
  %4872 = vmatpush1.bf16.msra.mxu0 0
  %4873 = vmatprep.subr.bf16.mxu0 0
  %4874 = vmatpush1.bf16.msra.mxu0 0
  %4875 = vmatprep.subr.bf16.mxu0 0
  %4876 = vmatpush1.bf16.msra.mxu0 0
  %4877 = vmatprep.subr.bf16.mxu0 0
  %4878 = vmatpush1.bf16.msra.mxu0 0
  %4879 = vmatprep.subr.bf16.mxu0 0
  %4880 = vmatpush1.bf16.msra.mxu0 0
  %4881 = vmatprep.subr.bf16.mxu0 0
  %4882 = vmatpush1.bf16.msra.mxu0 0
  %4883 = vmatprep.subr.bf16.mxu0 0
  %4884 = vmatpush1.bf16.msra.mxu0 0
  %4885 = vmatprep.subr.bf16.mxu0 0
  %4886 = vmatpush1.bf16.msra.mxu0 0
  %4887 = vmatprep.mubr.bf16.mxu0 0
  %4888 = vmatmul.mubr.bf16.gmra.mrb[0].mxu0 %v4790
  %v4889 = vpop.f32.mrb[0].mxu0
  %v4890 = vadd.f32 0.0, %v4889
  %v4891 = vpop.f32.mrb[0].mxu0
  %v4892 = vpop.f32.mrb[0].mxu0
  %v4893 = vpop.f32.mrb[0].mxu0
  %4894 = vdwg.mxu0
  %v4895 = vadd.f32 %v4789, %v4890
  %v4896 = vpack.c.bf16 %v649, %v649
  %v4897 = vld [vmem:[%s2 + $0xa40] sm:$0xf]
  %v4898 = vld [vmem:[%s2 + $0xa44] sm:$0xf]
  %v4899 = vld [vmem:[%s2 + $0xa48] sm:$0xf]
  %v4900 = vld [vmem:[%s2 + $0xa4c] sm:$0xf]
  %v4901 = vld [vmem:[%s2 + $0xa50] sm:$0xf]
  %v4902 = vld [vmem:[%s2 + $0xa54] sm:$0xf]
  %v4903 = vld [vmem:[%s2 + $0xa58] sm:$0xf]
  %v4904 = vld [vmem:[%s2 + $0xa5c] sm:$0xf]
  %v4905 = vld [vmem:[%s2 + $0xa60] sm:$0xf]
  %v4906 = vld [vmem:[%s2 + $0xa64] sm:$0xf]
  %v4907 = vld [vmem:[%s2 + $0xa68] sm:$0xf]
  %v4908 = vld [vmem:[%s2 + $0xa6c] sm:$0xf]
  %v4909 = vld [vmem:[%s2 + $0xa70] sm:$0xf]
  %v4910 = vld [vmem:[%s2 + $0xa74] sm:$0xf]
  %v4911 = vld [vmem:[%s2 + $0xa78] sm:$0xf]
  %v4912 = vld [vmem:[%s2 + $0xa7c] sm:$0xf]
  %v4929 = vunpack.c.l.b16 %v4897
  %v4930 = vunpack.c.l.b16 %v4898
  %v4931 = vunpack.c.l.b16 %v4899
  %v4932 = vunpack.c.l.b16 %v4900
  %v4933 = vunpack.c.l.b16 %v4901
  %v4934 = vunpack.c.l.b16 %v4902
  %v4935 = vunpack.c.l.b16 %v4903
  %v4936 = vunpack.c.l.b16 %v4904
  %v4937 = vunpack.c.l.b16 %v4905
  %v4938 = vunpack.c.l.b16 %v4906
  %v4939 = vunpack.c.l.b16 %v4907
  %v4940 = vunpack.c.l.b16 %v4908
  %v4941 = vunpack.c.l.b16 %v4909
  %v4942 = vunpack.c.l.b16 %v4910
  %v4943 = vunpack.c.l.b16 %v4911
  %v4944 = vunpack.c.l.b16 %v4912
  %v4945 = vpack.c.b16 %v4930, %v4929
  %v4946 = vpack.c.b16 %v4932, %v4931
  %v4947 = vpack.c.b16 %v4934, %v4933
  %v4948 = vpack.c.b16 %v4936, %v4935
  %v4949 = vpack.c.b16 %v4938, %v4937
  %v4950 = vpack.c.b16 %v4940, %v4939
  %v4951 = vpack.c.b16 %v4942, %v4941
  %v4952 = vpack.c.b16 %v4944, %v4943
  %4961 = vmatprep.subr.bf16.mxu0 0
  %4962 = vmatpush1.bf16.msra.mxu0 %v4945
  %4963 = vmatprep.subr.bf16.mxu0 0
  %4964 = vmatpush1.bf16.msra.mxu0 %v4946
  %4965 = vmatprep.subr.bf16.mxu0 0
  %4966 = vmatpush1.bf16.msra.mxu0 %v4947
  %4967 = vmatprep.subr.bf16.mxu0 0
  %4968 = vmatpush1.bf16.msra.mxu0 %v4948
  %4969 = vmatprep.subr.bf16.mxu0 0
  %4970 = vmatpush1.bf16.msra.mxu0 %v4949
  %4971 = vmatprep.subr.bf16.mxu0 0
  %4972 = vmatpush1.bf16.msra.mxu0 %v4950
  %4973 = vmatprep.subr.bf16.mxu0 0
  %4974 = vmatpush1.bf16.msra.mxu0 %v4951
  %4975 = vmatprep.subr.bf16.mxu0 0
  %4976 = vmatpush1.bf16.msra.mxu0 %v4952
  %4977 = vmatprep.subr.bf16.mxu0 0
  %4978 = vmatpush1.bf16.msra.mxu0 0
  %4979 = vmatprep.subr.bf16.mxu0 0
  %4980 = vmatpush1.bf16.msra.mxu0 0
  %4981 = vmatprep.subr.bf16.mxu0 0
  %4982 = vmatpush1.bf16.msra.mxu0 0
  %4983 = vmatprep.subr.bf16.mxu0 0
  %4984 = vmatpush1.bf16.msra.mxu0 0
  %4985 = vmatprep.subr.bf16.mxu0 0
  %4986 = vmatpush1.bf16.msra.mxu0 0
  %4987 = vmatprep.subr.bf16.mxu0 0
  %4988 = vmatpush1.bf16.msra.mxu0 0
  %4989 = vmatprep.subr.bf16.mxu0 0
  %4990 = vmatpush1.bf16.msra.mxu0 0
  %4991 = vmatprep.subr.bf16.mxu0 0
  %4992 = vmatpush1.bf16.msra.mxu0 0
  %4993 = vmatprep.mubr.bf16.mxu0 0
  %4994 = vmatmul.mubr.bf16.gmra.mrb[0].mxu0 %v4896
  %v4995 = vpop.f32.mrb[0].mxu0
  %v4996 = vadd.f32 0.0, %v4995
  %v4997 = vpop.f32.mrb[0].mxu0
  %v4998 = vpop.f32.mrb[0].mxu0
  %v4999 = vpop.f32.mrb[0].mxu0
  %5000 = vdwg.mxu0
  %v5001 = vadd.f32 %v4895, %v4996
  %v5002 = vpack.c.bf16 %v650, %v650
  %v5003 = vld [vmem:[%s2 + $0xa80] sm:$0xf]
  %v5004 = vld [vmem:[%s2 + $0xa84] sm:$0xf]
  %v5005 = vld [vmem:[%s2 + $0xa88] sm:$0xf]
  %v5006 = vld [vmem:[%s2 + $0xa8c] sm:$0xf]
  %v5007 = vld [vmem:[%s2 + $0xa90] sm:$0xf]
  %v5008 = vld [vmem:[%s2 + $0xa94] sm:$0xf]
  %v5009 = vld [vmem:[%s2 + $0xa98] sm:$0xf]
  %v5010 = vld [vmem:[%s2 + $0xa9c] sm:$0xf]
  %v5011 = vld [vmem:[%s2 + $0xaa0] sm:$0xf]
  %v5012 = vld [vmem:[%s2 + $0xaa4] sm:$0xf]
  %v5013 = vld [vmem:[%s2 + $0xaa8] sm:$0xf]
  %v5014 = vld [vmem:[%s2 + $0xaac] sm:$0xf]
  %v5015 = vld [vmem:[%s2 + $0xab0] sm:$0xf]
  %v5016 = vld [vmem:[%s2 + $0xab4] sm:$0xf]
  %v5017 = vld [vmem:[%s2 + $0xab8] sm:$0xf]
  %v5018 = vld [vmem:[%s2 + $0xabc] sm:$0xf]
  %v5035 = vunpack.c.l.b16 %v5003
  %v5036 = vunpack.c.l.b16 %v5004
  %v5037 = vunpack.c.l.b16 %v5005
  %v5038 = vunpack.c.l.b16 %v5006
  %v5039 = vunpack.c.l.b16 %v5007
  %v5040 = vunpack.c.l.b16 %v5008
  %v5041 = vunpack.c.l.b16 %v5009
  %v5042 = vunpack.c.l.b16 %v5010
  %v5043 = vunpack.c.l.b16 %v5011
  %v5044 = vunpack.c.l.b16 %v5012
  %v5045 = vunpack.c.l.b16 %v5013
  %v5046 = vunpack.c.l.b16 %v5014
  %v5047 = vunpack.c.l.b16 %v5015
  %v5048 = vunpack.c.l.b16 %v5016
  %v5049 = vunpack.c.l.b16 %v5017
  %v5050 = vunpack.c.l.b16 %v5018
  %v5051 = vpack.c.b16 %v5036, %v5035
  %v5052 = vpack.c.b16 %v5038, %v5037
  %v5053 = vpack.c.b16 %v5040, %v5039
  %v5054 = vpack.c.b16 %v5042, %v5041
  %v5055 = vpack.c.b16 %v5044, %v5043
  %v5056 = vpack.c.b16 %v5046, %v5045
  %v5057 = vpack.c.b16 %v5048, %v5047
  %v5058 = vpack.c.b16 %v5050, %v5049
  %5067 = vmatprep.subr.bf16.mxu0 0
  %5068 = vmatpush1.bf16.msra.mxu0 %v5051
  %5069 = vmatprep.subr.bf16.mxu0 0
  %5070 = vmatpush1.bf16.msra.mxu0 %v5052
  %5071 = vmatprep.subr.bf16.mxu0 0
  %5072 = vmatpush1.bf16.msra.mxu0 %v5053
  %5073 = vmatprep.subr.bf16.mxu0 0
  %5074 = vmatpush1.bf16.msra.mxu0 %v5054
  %5075 = vmatprep.subr.bf16.mxu0 0
  %5076 = vmatpush1.bf16.msra.mxu0 %v5055
  %5077 = vmatprep.subr.bf16.mxu0 0
  %5078 = vmatpush1.bf16.msra.mxu0 %v5056
  %5079 = vmatprep.subr.bf16.mxu0 0
  %5080 = vmatpush1.bf16.msra.mxu0 %v5057
  %5081 = vmatprep.subr.bf16.mxu0 0
  %5082 = vmatpush1.bf16.msra.mxu0 %v5058
  %5083 = vmatprep.subr.bf16.mxu0 0
  %5084 = vmatpush1.bf16.msra.mxu0 0
  %5085 = vmatprep.subr.bf16.mxu0 0
  %5086 = vmatpush1.bf16.msra.mxu0 0
  %5087 = vmatprep.subr.bf16.mxu0 0
  %5088 = vmatpush1.bf16.msra.mxu0 0
  %5089 = vmatprep.subr.bf16.mxu0 0
  %5090 = vmatpush1.bf16.msra.mxu0 0
  %5091 = vmatprep.subr.bf16.mxu0 0
  %5092 = vmatpush1.bf16.msra.mxu0 0
  %5093 = vmatprep.subr.bf16.mxu0 0
  %5094 = vmatpush1.bf16.msra.mxu0 0
  %5095 = vmatprep.subr.bf16.mxu0 0
  %5096 = vmatpush1.bf16.msra.mxu0 0
  %5097 = vmatprep.subr.bf16.mxu0 0
  %5098 = vmatpush1.bf16.msra.mxu0 0
  %5099 = vmatprep.mubr.bf16.mxu0 0
  %5100 = vmatmul.mubr.bf16.gmra.mrb[0].mxu0 %v5002
  %v5101 = vpop.f32.mrb[0].mxu0
  %v5102 = vadd.f32 0.0, %v5101
  %v5103 = vpop.f32.mrb[0].mxu0
  %v5104 = vpop.f32.mrb[0].mxu0
  %v5105 = vpop.f32.mrb[0].mxu0
  %5106 = vdwg.mxu0
  %v5107 = vadd.f32 %v5001, %v5102
  %v5108 = vpack.c.bf16 %v651, %v651
  %v5109 = vld [vmem:[%s2 + $0xac0] sm:$0xf]
  %v5110 = vld [vmem:[%s2 + $0xac4] sm:$0xf]
  %v5111 = vld [vmem:[%s2 + $0xac8] sm:$0xf]
  %v5112 = vld [vmem:[%s2 + $0xacc] sm:$0xf]
  %v5113 = vld [vmem:[%s2 + $0xad0] sm:$0xf]
  %v5114 = vld [vmem:[%s2 + $0xad4] sm:$0xf]
  %v5115 = vld [vmem:[%s2 + $0xad8] sm:$0xf]
  %v5116 = vld [vmem:[%s2 + $0xadc] sm:$0xf]
  %v5117 = vld [vmem:[%s2 + $0xae0] sm:$0xf]
  %v5118 = vld [vmem:[%s2 + $0xae4] sm:$0xf]
  %v5119 = vld [vmem:[%s2 + $0xae8] sm:$0xf]
  %v5120 = vld [vmem:[%s2 + $0xaec] sm:$0xf]
  %v5121 = vld [vmem:[%s2 + $0xaf0] sm:$0xf]
  %v5122 = vld [vmem:[%s2 + $0xaf4] sm:$0xf]
  %v5123 = vld [vmem:[%s2 + $0xaf8] sm:$0xf]
  %v5124 = vld [vmem:[%s2 + $0xafc] sm:$0xf]
  %v5141 = vunpack.c.l.b16 %v5109
  %v5142 = vunpack.c.l.b16 %v5110
  %v5143 = vunpack.c.l.b16 %v5111
  %v5144 = vunpack.c.l.b16 %v5112
  %v5145 = vunpack.c.l.b16 %v5113
  %v5146 = vunpack.c.l.b16 %v5114
  %v5147 = vunpack.c.l.b16 %v5115
  %v5148 = vunpack.c.l.b16 %v5116
  %v5149 = vunpack.c.l.b16 %v5117
  %v5150 = vunpack.c.l.b16 %v5118
  %v5151 = vunpack.c.l.b16 %v5119
  %v5152 = vunpack.c.l.b16 %v5120
  %v5153 = vunpack.c.l.b16 %v5121
  %v5154 = vunpack.c.l.b16 %v5122
  %v5155 = vunpack.c.l.b16 %v5123
  %v5156 = vunpack.c.l.b16 %v5124
  %v5157 = vpack.c.b16 %v5142, %v5141
  %v5158 = vpack.c.b16 %v5144, %v5143
  %v5159 = vpack.c.b16 %v5146, %v5145
  %v5160 = vpack.c.b16 %v5148, %v5147
  %v5161 = vpack.c.b16 %v5150, %v5149
  %v5162 = vpack.c.b16 %v5152, %v5151
  %v5163 = vpack.c.b16 %v5154, %v5153
  %v5164 = vpack.c.b16 %v5156, %v5155
  %5173 = vmatprep.subr.bf16.mxu0 0
  %5174 = vmatpush1.bf16.msra.mxu0 %v5157
  %5175 = vmatprep.subr.bf16.mxu0 0
  %5176 = vmatpush1.bf16.msra.mxu0 %v5158
  %5177 = vmatprep.subr.bf16.mxu0 0
  %5178 = vmatpush1.bf16.msra.mxu0 %v5159
  %5179 = vmatprep.subr.bf16.mxu0 0
  %5180 = vmatpush1.bf16.msra.mxu0 %v5160
  %5181 = vmatprep.subr.bf16.mxu0 0
  %5182 = vmatpush1.bf16.msra.mxu0 %v5161
  %5183 = vmatprep.subr.bf16.mxu0 0
  %5184 = vmatpush1.bf16.msra.mxu0 %v5162
  %5185 = vmatprep.subr.bf16.mxu0 0
  %5186 = vmatpush1.bf16.msra.mxu0 %v5163
  %5187 = vmatprep.subr.bf16.mxu0 0
  %5188 = vmatpush1.bf16.msra.mxu0 %v5164
  %5189 = vmatprep.subr.bf16.mxu0 0
  %5190 = vmatpush1.bf16.msra.mxu0 0
  %5191 = vmatprep.subr.bf16.mxu0 0
  %5192 = vmatpush1.bf16.msra.mxu0 0
  %5193 = vmatprep.subr.bf16.mxu0 0
  %5194 = vmatpush1.bf16.msra.mxu0 0
  %5195 = vmatprep.subr.bf16.mxu0 0
  %5196 = vmatpush1.bf16.msra.mxu0 0
  %5197 = vmatprep.subr.bf16.mxu0 0
  %5198 = vmatpush1.bf16.msra.mxu0 0
  %5199 = vmatprep.subr.bf16.mxu0 0
  %5200 = vmatpush1.bf16.msra.mxu0 0
  %5201 = vmatprep.subr.bf16.mxu0 0
  %5202 = vmatpush1.bf16.msra.mxu0 0
  %5203 = vmatprep.subr.bf16.mxu0 0
  %5204 = vmatpush1.bf16.msra.mxu0 0
  %5205 = vmatprep.mubr.bf16.mxu0 0
  %5206 = vmatmul.mubr.bf16.gmra.mrb[0].mxu0 %v5108
  %v5207 = vpop.f32.mrb[0].mxu0
  %v5208 = vadd.f32 0.0, %v5207
  %v5209 = vpop.f32.mrb[0].mxu0
  %v5210 = vpop.f32.mrb[0].mxu0
  %v5211 = vpop.f32.mrb[0].mxu0
  %5212 = vdwg.mxu0
  %v5213 = vadd.f32 %v5107, %v5208
  %v5214 = vpack.c.bf16 %v652, %v652
  %v5215 = vld [vmem:[%s2 + $0xb00] sm:$0xf]
  %v5216 = vld [vmem:[%s2 + $0xb04] sm:$0xf]
  %v5217 = vld [vmem:[%s2 + $0xb08] sm:$0xf]
  %v5218 = vld [vmem:[%s2 + $0xb0c] sm:$0xf]
  %v5219 = vld [vmem:[%s2 + $0xb10] sm:$0xf]
  %v5220 = vld [vmem:[%s2 + $0xb14] sm:$0xf]
  %v5221 = vld [vmem:[%s2 + $0xb18] sm:$0xf]
  %v5222 = vld [vmem:[%s2 + $0xb1c] sm:$0xf]
  %v5223 = vld [vmem:[%s2 + $0xb20] sm:$0xf]
  %v5224 = vld [vmem:[%s2 + $0xb24] sm:$0xf]
  %v5225 = vld [vmem:[%s2 + $0xb28] sm:$0xf]
  %v5226 = vld [vmem:[%s2 + $0xb2c] sm:$0xf]
  %v5227 = vld [vmem:[%s2 + $0xb30] sm:$0xf]
  %v5228 = vld [vmem:[%s2 + $0xb34] sm:$0xf]
  %v5229 = vld [vmem:[%s2 + $0xb38] sm:$0xf]
  %v5230 = vld [vmem:[%s2 + $0xb3c] sm:$0xf]
  %v5247 = vunpack.c.l.b16 %v5215
  %v5248 = vunpack.c.l.b16 %v5216
  %v5249 = vunpack.c.l.b16 %v5217
  %v5250 = vunpack.c.l.b16 %v5218
  %v5251 = vunpack.c.l.b16 %v5219
  %v5252 = vunpack.c.l.b16 %v5220
  %v5253 = vunpack.c.l.b16 %v5221
  %v5254 = vunpack.c.l.b16 %v5222
  %v5255 = vunpack.c.l.b16 %v5223
  %v5256 = vunpack.c.l.b16 %v5224
  %v5257 = vunpack.c.l.b16 %v5225
  %v5258 = vunpack.c.l.b16 %v5226
  %v5259 = vunpack.c.l.b16 %v5227
  %v5260 = vunpack.c.l.b16 %v5228
  %v5261 = vunpack.c.l.b16 %v5229
  %v5262 = vunpack.c.l.b16 %v5230
  %v5263 = vpack.c.b16 %v5248, %v5247
  %v5264 = vpack.c.b16 %v5250, %v5249
  %v5265 = vpack.c.b16 %v5252, %v5251
  %v5266 = vpack.c.b16 %v5254, %v5253
  %v5267 = vpack.c.b16 %v5256, %v5255
  %v5268 = vpack.c.b16 %v5258, %v5257
  %v5269 = vpack.c.b16 %v5260, %v5259
  %v5270 = vpack.c.b16 %v5262, %v5261
  %5279 = vmatprep.subr.bf16.mxu0 0
  %5280 = vmatpush1.bf16.msra.mxu0 %v5263
  %5281 = vmatprep.subr.bf16.mxu0 0
  %5282 = vmatpush1.bf16.msra.mxu0 %v5264
  %5283 = vmatprep.subr.bf16.mxu0 0
  %5284 = vmatpush1.bf16.msra.mxu0 %v5265
  %5285 = vmatprep.subr.bf16.mxu0 0
  %5286 = vmatpush1.bf16.msra.mxu0 %v5266
  %5287 = vmatprep.subr.bf16.mxu0 0
  %5288 = vmatpush1.bf16.msra.mxu0 %v5267
  %5289 = vmatprep.subr.bf16.mxu0 0
  %5290 = vmatpush1.bf16.msra.mxu0 %v5268
  %5291 = vmatprep.subr.bf16.mxu0 0
  %5292 = vmatpush1.bf16.msra.mxu0 %v5269
  %5293 = vmatprep.subr.bf16.mxu0 0
  %5294 = vmatpush1.bf16.msra.mxu0 %v5270
  %5295 = vmatprep.subr.bf16.mxu0 0
  %5296 = vmatpush1.bf16.msra.mxu0 0
  %5297 = vmatprep.subr.bf16.mxu0 0
  %5298 = vmatpush1.bf16.msra.mxu0 0
  %5299 = vmatprep.subr.bf16.mxu0 0
  %5300 = vmatpush1.bf16.msra.mxu0 0
  %5301 = vmatprep.subr.bf16.mxu0 0
  %5302 = vmatpush1.bf16.msra.mxu0 0
  %5303 = vmatprep.subr.bf16.mxu0 0
  %5304 = vmatpush1.bf16.msra.mxu0 0
  %5305 = vmatprep.subr.bf16.mxu0 0
  %5306 = vmatpush1.bf16.msra.mxu0 0
  %5307 = vmatprep.subr.bf16.mxu0 0
  %5308 = vmatpush1.bf16.msra.mxu0 0
  %5309 = vmatprep.subr.bf16.mxu0 0
  %5310 = vmatpush1.bf16.msra.mxu0 0
  %5311 = vmatprep.mubr.bf16.mxu0 0
  %5312 = vmatmul.mubr.bf16.gmra.mrb[0].mxu0 %v5214
  %v5313 = vpop.f32.mrb[0].mxu0
  %v5314 = vadd.f32 0.0, %v5313
  %v5315 = vpop.f32.mrb[0].mxu0
  %v5316 = vpop.f32.mrb[0].mxu0
  %v5317 = vpop.f32.mrb[0].mxu0
  %5318 = vdwg.mxu0
  %v5319 = vadd.f32 %v5213, %v5314
  %v5320 = vpack.c.bf16 %v653, %v653
  %v5321 = vld [vmem:[%s2 + $0xb40] sm:$0xf]
  %v5322 = vld [vmem:[%s2 + $0xb44] sm:$0xf]
  %v5323 = vld [vmem:[%s2 + $0xb48] sm:$0xf]
  %v5324 = vld [vmem:[%s2 + $0xb4c] sm:$0xf]
  %v5325 = vld [vmem:[%s2 + $0xb50] sm:$0xf]
  %v5326 = vld [vmem:[%s2 + $0xb54] sm:$0xf]
  %v5327 = vld [vmem:[%s2 + $0xb58] sm:$0xf]
  %v5328 = vld [vmem:[%s2 + $0xb5c] sm:$0xf]
  %v5329 = vld [vmem:[%s2 + $0xb60] sm:$0xf]
  %v5330 = vld [vmem:[%s2 + $0xb64] sm:$0xf]
  %v5331 = vld [vmem:[%s2 + $0xb68] sm:$0xf]
  %v5332 = vld [vmem:[%s2 + $0xb6c] sm:$0xf]
  %v5333 = vld [vmem:[%s2 + $0xb70] sm:$0xf]
  %v5334 = vld [vmem:[%s2 + $0xb74] sm:$0xf]
  %v5335 = vld [vmem:[%s2 + $0xb78] sm:$0xf]
  %v5336 = vld [vmem:[%s2 + $0xb7c] sm:$0xf]
  %v5353 = vunpack.c.l.b16 %v5321
  %v5354 = vunpack.c.l.b16 %v5322
  %v5355 = vunpack.c.l.b16 %v5323
  %v5356 = vunpack.c.l.b16 %v5324
  %v5357 = vunpack.c.l.b16 %v5325
  %v5358 = vunpack.c.l.b16 %v5326
  %v5359 = vunpack.c.l.b16 %v5327
  %v5360 = vunpack.c.l.b16 %v5328
  %v5361 = vunpack.c.l.b16 %v5329
  %v5362 = vunpack.c.l.b16 %v5330
  %v5363 = vunpack.c.l.b16 %v5331
  %v5364 = vunpack.c.l.b16 %v5332
  %v5365 = vunpack.c.l.b16 %v5333
  %v5366 = vunpack.c.l.b16 %v5334
  %v5367 = vunpack.c.l.b16 %v5335
  %v5368 = vunpack.c.l.b16 %v5336
  %v5369 = vpack.c.b16 %v5354, %v5353
  %v5370 = vpack.c.b16 %v5356, %v5355
  %v5371 = vpack.c.b16 %v5358, %v5357
  %v5372 = vpack.c.b16 %v5360, %v5359
  %v5373 = vpack.c.b16 %v5362, %v5361
  %v5374 = vpack.c.b16 %v5364, %v5363
  %v5375 = vpack.c.b16 %v5366, %v5365
  %v5376 = vpack.c.b16 %v5368, %v5367
  %5385 = vmatprep.subr.bf16.mxu0 0
  %5386 = vmatpush1.bf16.msra.mxu0 %v5369
  %5387 = vmatprep.subr.bf16.mxu0 0
  %5388 = vmatpush1.bf16.msra.mxu0 %v5370
  %5389 = vmatprep.subr.bf16.mxu0 0
  %5390 = vmatpush1.bf16.msra.mxu0 %v5371
  %5391 = vmatprep.subr.bf16.mxu0 0
  %5392 = vmatpush1.bf16.msra.mxu0 %v5372
  %5393 = vmatprep.subr.bf16.mxu0 0
  %5394 = vmatpush1.bf16.msra.mxu0 %v5373
  %5395 = vmatprep.subr.bf16.mxu0 0
  %5396 = vmatpush1.bf16.msra.mxu0 %v5374
  %5397 = vmatprep.subr.bf16.mxu0 0
  %5398 = vmatpush1.bf16.msra.mxu0 %v5375
  %5399 = vmatprep.subr.bf16.mxu0 0
  %5400 = vmatpush1.bf16.msra.mxu0 %v5376
  %5401 = vmatprep.subr.bf16.mxu0 0
  %5402 = vmatpush1.bf16.msra.mxu0 0
  %5403 = vmatprep.subr.bf16.mxu0 0
  %5404 = vmatpush1.bf16.msra.mxu0 0
  %5405 = vmatprep.subr.bf16.mxu0 0
  %5406 = vmatpush1.bf16.msra.mxu0 0
  %5407 = vmatprep.subr.bf16.mxu0 0
  %5408 = vmatpush1.bf16.msra.mxu0 0
  %5409 = vmatprep.subr.bf16.mxu0 0
  %5410 = vmatpush1.bf16.msra.mxu0 0
  %5411 = vmatprep.subr.bf16.mxu0 0
  %5412 = vmatpush1.bf16.msra.mxu0 0
  %5413 = vmatprep.subr.bf16.mxu0 0
  %5414 = vmatpush1.bf16.msra.mxu0 0
  %5415 = vmatprep.subr.bf16.mxu0 0
  %5416 = vmatpush1.bf16.msra.mxu0 0
  %5417 = vmatprep.mubr.bf16.mxu0 0
  %5418 = vmatmul.mubr.bf16.gmra.mrb[0].mxu0 %v5320
  %v5419 = vpop.f32.mrb[0].mxu0
  %v5420 = vadd.f32 0.0, %v5419
  %v5421 = vpop.f32.mrb[0].mxu0
  %v5422 = vpop.f32.mrb[0].mxu0
  %v5423 = vpop.f32.mrb[0].mxu0
  %5424 = vdwg.mxu0
  %v5425 = vadd.f32 %v5319, %v5420
  %v5426 = vpack.c.bf16 %v654, %v654
  %v5427 = vld [vmem:[%s2 + $0xb80] sm:$0xf]
  %v5428 = vld [vmem:[%s2 + $0xb84] sm:$0xf]
  %v5429 = vld [vmem:[%s2 + $0xb88] sm:$0xf]
  %v5430 = vld [vmem:[%s2 + $0xb8c] sm:$0xf]
  %v5431 = vld [vmem:[%s2 + $0xb90] sm:$0xf]
  %v5432 = vld [vmem:[%s2 + $0xb94] sm:$0xf]
  %v5433 = vld [vmem:[%s2 + $0xb98] sm:$0xf]
  %v5434 = vld [vmem:[%s2 + $0xb9c] sm:$0xf]
  %v5435 = vld [vmem:[%s2 + $0xba0] sm:$0xf]
  %v5436 = vld [vmem:[%s2 + $0xba4] sm:$0xf]
  %v5437 = vld [vmem:[%s2 + $0xba8] sm:$0xf]
  %v5438 = vld [vmem:[%s2 + $0xbac] sm:$0xf]
  %v5439 = vld [vmem:[%s2 + $0xbb0] sm:$0xf]
  %v5440 = vld [vmem:[%s2 + $0xbb4] sm:$0xf]
  %v5441 = vld [vmem:[%s2 + $0xbb8] sm:$0xf]
  %v5442 = vld [vmem:[%s2 + $0xbbc] sm:$0xf]
  %v5459 = vunpack.c.l.b16 %v5427
  %v5460 = vunpack.c.l.b16 %v5428
  %v5461 = vunpack.c.l.b16 %v5429
  %v5462 = vunpack.c.l.b16 %v5430
  %v5463 = vunpack.c.l.b16 %v5431
  %v5464 = vunpack.c.l.b16 %v5432
  %v5465 = vunpack.c.l.b16 %v5433
  %v5466 = vunpack.c.l.b16 %v5434
  %v5467 = vunpack.c.l.b16 %v5435
  %v5468 = vunpack.c.l.b16 %v5436
  %v5469 = vunpack.c.l.b16 %v5437
  %v5470 = vunpack.c.l.b16 %v5438
  %v5471 = vunpack.c.l.b16 %v5439
  %v5472 = vunpack.c.l.b16 %v5440
  %v5473 = vunpack.c.l.b16 %v5441
  %v5474 = vunpack.c.l.b16 %v5442
  %v5475 = vpack.c.b16 %v5460, %v5459
  %v5476 = vpack.c.b16 %v5462, %v5461
  %v5477 = vpack.c.b16 %v5464, %v5463
  %v5478 = vpack.c.b16 %v5466, %v5465
  %v5479 = vpack.c.b16 %v5468, %v5467
  %v5480 = vpack.c.b16 %v5470, %v5469
  %v5481 = vpack.c.b16 %v5472, %v5471
  %v5482 = vpack.c.b16 %v5474, %v5473
  %5491 = vmatprep.subr.bf16.mxu0 0
  %5492 = vmatpush1.bf16.msra.mxu0 %v5475
  %5493 = vmatprep.subr.bf16.mxu0 0
  %5494 = vmatpush1.bf16.msra.mxu0 %v5476
  %5495 = vmatprep.subr.bf16.mxu0 0
  %5496 = vmatpush1.bf16.msra.mxu0 %v5477
  %5497 = vmatprep.subr.bf16.mxu0 0
  %5498 = vmatpush1.bf16.msra.mxu0 %v5478
  %5499 = vmatprep.subr.bf16.mxu0 0
  %5500 = vmatpush1.bf16.msra.mxu0 %v5479
  %5501 = vmatprep.subr.bf16.mxu0 0
  %5502 = vmatpush1.bf16.msra.mxu0 %v5480
  %5503 = vmatprep.subr.bf16.mxu0 0
  %5504 = vmatpush1.bf16.msra.mxu0 %v5481
  %5505 = vmatprep.subr.bf16.mxu0 0
  %5506 = vmatpush1.bf16.msra.mxu0 %v5482
  %5507 = vmatprep.subr.bf16.mxu0 0
  %5508 = vmatpush1.bf16.msra.mxu0 0
  %5509 = vmatprep.subr.bf16.mxu0 0
  %5510 = vmatpush1.bf16.msra.mxu0 0
  %5511 = vmatprep.subr.bf16.mxu0 0
  %5512 = vmatpush1.bf16.msra.mxu0 0
  %5513 = vmatprep.subr.bf16.mxu0 0
  %5514 = vmatpush1.bf16.msra.mxu0 0
  %5515 = vmatprep.subr.bf16.mxu0 0
  %5516 = vmatpush1.bf16.msra.mxu0 0
  %5517 = vmatprep.subr.bf16.mxu0 0
  %5518 = vmatpush1.bf16.msra.mxu0 0
  %5519 = vmatprep.subr.bf16.mxu0 0
  %5520 = vmatpush1.bf16.msra.mxu0 0
  %5521 = vmatprep.subr.bf16.mxu0 0
  %5522 = vmatpush1.bf16.msra.mxu0 0
  %5523 = vmatprep.mubr.bf16.mxu0 0
  %5524 = vmatmul.mubr.bf16.gmra.mrb[0].mxu0 %v5426
  %v5525 = vpop.f32.mrb[0].mxu0
  %v5526 = vadd.f32 0.0, %v5525
  %v5527 = vpop.f32.mrb[0].mxu0
  %v5528 = vpop.f32.mrb[0].mxu0
  %v5529 = vpop.f32.mrb[0].mxu0
  %5530 = vdwg.mxu0
  %v5531 = vadd.f32 %v5425, %v5526
  %v5532 = vpack.c.bf16 %v655, %v655
  %v5533 = vld [vmem:[%s2 + $0xbc0] sm:$0xf]
  %v5534 = vld [vmem:[%s2 + $0xbc4] sm:$0xf]
  %v5535 = vld [vmem:[%s2 + $0xbc8] sm:$0xf]
  %v5536 = vld [vmem:[%s2 + $0xbcc] sm:$0xf]
  %v5537 = vld [vmem:[%s2 + $0xbd0] sm:$0xf]
  %v5538 = vld [vmem:[%s2 + $0xbd4] sm:$0xf]
  %v5539 = vld [vmem:[%s2 + $0xbd8] sm:$0xf]
  %v5540 = vld [vmem:[%s2 + $0xbdc] sm:$0xf]
  %v5541 = vld [vmem:[%s2 + $0xbe0] sm:$0xf]
  %v5542 = vld [vmem:[%s2 + $0xbe4] sm:$0xf]
  %v5543 = vld [vmem:[%s2 + $0xbe8] sm:$0xf]
  %v5544 = vld [vmem:[%s2 + $0xbec] sm:$0xf]
  %v5545 = vld [vmem:[%s2 + $0xbf0] sm:$0xf]
  %v5546 = vld [vmem:[%s2 + $0xbf4] sm:$0xf]
  %v5547 = vld [vmem:[%s2 + $0xbf8] sm:$0xf]
  %v5548 = vld [vmem:[%s2 + $0xbfc] sm:$0xf]
  %v5565 = vunpack.c.l.b16 %v5533
  %v5566 = vunpack.c.l.b16 %v5534
  %v5567 = vunpack.c.l.b16 %v5535
  %v5568 = vunpack.c.l.b16 %v5536
  %v5569 = vunpack.c.l.b16 %v5537
  %v5570 = vunpack.c.l.b16 %v5538
  %v5571 = vunpack.c.l.b16 %v5539
  %v5572 = vunpack.c.l.b16 %v5540
  %v5573 = vunpack.c.l.b16 %v5541
  %v5574 = vunpack.c.l.b16 %v5542
  %v5575 = vunpack.c.l.b16 %v5543
  %v5576 = vunpack.c.l.b16 %v5544
  %v5577 = vunpack.c.l.b16 %v5545
  %v5578 = vunpack.c.l.b16 %v5546
  %v5579 = vunpack.c.l.b16 %v5547
  %v5580 = vunpack.c.l.b16 %v5548
  %v5581 = vpack.c.b16 %v5566, %v5565
  %v5582 = vpack.c.b16 %v5568, %v5567
  %v5583 = vpack.c.b16 %v5570, %v5569
  %v5584 = vpack.c.b16 %v5572, %v5571
  %v5585 = vpack.c.b16 %v5574, %v5573
  %v5586 = vpack.c.b16 %v5576, %v5575
  %v5587 = vpack.c.b16 %v5578, %v5577
  %v5588 = vpack.c.b16 %v5580, %v5579
  %5597 = vmatprep.subr.bf16.mxu0 0
  %5598 = vmatpush1.bf16.msra.mxu0 %v5581
  %5599 = vmatprep.subr.bf16.mxu0 0
  %5600 = vmatpush1.bf16.msra.mxu0 %v5582
  %5601 = vmatprep.subr.bf16.mxu0 0
  %5602 = vmatpush1.bf16.msra.mxu0 %v5583
  %5603 = vmatprep.subr.bf16.mxu0 0
  %5604 = vmatpush1.bf16.msra.mxu0 %v5584
  %5605 = vmatprep.subr.bf16.mxu0 0
  %5606 = vmatpush1.bf16.msra.mxu0 %v5585
  %5607 = vmatprep.subr.bf16.mxu0 0
  %5608 = vmatpush1.bf16.msra.mxu0 %v5586
  %5609 = vmatprep.subr.bf16.mxu0 0
  %5610 = vmatpush1.bf16.msra.mxu0 %v5587
  %5611 = vmatprep.subr.bf16.mxu0 0
  %5612 = vmatpush1.bf16.msra.mxu0 %v5588
  %5613 = vmatprep.subr.bf16.mxu0 0
  %5614 = vmatpush1.bf16.msra.mxu0 0
  %5615 = vmatprep.subr.bf16.mxu0 0
  %5616 = vmatpush1.bf16.msra.mxu0 0
  %5617 = vmatprep.subr.bf16.mxu0 0
  %5618 = vmatpush1.bf16.msra.mxu0 0
  %5619 = vmatprep.subr.bf16.mxu0 0
  %5620 = vmatpush1.bf16.msra.mxu0 0
  %5621 = vmatprep.subr.bf16.mxu0 0
  %5622 = vmatpush1.bf16.msra.mxu0 0
  %5623 = vmatprep.subr.bf16.mxu0 0
  %5624 = vmatpush1.bf16.msra.mxu0 0
  %5625 = vmatprep.subr.bf16.mxu0 0
  %5626 = vmatpush1.bf16.msra.mxu0 0
  %5627 = vmatprep.subr.bf16.mxu0 0
  %5628 = vmatpush1.bf16.msra.mxu0 0
  %5629 = vmatprep.mubr.bf16.mxu0 0
  %5630 = vmatmul.mubr.bf16.gmra.mrb[0].mxu0 %v5532
  %v5631 = vpop.f32.mrb[0].mxu0
  %v5632 = vadd.f32 0.0, %v5631
  %v5633 = vpop.f32.mrb[0].mxu0
  %v5634 = vpop.f32.mrb[0].mxu0
  %v5635 = vpop.f32.mrb[0].mxu0
  %5636 = vdwg.mxu0
  %v5637 = vadd.f32 %v5531, %v5632
  %v5638 = vpack.c.bf16 %v656, %v656
  %v5639 = vld [vmem:[%s2 + $0xc00] sm:$0xf]
  %v5640 = vld [vmem:[%s2 + $0xc04] sm:$0xf]
  %v5641 = vld [vmem:[%s2 + $0xc08] sm:$0xf]
  %v5642 = vld [vmem:[%s2 + $0xc0c] sm:$0xf]
  %v5643 = vld [vmem:[%s2 + $0xc10] sm:$0xf]
  %v5644 = vld [vmem:[%s2 + $0xc14] sm:$0xf]
  %v5645 = vld [vmem:[%s2 + $0xc18] sm:$0xf]
  %v5646 = vld [vmem:[%s2 + $0xc1c] sm:$0xf]
  %v5647 = vld [vmem:[%s2 + $0xc20] sm:$0xf]
  %v5648 = vld [vmem:[%s2 + $0xc24] sm:$0xf]
  %v5649 = vld [vmem:[%s2 + $0xc28] sm:$0xf]
  %v5650 = vld [vmem:[%s2 + $0xc2c] sm:$0xf]
  %v5651 = vld [vmem:[%s2 + $0xc30] sm:$0xf]
  %v5652 = vld [vmem:[%s2 + $0xc34] sm:$0xf]
  %v5653 = vld [vmem:[%s2 + $0xc38] sm:$0xf]
  %v5654 = vld [vmem:[%s2 + $0xc3c] sm:$0xf]
  %v5671 = vunpack.c.l.b16 %v5639
  %v5672 = vunpack.c.l.b16 %v5640
  %v5673 = vunpack.c.l.b16 %v5641
  %v5674 = vunpack.c.l.b16 %v5642
  %v5675 = vunpack.c.l.b16 %v5643
  %v5676 = vunpack.c.l.b16 %v5644
  %v5677 = vunpack.c.l.b16 %v5645
  %v5678 = vunpack.c.l.b16 %v5646
  %v5679 = vunpack.c.l.b16 %v5647
  %v5680 = vunpack.c.l.b16 %v5648
  %v5681 = vunpack.c.l.b16 %v5649
  %v5682 = vunpack.c.l.b16 %v5650
  %v5683 = vunpack.c.l.b16 %v5651
  %v5684 = vunpack.c.l.b16 %v5652
  %v5685 = vunpack.c.l.b16 %v5653
  %v5686 = vunpack.c.l.b16 %v5654
  %v5687 = vpack.c.b16 %v5672, %v5671
  %v5688 = vpack.c.b16 %v5674, %v5673
  %v5689 = vpack.c.b16 %v5676, %v5675
  %v5690 = vpack.c.b16 %v5678, %v5677
  %v5691 = vpack.c.b16 %v5680, %v5679
  %v5692 = vpack.c.b16 %v5682, %v5681
  %v5693 = vpack.c.b16 %v5684, %v5683
  %v5694 = vpack.c.b16 %v5686, %v5685
  %5703 = vmatprep.subr.bf16.mxu0 0
  %5704 = vmatpush1.bf16.msra.mxu0 %v5687
  %5705 = vmatprep.subr.bf16.mxu0 0
  %5706 = vmatpush1.bf16.msra.mxu0 %v5688
  %5707 = vmatprep.subr.bf16.mxu0 0
  %5708 = vmatpush1.bf16.msra.mxu0 %v5689
  %5709 = vmatprep.subr.bf16.mxu0 0
  %5710 = vmatpush1.bf16.msra.mxu0 %v5690
  %5711 = vmatprep.subr.bf16.mxu0 0
  %5712 = vmatpush1.bf16.msra.mxu0 %v5691
  %5713 = vmatprep.subr.bf16.mxu0 0
  %5714 = vmatpush1.bf16.msra.mxu0 %v5692
  %5715 = vmatprep.subr.bf16.mxu0 0
  %5716 = vmatpush1.bf16.msra.mxu0 %v5693
  %5717 = vmatprep.subr.bf16.mxu0 0
  %5718 = vmatpush1.bf16.msra.mxu0 %v5694
  %5719 = vmatprep.subr.bf16.mxu0 0
  %5720 = vmatpush1.bf16.msra.mxu0 0
  %5721 = vmatprep.subr.bf16.mxu0 0
  %5722 = vmatpush1.bf16.msra.mxu0 0
  %5723 = vmatprep.subr.bf16.mxu0 0
  %5724 = vmatpush1.bf16.msra.mxu0 0
  %5725 = vmatprep.subr.bf16.mxu0 0
  %5726 = vmatpush1.bf16.msra.mxu0 0
  %5727 = vmatprep.subr.bf16.mxu0 0
  %5728 = vmatpush1.bf16.msra.mxu0 0
  %5729 = vmatprep.subr.bf16.mxu0 0
  %5730 = vmatpush1.bf16.msra.mxu0 0
  %5731 = vmatprep.subr.bf16.mxu0 0
  %5732 = vmatpush1.bf16.msra.mxu0 0
  %5733 = vmatprep.subr.bf16.mxu0 0
  %5734 = vmatpush1.bf16.msra.mxu0 0
  %5735 = vmatprep.mubr.bf16.mxu0 0
  %5736 = vmatmul.mubr.bf16.gmra.mrb[0].mxu0 %v5638
  %v5737 = vpop.f32.mrb[0].mxu0
  %v5738 = vadd.f32 0.0, %v5737
  %v5739 = vpop.f32.mrb[0].mxu0
  %v5740 = vpop.f32.mrb[0].mxu0
  %v5741 = vpop.f32.mrb[0].mxu0
  %5742 = vdwg.mxu0
  %v5743 = vadd.f32 %v5637, %v5738
  %v5744 = vpack.c.bf16 %v657, %v657
  %v5745 = vld [vmem:[%s2 + $0xc40] sm:$0xf]
  %v5746 = vld [vmem:[%s2 + $0xc44] sm:$0xf]
  %v5747 = vld [vmem:[%s2 + $0xc48] sm:$0xf]
  %v5748 = vld [vmem:[%s2 + $0xc4c] sm:$0xf]
  %v5749 = vld [vmem:[%s2 + $0xc50] sm:$0xf]
  %v5750 = vld [vmem:[%s2 + $0xc54] sm:$0xf]
  %v5751 = vld [vmem:[%s2 + $0xc58] sm:$0xf]
  %v5752 = vld [vmem:[%s2 + $0xc5c] sm:$0xf]
  %v5753 = vld [vmem:[%s2 + $0xc60] sm:$0xf]
  %v5754 = vld [vmem:[%s2 + $0xc64] sm:$0xf]
  %v5755 = vld [vmem:[%s2 + $0xc68] sm:$0xf]
  %v5756 = vld [vmem:[%s2 + $0xc6c] sm:$0xf]
  %v5757 = vld [vmem:[%s2 + $0xc70] sm:$0xf]
  %v5758 = vld [vmem:[%s2 + $0xc74] sm:$0xf]
  %v5759 = vld [vmem:[%s2 + $0xc78] sm:$0xf]
  %v5760 = vld [vmem:[%s2 + $0xc7c] sm:$0xf]
  %v5777 = vunpack.c.l.b16 %v5745
  %v5778 = vunpack.c.l.b16 %v5746
  %v5779 = vunpack.c.l.b16 %v5747
  %v5780 = vunpack.c.l.b16 %v5748
  %v5781 = vunpack.c.l.b16 %v5749
  %v5782 = vunpack.c.l.b16 %v5750
  %v5783 = vunpack.c.l.b16 %v5751
  %v5784 = vunpack.c.l.b16 %v5752
  %v5785 = vunpack.c.l.b16 %v5753
  %v5786 = vunpack.c.l.b16 %v5754
  %v5787 = vunpack.c.l.b16 %v5755
  %v5788 = vunpack.c.l.b16 %v5756
  %v5789 = vunpack.c.l.b16 %v5757
  %v5790 = vunpack.c.l.b16 %v5758
  %v5791 = vunpack.c.l.b16 %v5759
  %v5792 = vunpack.c.l.b16 %v5760
  %v5793 = vpack.c.b16 %v5778, %v5777
  %v5794 = vpack.c.b16 %v5780, %v5779
  %v5795 = vpack.c.b16 %v5782, %v5781
  %v5796 = vpack.c.b16 %v5784, %v5783
  %v5797 = vpack.c.b16 %v5786, %v5785
  %v5798 = vpack.c.b16 %v5788, %v5787
  %v5799 = vpack.c.b16 %v5790, %v5789
  %v5800 = vpack.c.b16 %v5792, %v5791
  %5809 = vmatprep.subr.bf16.mxu0 0
  %5810 = vmatpush1.bf16.msra.mxu0 %v5793
  %5811 = vmatprep.subr.bf16.mxu0 0
  %5812 = vmatpush1.bf16.msra.mxu0 %v5794
  %5813 = vmatprep.subr.bf16.mxu0 0
  %5814 = vmatpush1.bf16.msra.mxu0 %v5795
  %5815 = vmatprep.subr.bf16.mxu0 0
  %5816 = vmatpush1.bf16.msra.mxu0 %v5796
  %5817 = vmatprep.subr.bf16.mxu0 0
  %5818 = vmatpush1.bf16.msra.mxu0 %v5797
  %5819 = vmatprep.subr.bf16.mxu0 0
  %5820 = vmatpush1.bf16.msra.mxu0 %v5798
  %5821 = vmatprep.subr.bf16.mxu0 0
  %5822 = vmatpush1.bf16.msra.mxu0 %v5799
  %5823 = vmatprep.subr.bf16.mxu0 0
  %5824 = vmatpush1.bf16.msra.mxu0 %v5800
  %5825 = vmatprep.subr.bf16.mxu0 0
  %5826 = vmatpush1.bf16.msra.mxu0 0
  %5827 = vmatprep.subr.bf16.mxu0 0
  %5828 = vmatpush1.bf16.msra.mxu0 0
  %5829 = vmatprep.subr.bf16.mxu0 0
  %5830 = vmatpush1.bf16.msra.mxu0 0
  %5831 = vmatprep.subr.bf16.mxu0 0
  %5832 = vmatpush1.bf16.msra.mxu0 0
  %5833 = vmatprep.subr.bf16.mxu0 0
  %5834 = vmatpush1.bf16.msra.mxu0 0
  %5835 = vmatprep.subr.bf16.mxu0 0
  %5836 = vmatpush1.bf16.msra.mxu0 0
  %5837 = vmatprep.subr.bf16.mxu0 0
  %5838 = vmatpush1.bf16.msra.mxu0 0
  %5839 = vmatprep.subr.bf16.mxu0 0
  %5840 = vmatpush1.bf16.msra.mxu0 0
  %5841 = vmatprep.mubr.bf16.mxu0 0
  %5842 = vmatmul.mubr.bf16.gmra.mrb[0].mxu0 %v5744
  %v5843 = vpop.f32.mrb[0].mxu0
  %v5844 = vadd.f32 0.0, %v5843
  %v5845 = vpop.f32.mrb[0].mxu0
  %v5846 = vpop.f32.mrb[0].mxu0
  %v5847 = vpop.f32.mrb[0].mxu0
  %5848 = vdwg.mxu0
  %v5849 = vadd.f32 %v5743, %v5844
  %vm5850 = vcmp.ge.f32.partialorder %v5849, 0.0
  %v5851 = vmul.f32 %v5849, 0.01
  %v5852 = vsel %vm5850, %v5849, %v5851
  %v5854 = vrot.slane %v5852, 3
  %vm5856 = vcmask 1040384
  %v5857 = vsel %vm5856, %v5852, %v5854
  %v5858 = vld [vmem:[%s2 + $0xc80] sm:$0xf]
  %v5859 = vld [vmem:[%s2 + $0xc84] sm:$0xf]
  %v5860 = vld [vmem:[%s2 + $0xc88] sm:$0xf]
  %v5861 = vld [vmem:[%s2 + $0xc8c] sm:$0xf]
  %v5862 = vld [vmem:[%s2 + $0xc90] sm:$0xf]
  %v5863 = vld [vmem:[%s2 + $0xc94] sm:$0xf]
  %v5864 = vld [vmem:[%s2 + $0xc98] sm:$0xf]
  %v5865 = vld [vmem:[%s2 + $0xc9c] sm:$0xf]
  %v5866 = vld [vmem:[%s2 + $0xca0] sm:$0xf]
  %v5867 = vld [vmem:[%s2 + $0xca4] sm:$0xf]
  %v5868 = vld [vmem:[%s2 + $0xca8] sm:$0xf]
  %v5869 = vld [vmem:[%s2 + $0xcac] sm:$0xf]
  %v5870 = vld [vmem:[%s2 + $0xcb0] sm:$0xf]
  %v5871 = vld [vmem:[%s2 + $0xcb4] sm:$0xf]
  %v5872 = vld [vmem:[%s2 + $0xcb8] sm:$0xf]
  %v5873 = vld [vmem:[%s2 + $0xcbc] sm:$0xf]
  %v5874 = vpack.c.bf16 %v5857, %v5857
  %v5875 = vrot.slane %v5852, 1
  %v5877 = vrot.slane %v5852, 4
  %v5879 = vsel %vm5856, %v5875, %v5877
  %v5880 = vld [vmem:[%s2 + $0xcc0] sm:$0xf]
  %v5881 = vld [vmem:[%s2 + $0xcc4] sm:$0xf]
  %v5882 = vld [vmem:[%s2 + $0xcc8] sm:$0xf]
  %v5883 = vld [vmem:[%s2 + $0xccc] sm:$0xf]
  %v5884 = vld [vmem:[%s2 + $0xcd0] sm:$0xf]
  %v5885 = vld [vmem:[%s2 + $0xcd4] sm:$0xf]
  %v5886 = vld [vmem:[%s2 + $0xcd8] sm:$0xf]
  %v5887 = vld [vmem:[%s2 + $0xcdc] sm:$0xf]
  %v5888 = vld [vmem:[%s2 + $0xce0] sm:$0xf]
  %v5889 = vld [vmem:[%s2 + $0xce4] sm:$0xf]
  %v5890 = vld [vmem:[%s2 + $0xce8] sm:$0xf]
  %v5891 = vld [vmem:[%s2 + $0xcec] sm:$0xf]
  %v5892 = vld [vmem:[%s2 + $0xcf0] sm:$0xf]
  %v5893 = vld [vmem:[%s2 + $0xcf4] sm:$0xf]
  %v5894 = vld [vmem:[%s2 + $0xcf8] sm:$0xf]
  %v5895 = vld [vmem:[%s2 + $0xcfc] sm:$0xf]
  %v5896 = vpack.c.bf16 %v5879, %v5879
  %v5913 = vunpack.c.l.b16 %v5880
  %v5914 = vunpack.c.l.b16 %v5881
  %v5915 = vunpack.c.l.b16 %v5882
  %v5916 = vunpack.c.l.b16 %v5883
  %v5917 = vunpack.c.l.b16 %v5884
  %v5918 = vunpack.c.l.b16 %v5885
  %v5919 = vunpack.c.l.b16 %v5886
  %v5920 = vunpack.c.l.b16 %v5887
  %v5921 = vunpack.c.l.b16 %v5888
  %v5922 = vunpack.c.l.b16 %v5889
  %v5923 = vunpack.c.l.b16 %v5890
  %v5924 = vunpack.c.l.b16 %v5891
  %v5925 = vunpack.c.l.b16 %v5892
  %v5926 = vunpack.c.l.b16 %v5893
  %v5927 = vunpack.c.l.b16 %v5894
  %v5928 = vunpack.c.l.b16 %v5895
  %v5929 = vpack.c.b16 %v5914, %v5913
  %v5930 = vpack.c.b16 %v5916, %v5915
  %v5931 = vpack.c.b16 %v5918, %v5917
  %v5932 = vpack.c.b16 %v5920, %v5919
  %v5933 = vpack.c.b16 %v5922, %v5921
  %v5934 = vpack.c.b16 %v5924, %v5923
  %v5935 = vpack.c.b16 %v5926, %v5925
  %v5936 = vpack.c.b16 %v5928, %v5927
  %5945 = vmatprep.subr.bf16.mxu0 0
  %5946 = vmatpush1.bf16.msra.mxu0 %v5929
  %5947 = vmatprep.subr.bf16.mxu0 0
  %5948 = vmatpush1.bf16.msra.mxu0 %v5930
  %5949 = vmatprep.subr.bf16.mxu0 0
  %5950 = vmatpush1.bf16.msra.mxu0 %v5931
  %5951 = vmatprep.subr.bf16.mxu0 0
  %5952 = vmatpush1.bf16.msra.mxu0 %v5932
  %5953 = vmatprep.subr.bf16.mxu0 0
  %5954 = vmatpush1.bf16.msra.mxu0 %v5933
  %5955 = vmatprep.subr.bf16.mxu0 0
  %5956 = vmatpush1.bf16.msra.mxu0 %v5934
  %5957 = vmatprep.subr.bf16.mxu0 0
  %5958 = vmatpush1.bf16.msra.mxu0 %v5935
  %5959 = vmatprep.subr.bf16.mxu0 0
  %5960 = vmatpush1.bf16.msra.mxu0 %v5936
  %5961 = vmatprep.subr.bf16.mxu0 0
  %5962 = vmatpush1.bf16.msra.mxu0 0
  %5963 = vmatprep.subr.bf16.mxu0 0
  %5964 = vmatpush1.bf16.msra.mxu0 0
  %5965 = vmatprep.subr.bf16.mxu0 0
  %5966 = vmatpush1.bf16.msra.mxu0 0
  %5967 = vmatprep.subr.bf16.mxu0 0
  %5968 = vmatpush1.bf16.msra.mxu0 0
  %5969 = vmatprep.subr.bf16.mxu0 0
  %5970 = vmatpush1.bf16.msra.mxu0 0
  %5971 = vmatprep.subr.bf16.mxu0 0
  %5972 = vmatpush1.bf16.msra.mxu0 0
  %5973 = vmatprep.subr.bf16.mxu0 0
  %5974 = vmatpush1.bf16.msra.mxu0 0
  %5975 = vmatprep.subr.bf16.mxu0 0
  %5976 = vmatpush1.bf16.msra.mxu0 0
  %5977 = vmatprep.mubr.bf16.mxu0 0
  %5978 = vmatmul.mubr.bf16.gmra.mrb[0].mxu0 %v5896
  %v5979 = vpop.f32.mrb[0].mxu0
  %v5980 = vadd.f32 0.0, %v5979
  %v5981 = vpop.f32.mrb[0].mxu0
  %v5982 = vpop.f32.mrb[0].mxu0
  %v5983 = vpop.f32.mrb[0].mxu0
  %5984 = vdwg.mxu0
  %v6001 = vunpack.c.l.b16 %v5858
  %v6002 = vunpack.c.l.b16 %v5859
  %v6003 = vunpack.c.l.b16 %v5860
  %v6004 = vunpack.c.l.b16 %v5861
  %v6005 = vunpack.c.l.b16 %v5862
  %v6006 = vunpack.c.l.b16 %v5863
  %v6007 = vunpack.c.l.b16 %v5864
  %v6008 = vunpack.c.l.b16 %v5865
  %v6009 = vunpack.c.l.b16 %v5866
  %v6010 = vunpack.c.l.b16 %v5867
  %v6011 = vunpack.c.l.b16 %v5868
  %v6012 = vunpack.c.l.b16 %v5869
  %v6013 = vunpack.c.l.b16 %v5870
  %v6014 = vunpack.c.l.b16 %v5871
  %v6015 = vunpack.c.l.b16 %v5872
  %v6016 = vunpack.c.l.b16 %v5873
  %v6017 = vpack.c.b16 %v6002, %v6001
  %v6018 = vpack.c.b16 %v6004, %v6003
  %v6019 = vpack.c.b16 %v6006, %v6005
  %v6020 = vpack.c.b16 %v6008, %v6007
  %v6021 = vpack.c.b16 %v6010, %v6009
  %v6022 = vpack.c.b16 %v6012, %v6011
  %v6023 = vpack.c.b16 %v6014, %v6013
  %v6024 = vpack.c.b16 %v6016, %v6015
  %6033 = vmatprep.subr.bf16.mxu0 0
  %6034 = vmatpush1.bf16.msra.mxu0 %v6017
  %6035 = vmatprep.subr.bf16.mxu0 0
  %6036 = vmatpush1.bf16.msra.mxu0 %v6018
  %6037 = vmatprep.subr.bf16.mxu0 0
  %6038 = vmatpush1.bf16.msra.mxu0 %v6019
  %6039 = vmatprep.subr.bf16.mxu0 0
  %6040 = vmatpush1.bf16.msra.mxu0 %v6020
  %6041 = vmatprep.subr.bf16.mxu0 0
  %6042 = vmatpush1.bf16.msra.mxu0 %v6021
  %6043 = vmatprep.subr.bf16.mxu0 0
  %6044 = vmatpush1.bf16.msra.mxu0 %v6022
  %6045 = vmatprep.subr.bf16.mxu0 0
  %6046 = vmatpush1.bf16.msra.mxu0 %v6023
  %6047 = vmatprep.subr.bf16.mxu0 0
  %6048 = vmatpush1.bf16.msra.mxu0 %v6024
  %6049 = vmatprep.subr.bf16.mxu0 0
  %6050 = vmatpush1.bf16.msra.mxu0 0
  %6051 = vmatprep.subr.bf16.mxu0 0
  %6052 = vmatpush1.bf16.msra.mxu0 0
  %6053 = vmatprep.subr.bf16.mxu0 0
  %6054 = vmatpush1.bf16.msra.mxu0 0
  %6055 = vmatprep.subr.bf16.mxu0 0
  %6056 = vmatpush1.bf16.msra.mxu0 0
  %6057 = vmatprep.subr.bf16.mxu0 0
  %6058 = vmatpush1.bf16.msra.mxu0 0
  %6059 = vmatprep.subr.bf16.mxu0 0
  %6060 = vmatpush1.bf16.msra.mxu0 0
  %6061 = vmatprep.subr.bf16.mxu0 0
  %6062 = vmatpush1.bf16.msra.mxu0 0
  %6063 = vmatprep.subr.bf16.mxu0 0
  %6064 = vmatpush1.bf16.msra.mxu0 0
  %6065 = vmatprep.mubr.bf16.mxu0 0
  %6066 = vmatmul.mubr.bf16.gmra.mrb[0].mxu0 %v5874
  %v6067 = vpop.f32.mrb[0].mxu0
  %v6068 = vadd.f32 %v5980, %v6067
  %v6069 = vpop.f32.mrb[0].mxu0
  %v6070 = vpop.f32.mrb[0].mxu0
  %v6071 = vpop.f32.mrb[0].mxu0
  %6072 = vdwg.mxu0
  %v6073 = vrot.slane %v5852, 2
  %v6075 = vrot.slane %v5852, 5
  %v6077 = vsel %vm5856, %v6073, %v6075
  %v6078 = vld [vmem:[%s2 + $0xd00] sm:$0xf]
  %v6079 = vld [vmem:[%s2 + $0xd04] sm:$0xf]
  %v6080 = vld [vmem:[%s2 + $0xd08] sm:$0xf]
  %v6081 = vld [vmem:[%s2 + $0xd0c] sm:$0xf]
  %v6082 = vld [vmem:[%s2 + $0xd10] sm:$0xf]
  %v6083 = vld [vmem:[%s2 + $0xd14] sm:$0xf]
  %v6084 = vld [vmem:[%s2 + $0xd18] sm:$0xf]
  %v6085 = vld [vmem:[%s2 + $0xd1c] sm:$0xf]
  %v6086 = vld [vmem:[%s2 + $0xd20] sm:$0xf]
  %v6087 = vld [vmem:[%s2 + $0xd24] sm:$0xf]
  %v6088 = vld [vmem:[%s2 + $0xd28] sm:$0xf]
  %v6089 = vld [vmem:[%s2 + $0xd2c] sm:$0xf]
  %v6090 = vld [vmem:[%s2 + $0xd30] sm:$0xf]
  %v6091 = vld [vmem:[%s2 + $0xd34] sm:$0xf]
  %v6092 = vld [vmem:[%s2 + $0xd38] sm:$0xf]
  %v6093 = vld [vmem:[%s2 + $0xd3c] sm:$0xf]
  %v6094 = vpack.c.bf16 %v6077, %v6077
  %v6111 = vunpack.c.l.b16 %v6078
  %v6112 = vunpack.c.l.b16 %v6079
  %v6113 = vunpack.c.l.b16 %v6080
  %v6114 = vunpack.c.l.b16 %v6081
  %v6115 = vunpack.c.l.b16 %v6082
  %v6116 = vunpack.c.l.b16 %v6083
  %v6117 = vunpack.c.l.b16 %v6084
  %v6118 = vunpack.c.l.b16 %v6085
  %v6119 = vunpack.c.l.b16 %v6086
  %v6120 = vunpack.c.l.b16 %v6087
  %v6121 = vunpack.c.l.b16 %v6088
  %v6122 = vunpack.c.l.b16 %v6089
  %v6123 = vunpack.c.l.b16 %v6090
  %v6124 = vunpack.c.l.b16 %v6091
  %v6125 = vunpack.c.l.b16 %v6092
  %v6126 = vunpack.c.l.b16 %v6093
  %v6127 = vpack.c.b16 %v6112, %v6111
  %v6128 = vpack.c.b16 %v6114, %v6113
  %v6129 = vpack.c.b16 %v6116, %v6115
  %v6130 = vpack.c.b16 %v6118, %v6117
  %v6131 = vpack.c.b16 %v6120, %v6119
  %v6132 = vpack.c.b16 %v6122, %v6121
  %v6133 = vpack.c.b16 %v6124, %v6123
  %v6134 = vpack.c.b16 %v6126, %v6125
  %6143 = vmatprep.subr.bf16.mxu0 0
  %6144 = vmatpush1.bf16.msra.mxu0 %v6127
  %6145 = vmatprep.subr.bf16.mxu0 0
  %6146 = vmatpush1.bf16.msra.mxu0 %v6128
  %6147 = vmatprep.subr.bf16.mxu0 0
  %6148 = vmatpush1.bf16.msra.mxu0 %v6129
  %6149 = vmatprep.subr.bf16.mxu0 0
  %6150 = vmatpush1.bf16.msra.mxu0 %v6130
  %6151 = vmatprep.subr.bf16.mxu0 0
  %6152 = vmatpush1.bf16.msra.mxu0 %v6131
  %6153 = vmatprep.subr.bf16.mxu0 0
  %6154 = vmatpush1.bf16.msra.mxu0 %v6132
  %6155 = vmatprep.subr.bf16.mxu0 0
  %6156 = vmatpush1.bf16.msra.mxu0 %v6133
  %6157 = vmatprep.subr.bf16.mxu0 0
  %6158 = vmatpush1.bf16.msra.mxu0 %v6134
  %6159 = vmatprep.subr.bf16.mxu0 0
  %6160 = vmatpush1.bf16.msra.mxu0 0
  %6161 = vmatprep.subr.bf16.mxu0 0
  %6162 = vmatpush1.bf16.msra.mxu0 0
  %6163 = vmatprep.subr.bf16.mxu0 0
  %6164 = vmatpush1.bf16.msra.mxu0 0
  %6165 = vmatprep.subr.bf16.mxu0 0
  %6166 = vmatpush1.bf16.msra.mxu0 0
  %6167 = vmatprep.subr.bf16.mxu0 0
  %6168 = vmatpush1.bf16.msra.mxu0 0
  %6169 = vmatprep.subr.bf16.mxu0 0
  %6170 = vmatpush1.bf16.msra.mxu0 0
  %6171 = vmatprep.subr.bf16.mxu0 0
  %6172 = vmatpush1.bf16.msra.mxu0 0
  %6173 = vmatprep.subr.bf16.mxu0 0
  %6174 = vmatpush1.bf16.msra.mxu0 0
  %6175 = vmatprep.mubr.bf16.mxu0 0
  %6176 = vmatmul.mubr.bf16.gmra.mrb[0].mxu0 %v6094
  %v6177 = vpop.f32.mrb[0].mxu0
  %v6178 = vadd.f32 0.0, %v6177
  %v6179 = vpop.f32.mrb[0].mxu0
  %v6180 = vpop.f32.mrb[0].mxu0
  %v6181 = vpop.f32.mrb[0].mxu0
  %6182 = vdwg.mxu0
  %v6183 = vadd.f32 %v6068, %v6178
  %v6184 = vrot.slane %v5852, 6
  %v6186 = vsel %vm5856, %v5854, %v6184
  %v6187 = vld [vmem:[%s2 + $0xd40] sm:$0xf]
  %v6188 = vld [vmem:[%s2 + $0xd44] sm:$0xf]
  %v6189 = vld [vmem:[%s2 + $0xd48] sm:$0xf]
  %v6190 = vld [vmem:[%s2 + $0xd4c] sm:$0xf]
  %v6191 = vld [vmem:[%s2 + $0xd50] sm:$0xf]
  %v6192 = vld [vmem:[%s2 + $0xd54] sm:$0xf]
  %v6193 = vld [vmem:[%s2 + $0xd58] sm:$0xf]
  %v6194 = vld [vmem:[%s2 + $0xd5c] sm:$0xf]
  %v6195 = vld [vmem:[%s2 + $0xd60] sm:$0xf]
  %v6196 = vld [vmem:[%s2 + $0xd64] sm:$0xf]
  %v6197 = vld [vmem:[%s2 + $0xd68] sm:$0xf]
  %v6198 = vld [vmem:[%s2 + $0xd6c] sm:$0xf]
  %v6199 = vld [vmem:[%s2 + $0xd70] sm:$0xf]
  %v6200 = vld [vmem:[%s2 + $0xd74] sm:$0xf]
  %v6201 = vld [vmem:[%s2 + $0xd78] sm:$0xf]
  %v6202 = vld [vmem:[%s2 + $0xd7c] sm:$0xf]
  %v6203 = vpack.c.bf16 %v6186, %v6186
  %v6220 = vunpack.c.l.b16 %v6187
  %v6221 = vunpack.c.l.b16 %v6188
  %v6222 = vunpack.c.l.b16 %v6189
  %v6223 = vunpack.c.l.b16 %v6190
  %v6224 = vunpack.c.l.b16 %v6191
  %v6225 = vunpack.c.l.b16 %v6192
  %v6226 = vunpack.c.l.b16 %v6193
  %v6227 = vunpack.c.l.b16 %v6194
  %v6228 = vunpack.c.l.b16 %v6195
  %v6229 = vunpack.c.l.b16 %v6196
  %v6230 = vunpack.c.l.b16 %v6197
  %v6231 = vunpack.c.l.b16 %v6198
  %v6232 = vunpack.c.l.b16 %v6199
  %v6233 = vunpack.c.l.b16 %v6200
  %v6234 = vunpack.c.l.b16 %v6201
  %v6235 = vunpack.c.l.b16 %v6202
  %v6236 = vpack.c.b16 %v6221, %v6220
  %v6237 = vpack.c.b16 %v6223, %v6222
  %v6238 = vpack.c.b16 %v6225, %v6224
  %v6239 = vpack.c.b16 %v6227, %v6226
  %v6240 = vpack.c.b16 %v6229, %v6228
  %v6241 = vpack.c.b16 %v6231, %v6230
  %v6242 = vpack.c.b16 %v6233, %v6232
  %v6243 = vpack.c.b16 %v6235, %v6234
  %6252 = vmatprep.subr.bf16.mxu0 0
  %6253 = vmatpush1.bf16.msra.mxu0 %v6236
  %6254 = vmatprep.subr.bf16.mxu0 0
  %6255 = vmatpush1.bf16.msra.mxu0 %v6237
  %6256 = vmatprep.subr.bf16.mxu0 0
  %6257 = vmatpush1.bf16.msra.mxu0 %v6238
  %6258 = vmatprep.subr.bf16.mxu0 0
  %6259 = vmatpush1.bf16.msra.mxu0 %v6239
  %6260 = vmatprep.subr.bf16.mxu0 0
  %6261 = vmatpush1.bf16.msra.mxu0 %v6240
  %6262 = vmatprep.subr.bf16.mxu0 0
  %6263 = vmatpush1.bf16.msra.mxu0 %v6241
  %6264 = vmatprep.subr.bf16.mxu0 0
  %6265 = vmatpush1.bf16.msra.mxu0 %v6242
  %6266 = vmatprep.subr.bf16.mxu0 0
  %6267 = vmatpush1.bf16.msra.mxu0 %v6243
  %6268 = vmatprep.subr.bf16.mxu0 0
  %6269 = vmatpush1.bf16.msra.mxu0 0
  %6270 = vmatprep.subr.bf16.mxu0 0
  %6271 = vmatpush1.bf16.msra.mxu0 0
  %6272 = vmatprep.subr.bf16.mxu0 0
  %6273 = vmatpush1.bf16.msra.mxu0 0
  %6274 = vmatprep.subr.bf16.mxu0 0
  %6275 = vmatpush1.bf16.msra.mxu0 0
  %6276 = vmatprep.subr.bf16.mxu0 0
  %6277 = vmatpush1.bf16.msra.mxu0 0
  %6278 = vmatprep.subr.bf16.mxu0 0
  %6279 = vmatpush1.bf16.msra.mxu0 0
  %6280 = vmatprep.subr.bf16.mxu0 0
  %6281 = vmatpush1.bf16.msra.mxu0 0
  %6282 = vmatprep.subr.bf16.mxu0 0
  %6283 = vmatpush1.bf16.msra.mxu0 0
  %6284 = vmatprep.mubr.bf16.mxu0 0
  %6285 = vmatmul.mubr.bf16.gmra.mrb[0].mxu0 %v6203
  %v6286 = vpop.f32.mrb[0].mxu0
  %v6287 = vadd.f32 0.0, %v6286
  %v6288 = vpop.f32.mrb[0].mxu0
  %v6289 = vpop.f32.mrb[0].mxu0
  %v6290 = vpop.f32.mrb[0].mxu0
  %6291 = vdwg.mxu0
  %v6292 = vadd.f32 %v6183, %v6287
  %vm6293 = vcmp.ge.f32.partialorder %v6292, 0.0
  %v6294 = vmul.f32 %v6292, 0.01
  %v6295 = vsel %vm6293, %v6292, %v6294
  %v6296 = vpack.c.bf16 %v6295, %v6295
  %v6297 = vld [vmem:[%s2 + $0xd80] sm:$0xf]
  %v6298 = vld [vmem:[%s2 + $0xd84] sm:$0xf]
  %v6299 = vld [vmem:[%s2 + $0xd88] sm:$0xf]
  %v6300 = vld [vmem:[%s2 + $0xd8c] sm:$0xf]
  %v6301 = vld [vmem:[%s2 + $0xd90] sm:$0xf]
  %v6302 = vld [vmem:[%s2 + $0xd94] sm:$0xf]
  %v6303 = vld [vmem:[%s2 + $0xd98] sm:$0xf]
  %v6304 = vld [vmem:[%s2 + $0xd9c] sm:$0xf]
  %v6305 = vld [vmem:[%s2 + $0xda0] sm:$0xf]
  %v6306 = vld [vmem:[%s2 + $0xda4] sm:$0xf]
  %v6307 = vld [vmem:[%s2 + $0xda8] sm:$0xf]
  %v6308 = vld [vmem:[%s2 + $0xdac] sm:$0xf]
  %v6309 = vld [vmem:[%s2 + $0xdb0] sm:$0xf]
  %v6310 = vld [vmem:[%s2 + $0xdb4] sm:$0xf]
  %v6311 = vld [vmem:[%s2 + $0xdb8] sm:$0xf]
  %v6312 = vld [vmem:[%s2 + $0xdbc] sm:$0xf]
  %v6329 = vunpack.c.l.b16 %v6297
  %v6330 = vunpack.c.l.b16 %v6298
  %v6331 = vunpack.c.l.b16 %v6299
  %v6332 = vunpack.c.l.b16 %v6300
  %v6333 = vunpack.c.l.b16 %v6301
  %v6334 = vunpack.c.l.b16 %v6302
  %v6335 = vunpack.c.l.b16 %v6303
  %v6336 = vunpack.c.l.b16 %v6304
  %v6337 = vunpack.c.l.b16 %v6305
  %v6338 = vunpack.c.l.b16 %v6306
  %v6339 = vunpack.c.l.b16 %v6307
  %v6340 = vunpack.c.l.b16 %v6308
  %v6341 = vunpack.c.l.b16 %v6309
  %v6342 = vunpack.c.l.b16 %v6310
  %v6343 = vunpack.c.l.b16 %v6311
  %v6344 = vunpack.c.l.b16 %v6312
  %v6345 = vpack.c.b16 %v6330, %v6329
  %v6346 = vpack.c.b16 %v6332, %v6331
  %v6347 = vpack.c.b16 %v6334, %v6333
  %v6348 = vpack.c.b16 %v6336, %v6335
  %v6349 = vpack.c.b16 %v6338, %v6337
  %v6350 = vpack.c.b16 %v6340, %v6339
  %v6351 = vpack.c.b16 %v6342, %v6341
  %v6352 = vpack.c.b16 %v6344, %v6343
  %6361 = vmatprep.subr.bf16.mxu0 0
  %6362 = vmatpush1.bf16.msra.mxu0 %v6345
  %6363 = vmatprep.subr.bf16.mxu0 0
  %6364 = vmatpush1.bf16.msra.mxu0 %v6346
  %6365 = vmatprep.subr.bf16.mxu0 0
  %6366 = vmatpush1.bf16.msra.mxu0 %v6347
  %6367 = vmatprep.subr.bf16.mxu0 0
  %6368 = vmatpush1.bf16.msra.mxu0 %v6348
  %6369 = vmatprep.subr.bf16.mxu0 0
  %6370 = vmatpush1.bf16.msra.mxu0 %v6349
  %6371 = vmatprep.subr.bf16.mxu0 0
  %6372 = vmatpush1.bf16.msra.mxu0 %v6350
  %6373 = vmatprep.subr.bf16.mxu0 0
  %6374 = vmatpush1.bf16.msra.mxu0 %v6351
  %6375 = vmatprep.subr.bf16.mxu0 0
  %6376 = vmatpush1.bf16.msra.mxu0 %v6352
  %6377 = vmatprep.subr.bf16.mxu0 0
  %6378 = vmatpush1.bf16.msra.mxu0 0
  %6379 = vmatprep.subr.bf16.mxu0 0
  %6380 = vmatpush1.bf16.msra.mxu0 0
  %6381 = vmatprep.subr.bf16.mxu0 0
  %6382 = vmatpush1.bf16.msra.mxu0 0
  %6383 = vmatprep.subr.bf16.mxu0 0
  %6384 = vmatpush1.bf16.msra.mxu0 0
  %6385 = vmatprep.subr.bf16.mxu0 0
  %6386 = vmatpush1.bf16.msra.mxu0 0
  %6387 = vmatprep.subr.bf16.mxu0 0
  %6388 = vmatpush1.bf16.msra.mxu0 0
  %6389 = vmatprep.subr.bf16.mxu0 0
  %6390 = vmatpush1.bf16.msra.mxu0 0
  %6391 = vmatprep.subr.bf16.mxu0 0
  %6392 = vmatpush1.bf16.msra.mxu0 0
  %6393 = vmatprep.mubr.bf16.mxu0 0
  %6394 = vmatmul.mubr.bf16.gmra.mrb[0].mxu0 %v6296
  %v6395 = vpop.f32.mrb[0].mxu0
  %v6396 = vadd.f32 0.0, %v6395
  %v6397 = vpop.f32.mrb[0].mxu0
  %v6398 = vpop.f32.mrb[0].mxu0
  %v6399 = vpop.f32.mrb[0].mxu0
  %6400 = vdwg.mxu0
  %vm6401 = vcmp.ge.f32.partialorder %v6396, 0.0
  %v6402 = vmul.f32 %v6396, 0.01
  %v6403 = vsel %vm6401, %v6396, %v6402
  %v6404 = vpack.c.bf16 %v6403, %v6403
  %v6405 = vld [vmem:[%s2 + $0xdc0] sm:$0xf]
  %v6406 = vld [vmem:[%s2 + $0xdc4] sm:$0xf]
  %v6407 = vld [vmem:[%s2 + $0xdc8] sm:$0xf]
  %v6408 = vld [vmem:[%s2 + $0xdcc] sm:$0xf]
  %v6409 = vld [vmem:[%s2 + $0xdd0] sm:$0xf]
  %v6410 = vld [vmem:[%s2 + $0xdd4] sm:$0xf]
  %v6411 = vld [vmem:[%s2 + $0xdd8] sm:$0xf]
  %v6412 = vld [vmem:[%s2 + $0xddc] sm:$0xf]
  %v6413 = vld [vmem:[%s2 + $0xde0] sm:$0xf]
  %v6414 = vld [vmem:[%s2 + $0xde4] sm:$0xf]
  %v6415 = vld [vmem:[%s2 + $0xde8] sm:$0xf]
  %v6416 = vld [vmem:[%s2 + $0xdec] sm:$0xf]
  %v6417 = vld [vmem:[%s2 + $0xdf0] sm:$0xf]
  %v6418 = vld [vmem:[%s2 + $0xdf4] sm:$0xf]
  %v6419 = vld [vmem:[%s2 + $0xdf8] sm:$0xf]
  %v6420 = vld [vmem:[%s2 + $0xdfc] sm:$0xf]
  %v6437 = vunpack.c.l.b16 %v6405
  %v6438 = vunpack.c.l.b16 %v6406
  %v6439 = vunpack.c.l.b16 %v6407
  %v6440 = vunpack.c.l.b16 %v6408
  %v6441 = vunpack.c.l.b16 %v6409
  %v6442 = vunpack.c.l.b16 %v6410
  %v6443 = vunpack.c.l.b16 %v6411
  %v6444 = vunpack.c.l.b16 %v6412
  %v6445 = vunpack.c.l.b16 %v6413
  %v6446 = vunpack.c.l.b16 %v6414
  %v6447 = vunpack.c.l.b16 %v6415
  %v6448 = vunpack.c.l.b16 %v6416
  %v6449 = vunpack.c.l.b16 %v6417
  %v6450 = vunpack.c.l.b16 %v6418
  %v6451 = vunpack.c.l.b16 %v6419
  %v6452 = vunpack.c.l.b16 %v6420
  %v6453 = vpack.c.b16 %v6438, %v6437
  %v6454 = vpack.c.b16 %v6440, %v6439
  %v6455 = vpack.c.b16 %v6442, %v6441
  %v6456 = vpack.c.b16 %v6444, %v6443
  %v6457 = vpack.c.b16 %v6446, %v6445
  %v6458 = vpack.c.b16 %v6448, %v6447
  %v6459 = vpack.c.b16 %v6450, %v6449
  %v6460 = vpack.c.b16 %v6452, %v6451
  %6469 = vmatprep.subr.bf16.mxu0 0
  %6470 = vmatpush1.bf16.msra.mxu0 %v6453
  %6471 = vmatprep.subr.bf16.mxu0 0
  %6472 = vmatpush1.bf16.msra.mxu0 %v6454
  %6473 = vmatprep.subr.bf16.mxu0 0
  %6474 = vmatpush1.bf16.msra.mxu0 %v6455
  %6475 = vmatprep.subr.bf16.mxu0 0
  %6476 = vmatpush1.bf16.msra.mxu0 %v6456
  %6477 = vmatprep.subr.bf16.mxu0 0
  %6478 = vmatpush1.bf16.msra.mxu0 %v6457
  %6479 = vmatprep.subr.bf16.mxu0 0
  %6480 = vmatpush1.bf16.msra.mxu0 %v6458
  %6481 = vmatprep.subr.bf16.mxu0 0
  %6482 = vmatpush1.bf16.msra.mxu0 %v6459
  %6483 = vmatprep.subr.bf16.mxu0 0
  %6484 = vmatpush1.bf16.msra.mxu0 %v6460
  %6485 = vmatprep.subr.bf16.mxu0 0
  %6486 = vmatpush1.bf16.msra.mxu0 0
  %6487 = vmatprep.subr.bf16.mxu0 0
  %6488 = vmatpush1.bf16.msra.mxu0 0
  %6489 = vmatprep.subr.bf16.mxu0 0
  %6490 = vmatpush1.bf16.msra.mxu0 0
  %6491 = vmatprep.subr.bf16.mxu0 0
  %6492 = vmatpush1.bf16.msra.mxu0 0
  %6493 = vmatprep.subr.bf16.mxu0 0
  %6494 = vmatpush1.bf16.msra.mxu0 0
  %6495 = vmatprep.subr.bf16.mxu0 0
  %6496 = vmatpush1.bf16.msra.mxu0 0
  %6497 = vmatprep.subr.bf16.mxu0 0
  %6498 = vmatpush1.bf16.msra.mxu0 0
  %6499 = vmatprep.subr.bf16.mxu0 0
  %6500 = vmatpush1.bf16.msra.mxu0 0
  %6501 = vmatprep.mubr.bf16.mxu0 0
  %6502 = vmatmul.mubr.bf16.gmra.mrb[0].mxu0 %v6404
  %v6503 = vpop.f32.mrb[0].mxu0
  %v6504 = vadd.f32 0.0, %v6503
  %v6505 = vpop.f32.mrb[0].mxu0
  %v6506 = vpop.f32.mrb[0].mxu0
  %v6507 = vpop.f32.mrb[0].mxu0
  %6508 = vdwg.mxu0
  %vm6509 = vcmp.ge.f32.partialorder %v6504, 0.0
  %v6510 = vmul.f32 %v6504, 0.01
  %v6511 = vsel %vm6509, %v6504, %v6510
  %v6512 = vpack.c.bf16 %v6511, %v6511
  %v6513 = vld [vmem:[%s2 + $0xe00] sm:$0xf]
  %v6514 = vld [vmem:[%s2 + $0xe04] sm:$0xf]
  %v6515 = vld [vmem:[%s2 + $0xe08] sm:$0xf]
  %v6516 = vld [vmem:[%s2 + $0xe0c] sm:$0xf]
  %v6517 = vld [vmem:[%s2 + $0xe10] sm:$0xf]
  %v6518 = vld [vmem:[%s2 + $0xe14] sm:$0xf]
  %v6519 = vld [vmem:[%s2 + $0xe18] sm:$0xf]
  %v6520 = vld [vmem:[%s2 + $0xe1c] sm:$0xf]
  %v6521 = vld [vmem:[%s2 + $0xe20] sm:$0xf]
  %v6522 = vld [vmem:[%s2 + $0xe24] sm:$0xf]
  %v6523 = vld [vmem:[%s2 + $0xe28] sm:$0xf]
  %v6524 = vld [vmem:[%s2 + $0xe2c] sm:$0xf]
  %v6525 = vld [vmem:[%s2 + $0xe30] sm:$0xf]
  %v6526 = vld [vmem:[%s2 + $0xe34] sm:$0xf]
  %v6527 = vld [vmem:[%s2 + $0xe38] sm:$0xf]
  %v6528 = vld [vmem:[%s2 + $0xe3c] sm:$0xf]
  %v6545 = vunpack.c.l.b16 %v6513
  %v6546 = vunpack.c.l.b16 %v6514
  %v6547 = vunpack.c.l.b16 %v6515
  %v6548 = vunpack.c.l.b16 %v6516
  %v6549 = vunpack.c.l.b16 %v6517
  %v6550 = vunpack.c.l.b16 %v6518
  %v6551 = vunpack.c.l.b16 %v6519
  %v6552 = vunpack.c.l.b16 %v6520
  %v6553 = vunpack.c.l.b16 %v6521
  %v6554 = vunpack.c.l.b16 %v6522
  %v6555 = vunpack.c.l.b16 %v6523
  %v6556 = vunpack.c.l.b16 %v6524
  %v6557 = vunpack.c.l.b16 %v6525
  %v6558 = vunpack.c.l.b16 %v6526
  %v6559 = vunpack.c.l.b16 %v6527
  %v6560 = vunpack.c.l.b16 %v6528
  %v6561 = vpack.c.b16 %v6546, %v6545
  %v6562 = vpack.c.b16 %v6548, %v6547
  %v6563 = vpack.c.b16 %v6550, %v6549
  %v6564 = vpack.c.b16 %v6552, %v6551
  %v6565 = vpack.c.b16 %v6554, %v6553
  %v6566 = vpack.c.b16 %v6556, %v6555
  %v6567 = vpack.c.b16 %v6558, %v6557
  %v6568 = vpack.c.b16 %v6560, %v6559
  %6577 = vmatprep.subr.bf16.mxu0 0
  %6578 = vmatpush1.bf16.msra.mxu0 %v6561
  %6579 = vmatprep.subr.bf16.mxu0 0
  %6580 = vmatpush1.bf16.msra.mxu0 %v6562
  %6581 = vmatprep.subr.bf16.mxu0 0
  %6582 = vmatpush1.bf16.msra.mxu0 %v6563
  %6583 = vmatprep.subr.bf16.mxu0 0
  %6584 = vmatpush1.bf16.msra.mxu0 %v6564
  %6585 = vmatprep.subr.bf16.mxu0 0
  %6586 = vmatpush1.bf16.msra.mxu0 %v6565
  %6587 = vmatprep.subr.bf16.mxu0 0
  %6588 = vmatpush1.bf16.msra.mxu0 %v6566
  %6589 = vmatprep.subr.bf16.mxu0 0
  %6590 = vmatpush1.bf16.msra.mxu0 %v6567
  %6591 = vmatprep.subr.bf16.mxu0 0
  %6592 = vmatpush1.bf16.msra.mxu0 %v6568
  %6593 = vmatprep.subr.bf16.mxu0 0
  %6594 = vmatpush1.bf16.msra.mxu0 0
  %6595 = vmatprep.subr.bf16.mxu0 0
  %6596 = vmatpush1.bf16.msra.mxu0 0
  %6597 = vmatprep.subr.bf16.mxu0 0
  %6598 = vmatpush1.bf16.msra.mxu0 0
  %6599 = vmatprep.subr.bf16.mxu0 0
  %6600 = vmatpush1.bf16.msra.mxu0 0
  %6601 = vmatprep.subr.bf16.mxu0 0
  %6602 = vmatpush1.bf16.msra.mxu0 0
  %6603 = vmatprep.subr.bf16.mxu0 0
  %6604 = vmatpush1.bf16.msra.mxu0 0
  %6605 = vmatprep.subr.bf16.mxu0 0
  %6606 = vmatpush1.bf16.msra.mxu0 0
  %6607 = vmatprep.subr.bf16.mxu0 0
  %6608 = vmatpush1.bf16.msra.mxu0 0
  %6609 = vmatprep.mubr.bf16.mxu0 0
  %6610 = vmatmul.mubr.bf16.gmra.mrb[0].mxu0 %v6512
  %v6611 = vpop.f32.mrb[0].mxu0
  %v6612 = vadd.f32 0.0, %v6611
  %v6613 = vpop.f32.mrb[0].mxu0
  %v6614 = vpop.f32.mrb[0].mxu0
  %v6615 = vpop.f32.mrb[0].mxu0
  %6616 = vdwg.mxu0
  %vm6617 = vcmp.ge.f32.partialorder %v6612, 0.0
  %v6618 = vmul.f32 %v6612, 0.01
  %v6619 = vsel %vm6617, %v6612, %v6618
  %v6620 = vpack.c.bf16 %v6619, %v6619
  %v6621 = vld [vmem:[%s2 + $0xe40] sm:$0xf]
  %v6622 = vld [vmem:[%s2 + $0xe44] sm:$0xf]
  %v6623 = vld [vmem:[%s2 + $0xe48] sm:$0xf]
  %v6624 = vld [vmem:[%s2 + $0xe4c] sm:$0xf]
  %v6625 = vld [vmem:[%s2 + $0xe50] sm:$0xf]
  %v6626 = vld [vmem:[%s2 + $0xe54] sm:$0xf]
  %v6627 = vld [vmem:[%s2 + $0xe58] sm:$0xf]
  %v6628 = vld [vmem:[%s2 + $0xe5c] sm:$0xf]
  %v6629 = vld [vmem:[%s2 + $0xe60] sm:$0xf]
  %v6630 = vld [vmem:[%s2 + $0xe64] sm:$0xf]
  %v6631 = vld [vmem:[%s2 + $0xe68] sm:$0xf]
  %v6632 = vld [vmem:[%s2 + $0xe6c] sm:$0xf]
  %v6633 = vld [vmem:[%s2 + $0xe70] sm:$0xf]
  %v6634 = vld [vmem:[%s2 + $0xe74] sm:$0xf]
  %v6635 = vld [vmem:[%s2 + $0xe78] sm:$0xf]
  %v6636 = vld [vmem:[%s2 + $0xe7c] sm:$0xf]
  %v6653 = vunpack.c.l.b16 %v6621
  %v6654 = vunpack.c.l.b16 %v6622
  %v6655 = vunpack.c.l.b16 %v6623
  %v6656 = vunpack.c.l.b16 %v6624
  %v6657 = vunpack.c.l.b16 %v6625
  %v6658 = vunpack.c.l.b16 %v6626
  %v6659 = vunpack.c.l.b16 %v6627
  %v6660 = vunpack.c.l.b16 %v6628
  %v6661 = vunpack.c.l.b16 %v6629
  %v6662 = vunpack.c.l.b16 %v6630
  %v6663 = vunpack.c.l.b16 %v6631
  %v6664 = vunpack.c.l.b16 %v6632
  %v6665 = vunpack.c.l.b16 %v6633
  %v6666 = vunpack.c.l.b16 %v6634
  %v6667 = vunpack.c.l.b16 %v6635
  %v6668 = vunpack.c.l.b16 %v6636
  %v6669 = vpack.c.b16 %v6654, %v6653
  %v6670 = vpack.c.b16 %v6656, %v6655
  %v6671 = vpack.c.b16 %v6658, %v6657
  %v6672 = vpack.c.b16 %v6660, %v6659
  %v6673 = vpack.c.b16 %v6662, %v6661
  %v6674 = vpack.c.b16 %v6664, %v6663
  %v6675 = vpack.c.b16 %v6666, %v6665
  %v6676 = vpack.c.b16 %v6668, %v6667
  %6685 = vmatprep.subr.bf16.mxu0 0
  %6686 = vmatpush1.bf16.msra.mxu0 %v6669
  %6687 = vmatprep.subr.bf16.mxu0 0
  %6688 = vmatpush1.bf16.msra.mxu0 %v6670
  %6689 = vmatprep.subr.bf16.mxu0 0
  %6690 = vmatpush1.bf16.msra.mxu0 %v6671
  %6691 = vmatprep.subr.bf16.mxu0 0
  %6692 = vmatpush1.bf16.msra.mxu0 %v6672
  %6693 = vmatprep.subr.bf16.mxu0 0
  %6694 = vmatpush1.bf16.msra.mxu0 %v6673
  %6695 = vmatprep.subr.bf16.mxu0 0
  %6696 = vmatpush1.bf16.msra.mxu0 %v6674
  %6697 = vmatprep.subr.bf16.mxu0 0
  %6698 = vmatpush1.bf16.msra.mxu0 %v6675
  %6699 = vmatprep.subr.bf16.mxu0 0
  %6700 = vmatpush1.bf16.msra.mxu0 %v6676
  %6701 = vmatprep.subr.bf16.mxu0 0
  %6702 = vmatpush1.bf16.msra.mxu0 0
  %6703 = vmatprep.subr.bf16.mxu0 0
  %6704 = vmatpush1.bf16.msra.mxu0 0
  %6705 = vmatprep.subr.bf16.mxu0 0
  %6706 = vmatpush1.bf16.msra.mxu0 0
  %6707 = vmatprep.subr.bf16.mxu0 0
  %6708 = vmatpush1.bf16.msra.mxu0 0
  %6709 = vmatprep.subr.bf16.mxu0 0
  %6710 = vmatpush1.bf16.msra.mxu0 0
  %6711 = vmatprep.subr.bf16.mxu0 0
  %6712 = vmatpush1.bf16.msra.mxu0 0
  %6713 = vmatprep.subr.bf16.mxu0 0
  %6714 = vmatpush1.bf16.msra.mxu0 0
  %6715 = vmatprep.subr.bf16.mxu0 0
  %6716 = vmatpush1.bf16.msra.mxu0 0
  %6717 = vmatprep.mubr.bf16.mxu0 0
  %6718 = vmatmul.mubr.bf16.gmra.mrb[0].mxu0 %v6620
  %v6719 = vpop.f32.mrb[0].mxu0
  %v6720 = vadd.f32 0.0, %v6719
  %v6721 = vpop.f32.mrb[0].mxu0
  %v6722 = vpop.f32.mrb[0].mxu0
  %v6723 = vpop.f32.mrb[0].mxu0
  %6724 = vdwg.mxu0
  %vm6725 = vcmp.ge.f32.partialorder %v6720, 0.0
  %v6726 = vmul.f32 %v6720, 0.01
  %v6727 = vsel %vm6725, %v6720, %v6726
  %v6728 = vpack.c.bf16 %v6727, %v6727
  %v6729 = vld [vmem:[%s2 + $0xe80] sm:$0xf]
  %v6730 = vld [vmem:[%s2 + $0xe84] sm:$0xf]
  %v6731 = vld [vmem:[%s2 + $0xe88] sm:$0xf]
  %v6732 = vld [vmem:[%s2 + $0xe8c] sm:$0xf]
  %v6733 = vld [vmem:[%s2 + $0xe90] sm:$0xf]
  %v6734 = vld [vmem:[%s2 + $0xe94] sm:$0xf]
  %v6735 = vld [vmem:[%s2 + $0xe98] sm:$0xf]
  %v6736 = vld [vmem:[%s2 + $0xe9c] sm:$0xf]
  %v6737 = vld [vmem:[%s2 + $0xea0] sm:$0xf]
  %v6738 = vld [vmem:[%s2 + $0xea4] sm:$0xf]
  %v6739 = vld [vmem:[%s2 + $0xea8] sm:$0xf]
  %v6740 = vld [vmem:[%s2 + $0xeac] sm:$0xf]
  %v6741 = vld [vmem:[%s2 + $0xeb0] sm:$0xf]
  %v6742 = vld [vmem:[%s2 + $0xeb4] sm:$0xf]
  %v6743 = vld [vmem:[%s2 + $0xeb8] sm:$0xf]
  %v6744 = vld [vmem:[%s2 + $0xebc] sm:$0xf]
  %v6761 = vunpack.c.l.b16 %v6729
  %v6762 = vunpack.c.l.b16 %v6730
  %v6763 = vunpack.c.l.b16 %v6731
  %v6764 = vunpack.c.l.b16 %v6732
  %v6765 = vunpack.c.l.b16 %v6733
  %v6766 = vunpack.c.l.b16 %v6734
  %v6767 = vunpack.c.l.b16 %v6735
  %v6768 = vunpack.c.l.b16 %v6736
  %v6769 = vunpack.c.l.b16 %v6737
  %v6770 = vunpack.c.l.b16 %v6738
  %v6771 = vunpack.c.l.b16 %v6739
  %v6772 = vunpack.c.l.b16 %v6740
  %v6773 = vunpack.c.l.b16 %v6741
  %v6774 = vunpack.c.l.b16 %v6742
  %v6775 = vunpack.c.l.b16 %v6743
  %v6776 = vunpack.c.l.b16 %v6744
  %v6777 = vpack.c.b16 %v6762, %v6761
  %v6778 = vpack.c.b16 %v6764, %v6763
  %v6779 = vpack.c.b16 %v6766, %v6765
  %v6780 = vpack.c.b16 %v6768, %v6767
  %v6781 = vpack.c.b16 %v6770, %v6769
  %v6782 = vpack.c.b16 %v6772, %v6771
  %v6783 = vpack.c.b16 %v6774, %v6773
  %v6784 = vpack.c.b16 %v6776, %v6775
  %6793 = vmatprep.subr.bf16.mxu0 0
  %6794 = vmatpush1.bf16.msra.mxu0 %v6777
  %6795 = vmatprep.subr.bf16.mxu0 0
  %6796 = vmatpush1.bf16.msra.mxu0 %v6778
  %6797 = vmatprep.subr.bf16.mxu0 0
  %6798 = vmatpush1.bf16.msra.mxu0 %v6779
  %6799 = vmatprep.subr.bf16.mxu0 0
  %6800 = vmatpush1.bf16.msra.mxu0 %v6780
  %6801 = vmatprep.subr.bf16.mxu0 0
  %6802 = vmatpush1.bf16.msra.mxu0 %v6781
  %6803 = vmatprep.subr.bf16.mxu0 0
  %6804 = vmatpush1.bf16.msra.mxu0 %v6782
  %6805 = vmatprep.subr.bf16.mxu0 0
  %6806 = vmatpush1.bf16.msra.mxu0 %v6783
  %6807 = vmatprep.subr.bf16.mxu0 0
  %6808 = vmatpush1.bf16.msra.mxu0 %v6784
  %6809 = vmatprep.subr.bf16.mxu0 0
  %6810 = vmatpush1.bf16.msra.mxu0 0
  %6811 = vmatprep.subr.bf16.mxu0 0
  %6812 = vmatpush1.bf16.msra.mxu0 0
  %6813 = vmatprep.subr.bf16.mxu0 0
  %6814 = vmatpush1.bf16.msra.mxu0 0
  %6815 = vmatprep.subr.bf16.mxu0 0
  %6816 = vmatpush1.bf16.msra.mxu0 0
  %6817 = vmatprep.subr.bf16.mxu0 0
  %6818 = vmatpush1.bf16.msra.mxu0 0
  %6819 = vmatprep.subr.bf16.mxu0 0
  %6820 = vmatpush1.bf16.msra.mxu0 0
  %6821 = vmatprep.subr.bf16.mxu0 0
  %6822 = vmatpush1.bf16.msra.mxu0 0
  %6823 = vmatprep.subr.bf16.mxu0 0
  %6824 = vmatpush1.bf16.msra.mxu0 0
  %6825 = vmatprep.mubr.bf16.mxu0 0
  %6826 = vmatmul.mubr.bf16.gmra.mrb[0].mxu0 %v6728
  %v6827 = vpop.f32.mrb[0].mxu0
  %v6828 = vadd.f32 0.0, %v6827
  %v6829 = vpop.f32.mrb[0].mxu0
  %v6830 = vpop.f32.mrb[0].mxu0
  %v6831 = vpop.f32.mrb[0].mxu0
  %6832 = vdwg.mxu0
  %vm6833 = vcmp.ge.f32.partialorder %v6828, 0.0
  %v6834 = vmul.f32 %v6828, 0.01
  %v6835 = vsel %vm6833, %v6828, %v6834
  %v6836 = vpack.c.bf16 %v6835, %v6835
  %v6837 = vld [vmem:[%s2 + $0xec0] sm:$0xf]
  %v6838 = vld [vmem:[%s2 + $0xec4] sm:$0xf]
  %v6839 = vld [vmem:[%s2 + $0xec8] sm:$0xf]
  %v6840 = vld [vmem:[%s2 + $0xecc] sm:$0xf]
  %v6841 = vld [vmem:[%s2 + $0xed0] sm:$0xf]
  %v6842 = vld [vmem:[%s2 + $0xed4] sm:$0xf]
  %v6843 = vld [vmem:[%s2 + $0xed8] sm:$0xf]
  %v6844 = vld [vmem:[%s2 + $0xedc] sm:$0xf]
  %v6845 = vld [vmem:[%s2 + $0xee0] sm:$0xf]
  %v6846 = vld [vmem:[%s2 + $0xee4] sm:$0xf]
  %v6847 = vld [vmem:[%s2 + $0xee8] sm:$0xf]
  %v6848 = vld [vmem:[%s2 + $0xeec] sm:$0xf]
  %v6849 = vld [vmem:[%s2 + $0xef0] sm:$0xf]
  %v6850 = vld [vmem:[%s2 + $0xef4] sm:$0xf]
  %v6851 = vld [vmem:[%s2 + $0xef8] sm:$0xf]
  %v6852 = vld [vmem:[%s2 + $0xefc] sm:$0xf]
  %v6869 = vunpack.c.l.b16 %v6837
  %v6870 = vunpack.c.l.b16 %v6838
  %v6871 = vunpack.c.l.b16 %v6839
  %v6872 = vunpack.c.l.b16 %v6840
  %v6873 = vunpack.c.l.b16 %v6841
  %v6874 = vunpack.c.l.b16 %v6842
  %v6875 = vunpack.c.l.b16 %v6843
  %v6876 = vunpack.c.l.b16 %v6844
  %v6877 = vunpack.c.l.b16 %v6845
  %v6878 = vunpack.c.l.b16 %v6846
  %v6879 = vunpack.c.l.b16 %v6847
  %v6880 = vunpack.c.l.b16 %v6848
  %v6881 = vunpack.c.l.b16 %v6849
  %v6882 = vunpack.c.l.b16 %v6850
  %v6883 = vunpack.c.l.b16 %v6851
  %v6884 = vunpack.c.l.b16 %v6852
  %v6885 = vpack.c.b16 %v6870, %v6869
  %v6886 = vpack.c.b16 %v6872, %v6871
  %v6887 = vpack.c.b16 %v6874, %v6873
  %v6888 = vpack.c.b16 %v6876, %v6875
  %v6889 = vpack.c.b16 %v6878, %v6877
  %v6890 = vpack.c.b16 %v6880, %v6879
  %v6891 = vpack.c.b16 %v6882, %v6881
  %v6892 = vpack.c.b16 %v6884, %v6883
  %6901 = vmatprep.subr.bf16.mxu0 0
  %6902 = vmatpush1.bf16.msra.mxu0 %v6885
  %6903 = vmatprep.subr.bf16.mxu0 0
  %6904 = vmatpush1.bf16.msra.mxu0 %v6886
  %6905 = vmatprep.subr.bf16.mxu0 0
  %6906 = vmatpush1.bf16.msra.mxu0 %v6887
  %6907 = vmatprep.subr.bf16.mxu0 0
  %6908 = vmatpush1.bf16.msra.mxu0 %v6888
  %6909 = vmatprep.subr.bf16.mxu0 0
  %6910 = vmatpush1.bf16.msra.mxu0 %v6889
  %6911 = vmatprep.subr.bf16.mxu0 0
  %6912 = vmatpush1.bf16.msra.mxu0 %v6890
  %6913 = vmatprep.subr.bf16.mxu0 0
  %6914 = vmatpush1.bf16.msra.mxu0 %v6891
  %6915 = vmatprep.subr.bf16.mxu0 0
  %6916 = vmatpush1.bf16.msra.mxu0 %v6892
  %6917 = vmatprep.subr.bf16.mxu0 0
  %6918 = vmatpush1.bf16.msra.mxu0 0
  %6919 = vmatprep.subr.bf16.mxu0 0
  %6920 = vmatpush1.bf16.msra.mxu0 0
  %6921 = vmatprep.subr.bf16.mxu0 0
  %6922 = vmatpush1.bf16.msra.mxu0 0
  %6923 = vmatprep.subr.bf16.mxu0 0
  %6924 = vmatpush1.bf16.msra.mxu0 0
  %6925 = vmatprep.subr.bf16.mxu0 0
  %6926 = vmatpush1.bf16.msra.mxu0 0
  %6927 = vmatprep.subr.bf16.mxu0 0
  %6928 = vmatpush1.bf16.msra.mxu0 0
  %6929 = vmatprep.subr.bf16.mxu0 0
  %6930 = vmatpush1.bf16.msra.mxu0 0
  %6931 = vmatprep.subr.bf16.mxu0 0
  %6932 = vmatpush1.bf16.msra.mxu0 0
  %6933 = vmatprep.mubr.bf16.mxu0 0
  %6934 = vmatmul.mubr.bf16.gmra.mrb[0].mxu0 %v6836
  %v6935 = vpop.f32.mrb[0].mxu0
  %v6936 = vadd.f32 0.0, %v6935
  %v6937 = vpop.f32.mrb[0].mxu0
  %v6938 = vpop.f32.mrb[0].mxu0
  %v6939 = vpop.f32.mrb[0].mxu0
  %6940 = vdwg.mxu0
  %vm6941 = vcmp.ge.f32.partialorder %v6936, 0.0
  %v6942 = vmul.f32 %v6936, 0.01
  %v6943 = vsel %vm6941, %v6936, %v6942
  %v6944 = vpack.c.bf16 %v6943, %v6943
  %v6945 = vld [vmem:[%s2 + $0xf00] sm:$0xf]
  %v6946 = vld [vmem:[%s2 + $0xf04] sm:$0xf]
  %v6947 = vld [vmem:[%s2 + $0xf08] sm:$0xf]
  %v6948 = vld [vmem:[%s2 + $0xf0c] sm:$0xf]
  %v6949 = vld [vmem:[%s2 + $0xf10] sm:$0xf]
  %v6950 = vld [vmem:[%s2 + $0xf14] sm:$0xf]
  %v6951 = vld [vmem:[%s2 + $0xf18] sm:$0xf]
  %v6952 = vld [vmem:[%s2 + $0xf1c] sm:$0xf]
  %v6953 = vld [vmem:[%s2 + $0xf20] sm:$0xf]
  %v6954 = vld [vmem:[%s2 + $0xf24] sm:$0xf]
  %v6955 = vld [vmem:[%s2 + $0xf28] sm:$0xf]
  %v6956 = vld [vmem:[%s2 + $0xf2c] sm:$0xf]
  %v6957 = vld [vmem:[%s2 + $0xf30] sm:$0xf]
  %v6958 = vld [vmem:[%s2 + $0xf34] sm:$0xf]
  %v6959 = vld [vmem:[%s2 + $0xf38] sm:$0xf]
  %v6960 = vld [vmem:[%s2 + $0xf3c] sm:$0xf]
  %v6977 = vunpack.c.l.b16 %v6945
  %v6978 = vunpack.c.l.b16 %v6946
  %v6979 = vunpack.c.l.b16 %v6947
  %v6980 = vunpack.c.l.b16 %v6948
  %v6981 = vunpack.c.l.b16 %v6949
  %v6982 = vunpack.c.l.b16 %v6950
  %v6983 = vunpack.c.l.b16 %v6951
  %v6984 = vunpack.c.l.b16 %v6952
  %v6985 = vunpack.c.l.b16 %v6953
  %v6986 = vunpack.c.l.b16 %v6954
  %v6987 = vunpack.c.l.b16 %v6955
  %v6988 = vunpack.c.l.b16 %v6956
  %v6989 = vunpack.c.l.b16 %v6957
  %v6990 = vunpack.c.l.b16 %v6958
  %v6991 = vunpack.c.l.b16 %v6959
  %v6992 = vunpack.c.l.b16 %v6960
  %v6993 = vpack.c.b16 %v6978, %v6977
  %v6994 = vpack.c.b16 %v6980, %v6979
  %v6995 = vpack.c.b16 %v6982, %v6981
  %v6996 = vpack.c.b16 %v6984, %v6983
  %v6997 = vpack.c.b16 %v6986, %v6985
  %v6998 = vpack.c.b16 %v6988, %v6987
  %v6999 = vpack.c.b16 %v6990, %v6989
  %v7000 = vpack.c.b16 %v6992, %v6991
  %7009 = vmatprep.subr.bf16.mxu0 0
  %7010 = vmatpush1.bf16.msra.mxu0 %v6993
  %7011 = vmatprep.subr.bf16.mxu0 0
  %7012 = vmatpush1.bf16.msra.mxu0 %v6994
  %7013 = vmatprep.subr.bf16.mxu0 0
  %7014 = vmatpush1.bf16.msra.mxu0 %v6995
  %7015 = vmatprep.subr.bf16.mxu0 0
  %7016 = vmatpush1.bf16.msra.mxu0 %v6996
  %7017 = vmatprep.subr.bf16.mxu0 0
  %7018 = vmatpush1.bf16.msra.mxu0 %v6997
  %7019 = vmatprep.subr.bf16.mxu0 0
  %7020 = vmatpush1.bf16.msra.mxu0 %v6998
  %7021 = vmatprep.subr.bf16.mxu0 0
  %7022 = vmatpush1.bf16.msra.mxu0 %v6999
  %7023 = vmatprep.subr.bf16.mxu0 0
  %7024 = vmatpush1.bf16.msra.mxu0 %v7000
  %7025 = vmatprep.subr.bf16.mxu0 0
  %7026 = vmatpush1.bf16.msra.mxu0 0
  %7027 = vmatprep.subr.bf16.mxu0 0
  %7028 = vmatpush1.bf16.msra.mxu0 0
  %7029 = vmatprep.subr.bf16.mxu0 0
  %7030 = vmatpush1.bf16.msra.mxu0 0
  %7031 = vmatprep.subr.bf16.mxu0 0
  %7032 = vmatpush1.bf16.msra.mxu0 0
  %7033 = vmatprep.subr.bf16.mxu0 0
  %7034 = vmatpush1.bf16.msra.mxu0 0
  %7035 = vmatprep.subr.bf16.mxu0 0
  %7036 = vmatpush1.bf16.msra.mxu0 0
  %7037 = vmatprep.subr.bf16.mxu0 0
  %7038 = vmatpush1.bf16.msra.mxu0 0
  %7039 = vmatprep.subr.bf16.mxu0 0
  %7040 = vmatpush1.bf16.msra.mxu0 0
  %7041 = vmatprep.mubr.bf16.mxu0 0
  %7042 = vmatmul.mubr.bf16.gmra.mrb[0].mxu0 %v6944
  %v7043 = vpop.f32.mrb[0].mxu0
  %v7044 = vadd.f32 0.0, %v7043
  %v7045 = vpop.f32.mrb[0].mxu0
  %v7046 = vpop.f32.mrb[0].mxu0
  %v7047 = vpop.f32.mrb[0].mxu0
  %7048 = vdwg.mxu0
  %vm7049 = vcmp.ge.f32.partialorder %v7044, 0.0
  %v7050 = vmul.f32 %v7044, 0.01
  %v7051 = vsel %vm7049, %v7044, %v7050
  %v7052 = vpack.c.bf16 %v7051, %v7051
  %v7053 = vld [vmem:[%s2 + $0xf40] sm:$0xf]
  %v7054 = vld [vmem:[%s2 + $0xf44] sm:$0xf]
  %v7055 = vld [vmem:[%s2 + $0xf48] sm:$0xf]
  %v7056 = vld [vmem:[%s2 + $0xf4c] sm:$0xf]
  %v7057 = vld [vmem:[%s2 + $0xf50] sm:$0xf]
  %v7058 = vld [vmem:[%s2 + $0xf54] sm:$0xf]
  %v7059 = vld [vmem:[%s2 + $0xf58] sm:$0xf]
  %v7060 = vld [vmem:[%s2 + $0xf5c] sm:$0xf]
  %v7061 = vld [vmem:[%s2 + $0xf60] sm:$0xf]
  %v7062 = vld [vmem:[%s2 + $0xf64] sm:$0xf]
  %v7063 = vld [vmem:[%s2 + $0xf68] sm:$0xf]
  %v7064 = vld [vmem:[%s2 + $0xf6c] sm:$0xf]
  %v7065 = vld [vmem:[%s2 + $0xf70] sm:$0xf]
  %v7066 = vld [vmem:[%s2 + $0xf74] sm:$0xf]
  %v7067 = vld [vmem:[%s2 + $0xf78] sm:$0xf]
  %v7068 = vld [vmem:[%s2 + $0xf7c] sm:$0xf]
  %v7085 = vunpack.c.l.b16 %v7053
  %v7086 = vunpack.c.l.b16 %v7054
  %v7087 = vunpack.c.l.b16 %v7055
  %v7088 = vunpack.c.l.b16 %v7056
  %v7089 = vunpack.c.l.b16 %v7057
  %v7090 = vunpack.c.l.b16 %v7058
  %v7091 = vunpack.c.l.b16 %v7059
  %v7092 = vunpack.c.l.b16 %v7060
  %v7093 = vunpack.c.l.b16 %v7061
  %v7094 = vunpack.c.l.b16 %v7062
  %v7095 = vunpack.c.l.b16 %v7063
  %v7096 = vunpack.c.l.b16 %v7064
  %v7097 = vunpack.c.l.b16 %v7065
  %v7098 = vunpack.c.l.b16 %v7066
  %v7099 = vunpack.c.l.b16 %v7067
  %v7100 = vunpack.c.l.b16 %v7068
  %v7101 = vpack.c.b16 %v7086, %v7085
  %v7102 = vpack.c.b16 %v7088, %v7087
  %v7103 = vpack.c.b16 %v7090, %v7089
  %v7104 = vpack.c.b16 %v7092, %v7091
  %v7105 = vpack.c.b16 %v7094, %v7093
  %v7106 = vpack.c.b16 %v7096, %v7095
  %v7107 = vpack.c.b16 %v7098, %v7097
  %v7108 = vpack.c.b16 %v7100, %v7099
  %7117 = vmatprep.subr.bf16.mxu0 0
  %7118 = vmatpush1.bf16.msra.mxu0 %v7101
  %7119 = vmatprep.subr.bf16.mxu0 0
  %7120 = vmatpush1.bf16.msra.mxu0 %v7102
  %7121 = vmatprep.subr.bf16.mxu0 0
  %7122 = vmatpush1.bf16.msra.mxu0 %v7103
  %7123 = vmatprep.subr.bf16.mxu0 0
  %7124 = vmatpush1.bf16.msra.mxu0 %v7104
  %7125 = vmatprep.subr.bf16.mxu0 0
  %7126 = vmatpush1.bf16.msra.mxu0 %v7105
  %7127 = vmatprep.subr.bf16.mxu0 0
  %7128 = vmatpush1.bf16.msra.mxu0 %v7106
  %7129 = vmatprep.subr.bf16.mxu0 0
  %7130 = vmatpush1.bf16.msra.mxu0 %v7107
  %7131 = vmatprep.subr.bf16.mxu0 0
  %7132 = vmatpush1.bf16.msra.mxu0 %v7108
  %7133 = vmatprep.subr.bf16.mxu0 0
  %7134 = vmatpush1.bf16.msra.mxu0 0
  %7135 = vmatprep.subr.bf16.mxu0 0
  %7136 = vmatpush1.bf16.msra.mxu0 0
  %7137 = vmatprep.subr.bf16.mxu0 0
  %7138 = vmatpush1.bf16.msra.mxu0 0
  %7139 = vmatprep.subr.bf16.mxu0 0
  %7140 = vmatpush1.bf16.msra.mxu0 0
  %7141 = vmatprep.subr.bf16.mxu0 0
  %7142 = vmatpush1.bf16.msra.mxu0 0
  %7143 = vmatprep.subr.bf16.mxu0 0
  %7144 = vmatpush1.bf16.msra.mxu0 0
  %7145 = vmatprep.subr.bf16.mxu0 0
  %7146 = vmatpush1.bf16.msra.mxu0 0
  %7147 = vmatprep.subr.bf16.mxu0 0
  %7148 = vmatpush1.bf16.msra.mxu0 0
  %7149 = vmatprep.mubr.bf16.mxu0 0
  %7150 = vmatmul.mubr.bf16.gmra.mrb[0].mxu0 %v7052
  %v7151 = vpop.f32.mrb[0].mxu0
  %v7152 = vadd.f32 0.0, %v7151
  %v7153 = vpop.f32.mrb[0].mxu0
  %v7154 = vpop.f32.mrb[0].mxu0
  %v7155 = vpop.f32.mrb[0].mxu0
  %7156 = vdwg.mxu0
  %vm7157 = vcmp.ge.f32.partialorder %v7152, 0.0
  %v7158 = vmul.f32 %v7152, 0.01
  %v7159 = vsel %vm7157, %v7152, %v7158
  %v7160 = vpack.c.bf16 %v7159, %v7159
  %v7161 = vld [vmem:[%s2 + $0xf80] sm:$0xf]
  %v7162 = vld [vmem:[%s2 + $0xf84] sm:$0xf]
  %v7163 = vld [vmem:[%s2 + $0xf88] sm:$0xf]
  %v7164 = vld [vmem:[%s2 + $0xf8c] sm:$0xf]
  %v7165 = vld [vmem:[%s2 + $0xf90] sm:$0xf]
  %v7166 = vld [vmem:[%s2 + $0xf94] sm:$0xf]
  %v7167 = vld [vmem:[%s2 + $0xf98] sm:$0xf]
  %v7168 = vld [vmem:[%s2 + $0xf9c] sm:$0xf]
  %v7169 = vld [vmem:[%s2 + $0xfa0] sm:$0xf]
  %v7170 = vld [vmem:[%s2 + $0xfa4] sm:$0xf]
  %v7171 = vld [vmem:[%s2 + $0xfa8] sm:$0xf]
  %v7172 = vld [vmem:[%s2 + $0xfac] sm:$0xf]
  %v7173 = vld [vmem:[%s2 + $0xfb0] sm:$0xf]
  %v7174 = vld [vmem:[%s2 + $0xfb4] sm:$0xf]
  %v7175 = vld [vmem:[%s2 + $0xfb8] sm:$0xf]
  %v7176 = vld [vmem:[%s2 + $0xfbc] sm:$0xf]
  %v7193 = vunpack.c.l.b16 %v7161
  %v7194 = vunpack.c.l.b16 %v7162
  %v7195 = vunpack.c.l.b16 %v7163
  %v7196 = vunpack.c.l.b16 %v7164
  %v7197 = vunpack.c.l.b16 %v7165
  %v7198 = vunpack.c.l.b16 %v7166
  %v7199 = vunpack.c.l.b16 %v7167
  %v7200 = vunpack.c.l.b16 %v7168
  %v7201 = vunpack.c.l.b16 %v7169
  %v7202 = vunpack.c.l.b16 %v7170
  %v7203 = vunpack.c.l.b16 %v7171
  %v7204 = vunpack.c.l.b16 %v7172
  %v7205 = vunpack.c.l.b16 %v7173
  %v7206 = vunpack.c.l.b16 %v7174
  %v7207 = vunpack.c.l.b16 %v7175
  %v7208 = vunpack.c.l.b16 %v7176
  %v7209 = vpack.c.b16 %v7194, %v7193
  %v7210 = vpack.c.b16 %v7196, %v7195
  %v7211 = vpack.c.b16 %v7198, %v7197
  %v7212 = vpack.c.b16 %v7200, %v7199
  %v7213 = vpack.c.b16 %v7202, %v7201
  %v7214 = vpack.c.b16 %v7204, %v7203
  %v7215 = vpack.c.b16 %v7206, %v7205
  %v7216 = vpack.c.b16 %v7208, %v7207
  %7225 = vmatprep.subr.bf16.mxu0 0
  %7226 = vmatpush1.bf16.msra.mxu0 %v7209
  %7227 = vmatprep.subr.bf16.mxu0 0
  %7228 = vmatpush1.bf16.msra.mxu0 %v7210
  %7229 = vmatprep.subr.bf16.mxu0 0
  %7230 = vmatpush1.bf16.msra.mxu0 %v7211
  %7231 = vmatprep.subr.bf16.mxu0 0
  %7232 = vmatpush1.bf16.msra.mxu0 %v7212
  %7233 = vmatprep.subr.bf16.mxu0 0
  %7234 = vmatpush1.bf16.msra.mxu0 %v7213
  %7235 = vmatprep.subr.bf16.mxu0 0
  %7236 = vmatpush1.bf16.msra.mxu0 %v7214
  %7237 = vmatprep.subr.bf16.mxu0 0
  %7238 = vmatpush1.bf16.msra.mxu0 %v7215
  %7239 = vmatprep.subr.bf16.mxu0 0
  %7240 = vmatpush1.bf16.msra.mxu0 %v7216
  %7241 = vmatprep.subr.bf16.mxu0 0
  %7242 = vmatpush1.bf16.msra.mxu0 0
  %7243 = vmatprep.subr.bf16.mxu0 0
  %7244 = vmatpush1.bf16.msra.mxu0 0
  %7245 = vmatprep.subr.bf16.mxu0 0
  %7246 = vmatpush1.bf16.msra.mxu0 0
  %7247 = vmatprep.subr.bf16.mxu0 0
  %7248 = vmatpush1.bf16.msra.mxu0 0
  %7249 = vmatprep.subr.bf16.mxu0 0
  %7250 = vmatpush1.bf16.msra.mxu0 0
  %7251 = vmatprep.subr.bf16.mxu0 0
  %7252 = vmatpush1.bf16.msra.mxu0 0
  %7253 = vmatprep.subr.bf16.mxu0 0
  %7254 = vmatpush1.bf16.msra.mxu0 0
  %7255 = vmatprep.subr.bf16.mxu0 0
  %7256 = vmatpush1.bf16.msra.mxu0 0
  %7257 = vmatprep.mubr.bf16.mxu0 0
  %7258 = vmatmul.mubr.bf16.gmra.mrb[0].mxu0 %v7160
  %v7259 = vpop.f32.mrb[0].mxu0
  %v7260 = vadd.f32 0.0, %v7259
  %v7261 = vpop.f32.mrb[0].mxu0
  %v7262 = vpop.f32.mrb[0].mxu0
  %v7263 = vpop.f32.mrb[0].mxu0
  %7264 = vdwg.mxu0
  %vm7265 = vcmp.ge.f32.partialorder %v7260, 0.0
  %v7266 = vmul.f32 %v7260, 0.01
  %v7267 = vsel %vm7265, %v7260, %v7266
  %v7268 = vpack.c.bf16 %v7267, %v7267
  %v7269 = vld [vmem:[%s2 + $0xfc0] sm:$0xf]
  %v7270 = vld [vmem:[%s2 + $0xfc4] sm:$0xf]
  %v7271 = vld [vmem:[%s2 + $0xfc8] sm:$0xf]
  %v7272 = vld [vmem:[%s2 + $0xfcc] sm:$0xf]
  %v7273 = vld [vmem:[%s2 + $0xfd0] sm:$0xf]
  %v7274 = vld [vmem:[%s2 + $0xfd4] sm:$0xf]
  %v7275 = vld [vmem:[%s2 + $0xfd8] sm:$0xf]
  %v7276 = vld [vmem:[%s2 + $0xfdc] sm:$0xf]
  %v7277 = vld [vmem:[%s2 + $0xfe0] sm:$0xf]
  %v7278 = vld [vmem:[%s2 + $0xfe4] sm:$0xf]
  %v7279 = vld [vmem:[%s2 + $0xfe8] sm:$0xf]
  %v7280 = vld [vmem:[%s2 + $0xfec] sm:$0xf]
  %v7281 = vld [vmem:[%s2 + $0xff0] sm:$0xf]
  %v7282 = vld [vmem:[%s2 + $0xff4] sm:$0xf]
  %v7283 = vld [vmem:[%s2 + $0xff8] sm:$0xf]
  %v7284 = vld [vmem:[%s2 + $0xffc] sm:$0xf]
  %v7301 = vunpack.c.l.b16 %v7269
  %v7302 = vunpack.c.l.b16 %v7270
  %v7303 = vunpack.c.l.b16 %v7271
  %v7304 = vunpack.c.l.b16 %v7272
  %v7305 = vunpack.c.l.b16 %v7273
  %v7306 = vunpack.c.l.b16 %v7274
  %v7307 = vunpack.c.l.b16 %v7275
  %v7308 = vunpack.c.l.b16 %v7276
  %v7309 = vunpack.c.l.b16 %v7277
  %v7310 = vunpack.c.l.b16 %v7278
  %v7311 = vunpack.c.l.b16 %v7279
  %v7312 = vunpack.c.l.b16 %v7280
  %v7313 = vunpack.c.l.b16 %v7281
  %v7314 = vunpack.c.l.b16 %v7282
  %v7315 = vunpack.c.l.b16 %v7283
  %v7316 = vunpack.c.l.b16 %v7284
  %v7317 = vpack.c.b16 %v7302, %v7301
  %v7318 = vpack.c.b16 %v7304, %v7303
  %v7319 = vpack.c.b16 %v7306, %v7305
  %v7320 = vpack.c.b16 %v7308, %v7307
  %v7321 = vpack.c.b16 %v7310, %v7309
  %v7322 = vpack.c.b16 %v7312, %v7311
  %v7323 = vpack.c.b16 %v7314, %v7313
  %v7324 = vpack.c.b16 %v7316, %v7315
  %7333 = vmatprep.subr.bf16.mxu0 0
  %7334 = vmatpush1.bf16.msra.mxu0 %v7317
  %7335 = vmatprep.subr.bf16.mxu0 0
  %7336 = vmatpush1.bf16.msra.mxu0 %v7318
  %7337 = vmatprep.subr.bf16.mxu0 0
  %7338 = vmatpush1.bf16.msra.mxu0 %v7319
  %7339 = vmatprep.subr.bf16.mxu0 0
  %7340 = vmatpush1.bf16.msra.mxu0 %v7320
  %7341 = vmatprep.subr.bf16.mxu0 0
  %7342 = vmatpush1.bf16.msra.mxu0 %v7321
  %7343 = vmatprep.subr.bf16.mxu0 0
  %7344 = vmatpush1.bf16.msra.mxu0 %v7322
  %7345 = vmatprep.subr.bf16.mxu0 0
  %7346 = vmatpush1.bf16.msra.mxu0 %v7323
  %7347 = vmatprep.subr.bf16.mxu0 0
  %7348 = vmatpush1.bf16.msra.mxu0 %v7324
  %7349 = vmatprep.subr.bf16.mxu0 0
  %7350 = vmatpush1.bf16.msra.mxu0 0
  %7351 = vmatprep.subr.bf16.mxu0 0
  %7352 = vmatpush1.bf16.msra.mxu0 0
  %7353 = vmatprep.subr.bf16.mxu0 0
  %7354 = vmatpush1.bf16.msra.mxu0 0
  %7355 = vmatprep.subr.bf16.mxu0 0
  %7356 = vmatpush1.bf16.msra.mxu0 0
  %7357 = vmatprep.subr.bf16.mxu0 0
  %7358 = vmatpush1.bf16.msra.mxu0 0
  %7359 = vmatprep.subr.bf16.mxu0 0
  %7360 = vmatpush1.bf16.msra.mxu0 0
  %7361 = vmatprep.subr.bf16.mxu0 0
  %7362 = vmatpush1.bf16.msra.mxu0 0
  %7363 = vmatprep.subr.bf16.mxu0 0
  %7364 = vmatpush1.bf16.msra.mxu0 0
  %7365 = vmatprep.mubr.bf16.mxu0 0
  %7366 = vmatmul.mubr.bf16.gmra.mrb[0].mxu0 %v7268
  %v7367 = vpop.f32.mrb[0].mxu0
  %v7368 = vadd.f32 0.0, %v7367
  %v7369 = vpop.f32.mrb[0].mxu0
  %v7370 = vpop.f32.mrb[0].mxu0
  %v7371 = vpop.f32.mrb[0].mxu0
  %7372 = vdwg.mxu0
  %vm7373 = vcmp.ge.f32.partialorder %v7368, 0.0
  %v7374 = vmul.f32 %v7368, 0.01
  %v7375 = vsel %vm7373, %v7368, %v7374
  %v7376 = vpack.c.bf16 %v7375, %v7375
  %v7377 = vld [vmem:[%s2 + $0x1000] sm:$0xf]
  %v7378 = vld [vmem:[%s2 + $0x1004] sm:$0xf]
  %v7379 = vld [vmem:[%s2 + $0x1008] sm:$0xf]
  %v7380 = vld [vmem:[%s2 + $0x100c] sm:$0xf]
  %v7381 = vld [vmem:[%s2 + $0x1010] sm:$0xf]
  %v7382 = vld [vmem:[%s2 + $0x1014] sm:$0xf]
  %v7383 = vld [vmem:[%s2 + $0x1018] sm:$0xf]
  %v7384 = vld [vmem:[%s2 + $0x101c] sm:$0xf]
  %v7385 = vld [vmem:[%s2 + $0x1020] sm:$0xf]
  %v7386 = vld [vmem:[%s2 + $0x1024] sm:$0xf]
  %v7387 = vld [vmem:[%s2 + $0x1028] sm:$0xf]
  %v7388 = vld [vmem:[%s2 + $0x102c] sm:$0xf]
  %v7389 = vld [vmem:[%s2 + $0x1030] sm:$0xf]
  %v7390 = vld [vmem:[%s2 + $0x1034] sm:$0xf]
  %v7391 = vld [vmem:[%s2 + $0x1038] sm:$0xf]
  %v7392 = vld [vmem:[%s2 + $0x103c] sm:$0xf]
  %v7409 = vunpack.c.l.b16 %v7377
  %v7410 = vunpack.c.l.b16 %v7378
  %v7411 = vunpack.c.l.b16 %v7379
  %v7412 = vunpack.c.l.b16 %v7380
  %v7413 = vunpack.c.l.b16 %v7381
  %v7414 = vunpack.c.l.b16 %v7382
  %v7415 = vunpack.c.l.b16 %v7383
  %v7416 = vunpack.c.l.b16 %v7384
  %v7417 = vunpack.c.l.b16 %v7385
  %v7418 = vunpack.c.l.b16 %v7386
  %v7419 = vunpack.c.l.b16 %v7387
  %v7420 = vunpack.c.l.b16 %v7388
  %v7421 = vunpack.c.l.b16 %v7389
  %v7422 = vunpack.c.l.b16 %v7390
  %v7423 = vunpack.c.l.b16 %v7391
  %v7424 = vunpack.c.l.b16 %v7392
  %v7425 = vpack.c.b16 %v7410, %v7409
  %v7426 = vpack.c.b16 %v7412, %v7411
  %v7427 = vpack.c.b16 %v7414, %v7413
  %v7428 = vpack.c.b16 %v7416, %v7415
  %v7429 = vpack.c.b16 %v7418, %v7417
  %v7430 = vpack.c.b16 %v7420, %v7419
  %v7431 = vpack.c.b16 %v7422, %v7421
  %v7432 = vpack.c.b16 %v7424, %v7423
  %7441 = vmatprep.subr.bf16.mxu0 0
  %7442 = vmatpush1.bf16.msra.mxu0 %v7425
  %7443 = vmatprep.subr.bf16.mxu0 0
  %7444 = vmatpush1.bf16.msra.mxu0 %v7426
  %7445 = vmatprep.subr.bf16.mxu0 0
  %7446 = vmatpush1.bf16.msra.mxu0 %v7427
  %7447 = vmatprep.subr.bf16.mxu0 0
  %7448 = vmatpush1.bf16.msra.mxu0 %v7428
  %7449 = vmatprep.subr.bf16.mxu0 0
  %7450 = vmatpush1.bf16.msra.mxu0 %v7429
  %7451 = vmatprep.subr.bf16.mxu0 0
  %7452 = vmatpush1.bf16.msra.mxu0 %v7430
  %7453 = vmatprep.subr.bf16.mxu0 0
  %7454 = vmatpush1.bf16.msra.mxu0 %v7431
  %7455 = vmatprep.subr.bf16.mxu0 0
  %7456 = vmatpush1.bf16.msra.mxu0 %v7432
  %7457 = vmatprep.subr.bf16.mxu0 0
  %7458 = vmatpush1.bf16.msra.mxu0 0
  %7459 = vmatprep.subr.bf16.mxu0 0
  %7460 = vmatpush1.bf16.msra.mxu0 0
  %7461 = vmatprep.subr.bf16.mxu0 0
  %7462 = vmatpush1.bf16.msra.mxu0 0
  %7463 = vmatprep.subr.bf16.mxu0 0
  %7464 = vmatpush1.bf16.msra.mxu0 0
  %7465 = vmatprep.subr.bf16.mxu0 0
  %7466 = vmatpush1.bf16.msra.mxu0 0
  %7467 = vmatprep.subr.bf16.mxu0 0
  %7468 = vmatpush1.bf16.msra.mxu0 0
  %7469 = vmatprep.subr.bf16.mxu0 0
  %7470 = vmatpush1.bf16.msra.mxu0 0
  %7471 = vmatprep.subr.bf16.mxu0 0
  %7472 = vmatpush1.bf16.msra.mxu0 0
  %7473 = vmatprep.mubr.bf16.mxu0 0
  %7474 = vmatmul.mubr.bf16.gmra.mrb[0].mxu0 %v7376
  %v7475 = vpop.f32.mrb[0].mxu0
  %v7476 = vadd.f32 0.0, %v7475
  %v7477 = vpop.f32.mrb[0].mxu0
  %v7478 = vpop.f32.mrb[0].mxu0
  %v7479 = vpop.f32.mrb[0].mxu0
  %7480 = vdwg.mxu0
  %vm7481 = vcmp.ge.f32.partialorder %v7476, 0.0
  %v7482 = vmul.f32 %v7476, 0.01
  %v7483 = vsel %vm7481, %v7476, %v7482
  %v7484 = vpack.c.bf16 %v7483, %v7483
  %v7485 = vld [vmem:[%s2 + $0x1040] sm:$0xf]
  %v7486 = vld [vmem:[%s2 + $0x1044] sm:$0xf]
  %v7487 = vld [vmem:[%s2 + $0x1048] sm:$0xf]
  %v7488 = vld [vmem:[%s2 + $0x104c] sm:$0xf]
  %v7489 = vld [vmem:[%s2 + $0x1050] sm:$0xf]
  %v7490 = vld [vmem:[%s2 + $0x1054] sm:$0xf]
  %v7491 = vld [vmem:[%s2 + $0x1058] sm:$0xf]
  %v7492 = vld [vmem:[%s2 + $0x105c] sm:$0xf]
  %v7493 = vld [vmem:[%s2 + $0x1060] sm:$0xf]
  %v7494 = vld [vmem:[%s2 + $0x1064] sm:$0xf]
  %v7495 = vld [vmem:[%s2 + $0x1068] sm:$0xf]
  %v7496 = vld [vmem:[%s2 + $0x106c] sm:$0xf]
  %v7497 = vld [vmem:[%s2 + $0x1070] sm:$0xf]
  %v7498 = vld [vmem:[%s2 + $0x1074] sm:$0xf]
  %v7499 = vld [vmem:[%s2 + $0x1078] sm:$0xf]
  %v7500 = vld [vmem:[%s2 + $0x107c] sm:$0xf]
  %v7517 = vunpack.c.l.b16 %v7485
  %v7518 = vunpack.c.l.b16 %v7486
  %v7519 = vunpack.c.l.b16 %v7487
  %v7520 = vunpack.c.l.b16 %v7488
  %v7521 = vunpack.c.l.b16 %v7489
  %v7522 = vunpack.c.l.b16 %v7490
  %v7523 = vunpack.c.l.b16 %v7491
  %v7524 = vunpack.c.l.b16 %v7492
  %v7525 = vunpack.c.l.b16 %v7493
  %v7526 = vunpack.c.l.b16 %v7494
  %v7527 = vunpack.c.l.b16 %v7495
  %v7528 = vunpack.c.l.b16 %v7496
  %v7529 = vunpack.c.l.b16 %v7497
  %v7530 = vunpack.c.l.b16 %v7498
  %v7531 = vunpack.c.l.b16 %v7499
  %v7532 = vunpack.c.l.b16 %v7500
  %v7533 = vpack.c.b16 %v7518, %v7517
  %v7534 = vpack.c.b16 %v7520, %v7519
  %v7535 = vpack.c.b16 %v7522, %v7521
  %v7536 = vpack.c.b16 %v7524, %v7523
  %v7537 = vpack.c.b16 %v7526, %v7525
  %v7538 = vpack.c.b16 %v7528, %v7527
  %v7539 = vpack.c.b16 %v7530, %v7529
  %v7540 = vpack.c.b16 %v7532, %v7531
  %7549 = vmatprep.subr.bf16.mxu0 0
  %7550 = vmatpush1.bf16.msra.mxu0 %v7533
  %7551 = vmatprep.subr.bf16.mxu0 0
  %7552 = vmatpush1.bf16.msra.mxu0 %v7534
  %7553 = vmatprep.subr.bf16.mxu0 0
  %7554 = vmatpush1.bf16.msra.mxu0 %v7535
  %7555 = vmatprep.subr.bf16.mxu0 0
  %7556 = vmatpush1.bf16.msra.mxu0 %v7536
  %7557 = vmatprep.subr.bf16.mxu0 0
  %7558 = vmatpush1.bf16.msra.mxu0 %v7537
  %7559 = vmatprep.subr.bf16.mxu0 0
  %7560 = vmatpush1.bf16.msra.mxu0 %v7538
  %7561 = vmatprep.subr.bf16.mxu0 0
  %7562 = vmatpush1.bf16.msra.mxu0 %v7539
  %7563 = vmatprep.subr.bf16.mxu0 0
  %7564 = vmatpush1.bf16.msra.mxu0 %v7540
  %7565 = vmatprep.subr.bf16.mxu0 0
  %7566 = vmatpush1.bf16.msra.mxu0 0
  %7567 = vmatprep.subr.bf16.mxu0 0
  %7568 = vmatpush1.bf16.msra.mxu0 0
  %7569 = vmatprep.subr.bf16.mxu0 0
  %7570 = vmatpush1.bf16.msra.mxu0 0
  %7571 = vmatprep.subr.bf16.mxu0 0
  %7572 = vmatpush1.bf16.msra.mxu0 0
  %7573 = vmatprep.subr.bf16.mxu0 0
  %7574 = vmatpush1.bf16.msra.mxu0 0
  %7575 = vmatprep.subr.bf16.mxu0 0
  %7576 = vmatpush1.bf16.msra.mxu0 0
  %7577 = vmatprep.subr.bf16.mxu0 0
  %7578 = vmatpush1.bf16.msra.mxu0 0
  %7579 = vmatprep.subr.bf16.mxu0 0
  %7580 = vmatpush1.bf16.msra.mxu0 0
  %7581 = vmatprep.mubr.bf16.mxu0 0
  %7582 = vmatmul.mubr.bf16.gmra.mrb[0].mxu0 %v7484
  %v7583 = vpop.f32.mrb[0].mxu0
  %v7584 = vadd.f32 0.0, %v7583
  %v7585 = vpop.f32.mrb[0].mxu0
  %v7586 = vpop.f32.mrb[0].mxu0
  %v7587 = vpop.f32.mrb[0].mxu0
  %7588 = vdwg.mxu0
  %v7589 = vld [vmem:[%s1] sm:$0xf]
  %7591 = vset.pattern.permute.xlu0 0
  %7592 = vperm.xlu0 %7591, %v7584
  %v7593 = vpop.permute.xlu0 %7592
  %v7595 = vunpack.c.l.s4 269488144
  %v7596 = vunpack.c.0.s8 %v7595
  %v7597 = vlaneseq
  %v7598 = vshrl.u32 %v7597, 7
  %v7599 = vsub.s32 %v7596, %v7598
  %v7600 = vrot.slane %v7593, %v7599
  %v7602 = vadd.f32 %v7589, %v7600
  %7603 = vst [vmem:[%s3] sm:$0xf] %v7602
  // Predicated region
  $region14: #{forward.1} parent=0 // pred_check
    _
  $region15: #{forward.1} parent=0 // pred_check_branch
    %7605 = sbr.rel (0) target = $region17
  $region16: #{forward.1} parent=0 // pred_region
    _
  $region17: #{forward.1} parent=0 // pred_fallthru
    _
  // Predicated region
  $region18: #{forward.1} parent=0 // pred_check
    _
  $region19: #{forward.1} parent=0 // pred_check_branch
    %7607 = sbr.rel (0) target = $region21
  $region20: #{forward.1} parent=0 // pred_region
    _
  $region21: #{forward.1} parent=0 // pred_fallthru
    _

</llo_original>
